<compile_context>
chip_gen: v7x
topology: tpu7x:2x2x1
jax: 0.10.0
libtpu: 0.0.40
codegen_flags: <defaults>
</compile_context>

<pallas_src>
import jax
import jax.numpy as jnp
from jax import lax
from jax.experimental import pallas as pl
from jax.experimental.pallas import tpu as pltpu

EPS = 1e-3  # BatchNorm2d eps=0.001 in the PyTorch module

# Branch widths fixed by the module definition.
C1_1, C2_1, C4_1 = 64, 48, 64      # 1x1 convs
C1_2, C1_3, C2_2 = 96, 96, 64      # 3x3, 3x3, 5x5 convs
C1X1 = C1_1 + C4_1 + C2_1          # fused 1x1 output width (176)

LPAD = 16                          # aligned interior column offset in scratch


def _fold_bn(p, pre_scale=1.0):
    """Fold inference-mode BN (and an optional constant) into (bf16 w, f32 b)."""
    scale = p["gamma"] / jnp.sqrt(p["var"] + EPS)
    w = (p["w"] * (scale * pre_scale)).astype(jnp.bfloat16)   # (K,K,Cin,Cout)
    b = (p["beta"] - p["mean"] * scale).astype(jnp.float32)
    return w, b


# --------------------------------------------------------------------------
# Fused InceptionA kernel: one grid step = one image
# --------------------------------------------------------------------------
def _make_kernel(H, W, Cin, P):
    Hp, Wp = H + 2, W + 2
    WS = LPAD + W + 4                      # scratch width (covers pad-2 halo)
    Ctot = C1_3 + C2_2 + P + C4_1

    def kernel(xp_ref, w1_ref, b1_ref, wp_ref, bp_ref,
               w12_ref, b12_ref, w13_ref, b13_ref, w22_ref, b22_ref,
               o_ref, m1s, y12s, m2s):
        f32 = jnp.float32
        xv = xp_ref[0]                                     # (Hp, Wp, Cin) bf16

        # ------- fused 1x1 convs [conv1_1 | conv4_1 | conv2_1]: one matmul --
        xi = xv[1:1 + H, 1:1 + W, :].reshape(H * W, Cin)
        y = jnp.dot(xi, w1_ref[...], preferred_element_type=f32)
        y = jnp.maximum(y + b1_ref[...], 0.0)
        m1 = y[:, :C1_1].reshape(H, W, C1_1).astype(jnp.bfloat16)
        o4 = y[:, C1_1:C1_1 + C4_1]                        # (H*W, 64) f32
        m2 = y[:, C1_1 + C4_1:].reshape(H, W, C2_1).astype(jnp.bfloat16)

        # ------- pool branch: separable 3x3 sum-pool (1/9 folded into wp) ---
        xf = xv.astype(f32)
        csum = xf[:, 0:W, :] + xf[:, 1:1 + W, :] + xf[:, 2:2 + W, :]  # (Hp,W,Cin)
        pooled = csum[0:H] + csum[1:1 + H] + csum[2:2 + H]            # (H,W,Cin)
        o3 = jnp.dot(pooled.astype(jnp.bfloat16).reshape(H * W, Cin),
                     wp_ref[...], preferred_element_type=f32)
        o3 = jnp.maximum(o3 + bp_ref[...], 0.0)                       # (H*W, P)

        # ------- branch 1: conv3x3(64->96) -> conv3x3(96->96) ---------------
        # Zero-ringed VMEM scratch provides the conv padding; kw taps are
        # packed along K so each 3x3 conv is only 3 MXU dots.
        m1s[...] = jnp.zeros_like(m1s)
        m1s[1:1 + H, LPAD:LPAD + W, :] = m1
        v = m1s[...]
        packed = jnp.concatenate(
            [v[:, LPAD - 1 + kw:LPAD - 1 + kw + W, :] for kw in range(3)],
            axis=-1)                                       # (H+2, W, 3*64)
        acc = jnp.zeros((H * W, C1_2), f32)
        for kh in range(3):
            acc = acc + jnp.dot(packed[kh:kh + H].reshape(H * W, 3 * C1_1),
                                w12_ref[kh], preferred_element_type=f32)
        y12 = jnp.maximum(acc + b12_ref[...], 0.0)

        y12s[...] = jnp.zeros_like(y12s)
        y12s[1:1 + H, LPAD:LPAD + W, :] = (
            y12.reshape(H, W, C1_2).astype(jnp.bfloat16))
        v = y12s[...]
        packed = jnp.concatenate(
            [v[:, LPAD - 1 + kw:LPAD - 1 + kw + W, :] for kw in range(3)],
            axis=-1)                                       # (H+2, W, 3*96)
        acc = jnp.zeros((H * W, C1_3), f32)
        for kh in range(3):
            acc = acc + jnp.dot(packed[kh:kh + H].reshape(H * W, 3 * C1_2),
                                w13_ref[kh], preferred_element_type=f32)
        o1 = jnp.maximum(acc + b13_ref[...], 0.0)          # (H*W, 96)

        # ------- branch 2: conv5x5(48->64): 5 dots with K = 240 -------------
        m2s[...] = jnp.zeros_like(m2s)
        m2s[2:2 + H, LPAD:LPAD + W, :] = m2
        v = m2s[...]
        packed = jnp.concatenate(
            [v[:, LPAD - 2 + kw:LPAD - 2 + kw + W, :] for kw in range(5)],
            axis=-1)                                       # (H+4, W, 5*48)
        acc = jnp.zeros((H * W, C2_2), f32)
        for kh in range(5):
            acc = acc + jnp.dot(packed[kh:kh + H].reshape(H * W, 5 * C2_1),
                                w22_ref[kh], preferred_element_type=f32)
        o2 = jnp.maximum(acc + b22_ref[...], 0.0)          # (H*W, 64)

        # ------- single lane-dense store of the concatenated output ---------
        out = jnp.concatenate([o1, o2, o3, o4], axis=-1)   # (H*W, 96+64+P+64)
        o_ref[0] = out.reshape(H, W, Ctot).astype(o_ref.dtype)

    return kernel


# --------------------------------------------------------------------------
# InceptionA forward (one fused pallas_call)
# --------------------------------------------------------------------------
def inception_a_forward_nhwc(x_nhwc, params):
    """NHWC in, NHWC out — use this to chain layers without transposes."""
    N, H, W, Cin = x_nhwc.shape
    P = params["c3_1"]["w"].shape[-1]
    Ctot = C1_3 + C2_2 + P + C4_1
    # TODO(synk): for very large H*W add an H-tile grid axis (with halo) to
    # bound VMEM; at InceptionA sizes the whole image fits comfortably.

    # Fold BN into bf16 weights / f32 biases; 1/9 of the avg-pool folded into
    # the pool-branch 1x1 weights; fuse the three plain 1x1 convs into one slab.
    w11, b11 = _fold_bn(params["c1_1"])
    w41, b41 = _fold_bn(params["c4_1"])
    w21, b21 = _fold_bn(params["c2_1"])
    w31, b31 = _fold_bn(params["c3_1"], pre_scale=1.0 / 9.0)
    w12, b12 = _fold_bn(params["c1_2"])
    w13, b13 = _fold_bn(params["c1_3"])
    w22, b22 = _fold_bn(params["c2_2"])

    w1x1 = jnp.concatenate([w11[0, 0], w41[0, 0], w21[0, 0]], axis=-1)  # (Cin,176)
    b1x1 = jnp.concatenate([b11, b41, b21]).reshape(1, -1)
    wpool = w31[0, 0]                                       # (Cin, P), has 1/9
    bpool = b31.reshape(1, -1)
    # kw taps packed along the contraction axis: (K, K, Ci, Co) -> (K, K*Ci, Co)
    w12p = w12.reshape(3, 3 * C1_1, C1_2)
    w13p = w13.reshape(3, 3 * C1_2, C1_3)
    w22p = w22.reshape(5, 5 * C2_1, C2_2)

    # Only the small Cin-wide input is padded outside the kernel (pool halo +
    # branch-free interior slicing); all intermediate padding is in VMEM.
    xpad = jnp.pad(x_nhwc.astype(jnp.bfloat16), ((0, 0), (1, 1), (1, 1), (0, 0)))

    WS = LPAD + W + 4
    return pl.pallas_call(
        _make_kernel(H, W, Cin, P),
        out_shape=jax.ShapeDtypeStruct((N, H, W, Ctot), x_nhwc.dtype),
        grid=(N,),
        in_specs=[
            pl.BlockSpec((1, H + 2, W + 2, Cin), lambda n: (n, 0, 0, 0)),
            pl.BlockSpec((Cin, C1X1), lambda n: (0, 0)),
            pl.BlockSpec((1, C1X1), lambda n: (0, 0)),
            pl.BlockSpec((Cin, P), lambda n: (0, 0)),
            pl.BlockSpec((1, P), lambda n: (0, 0)),
            pl.BlockSpec((3, 3 * C1_1, C1_2), lambda n: (0, 0, 0)),
            pl.BlockSpec((1, C1_2), lambda n: (0, 0)),
            pl.BlockSpec((3, 3 * C1_2, C1_3), lambda n: (0, 0, 0)),
            pl.BlockSpec((1, C1_3), lambda n: (0, 0)),
            pl.BlockSpec((5, 5 * C2_1, C2_2), lambda n: (0, 0, 0)),
            pl.BlockSpec((1, C2_2), lambda n: (0, 0)),
        ],
        out_specs=pl.BlockSpec((1, H, W, Ctot), lambda n: (n, 0, 0, 0)),
        scratch_shapes=[
            pltpu.VMEM((H + 2, WS, C1_1), jnp.bfloat16),   # padded conv1_1 out
            pltpu.VMEM((H + 2, WS, C1_2), jnp.bfloat16),   # padded conv1_2 out
            pltpu.VMEM((H + 4, WS, C2_1), jnp.bfloat16),   # padded conv2_1 out
        ],
        compiler_params=pltpu.CompilerParams(
            dimension_semantics=("parallel",)),
    )(xpad, w1x1, b1x1, wpool, bpool,
      w12p, b12.reshape(1, -1), w13p, b13.reshape(1, -1),
      w22p, b22.reshape(1, -1))


def inception_a_forward(x_nchw, params):
    """PyTorch-compatible NCHW interface (transposes live outside the kernel)."""
    x = jnp.transpose(x_nchw, (0, 2, 3, 1))                 # NCHW -> NHWC
    out = inception_a_forward_nhwc(x, params)
    return jnp.transpose(out, (0, 3, 1, 2))                 # NHWC -> NCHW


# --------------------------------------------------------------------------
# Parameter construction (deterministic, synthetic)
# --------------------------------------------------------------------------
def _conv_bn_params(key, K, cin, cout):
    kw_, kg, kb, km, kv = jax.random.split(key, 5)
    w = 0.1 * jax.random.normal(kw_, (K, K, cin, cout), jnp.float32)
    gamma = 1.0 + 0.1 * jax.random.normal(kg, (cout,), jnp.float32)
    beta = 0.1 * jax.random.normal(kb, (cout,), jnp.float32)
    mean = 0.1 * jax.random.normal(km, (cout,), jnp.float32)
    var = jnp.abs(1.0 + 0.1 * jax.random.normal(kv, (cout,), jnp.float32))
    return dict(w=w, gamma=gamma, beta=beta, mean=mean, var=var)


def init_inception_a(key, input_size, pool_features):
    keys = jax.random.split(key, 7)
    return {
        "c1_1": _conv_bn_params(keys[0], 1, input_size, C1_1),
        "c1_2": _conv_bn_params(keys[1], 3, C1_1, C1_2),
        "c1_3": _conv_bn_params(keys[2], 3, C1_2, C1_3),
        "c2_1": _conv_bn_params(keys[3], 1, input_size, C2_1),
        "c2_2": _conv_bn_params(keys[4], 5, C2_1, C2_2),
        "c3_1": _conv_bn_params(keys[5], 1, input_size, pool_features),
        "c4_1": _conv_bn_params(keys[6], 1, input_size, C4_1),
    }


# --------------------------------------------------------------------------
# Pure-JAX reference with matching bf16/f32 numerics (verification only)
# --------------------------------------------------------------------------
def _ref_conv(h, p, K):
    w, b = _fold_bn(p)
    pad = K // 2
    y = lax.conv_general_dilated(
        h.astype(jnp.bfloat16), w, (1, 1), [(pad, pad), (pad, pad)],
        dimension_numbers=("NHWC", "HWIO", "NHWC"),
        preferred_element_type=jnp.float32)
    return jnp.maximum(y + b, 0.0)


def _ref_forward(x_nchw, params):
    x = jnp.transpose(x_nchw, (0, 2, 3, 1)).astype(jnp.bfloat16)
    o1 = _ref_conv(_ref_conv(_ref_conv(x, params["c1_1"], 1),
                             params["c1_2"], 3), params["c1_3"], 3)
    o2 = _ref_conv(_ref_conv(x, params["c2_1"], 1), params["c2_2"], 5)
    xpad = jnp.pad(x.astype(jnp.float32), ((0, 0), (1, 1), (1, 1), (0, 0)))
    pooled = lax.reduce_window(xpad, 0.0, lax.add, (1, 3, 3, 1),
                               (1, 1, 1, 1), "VALID") / 9.0
    o3 = _ref_conv(pooled, params["c3_1"], 1)
    o4 = _ref_conv(x, params["c4_1"], 1)
    out = jnp.concatenate([o1, o2, o3, o4], axis=-1)
    return jnp.transpose(out, (0, 3, 1, 2)).astype(x_nchw.dtype)


if __name__ == "__main__":
    key = jax.random.PRNGKey(0)
    k_in, k_par = jax.random.split(key)

    N, C, H, W = 2, 4, 16, 16
    pool_features = 8
    x = jax.random.normal(k_in, (N, C, H, W), jnp.float32)
    params = init_inception_a(k_par, input_size=C, pool_features=pool_features)

    out = jax.jit(inception_a_forward)(x, params)
    out = jax.block_until_ready(out)
    assert out.shape == (N, 96 + 64 + pool_features + 64, H, W), out.shape

    ref = _ref_forward(x, params)
    err = float(jnp.max(jnp.abs(out - ref)))
    assert err < 2e-2, err

    print("KERNEL_OK")
</pallas_src>

<mosaic_0001>
module attributes {stable_mosaic.version = 11 : i64} {
  func.func @kernel(%arg0: i32, %arg1: memref<1x18x18x4xbf16, #tpu.memory_space<vmem>>, %arg2: memref<4x176xbf16, #tpu.memory_space<vmem>>, %arg3: memref<1x176xf32, #tpu.memory_space<vmem>>, %arg4: memref<4x8xbf16, #tpu.memory_space<vmem>>, %arg5: memref<1x8xf32, #tpu.memory_space<vmem>>, %arg6: memref<3x192x96xbf16, #tpu.memory_space<vmem>>, %arg7: memref<1x96xf32, #tpu.memory_space<vmem>>, %arg8: memref<3x288x96xbf16, #tpu.memory_space<vmem>>, %arg9: memref<1x96xf32, #tpu.memory_space<vmem>>, %arg10: memref<5x240x64xbf16, #tpu.memory_space<vmem>>, %arg11: memref<1x64xf32, #tpu.memory_space<vmem>>, %arg12: memref<1x16x16x232xf32, #tpu.memory_space<vmem>>, %arg13: memref<18x36x64xbf16, #tpu.memory_space<vmem>>, %arg14: memref<18x36x96xbf16, #tpu.memory_space<vmem>>, %arg15: memref<20x36x48xbf16, #tpu.memory_space<vmem>>) attributes {dimension_semantics = [#tpu.dimension_semantics<parallel>], iteration_bounds = array<i64: 2>, scalar_prefetch = 0 : i64, scratch_operands = 3 : i64, tpu.core_type = #tpu.core_type<tc>, window_params = [{transform_indices = @transform_0, window_bounds = array<i64: 1, 18, 18, 4>}, {pipeline_mode = #tpu.pipeline_mode<synchronous>, transform_indices = @transform_1, window_bounds = array<i64: 4, 176>}, {pipeline_mode = #tpu.pipeline_mode<synchronous>, transform_indices = @transform_2, window_bounds = array<i64: 1, 176>}, {pipeline_mode = #tpu.pipeline_mode<synchronous>, transform_indices = @transform_3, window_bounds = array<i64: 4, 8>}, {pipeline_mode = #tpu.pipeline_mode<synchronous>, transform_indices = @transform_4, window_bounds = array<i64: 1, 8>}, {pipeline_mode = #tpu.pipeline_mode<synchronous>, transform_indices = @transform_5, window_bounds = array<i64: 3, 192, 96>}, {pipeline_mode = #tpu.pipeline_mode<synchronous>, transform_indices = @transform_6, window_bounds = array<i64: 1, 96>}, {pipeline_mode = #tpu.pipeline_mode<synchronous>, transform_indices = @transform_7, window_bounds = array<i64: 3, 288, 96>}, {pipeline_mode = #tpu.pipeline_mode<synchronous>, transform_indices = @transform_8, window_bounds = array<i64: 1, 96>}, {pipeline_mode = #tpu.pipeline_mode<synchronous>, transform_indices = @transform_9, window_bounds = array<i64: 5, 240, 64>}, {pipeline_mode = #tpu.pipeline_mode<synchronous>, transform_indices = @transform_10, window_bounds = array<i64: 1, 64>}, {transform_indices = @transform_11, window_bounds = array<i64: 1, 16, 16, 232>}]} {
    %c0 = arith.constant 0 : index
    %c0_0 = arith.constant 0 : index
    %c0_1 = arith.constant 0 : index
    %c0_2 = arith.constant 0 : index
    %0 = vector.load %arg1[%c0, %c0_0, %c0_1, %c0_2] : memref<1x18x18x4xbf16, #tpu.memory_space<vmem>>, vector<1x18x18x4xbf16>
    %1 = vector.shape_cast %0 : vector<1x18x18x4xbf16> to vector<18x18x4xbf16>
    %2 = vector.extract_strided_slice %1 {offsets = [1, 1, 0], sizes = [16, 16, 4], strides = [1, 1, 1]} : vector<18x18x4xbf16> to vector<16x16x4xbf16>
    %3 = vector.shape_cast %2 : vector<16x16x4xbf16> to vector<256x4xbf16>
    %c0_3 = arith.constant 0 : index
    %c0_4 = arith.constant 0 : index
    %4 = vector.load %arg2[%c0_3, %c0_4] : memref<4x176xbf16, #tpu.memory_space<vmem>>, vector<4x176xbf16>
    %cst = arith.constant dense<0.000000e+00> : vector<256x176xf32>
    %5 = tpu.matmul %3, %4, %cst {dimension_numbers = #tpu.dot_dimension_numbers<[1], [0], [0], [1], [0, 0, 1, 1], [], []>} : vector<256x4xbf16>, vector<4x176xbf16>, vector<256x176xf32> -> vector<256x176xf32>
    %c0_5 = arith.constant 0 : index
    %c0_6 = arith.constant 0 : index
    %6 = vector.load %arg3[%c0_5, %c0_6] : memref<1x176xf32, #tpu.memory_space<vmem>>, vector<1x176xf32>
    %7 = vector.broadcast %6 : vector<1x176xf32> to vector<256x176xf32>
    %8 = arith.addf %5, %7 : vector<256x176xf32>
    %cst_7 = arith.constant 0.000000e+00 : f32
    %9 = vector.broadcast %cst_7 : f32 to vector<256x176xf32>
    %10 = arith.maximumf %8, %9 : vector<256x176xf32>
    %11 = vector.extract_strided_slice %10 {offsets = [0, 0], sizes = [256, 64], strides = [1, 1]} : vector<256x176xf32> to vector<256x64xf32>
    %12 = vector.shape_cast %11 : vector<256x64xf32> to vector<16x16x64xf32>
    %13 = arith.truncf %12 : vector<16x16x64xf32> to vector<16x16x64xbf16>
    %14 = vector.extract_strided_slice %10 {offsets = [0, 64], sizes = [256, 64], strides = [1, 1]} : vector<256x176xf32> to vector<256x64xf32>
    %15 = vector.extract_strided_slice %10 {offsets = [0, 128], sizes = [256, 48], strides = [1, 1]} : vector<256x176xf32> to vector<256x48xf32>
    %16 = vector.shape_cast %15 : vector<256x48xf32> to vector<16x16x48xf32>
    %17 = arith.truncf %16 : vector<16x16x48xf32> to vector<16x16x48xbf16>
    %18 = arith.extf %1 : vector<18x18x4xbf16> to vector<18x18x4xf32>
    %19 = vector.extract_strided_slice %18 {offsets = [0, 0, 0], sizes = [18, 16, 4], strides = [1, 1, 1]} : vector<18x18x4xf32> to vector<18x16x4xf32>
    %20 = vector.extract_strided_slice %18 {offsets = [0, 1, 0], sizes = [18, 16, 4], strides = [1, 1, 1]} : vector<18x18x4xf32> to vector<18x16x4xf32>
    %21 = arith.addf %19, %20 : vector<18x16x4xf32>
    %22 = vector.extract_strided_slice %18 {offsets = [0, 2, 0], sizes = [18, 16, 4], strides = [1, 1, 1]} : vector<18x18x4xf32> to vector<18x16x4xf32>
    %23 = arith.addf %21, %22 : vector<18x16x4xf32>
    %24 = vector.extract_strided_slice %23 {offsets = [0, 0, 0], sizes = [16, 16, 4], strides = [1, 1, 1]} : vector<18x16x4xf32> to vector<16x16x4xf32>
    %25 = vector.extract_strided_slice %23 {offsets = [1, 0, 0], sizes = [16, 16, 4], strides = [1, 1, 1]} : vector<18x16x4xf32> to vector<16x16x4xf32>
    %26 = arith.addf %24, %25 : vector<16x16x4xf32>
    %27 = vector.extract_strided_slice %23 {offsets = [2, 0, 0], sizes = [16, 16, 4], strides = [1, 1, 1]} : vector<18x16x4xf32> to vector<16x16x4xf32>
    %28 = arith.addf %26, %27 : vector<16x16x4xf32>
    %29 = arith.truncf %28 : vector<16x16x4xf32> to vector<16x16x4xbf16>
    %30 = vector.shape_cast %29 : vector<16x16x4xbf16> to vector<256x4xbf16>
    %c0_8 = arith.constant 0 : index
    %c0_9 = arith.constant 0 : index
    %31 = vector.load %arg4[%c0_8, %c0_9] : memref<4x8xbf16, #tpu.memory_space<vmem>>, vector<4x8xbf16>
    %cst_10 = arith.constant dense<0.000000e+00> : vector<256x8xf32>
    %32 = tpu.matmul %30, %31, %cst_10 {dimension_numbers = #tpu.dot_dimension_numbers<[1], [0], [0], [1], [0, 0, 1, 1], [], []>} : vector<256x4xbf16>, vector<4x8xbf16>, vector<256x8xf32> -> vector<256x8xf32>
    %c0_11 = arith.constant 0 : index
    %c0_12 = arith.constant 0 : index
    %33 = vector.load %arg5[%c0_11, %c0_12] : memref<1x8xf32, #tpu.memory_space<vmem>>, vector<1x8xf32>
    %34 = vector.broadcast %33 : vector<1x8xf32> to vector<256x8xf32>
    %35 = arith.addf %32, %34 : vector<256x8xf32>
    %cst_13 = arith.constant 0.000000e+00 : f32
    %36 = vector.broadcast %cst_13 : f32 to vector<256x8xf32>
    %37 = arith.maximumf %35, %36 : vector<256x8xf32>
    %cst_14 = arith.constant 0.000000e+00 : bf16
    %38 = vector.broadcast %cst_14 : bf16 to vector<18x36x64xbf16>
    %c0_15 = arith.constant 0 : index
    %c0_16 = arith.constant 0 : index
    %c0_17 = arith.constant 0 : index
    %39 = vector.load %arg13[%c0_15, %c0_16, %c0_17] : memref<18x36x64xbf16, #tpu.memory_space<vmem>>, vector<18x36x64xbf16>
    tpu.vector_store %arg13[%c0_15, %c0_16, %c0_17], %38 {strides = array<i32>} : memref<18x36x64xbf16, #tpu.memory_space<vmem>>, vector<18x36x64xbf16>,
    %c1 = arith.constant 1 : index
    %c16 = arith.constant 16 : index
    %c0_18 = arith.constant 0 : index
    %40 = vector.load %arg13[%c1, %c16, %c0_18] : memref<18x36x64xbf16, #tpu.memory_space<vmem>>, vector<16x16x64xbf16>
    tpu.vector_store %arg13[%c1, %c16, %c0_18], %13 {strides = array<i32>} : memref<18x36x64xbf16, #tpu.memory_space<vmem>>, vector<16x16x64xbf16>,
    %c0_19 = arith.constant 0 : index
    %c0_20 = arith.constant 0 : index
    %c0_21 = arith.constant 0 : index
    %41 = vector.load %arg13[%c0_19, %c0_20, %c0_21] : memref<18x36x64xbf16, #tpu.memory_space<vmem>>, vector<18x36x64xbf16>
    %42 = vector.extract_strided_slice %41 {offsets = [0, 15, 0], sizes = [18, 16, 64], strides = [1, 1, 1]} : vector<18x36x64xbf16> to vector<18x16x64xbf16>
    %43 = vector.extract_strided_slice %41 {offsets = [0, 16, 0], sizes = [18, 16, 64], strides = [1, 1, 1]} : vector<18x36x64xbf16> to vector<18x16x64xbf16>
    %44 = vector.extract_strided_slice %41 {offsets = [0, 17, 0], sizes = [18, 16, 64], strides = [1, 1, 1]} : vector<18x36x64xbf16> to vector<18x16x64xbf16>
    %45 = tpu.concatenate %42, %43, %44 in 2 : vector<18x16x64xbf16>, vector<18x16x64xbf16>, vector<18x16x64xbf16> -> vector<18x16x192xbf16>
    %cst_22 = arith.constant 0.000000e+00 : f32
    %46 = vector.broadcast %cst_22 : f32 to vector<256x96xf32>
    %47 = vector.extract_strided_slice %45 {offsets = [0, 0, 0], sizes = [16, 16, 192], strides = [1, 1, 1]} : vector<18x16x192xbf16> to vector<16x16x192xbf16>
    %48 = vector.shape_cast %47 : vector<16x16x192xbf16> to vector<256x192xbf16>
    %c0_23 = arith.constant 0 : index
    %c0_24 = arith.constant 0 : index
    %c0_25 = arith.constant 0 : index
    %49 = vector.load %arg6[%c0_23, %c0_24, %c0_25] : memref<3x192x96xbf16, #tpu.memory_space<vmem>>, vector<1x192x96xbf16>
    %50 = vector.shape_cast %49 : vector<1x192x96xbf16> to vector<192x96xbf16>
    %cst_26 = arith.constant dense<0.000000e+00> : vector<256x96xf32>
    %51 = tpu.matmul %48, %50, %cst_26 {dimension_numbers = #tpu.dot_dimension_numbers<[1], [0], [0], [1], [0, 0, 1, 1], [], []>} : vector<256x192xbf16>, vector<192x96xbf16>, vector<256x96xf32> -> vector<256x96xf32>
    %52 = arith.addf %46, %51 : vector<256x96xf32>
    %53 = vector.extract_strided_slice %45 {offsets = [1, 0, 0], sizes = [16, 16, 192], strides = [1, 1, 1]} : vector<18x16x192xbf16> to vector<16x16x192xbf16>
    %54 = vector.shape_cast %53 : vector<16x16x192xbf16> to vector<256x192xbf16>
    %c1_27 = arith.constant 1 : index
    %c0_28 = arith.constant 0 : index
    %c0_29 = arith.constant 0 : index
    %55 = vector.load %arg6[%c1_27, %c0_28, %c0_29] : memref<3x192x96xbf16, #tpu.memory_space<vmem>>, vector<1x192x96xbf16>
    %56 = vector.shape_cast %55 : vector<1x192x96xbf16> to vector<192x96xbf16>
    %cst_30 = arith.constant dense<0.000000e+00> : vector<256x96xf32>
    %57 = tpu.matmul %54, %56, %cst_30 {dimension_numbers = #tpu.dot_dimension_numbers<[1], [0], [0], [1], [0, 0, 1, 1], [], []>} : vector<256x192xbf16>, vector<192x96xbf16>, vector<256x96xf32> -> vector<256x96xf32>
    %58 = arith.addf %52, %57 : vector<256x96xf32>
    %59 = vector.extract_strided_slice %45 {offsets = [2, 0, 0], sizes = [16, 16, 192], strides = [1, 1, 1]} : vector<18x16x192xbf16> to vector<16x16x192xbf16>
    %60 = vector.shape_cast %59 : vector<16x16x192xbf16> to vector<256x192xbf16>
    %c2 = arith.constant 2 : index
    %c0_31 = arith.constant 0 : index
    %c0_32 = arith.constant 0 : index
    %61 = vector.load %arg6[%c2, %c0_31, %c0_32] : memref<3x192x96xbf16, #tpu.memory_space<vmem>>, vector<1x192x96xbf16>
    %62 = vector.shape_cast %61 : vector<1x192x96xbf16> to vector<192x96xbf16>
    %cst_33 = arith.constant dense<0.000000e+00> : vector<256x96xf32>
    %63 = tpu.matmul %60, %62, %cst_33 {dimension_numbers = #tpu.dot_dimension_numbers<[1], [0], [0], [1], [0, 0, 1, 1], [], []>} : vector<256x192xbf16>, vector<192x96xbf16>, vector<256x96xf32> -> vector<256x96xf32>
    %64 = arith.addf %58, %63 : vector<256x96xf32>
    %c0_34 = arith.constant 0 : index
    %c0_35 = arith.constant 0 : index
    %65 = vector.load %arg7[%c0_34, %c0_35] : memref<1x96xf32, #tpu.memory_space<vmem>>, vector<1x96xf32>
    %66 = vector.broadcast %65 : vector<1x96xf32> to vector<256x96xf32>
    %67 = arith.addf %64, %66 : vector<256x96xf32>
    %cst_36 = arith.constant 0.000000e+00 : f32
    %68 = vector.broadcast %cst_36 : f32 to vector<256x96xf32>
    %69 = arith.maximumf %67, %68 : vector<256x96xf32>
    %cst_37 = arith.constant 0.000000e+00 : bf16
    %70 = vector.broadcast %cst_37 : bf16 to vector<18x36x96xbf16>
    %c0_38 = arith.constant 0 : index
    %c0_39 = arith.constant 0 : index
    %c0_40 = arith.constant 0 : index
    %71 = vector.load %arg14[%c0_38, %c0_39, %c0_40] : memref<18x36x96xbf16, #tpu.memory_space<vmem>>, vector<18x36x96xbf16>
    tpu.vector_store %arg14[%c0_38, %c0_39, %c0_40], %70 {strides = array<i32>} : memref<18x36x96xbf16, #tpu.memory_space<vmem>>, vector<18x36x96xbf16>,
    %72 = vector.shape_cast %69 : vector<256x96xf32> to vector<16x16x96xf32>
    %73 = arith.truncf %72 : vector<16x16x96xf32> to vector<16x16x96xbf16>
    %c1_41 = arith.constant 1 : index
    %c16_42 = arith.constant 16 : index
    %c0_43 = arith.constant 0 : index
    %74 = vector.load %arg14[%c1_41, %c16_42, %c0_43] : memref<18x36x96xbf16, #tpu.memory_space<vmem>>, vector<16x16x96xbf16>
    tpu.vector_store %arg14[%c1_41, %c16_42, %c0_43], %73 {strides = array<i32>} : memref<18x36x96xbf16, #tpu.memory_space<vmem>>, vector<16x16x96xbf16>,
    %c0_44 = arith.constant 0 : index
    %c0_45 = arith.constant 0 : index
    %c0_46 = arith.constant 0 : index
    %75 = vector.load %arg14[%c0_44, %c0_45, %c0_46] : memref<18x36x96xbf16, #tpu.memory_space<vmem>>, vector<18x36x96xbf16>
    %76 = vector.extract_strided_slice %75 {offsets = [0, 15, 0], sizes = [18, 16, 96], strides = [1, 1, 1]} : vector<18x36x96xbf16> to vector<18x16x96xbf16>
    %77 = vector.extract_strided_slice %75 {offsets = [0, 16, 0], sizes = [18, 16, 96], strides = [1, 1, 1]} : vector<18x36x96xbf16> to vector<18x16x96xbf16>
    %78 = vector.extract_strided_slice %75 {offsets = [0, 17, 0], sizes = [18, 16, 96], strides = [1, 1, 1]} : vector<18x36x96xbf16> to vector<18x16x96xbf16>
    %79 = tpu.concatenate %76, %77, %78 in 2 : vector<18x16x96xbf16>, vector<18x16x96xbf16>, vector<18x16x96xbf16> -> vector<18x16x288xbf16>
    %cst_47 = arith.constant 0.000000e+00 : f32
    %80 = vector.broadcast %cst_47 : f32 to vector<256x96xf32>
    %81 = vector.extract_strided_slice %79 {offsets = [0, 0, 0], sizes = [16, 16, 288], strides = [1, 1, 1]} : vector<18x16x288xbf16> to vector<16x16x288xbf16>
    %82 = vector.shape_cast %81 : vector<16x16x288xbf16> to vector<256x288xbf16>
    %c0_48 = arith.constant 0 : index
    %c0_49 = arith.constant 0 : index
    %c0_50 = arith.constant 0 : index
    %83 = vector.load %arg8[%c0_48, %c0_49, %c0_50] : memref<3x288x96xbf16, #tpu.memory_space<vmem>>, vector<1x288x96xbf16>
    %84 = vector.shape_cast %83 : vector<1x288x96xbf16> to vector<288x96xbf16>
    %cst_51 = arith.constant dense<0.000000e+00> : vector<256x96xf32>
    %85 = tpu.matmul %82, %84, %cst_51 {dimension_numbers = #tpu.dot_dimension_numbers<[1], [0], [0], [1], [0, 0, 1, 1], [], []>} : vector<256x288xbf16>, vector<288x96xbf16>, vector<256x96xf32> -> vector<256x96xf32>
    %86 = arith.addf %80, %85 : vector<256x96xf32>
    %87 = vector.extract_strided_slice %79 {offsets = [1, 0, 0], sizes = [16, 16, 288], strides = [1, 1, 1]} : vector<18x16x288xbf16> to vector<16x16x288xbf16>
    %88 = vector.shape_cast %87 : vector<16x16x288xbf16> to vector<256x288xbf16>
    %c1_52 = arith.constant 1 : index
    %c0_53 = arith.constant 0 : index
    %c0_54 = arith.constant 0 : index
    %89 = vector.load %arg8[%c1_52, %c0_53, %c0_54] : memref<3x288x96xbf16, #tpu.memory_space<vmem>>, vector<1x288x96xbf16>
    %90 = vector.shape_cast %89 : vector<1x288x96xbf16> to vector<288x96xbf16>
    %cst_55 = arith.constant dense<0.000000e+00> : vector<256x96xf32>
    %91 = tpu.matmul %88, %90, %cst_55 {dimension_numbers = #tpu.dot_dimension_numbers<[1], [0], [0], [1], [0, 0, 1, 1], [], []>} : vector<256x288xbf16>, vector<288x96xbf16>, vector<256x96xf32> -> vector<256x96xf32>
    %92 = arith.addf %86, %91 : vector<256x96xf32>
    %93 = vector.extract_strided_slice %79 {offsets = [2, 0, 0], sizes = [16, 16, 288], strides = [1, 1, 1]} : vector<18x16x288xbf16> to vector<16x16x288xbf16>
    %94 = vector.shape_cast %93 : vector<16x16x288xbf16> to vector<256x288xbf16>
    %c2_56 = arith.constant 2 : index
    %c0_57 = arith.constant 0 : index
    %c0_58 = arith.constant 0 : index
    %95 = vector.load %arg8[%c2_56, %c0_57, %c0_58] : memref<3x288x96xbf16, #tpu.memory_space<vmem>>, vector<1x288x96xbf16>
    %96 = vector.shape_cast %95 : vector<1x288x96xbf16> to vector<288x96xbf16>
    %cst_59 = arith.constant dense<0.000000e+00> : vector<256x96xf32>
    %97 = tpu.matmul %94, %96, %cst_59 {dimension_numbers = #tpu.dot_dimension_numbers<[1], [0], [0], [1], [0, 0, 1, 1], [], []>} : vector<256x288xbf16>, vector<288x96xbf16>, vector<256x96xf32> -> vector<256x96xf32>
    %98 = arith.addf %92, %97 : vector<256x96xf32>
    %c0_60 = arith.constant 0 : index
    %c0_61 = arith.constant 0 : index
    %99 = vector.load %arg9[%c0_60, %c0_61] : memref<1x96xf32, #tpu.memory_space<vmem>>, vector<1x96xf32>
    %100 = vector.broadcast %99 : vector<1x96xf32> to vector<256x96xf32>
    %101 = arith.addf %98, %100 : vector<256x96xf32>
    %cst_62 = arith.constant 0.000000e+00 : f32
    %102 = vector.broadcast %cst_62 : f32 to vector<256x96xf32>
    %103 = arith.maximumf %101, %102 : vector<256x96xf32>
    %cst_63 = arith.constant 0.000000e+00 : bf16
    %104 = vector.broadcast %cst_63 : bf16 to vector<20x36x48xbf16>
    %c0_64 = arith.constant 0 : index
    %c0_65 = arith.constant 0 : index
    %c0_66 = arith.constant 0 : index
    %105 = vector.load %arg15[%c0_64, %c0_65, %c0_66] : memref<20x36x48xbf16, #tpu.memory_space<vmem>>, vector<20x36x48xbf16>
    tpu.vector_store %arg15[%c0_64, %c0_65, %c0_66], %104 {strides = array<i32>} : memref<20x36x48xbf16, #tpu.memory_space<vmem>>, vector<20x36x48xbf16>,
    %c2_67 = arith.constant 2 : index
    %c16_68 = arith.constant 16 : index
    %c0_69 = arith.constant 0 : index
    %106 = vector.load %arg15[%c2_67, %c16_68, %c0_69] : memref<20x36x48xbf16, #tpu.memory_space<vmem>>, vector<16x16x48xbf16>
    tpu.vector_store %arg15[%c2_67, %c16_68, %c0_69], %17 {strides = array<i32>} : memref<20x36x48xbf16, #tpu.memory_space<vmem>>, vector<16x16x48xbf16>,
    %c0_70 = arith.constant 0 : index
    %c0_71 = arith.constant 0 : index
    %c0_72 = arith.constant 0 : index
    %107 = vector.load %arg15[%c0_70, %c0_71, %c0_72] : memref<20x36x48xbf16, #tpu.memory_space<vmem>>, vector<20x36x48xbf16>
    %108 = vector.extract_strided_slice %107 {offsets = [0, 14, 0], sizes = [20, 16, 48], strides = [1, 1, 1]} : vector<20x36x48xbf16> to vector<20x16x48xbf16>
    %109 = vector.extract_strided_slice %107 {offsets = [0, 15, 0], sizes = [20, 16, 48], strides = [1, 1, 1]} : vector<20x36x48xbf16> to vector<20x16x48xbf16>
    %110 = vector.extract_strided_slice %107 {offsets = [0, 16, 0], sizes = [20, 16, 48], strides = [1, 1, 1]} : vector<20x36x48xbf16> to vector<20x16x48xbf16>
    %111 = vector.extract_strided_slice %107 {offsets = [0, 17, 0], sizes = [20, 16, 48], strides = [1, 1, 1]} : vector<20x36x48xbf16> to vector<20x16x48xbf16>
    %112 = vector.extract_strided_slice %107 {offsets = [0, 18, 0], sizes = [20, 16, 48], strides = [1, 1, 1]} : vector<20x36x48xbf16> to vector<20x16x48xbf16>
    %113 = tpu.concatenate %108, %109, %110, %111, %112 in 2 : vector<20x16x48xbf16>, vector<20x16x48xbf16>, vector<20x16x48xbf16>, vector<20x16x48xbf16>, vector<20x16x48xbf16> -> vector<20x16x240xbf16>
    %cst_73 = arith.constant 0.000000e+00 : f32
    %114 = vector.broadcast %cst_73 : f32 to vector<256x64xf32>
    %115 = vector.extract_strided_slice %113 {offsets = [0, 0, 0], sizes = [16, 16, 240], strides = [1, 1, 1]} : vector<20x16x240xbf16> to vector<16x16x240xbf16>
    %116 = vector.shape_cast %115 : vector<16x16x240xbf16> to vector<256x240xbf16>
    %c0_74 = arith.constant 0 : index
    %c0_75 = arith.constant 0 : index
    %c0_76 = arith.constant 0 : index
    %117 = vector.load %arg10[%c0_74, %c0_75, %c0_76] : memref<5x240x64xbf16, #tpu.memory_space<vmem>>, vector<1x240x64xbf16>
    %118 = vector.shape_cast %117 : vector<1x240x64xbf16> to vector<240x64xbf16>
    %cst_77 = arith.constant dense<0.000000e+00> : vector<256x64xf32>
    %119 = tpu.matmul %116, %118, %cst_77 {dimension_numbers = #tpu.dot_dimension_numbers<[1], [0], [0], [1], [0, 0, 1, 1], [], []>} : vector<256x240xbf16>, vector<240x64xbf16>, vector<256x64xf32> -> vector<256x64xf32>
    %120 = arith.addf %114, %119 : vector<256x64xf32>
    %121 = vector.extract_strided_slice %113 {offsets = [1, 0, 0], sizes = [16, 16, 240], strides = [1, 1, 1]} : vector<20x16x240xbf16> to vector<16x16x240xbf16>
    %122 = vector.shape_cast %121 : vector<16x16x240xbf16> to vector<256x240xbf16>
    %c1_78 = arith.constant 1 : index
    %c0_79 = arith.constant 0 : index
    %c0_80 = arith.constant 0 : index
    %123 = vector.load %arg10[%c1_78, %c0_79, %c0_80] : memref<5x240x64xbf16, #tpu.memory_space<vmem>>, vector<1x240x64xbf16>
    %124 = vector.shape_cast %123 : vector<1x240x64xbf16> to vector<240x64xbf16>
    %cst_81 = arith.constant dense<0.000000e+00> : vector<256x64xf32>
    %125 = tpu.matmul %122, %124, %cst_81 {dimension_numbers = #tpu.dot_dimension_numbers<[1], [0], [0], [1], [0, 0, 1, 1], [], []>} : vector<256x240xbf16>, vector<240x64xbf16>, vector<256x64xf32> -> vector<256x64xf32>
    %126 = arith.addf %120, %125 : vector<256x64xf32>
    %127 = vector.extract_strided_slice %113 {offsets = [2, 0, 0], sizes = [16, 16, 240], strides = [1, 1, 1]} : vector<20x16x240xbf16> to vector<16x16x240xbf16>
    %128 = vector.shape_cast %127 : vector<16x16x240xbf16> to vector<256x240xbf16>
    %c2_82 = arith.constant 2 : index
    %c0_83 = arith.constant 0 : index
    %c0_84 = arith.constant 0 : index
    %129 = vector.load %arg10[%c2_82, %c0_83, %c0_84] : memref<5x240x64xbf16, #tpu.memory_space<vmem>>, vector<1x240x64xbf16>
    %130 = vector.shape_cast %129 : vector<1x240x64xbf16> to vector<240x64xbf16>
    %cst_85 = arith.constant dense<0.000000e+00> : vector<256x64xf32>
    %131 = tpu.matmul %128, %130, %cst_85 {dimension_numbers = #tpu.dot_dimension_numbers<[1], [0], [0], [1], [0, 0, 1, 1], [], []>} : vector<256x240xbf16>, vector<240x64xbf16>, vector<256x64xf32> -> vector<256x64xf32>
    %132 = arith.addf %126, %131 : vector<256x64xf32>
    %133 = vector.extract_strided_slice %113 {offsets = [3, 0, 0], sizes = [16, 16, 240], strides = [1, 1, 1]} : vector<20x16x240xbf16> to vector<16x16x240xbf16>
    %134 = vector.shape_cast %133 : vector<16x16x240xbf16> to vector<256x240xbf16>
    %c3 = arith.constant 3 : index
    %c0_86 = arith.constant 0 : index
    %c0_87 = arith.constant 0 : index
    %135 = vector.load %arg10[%c3, %c0_86, %c0_87] : memref<5x240x64xbf16, #tpu.memory_space<vmem>>, vector<1x240x64xbf16>
    %136 = vector.shape_cast %135 : vector<1x240x64xbf16> to vector<240x64xbf16>
    %cst_88 = arith.constant dense<0.000000e+00> : vector<256x64xf32>
    %137 = tpu.matmul %134, %136, %cst_88 {dimension_numbers = #tpu.dot_dimension_numbers<[1], [0], [0], [1], [0, 0, 1, 1], [], []>} : vector<256x240xbf16>, vector<240x64xbf16>, vector<256x64xf32> -> vector<256x64xf32>
    %138 = arith.addf %132, %137 : vector<256x64xf32>
    %139 = vector.extract_strided_slice %113 {offsets = [4, 0, 0], sizes = [16, 16, 240], strides = [1, 1, 1]} : vector<20x16x240xbf16> to vector<16x16x240xbf16>
    %140 = vector.shape_cast %139 : vector<16x16x240xbf16> to vector<256x240xbf16>
    %c4 = arith.constant 4 : index
    %c0_89 = arith.constant 0 : index
    %c0_90 = arith.constant 0 : index
    %141 = vector.load %arg10[%c4, %c0_89, %c0_90] : memref<5x240x64xbf16, #tpu.memory_space<vmem>>, vector<1x240x64xbf16>
    %142 = vector.shape_cast %141 : vector<1x240x64xbf16> to vector<240x64xbf16>
    %cst_91 = arith.constant dense<0.000000e+00> : vector<256x64xf32>
    %143 = tpu.matmul %140, %142, %cst_91 {dimension_numbers = #tpu.dot_dimension_numbers<[1], [0], [0], [1], [0, 0, 1, 1], [], []>} : vector<256x240xbf16>, vector<240x64xbf16>, vector<256x64xf32> -> vector<256x64xf32>
    %144 = arith.addf %138, %143 : vector<256x64xf32>
    %c0_92 = arith.constant 0 : index
    %c0_93 = arith.constant 0 : index
    %145 = vector.load %arg11[%c0_92, %c0_93] : memref<1x64xf32, #tpu.memory_space<vmem>>, vector<1x64xf32>
    %146 = vector.broadcast %145 : vector<1x64xf32> to vector<256x64xf32>
    %147 = arith.addf %144, %146 : vector<256x64xf32>
    %cst_94 = arith.constant 0.000000e+00 : f32
    %148 = vector.broadcast %cst_94 : f32 to vector<256x64xf32>
    %149 = arith.maximumf %147, %148 : vector<256x64xf32>
    %150 = tpu.concatenate %103, %149, %37, %14 in 1 : vector<256x96xf32>, vector<256x64xf32>, vector<256x8xf32>, vector<256x64xf32> -> vector<256x232xf32>
    %151 = vector.shape_cast %150 : vector<256x232xf32> to vector<16x16x232xf32>
    %c0_95 = arith.constant 0 : index
    %c0_96 = arith.constant 0 : index
    %c0_97 = arith.constant 0 : index
    %c0_98 = arith.constant 0 : index
    %152 = vector.load %arg12[%c0_95, %c0_96, %c0_97, %c0_98] : memref<1x16x16x232xf32, #tpu.memory_space<vmem>>, vector<1x16x16x232xf32>
    %153 = vector.shape_cast %152 : vector<1x16x16x232xf32> to vector<16x16x232xf32>
    %154 = vector.shape_cast %151 : vector<16x16x232xf32> to vector<1x16x16x232xf32>
    tpu.vector_store %arg12[%c0_95, %c0_96, %c0_97, %c0_98], %154 {strides = array<i32>} : memref<1x16x16x232xf32, #tpu.memory_space<vmem>>, vector<1x16x16x232xf32>,
    return
  }
  func.func @transform_0(%arg0: i32) -> (i32, i32, i32, i32) {
    %c0_i32 = arith.constant 0 : i32
    %c0_i32_0 = arith.constant 0 : i32
    %c0_i32_1 = arith.constant 0 : i32
    %c0_i32_2 = arith.constant 0 : i32
    return %arg0, %c0_i32, %c0_i32_0, %c0_i32_1 : i32, i32, i32, i32
  }
  func.func @transform_1(%arg0: i32) -> (i32, i32) {
    %c0_i32 = arith.constant 0 : i32
    %c0_i32_0 = arith.constant 0 : i32
    %c0_i32_1 = arith.constant 0 : i32
    return %c0_i32, %c0_i32_0 : i32, i32
  }
  func.func @transform_2(%arg0: i32) -> (i32, i32) {
    %c0_i32 = arith.constant 0 : i32
    %c0_i32_0 = arith.constant 0 : i32
    %c0_i32_1 = arith.constant 0 : i32
    return %c0_i32, %c0_i32_0 : i32, i32
  }
  func.func @transform_3(%arg0: i32) -> (i32, i32) {
    %c0_i32 = arith.constant 0 : i32
    %c0_i32_0 = arith.constant 0 : i32
    %c0_i32_1 = arith.constant 0 : i32
    return %c0_i32, %c0_i32_0 : i32, i32
  }
  func.func @transform_4(%arg0: i32) -> (i32, i32) {
    %c0_i32 = arith.constant 0 : i32
    %c0_i32_0 = arith.constant 0 : i32
    %c0_i32_1 = arith.constant 0 : i32
    return %c0_i32, %c0_i32_0 : i32, i32
  }
  func.func @transform_5(%arg0: i32) -> (i32, i32, i32) {
    %c0_i32 = arith.constant 0 : i32
    %c0_i32_0 = arith.constant 0 : i32
    %c0_i32_1 = arith.constant 0 : i32
    %c0_i32_2 = arith.constant 0 : i32
    return %c0_i32, %c0_i32_0, %c0_i32_1 : i32, i32, i32
  }
  func.func @transform_6(%arg0: i32) -> (i32, i32) {
    %c0_i32 = arith.constant 0 : i32
    %c0_i32_0 = arith.constant 0 : i32
    %c0_i32_1 = arith.constant 0 : i32
    return %c0_i32, %c0_i32_0 : i32, i32
  }
  func.func @transform_7(%arg0: i32) -> (i32, i32, i32) {
    %c0_i32 = arith.constant 0 : i32
    %c0_i32_0 = arith.constant 0 : i32
    %c0_i32_1 = arith.constant 0 : i32
    %c0_i32_2 = arith.constant 0 : i32
    return %c0_i32, %c0_i32_0, %c0_i32_1 : i32, i32, i32
  }
  func.func @transform_8(%arg0: i32) -> (i32, i32) {
    %c0_i32 = arith.constant 0 : i32
    %c0_i32_0 = arith.constant 0 : i32
    %c0_i32_1 = arith.constant 0 : i32
    return %c0_i32, %c0_i32_0 : i32, i32
  }
  func.func @transform_9(%arg0: i32) -> (i32, i32, i32) {
    %c0_i32 = arith.constant 0 : i32
    %c0_i32_0 = arith.constant 0 : i32
    %c0_i32_1 = arith.constant 0 : i32
    %c0_i32_2 = arith.constant 0 : i32
    return %c0_i32, %c0_i32_0, %c0_i32_1 : i32, i32, i32
  }
  func.func @transform_10(%arg0: i32) -> (i32, i32) {
    %c0_i32 = arith.constant 0 : i32
    %c0_i32_0 = arith.constant 0 : i32
    %c0_i32_1 = arith.constant 0 : i32
    return %c0_i32, %c0_i32_0 : i32, i32
  }
  func.func @transform_11(%arg0: i32) -> (i32, i32, i32, i32) {
    %c0_i32 = arith.constant 0 : i32
    %c0_i32_0 = arith.constant 0 : i32
    %c0_i32_1 = arith.constant 0 : i32
    %c0_i32_2 = arith.constant 0 : i32
    return %arg0, %c0_i32, %c0_i32_0, %c0_i32_1 : i32, i32, i32, i32
  }
}

</mosaic_0001>

<llo_original>
// kernel: inception_a_forward.1
$region0: #{inception_a_forward.1}
  #allocation0 [shape = 'u32[]', space=smem, size = 0x4, offset = 0x4, fixed_abs, tag = 'smem constant byte address 0x4 - core index']
  #allocation1 [shape = 'u32[144,128]{1,0:T(1,128)}', space=vmem, size = 0x12000, scoped, tag = 'internal scratch']
  #allocation2 [shape = 'bf16[18,36,64]{2,1,0:T(8,128)(2,1)}', space=vmem, size = 0x2d000, scoped, tag = 'scratch operand']
  #allocation3 [shape = 'bf16[18,36,96]{2,1,0:T(8,128)(2,1)}', space=vmem, size = 0x2d000, scoped, tag = 'scratch operand']
  #allocation4 [shape = 'bf16[20,36,48]{2,1,0:T(8,128)(2,1)}', space=vmem, size = 0x32000, scoped, tag = 'scratch operand']
  %s0 = inlined_call_operand.vmem [shape: bf16[2,18,18,4], index: 0, kind: input, shape index: {}]
  %s1 = inlined_call_operand.vmem [shape: bf16[4,176], index: 1, kind: input, shape index: {}]
  %s2 = inlined_call_operand.vmem [shape: f32[1,176], index: 2, kind: input, shape index: {}]
  %s3 = inlined_call_operand.vmem [shape: bf16[4,8], index: 3, kind: input, shape index: {}]
  %s4 = inlined_call_operand.vmem [shape: f32[1,8], index: 4, kind: input, shape index: {}]
  %s5 = inlined_call_operand.vmem [shape: bf16[3,192,96], index: 5, kind: input, shape index: {}]
  %s6 = inlined_call_operand.vmem [shape: f32[1,96], index: 6, kind: input, shape index: {}]
  %s7 = inlined_call_operand.vmem [shape: bf16[3,288,96], index: 7, kind: input, shape index: {}]
  %s8 = inlined_call_operand.vmem [shape: f32[1,96], index: 8, kind: input, shape index: {}]
  %s9 = inlined_call_operand.vmem [shape: bf16[5,240,64], index: 9, kind: input, shape index: {}]
  %s10 = inlined_call_operand.vmem [shape: f32[1,64], index: 10, kind: input, shape index: {}]
  %s11 = inlined_call_operand.hbm [shape: f32[2,16,16,232], index: 11, kind: output, shape index: {}]
  %s12 = sld [smem:[#allocation0]]
  $region77: #{inception_a_forward.1} parent=0
    _
  %s14 = ssub.s32 1, %s12
  %s15 = scalar_select 0, %s14, %s12
  $region1: #{inception_a_forward.1} parent=0
    #allocation5 [shape = 'u8[524288]{0}', space=vmem, size = 0x80000, scoped, tag = 'output window, operand 0']
    #allocation6 [shape = 's32[2]{0}', space=sflag, size = 0x8, scoped, tag = 'scoped memory for inception_a_forward.1']
    %16 = vsyncpa [#allocation6], 0
    %s17 = scalar_lea.sflag [#allocation6], 1
    %18 = vsyncpa %s17, 0
    loop: start=0, step=1, limit=4
    $region2: #{inception_a_forward.1} parent=1 // loop_pre_header
      _
    $region3: #{inception_a_forward.1} parent=1 // loop_header
      %s20 = sphi 0, %s24
      %p21 = scmp.ge.s32.totalorder %s20, 4
      %s30 = sphi 0, %s32
      %s33 = sphi 0, %s30
      %s34 = sphi 0, %s33
      %s50 = sphi 0, %s34
      %s54 = sphi 0, %s54
      %s56 = sphi 0, %s54
      %s57 = sphi 0, %s56
      %s71 = sphi 0, %s57
      %s75 = sphi 0, %s75
      %s77 = sphi 0, %s75
      %s78 = sphi 0, %s77
      %s92 = sphi 0, %s78
      %s96 = sphi 0, %s96
      %s98 = sphi 0, %s96
      %s99 = sphi 0, %s98
      %s113 = sphi 0, %s99
      %s117 = sphi 0, %s117
      %s119 = sphi 0, %s117
      %s120 = sphi 0, %s119
      %s134 = sphi 0, %s120
      %s138 = sphi 0, %s138
      %s140 = sphi 0, %s138
      %s141 = sphi 0, %s140
      %s155 = sphi 0, %s141
      %s159 = sphi 0, %s159
      %s161 = sphi 0, %s159
      %s162 = sphi 0, %s161
      %s176 = sphi 0, %s162
      %s180 = sphi 0, %s180
      %s182 = sphi 0, %s180
      %s183 = sphi 0, %s182
      %s197 = sphi 0, %s183
      %s201 = sphi 0, %s201
      %s203 = sphi 0, %s201
      %s204 = sphi 0, %s203
      %s218 = sphi 0, %s204
      %s222 = sphi 0, %s222
      %s224 = sphi 0, %s222
      %s225 = sphi 0, %s224
      %s239 = sphi 0, %s225
      %s243 = sphi 0, %s243
      %s245 = sphi 0, %s243
      %s246 = sphi 0, %s245
      %s260 = sphi 0, %s246
      %s266 = sphi 0, %s268
      %s269 = sphi 0, %s266
      %s270 = sphi 0, %s269
      %s286 = sphi 0, %s270
    $region4: #{inception_a_forward.1} parent=1 // loop_header_branch
      %23 = sbr.rel (%p21) target = $region8
    $region5: #{inception_a_forward.1} parent=1 // loop_body
      %s25 = ssub.s32 %s20, 1
      %s26 = ssub.s32 %s20, 2
      %s27 = sadd.s32 %s20, 1
      %s28 = ssub.s32 %s20, %s27
      %p29 = scmp.eq.s32.totalorder %s28, 0
      %s31 = sadd.s32 %s30, 1
      %s32 = scalar_select %p29, %s30, %s31
      %p35 = pneg %p29
      %p36 = scmp.eq.s32.totalorder %s20, 1
      %p37 = por %p35, %p36
      %p38 = scmp.ne.s32.totalorder %s30, %s33
      %p39 = scmp.eq.s32.totalorder %s20, 0
      %p40 = por %p38, %p39
      %p41 = scmp.ne.s32.totalorder %s30, %s33
      %p42 = scmp.eq.s32.totalorder %s25, 1
      %p43 = por %p41, %p42
      %p44 = scmp.ne.s32.totalorder %s33, %s34
      %p45 = scmp.eq.s32.totalorder %s25, 0
      %p46 = por %p44, %p45
      %p47 = scmp.ne.s32.totalorder %s33, %s34
      %p48 = scmp.eq.s32.totalorder %s26, 1
      %p49 = por %p47, %p48
      %p51 = scmp.ne.s32.totalorder %s34, %s50
      %p52 = scmp.eq.s32.totalorder %s26, 0
      %p53 = por %p51, %p52
      %s55 = sadd.s32 %s54, 1
      %p58 = scmp.eq.s32.totalorder %s20, 1
      %p59 = scmp.ne.s32.totalorder %s54, %s56
      %p60 = scmp.eq.s32.totalorder %s20, 0
      %p61 = por %p59, %p60
      %p62 = scmp.ne.s32.totalorder %s54, %s56
      %p63 = scmp.eq.s32.totalorder %s25, 1
      %p64 = por %p62, %p63
      %p65 = scmp.ne.s32.totalorder %s56, %s57
      %p66 = scmp.eq.s32.totalorder %s25, 0
      %p67 = por %p65, %p66
      %p68 = scmp.ne.s32.totalorder %s56, %s57
      %p69 = scmp.eq.s32.totalorder %s26, 1
      %p70 = por %p68, %p69
      %p72 = scmp.ne.s32.totalorder %s57, %s71
      %p73 = scmp.eq.s32.totalorder %s26, 0
      %p74 = por %p72, %p73
      %s76 = sadd.s32 %s75, 1
      %p79 = scmp.eq.s32.totalorder %s20, 1
      %p80 = scmp.ne.s32.totalorder %s75, %s77
      %p81 = scmp.eq.s32.totalorder %s20, 0
      %p82 = por %p80, %p81
      %p83 = scmp.ne.s32.totalorder %s75, %s77
      %p84 = scmp.eq.s32.totalorder %s25, 1
      %p85 = por %p83, %p84
      %p86 = scmp.ne.s32.totalorder %s77, %s78
      %p87 = scmp.eq.s32.totalorder %s25, 0
      %p88 = por %p86, %p87
      %p89 = scmp.ne.s32.totalorder %s77, %s78
      %p90 = scmp.eq.s32.totalorder %s26, 1
      %p91 = por %p89, %p90
      %p93 = scmp.ne.s32.totalorder %s78, %s92
      %p94 = scmp.eq.s32.totalorder %s26, 0
      %p95 = por %p93, %p94
      %s97 = sadd.s32 %s96, 1
      %p100 = scmp.eq.s32.totalorder %s20, 1
      %p101 = scmp.ne.s32.totalorder %s96, %s98
      %p102 = scmp.eq.s32.totalorder %s20, 0
      %p103 = por %p101, %p102
      %p104 = scmp.ne.s32.totalorder %s96, %s98
      %p105 = scmp.eq.s32.totalorder %s25, 1
      %p106 = por %p104, %p105
      %p107 = scmp.ne.s32.totalorder %s98, %s99
      %p108 = scmp.eq.s32.totalorder %s25, 0
      %p109 = por %p107, %p108
      %p110 = scmp.ne.s32.totalorder %s98, %s99
      %p111 = scmp.eq.s32.totalorder %s26, 1
      %p112 = por %p110, %p111
      %p114 = scmp.ne.s32.totalorder %s99, %s113
      %p115 = scmp.eq.s32.totalorder %s26, 0
      %p116 = por %p114, %p115
      %s118 = sadd.s32 %s117, 1
      %p121 = scmp.eq.s32.totalorder %s20, 1
      %p122 = scmp.ne.s32.totalorder %s117, %s119
      %p123 = scmp.eq.s32.totalorder %s20, 0
      %p124 = por %p122, %p123
      %p125 = scmp.ne.s32.totalorder %s117, %s119
      %p126 = scmp.eq.s32.totalorder %s25, 1
      %p127 = por %p125, %p126
      %p128 = scmp.ne.s32.totalorder %s119, %s120
      %p129 = scmp.eq.s32.totalorder %s25, 0
      %p130 = por %p128, %p129
      %p131 = scmp.ne.s32.totalorder %s119, %s120
      %p132 = scmp.eq.s32.totalorder %s26, 1
      %p133 = por %p131, %p132
      %p135 = scmp.ne.s32.totalorder %s120, %s134
      %p136 = scmp.eq.s32.totalorder %s26, 0
      %p137 = por %p135, %p136
      %s139 = sadd.s32 %s138, 1
      %p142 = scmp.eq.s32.totalorder %s20, 1
      %p143 = scmp.ne.s32.totalorder %s138, %s140
      %p144 = scmp.eq.s32.totalorder %s20, 0
      %p145 = por %p143, %p144
      %p146 = scmp.ne.s32.totalorder %s138, %s140
      %p147 = scmp.eq.s32.totalorder %s25, 1
      %p148 = por %p146, %p147
      %p149 = scmp.ne.s32.totalorder %s140, %s141
      %p150 = scmp.eq.s32.totalorder %s25, 0
      %p151 = por %p149, %p150
      %p152 = scmp.ne.s32.totalorder %s140, %s141
      %p153 = scmp.eq.s32.totalorder %s26, 1
      %p154 = por %p152, %p153
      %p156 = scmp.ne.s32.totalorder %s141, %s155
      %p157 = scmp.eq.s32.totalorder %s26, 0
      %p158 = por %p156, %p157
      %s160 = sadd.s32 %s159, 1
      %p163 = scmp.eq.s32.totalorder %s20, 1
      %p164 = scmp.ne.s32.totalorder %s159, %s161
      %p165 = scmp.eq.s32.totalorder %s20, 0
      %p166 = por %p164, %p165
      %p167 = scmp.ne.s32.totalorder %s159, %s161
      %p168 = scmp.eq.s32.totalorder %s25, 1
      %p169 = por %p167, %p168
      %p170 = scmp.ne.s32.totalorder %s161, %s162
      %p171 = scmp.eq.s32.totalorder %s25, 0
      %p172 = por %p170, %p171
      %p173 = scmp.ne.s32.totalorder %s161, %s162
      %p174 = scmp.eq.s32.totalorder %s26, 1
      %p175 = por %p173, %p174
      %p177 = scmp.ne.s32.totalorder %s162, %s176
      %p178 = scmp.eq.s32.totalorder %s26, 0
      %p179 = por %p177, %p178
      %s181 = sadd.s32 %s180, 1
      %p184 = scmp.eq.s32.totalorder %s20, 1
      %p185 = scmp.ne.s32.totalorder %s180, %s182
      %p186 = scmp.eq.s32.totalorder %s20, 0
      %p187 = por %p185, %p186
      %p188 = scmp.ne.s32.totalorder %s180, %s182
      %p189 = scmp.eq.s32.totalorder %s25, 1
      %p190 = por %p188, %p189
      %p191 = scmp.ne.s32.totalorder %s182, %s183
      %p192 = scmp.eq.s32.totalorder %s25, 0
      %p193 = por %p191, %p192
      %p194 = scmp.ne.s32.totalorder %s182, %s183
      %p195 = scmp.eq.s32.totalorder %s26, 1
      %p196 = por %p194, %p195
      %p198 = scmp.ne.s32.totalorder %s183, %s197
      %p199 = scmp.eq.s32.totalorder %s26, 0
      %p200 = por %p198, %p199
      %s202 = sadd.s32 %s201, 1
      %p205 = scmp.eq.s32.totalorder %s20, 1
      %p206 = scmp.ne.s32.totalorder %s201, %s203
      %p207 = scmp.eq.s32.totalorder %s20, 0
      %p208 = por %p206, %p207
      %p209 = scmp.ne.s32.totalorder %s201, %s203
      %p210 = scmp.eq.s32.totalorder %s25, 1
      %p211 = por %p209, %p210
      %p212 = scmp.ne.s32.totalorder %s203, %s204
      %p213 = scmp.eq.s32.totalorder %s25, 0
      %p214 = por %p212, %p213
      %p215 = scmp.ne.s32.totalorder %s203, %s204
      %p216 = scmp.eq.s32.totalorder %s26, 1
      %p217 = por %p215, %p216
      %p219 = scmp.ne.s32.totalorder %s204, %s218
      %p220 = scmp.eq.s32.totalorder %s26, 0
      %p221 = por %p219, %p220
      %s223 = sadd.s32 %s222, 1
      %p226 = scmp.eq.s32.totalorder %s20, 1
      %p227 = scmp.ne.s32.totalorder %s222, %s224
      %p228 = scmp.eq.s32.totalorder %s20, 0
      %p229 = por %p227, %p228
      %p230 = scmp.ne.s32.totalorder %s222, %s224
      %p231 = scmp.eq.s32.totalorder %s25, 1
      %p232 = por %p230, %p231
      %p233 = scmp.ne.s32.totalorder %s224, %s225
      %p234 = scmp.eq.s32.totalorder %s25, 0
      %p235 = por %p233, %p234
      %p236 = scmp.ne.s32.totalorder %s224, %s225
      %p237 = scmp.eq.s32.totalorder %s26, 1
      %p238 = por %p236, %p237
      %p240 = scmp.ne.s32.totalorder %s225, %s239
      %p241 = scmp.eq.s32.totalorder %s26, 0
      %p242 = por %p240, %p241
      %s244 = sadd.s32 %s243, 1
      %p247 = scmp.eq.s32.totalorder %s20, 1
      %p248 = scmp.ne.s32.totalorder %s243, %s245
      %p249 = scmp.eq.s32.totalorder %s20, 0
      %p250 = por %p248, %p249
      %p251 = scmp.ne.s32.totalorder %s243, %s245
      %p252 = scmp.eq.s32.totalorder %s25, 1
      %p253 = por %p251, %p252
      %p254 = scmp.ne.s32.totalorder %s245, %s246
      %p255 = scmp.eq.s32.totalorder %s25, 0
      %p256 = por %p254, %p255
      %p257 = scmp.ne.s32.totalorder %s245, %s246
      %p258 = scmp.eq.s32.totalorder %s26, 1
      %p259 = por %p257, %p258
      %p261 = scmp.ne.s32.totalorder %s246, %s260
      %p262 = scmp.eq.s32.totalorder %s26, 0
      %p263 = por %p261, %p262
      %s264 = ssub.s32 %s20, %s27
      %p265 = scmp.eq.s32.totalorder %s264, 0
      %s267 = sadd.s32 %s266, 1
      %s268 = scalar_select %p265, %s266, %s267
      %p271 = pneg %p265
      %p272 = scmp.eq.s32.totalorder %s20, 1
      %p273 = por %p271, %p272
      %p274 = scmp.ne.s32.totalorder %s266, %s269
      %p275 = scmp.eq.s32.totalorder %s20, 0
      %p276 = por %p274, %p275
      %p277 = scmp.ne.s32.totalorder %s266, %s269
      %p278 = scmp.eq.s32.totalorder %s25, 1
      %p279 = por %p277, %p278
      %p280 = scmp.ne.s32.totalorder %s269, %s270
      %p281 = scmp.eq.s32.totalorder %s25, 0
      %p282 = por %p280, %p281
      %p283 = scmp.ne.s32.totalorder %s269, %s270
      %p284 = scmp.eq.s32.totalorder %s26, 1
      %p285 = por %p283, %p284
      %p287 = scmp.ne.s32.totalorder %s270, %s286
      %p288 = scmp.eq.s32.totalorder %s26, 0
      %p289 = por %p287, %p288
      %p290 = scmp.le.s32.totalorder 1, %s20
      %p291 = scmp.lt.s32.totalorder %s20, 3
      %p292 = pnand %p290, %p291
      %p293 = pneg %p292
      // Predicated region
      $region9: #{inception_a_forward.1} parent=5 // pred_check
        _
      $region10: #{inception_a_forward.1} parent=5 // pred_check_branch
        %295 = sbr.rel (%p292) target = $region12
      $region11: #{inception_a_forward.1} parent=5 // pred_region
        %s296 = ssub.s32 %s20, 1
        // Predicated region
        $region13: #{inception_a_forward.1} parent=11 // pred_check
          %p297 = pneg %p67
        $region14: #{inception_a_forward.1} parent=11 // pred_check_branch
          %299 = sbr.rel (%p297) target = $region16
        $region15: #{inception_a_forward.1} parent=11 // pred_region
          _
        $region16: #{inception_a_forward.1} parent=11 // pred_fallthru
          _
        // Predicated region
        $region17: #{inception_a_forward.1} parent=11 // pred_check
          %p300 = pneg %p88
        $region18: #{inception_a_forward.1} parent=11 // pred_check_branch
          %302 = sbr.rel (%p300) target = $region20
        $region19: #{inception_a_forward.1} parent=11 // pred_region
          _
        $region20: #{inception_a_forward.1} parent=11 // pred_fallthru
          _
        // Predicated region
        $region21: #{inception_a_forward.1} parent=11 // pred_check
          %p303 = pneg %p109
        $region22: #{inception_a_forward.1} parent=11 // pred_check_branch
          %305 = sbr.rel (%p303) target = $region24
        $region23: #{inception_a_forward.1} parent=11 // pred_region
          _
        $region24: #{inception_a_forward.1} parent=11 // pred_fallthru
          _
        // Predicated region
        $region25: #{inception_a_forward.1} parent=11 // pred_check
          %p306 = pneg %p130
        $region26: #{inception_a_forward.1} parent=11 // pred_check_branch
          %308 = sbr.rel (%p306) target = $region28
        $region27: #{inception_a_forward.1} parent=11 // pred_region
          _
        $region28: #{inception_a_forward.1} parent=11 // pred_fallthru
          _
        // Predicated region
        $region29: #{inception_a_forward.1} parent=11 // pred_check
          %p309 = pneg %p151
        $region30: #{inception_a_forward.1} parent=11 // pred_check_branch
          %311 = sbr.rel (%p309) target = $region32
        $region31: #{inception_a_forward.1} parent=11 // pred_region
          _
        $region32: #{inception_a_forward.1} parent=11 // pred_fallthru
          _
        // Predicated region
        $region33: #{inception_a_forward.1} parent=11 // pred_check
          %p312 = pneg %p172
        $region34: #{inception_a_forward.1} parent=11 // pred_check_branch
          %314 = sbr.rel (%p312) target = $region36
        $region35: #{inception_a_forward.1} parent=11 // pred_region
          _
        $region36: #{inception_a_forward.1} parent=11 // pred_fallthru
          _
        // Predicated region
        $region37: #{inception_a_forward.1} parent=11 // pred_check
          %p315 = pneg %p193
        $region38: #{inception_a_forward.1} parent=11 // pred_check_branch
          %317 = sbr.rel (%p315) target = $region40
        $region39: #{inception_a_forward.1} parent=11 // pred_region
          _
        $region40: #{inception_a_forward.1} parent=11 // pred_fallthru
          _
        // Predicated region
        $region41: #{inception_a_forward.1} parent=11 // pred_check
          %p318 = pneg %p214
        $region42: #{inception_a_forward.1} parent=11 // pred_check_branch
          %320 = sbr.rel (%p318) target = $region44
        $region43: #{inception_a_forward.1} parent=11 // pred_region
          _
        $region44: #{inception_a_forward.1} parent=11 // pred_fallthru
          _
        // Predicated region
        $region45: #{inception_a_forward.1} parent=11 // pred_check
          %p321 = pneg %p235
        $region46: #{inception_a_forward.1} parent=11 // pred_check_branch
          %323 = sbr.rel (%p321) target = $region48
        $region47: #{inception_a_forward.1} parent=11 // pred_region
          _
        $region48: #{inception_a_forward.1} parent=11 // pred_fallthru
          _
        // Predicated region
        $region49: #{inception_a_forward.1} parent=11 // pred_check
          %p324 = pneg %p256
        $region50: #{inception_a_forward.1} parent=11 // pred_check_branch
          %326 = sbr.rel (%p324) target = $region52
        $region51: #{inception_a_forward.1} parent=11 // pred_region
          _
        $region52: #{inception_a_forward.1} parent=11 // pred_fallthru
          _
      $region12: #{inception_a_forward.1} parent=5 // pred_fallthru
        _
      %p327 = scmp.lt.s32.totalorder %s20, 2
      // Predicated region
      $region53: #{inception_a_forward.1} parent=5 // pred_check
        %p328 = pneg %p327
      $region54: #{inception_a_forward.1} parent=5 // pred_check_branch
        %330 = sbr.rel (%p328) target = $region56
      $region55: #{inception_a_forward.1} parent=5 // pred_region
        // Predicated region
        $region57: #{inception_a_forward.1} parent=55 // pred_check
          %p331 = pneg %p40
        $region58: #{inception_a_forward.1} parent=55 // pred_check_branch
          %333 = sbr.rel (%p331) target = $region60
        $region59: #{inception_a_forward.1} parent=55 // pred_region
          %p334 = scmp.lt.s32.totalorder %s20, 1
          %s335 = scalar_select %p334, %s20, 1
          %s336 = smul.addr %s335, 54
          %s337 = smul.addr %s336, 4
          %s338 = scalar_lea.vmem %s0, %s337
        $region60: #{inception_a_forward.1} parent=55 // pred_fallthru
          _
      $region56: #{inception_a_forward.1} parent=5 // pred_fallthru
        _
      %p339 = scmp.le.s32.totalorder 1, %s20
      %p340 = scmp.lt.s32.totalorder %s20, 3
      %p341 = pnand %p339, %p340
      %p342 = pneg %p341
      // Predicated region
      $region61: #{inception_a_forward.1} parent=5 // pred_check
        _
      $region62: #{inception_a_forward.1} parent=5 // pred_check_branch
        %344 = sbr.rel (%p341) target = $region64
      $region63: #{inception_a_forward.1} parent=5 // pred_region
        %s345 = ssub.s32 %s20, 1
        %p346 = scmp.lt.s32.totalorder %s25, 1
        %s347 = scalar_select %p346, %s25, 1
        %s348 = smul.addr %s347, 54
        %s349 = smul.addr %s348, 4
        %s350 = scalar_lea.vmem %s0, %s349
        %p351 = pneg %p46
        %p352 = pneg %p43
        %p353 = pneg %p67
        %p354 = pneg %p64
        %p355 = pneg %p88
        %p356 = pneg %p85
        %p357 = pneg %p109
        %p358 = pneg %p106
        %p359 = pneg %p130
        %p360 = pneg %p127
        %p361 = pneg %p151
        %p362 = pneg %p148
        %p363 = pneg %p172
        %p364 = pneg %p169
        %p365 = pneg %p193
        %p366 = pneg %p190
        %p367 = pneg %p214
        %p368 = pneg %p211
        %p369 = pneg %p235
        %p370 = pneg %p232
        %p371 = pneg %p256
        %p372 = pneg %p253
        %p373 = pneg %p282
        %p374 = pneg %p279
        %s375 = sand.u32 %s269, 1
        %s376 = scalar_lea.sflag [#allocation6], %s375
        %s377 = sand.u32 %s269, 1
        %s378 = smul.addr %s377, 512
        %s379 = scalar_lea.vmem [#allocation5], %s378
        %p380 = scmp.lt.s32.totalorder %s25, 1
        %s381 = scalar_select %p380, %s25, 1
        %s382 = smul.addr %s381, 54
        %s383 = smul.addr %s382, 4
        %s384 = scalar_lea.vmem %s0, %s383
        %v386 = vld [vmem:[%s384] sm:$0xf]
        %v387 = vld [vmem:[%s384 + $0x4] sm:$0xf]
        %v388 = vld [vmem:[%s384 + $0x8] sm:$0x1]
        %v389 = vld [vmem:[%s384 + $0xc] sm:$0xf]
        %v390 = vld [vmem:[%s384 + $0x10] sm:$0xf]
        %v391 = vld [vmem:[%s384 + $0x14] sm:$0x1]
        %v392 = vld [vmem:[%s384 + $0x18] sm:$0xf]
        %v393 = vld [vmem:[%s384 + $0x1c] sm:$0xf]
        %v394 = vld [vmem:[%s384 + $0x20] sm:$0x1]
        %v395 = vld [vmem:[%s384 + $0x24] sm:$0xf]
        %v396 = vld [vmem:[%s384 + $0x28] sm:$0xf]
        %v397 = vld [vmem:[%s384 + $0x2c] sm:$0x1]
        %v398 = vld [vmem:[%s384 + $0x30] sm:$0xf]
        %v399 = vld [vmem:[%s384 + $0x34] sm:$0xf]
        %v400 = vld [vmem:[%s384 + $0x38] sm:$0x1]
        %v401 = vld [vmem:[%s384 + $0x3c] sm:$0xf]
        %v402 = vld [vmem:[%s384 + $0x40] sm:$0xf]
        %v403 = vld [vmem:[%s384 + $0x44] sm:$0x1]
        %v404 = vld [vmem:[%s384 + $0x48] sm:$0xf]
        %v405 = vld [vmem:[%s384 + $0x4c] sm:$0xf]
        %v406 = vld [vmem:[%s384 + $0x50] sm:$0x1]
        %v407 = vld [vmem:[%s384 + $0x54] sm:$0xf]
        %v408 = vld [vmem:[%s384 + $0x58] sm:$0xf]
        %v409 = vld [vmem:[%s384 + $0x5c] sm:$0x1]
        %v410 = vld [vmem:[%s384 + $0x60] sm:$0xf]
        %v411 = vld [vmem:[%s384 + $0x64] sm:$0xf]
        %v412 = vld [vmem:[%s384 + $0x68] sm:$0x1]
        %v413 = vld [vmem:[%s384 + $0x6c] sm:$0xf]
        %v414 = vld [vmem:[%s384 + $0x70] sm:$0xf]
        %v415 = vld [vmem:[%s384 + $0x74] sm:$0x1]
        %v416 = vld [vmem:[%s384 + $0x78] sm:$0xf]
        %v417 = vld [vmem:[%s384 + $0x7c] sm:$0xf]
        %v418 = vld [vmem:[%s384 + $0x80] sm:$0x1]
        %v419 = vld [vmem:[%s384 + $0x84] sm:$0xf]
        %v420 = vld [vmem:[%s384 + $0x88] sm:$0xf]
        %v421 = vld [vmem:[%s384 + $0x8c] sm:$0x1]
        %v422 = vld [vmem:[%s384 + $0x90] sm:$0xf]
        %v423 = vld [vmem:[%s384 + $0x94] sm:$0xf]
        %v424 = vld [vmem:[%s384 + $0x98] sm:$0x1]
        %v425 = vld [vmem:[%s384 + $0x9c] sm:$0xf]
        %v426 = vld [vmem:[%s384 + $0xa0] sm:$0xf]
        %v427 = vld [vmem:[%s384 + $0xa4] sm:$0x1]
        %v428 = vld [vmem:[%s384 + $0xa8] sm:$0xf]
        %v429 = vld [vmem:[%s384 + $0xac] sm:$0xf]
        %v430 = vld [vmem:[%s384 + $0xb0] sm:$0x1]
        %v431 = vld [vmem:[%s384 + $0xb4] sm:$0xf]
        %v432 = vld [vmem:[%s384 + $0xb8] sm:$0xf]
        %v433 = vld [vmem:[%s384 + $0xbc] sm:$0x1]
        %v434 = vld [vmem:[%s384 + $0xc0] sm:$0xf]
        %v435 = vld [vmem:[%s384 + $0xc4] sm:$0xf]
        %v436 = vld [vmem:[%s384 + $0xc8] sm:$0x1]
        %v437 = vld [vmem:[%s384 + $0xcc] sm:$0xf]
        %v438 = vld [vmem:[%s384 + $0xd0] sm:$0xf]
        %v439 = vld [vmem:[%s384 + $0xd4] sm:$0x1]
        %vm440 = vsmask.f32 3328
        %vm441 = vsmask.f32 7440
        %vm442 = vmor %vm440, %vm441
        %v444 = vshrl.u32 %v389, 16
        %v446 = vrot.slane %v444, 4
        %v447 = vshll.u32 %v389, 16
        %v449 = vrot.slane %v447, 5
        %v450 = vor.u32 %v446, %v449
        %v451 = vrot.slane %v450, 4
        %v453 = vshll.u32 %v390, 16
        %v455 = vrot.slane %v453, 5
        %v456 = vsel %vm442, %v451, %v455
        %v457 = vshrl.u32 %v390, 16
        %v459 = vrot.slane %v457, 4
        %v460 = vor.u32 %v459, %v455
        %v461 = vrot.slane %v460, 4
        %v463 = vshll.u32 %v391, 16
        %v465 = vrot.slane %v463, 5
        %v466 = vsel %vm442, %v461, %v465
        %v468 = vshrl.u32 %v392, 16
        %v470 = vrot.slane %v468, 4
        %v471 = vshll.u32 %v392, 16
        %v473 = vrot.slane %v471, 5
        %v474 = vor.u32 %v470, %v473
        %v475 = vrot.slane %v474, 4
        %v477 = vshll.u32 %v393, 16
        %v479 = vrot.slane %v477, 5
        %v480 = vsel %vm442, %v475, %v479
        %v481 = vshrl.u32 %v393, 16
        %v483 = vrot.slane %v481, 4
        %v484 = vor.u32 %v483, %v479
        %v485 = vrot.slane %v484, 4
        %v487 = vshll.u32 %v394, 16
        %v489 = vrot.slane %v487, 5
        %v490 = vsel %vm442, %v485, %v489
        %v492 = vshrl.u32 %v395, 16
        %v494 = vrot.slane %v492, 4
        %v495 = vshll.u32 %v395, 16
        %v497 = vrot.slane %v495, 5
        %v498 = vor.u32 %v494, %v497
        %v499 = vrot.slane %v498, 4
        %v501 = vshll.u32 %v396, 16
        %v503 = vrot.slane %v501, 5
        %v504 = vsel %vm442, %v499, %v503
        %v505 = vshrl.u32 %v396, 16
        %v507 = vrot.slane %v505, 4
        %v508 = vor.u32 %v507, %v503
        %v509 = vrot.slane %v508, 4
        %v511 = vshll.u32 %v397, 16
        %v513 = vrot.slane %v511, 5
        %v514 = vsel %vm442, %v509, %v513
        %v516 = vshrl.u32 %v398, 16
        %v518 = vrot.slane %v516, 4
        %v519 = vshll.u32 %v398, 16
        %v521 = vrot.slane %v519, 5
        %v522 = vor.u32 %v518, %v521
        %v523 = vrot.slane %v522, 4
        %v525 = vshll.u32 %v399, 16
        %v527 = vrot.slane %v525, 5
        %v528 = vsel %vm442, %v523, %v527
        %v529 = vshrl.u32 %v399, 16
        %v531 = vrot.slane %v529, 4
        %v532 = vor.u32 %v531, %v527
        %v533 = vrot.slane %v532, 4
        %v535 = vshll.u32 %v400, 16
        %v537 = vrot.slane %v535, 5
        %v538 = vsel %vm442, %v533, %v537
        %v540 = vshrl.u32 %v401, 16
        %v542 = vrot.slane %v540, 4
        %v543 = vshll.u32 %v401, 16
        %v545 = vrot.slane %v543, 5
        %v546 = vor.u32 %v542, %v545
        %v547 = vrot.slane %v546, 4
        %v549 = vshll.u32 %v402, 16
        %v551 = vrot.slane %v549, 5
        %v552 = vsel %vm442, %v547, %v551
        %v553 = vshrl.u32 %v402, 16
        %v555 = vrot.slane %v553, 4
        %v556 = vor.u32 %v555, %v551
        %v557 = vrot.slane %v556, 4
        %v559 = vshll.u32 %v403, 16
        %v561 = vrot.slane %v559, 5
        %v562 = vsel %vm442, %v557, %v561
        %v564 = vshrl.u32 %v404, 16
        %v566 = vrot.slane %v564, 4
        %v567 = vshll.u32 %v404, 16
        %v569 = vrot.slane %v567, 5
        %v570 = vor.u32 %v566, %v569
        %v571 = vrot.slane %v570, 4
        %v573 = vshll.u32 %v405, 16
        %v575 = vrot.slane %v573, 5
        %v576 = vsel %vm442, %v571, %v575
        %v577 = vshrl.u32 %v405, 16
        %v579 = vrot.slane %v577, 4
        %v580 = vor.u32 %v579, %v575
        %v581 = vrot.slane %v580, 4
        %v583 = vshll.u32 %v406, 16
        %v585 = vrot.slane %v583, 5
        %v586 = vsel %vm442, %v581, %v585
        %v588 = vshrl.u32 %v407, 16
        %v590 = vrot.slane %v588, 4
        %v591 = vshll.u32 %v407, 16
        %v593 = vrot.slane %v591, 5
        %v594 = vor.u32 %v590, %v593
        %v595 = vrot.slane %v594, 4
        %v597 = vshll.u32 %v408, 16
        %v599 = vrot.slane %v597, 5
        %v600 = vsel %vm442, %v595, %v599
        %v601 = vshrl.u32 %v408, 16
        %v603 = vrot.slane %v601, 4
        %v604 = vor.u32 %v603, %v599
        %v605 = vrot.slane %v604, 4
        %v607 = vshll.u32 %v409, 16
        %v609 = vrot.slane %v607, 5
        %v610 = vsel %vm442, %v605, %v609
        %v612 = vshrl.u32 %v410, 16
        %v614 = vrot.slane %v612, 4
        %v615 = vshll.u32 %v410, 16
        %v617 = vrot.slane %v615, 5
        %v618 = vor.u32 %v614, %v617
        %v619 = vrot.slane %v618, 4
        %v621 = vshll.u32 %v411, 16
        %v623 = vrot.slane %v621, 5
        %v624 = vsel %vm442, %v619, %v623
        %v625 = vshrl.u32 %v411, 16
        %v627 = vrot.slane %v625, 4
        %v628 = vor.u32 %v627, %v623
        %v629 = vrot.slane %v628, 4
        %v631 = vshll.u32 %v412, 16
        %v633 = vrot.slane %v631, 5
        %v634 = vsel %vm442, %v629, %v633
        %v636 = vshrl.u32 %v413, 16
        %v638 = vrot.slane %v636, 4
        %v639 = vshll.u32 %v413, 16
        %v641 = vrot.slane %v639, 5
        %v642 = vor.u32 %v638, %v641
        %v643 = vrot.slane %v642, 4
        %v645 = vshll.u32 %v414, 16
        %v647 = vrot.slane %v645, 5
        %v648 = vsel %vm442, %v643, %v647
        %v649 = vshrl.u32 %v414, 16
        %v651 = vrot.slane %v649, 4
        %v652 = vor.u32 %v651, %v647
        %v653 = vrot.slane %v652, 4
        %v655 = vshll.u32 %v415, 16
        %v657 = vrot.slane %v655, 5
        %v658 = vsel %vm442, %v653, %v657
        %v660 = vshrl.u32 %v416, 16
        %v662 = vrot.slane %v660, 4
        %v663 = vshll.u32 %v416, 16
        %v665 = vrot.slane %v663, 5
        %v666 = vor.u32 %v662, %v665
        %v667 = vrot.slane %v666, 4
        %v669 = vshll.u32 %v417, 16
        %v671 = vrot.slane %v669, 5
        %v672 = vsel %vm442, %v667, %v671
        %v673 = vshrl.u32 %v417, 16
        %v675 = vrot.slane %v673, 4
        %v676 = vor.u32 %v675, %v671
        %v677 = vrot.slane %v676, 4
        %v679 = vshll.u32 %v418, 16
        %v681 = vrot.slane %v679, 5
        %v682 = vsel %vm442, %v677, %v681
        %v684 = vshrl.u32 %v419, 16
        %v686 = vrot.slane %v684, 4
        %v687 = vshll.u32 %v419, 16
        %v689 = vrot.slane %v687, 5
        %v690 = vor.u32 %v686, %v689
        %v691 = vrot.slane %v690, 4
        %v693 = vshll.u32 %v420, 16
        %v695 = vrot.slane %v693, 5
        %v696 = vsel %vm442, %v691, %v695
        %v697 = vshrl.u32 %v420, 16
        %v699 = vrot.slane %v697, 4
        %v700 = vor.u32 %v699, %v695
        %v701 = vrot.slane %v700, 4
        %v703 = vshll.u32 %v421, 16
        %v705 = vrot.slane %v703, 5
        %v706 = vsel %vm442, %v701, %v705
        %v708 = vshrl.u32 %v422, 16
        %v710 = vrot.slane %v708, 4
        %v711 = vshll.u32 %v422, 16
        %v713 = vrot.slane %v711, 5
        %v714 = vor.u32 %v710, %v713
        %v715 = vrot.slane %v714, 4
        %v717 = vshll.u32 %v423, 16
        %v719 = vrot.slane %v717, 5
        %v720 = vsel %vm442, %v715, %v719
        %v721 = vshrl.u32 %v423, 16
        %v723 = vrot.slane %v721, 4
        %v724 = vor.u32 %v723, %v719
        %v725 = vrot.slane %v724, 4
        %v727 = vshll.u32 %v424, 16
        %v729 = vrot.slane %v727, 5
        %v730 = vsel %vm442, %v725, %v729
        %v732 = vshrl.u32 %v425, 16
        %v734 = vrot.slane %v732, 4
        %v735 = vshll.u32 %v425, 16
        %v737 = vrot.slane %v735, 5
        %v738 = vor.u32 %v734, %v737
        %v739 = vrot.slane %v738, 4
        %v741 = vshll.u32 %v426, 16
        %v743 = vrot.slane %v741, 5
        %v744 = vsel %vm442, %v739, %v743
        %v745 = vshrl.u32 %v426, 16
        %v747 = vrot.slane %v745, 4
        %v748 = vor.u32 %v747, %v743
        %v749 = vrot.slane %v748, 4
        %v751 = vshll.u32 %v427, 16
        %v753 = vrot.slane %v751, 5
        %v754 = vsel %vm442, %v749, %v753
        %v756 = vshrl.u32 %v428, 16
        %v758 = vrot.slane %v756, 4
        %v759 = vshll.u32 %v428, 16
        %v761 = vrot.slane %v759, 5
        %v762 = vor.u32 %v758, %v761
        %v763 = vrot.slane %v762, 4
        %v765 = vshll.u32 %v429, 16
        %v767 = vrot.slane %v765, 5
        %v768 = vsel %vm442, %v763, %v767
        %v769 = vshrl.u32 %v429, 16
        %v771 = vrot.slane %v769, 4
        %v772 = vor.u32 %v771, %v767
        %v773 = vrot.slane %v772, 4
        %v775 = vshll.u32 %v430, 16
        %v777 = vrot.slane %v775, 5
        %v778 = vsel %vm442, %v773, %v777
        %v780 = vshrl.u32 %v431, 16
        %v782 = vrot.slane %v780, 4
        %v783 = vshll.u32 %v431, 16
        %v785 = vrot.slane %v783, 5
        %v786 = vor.u32 %v782, %v785
        %v787 = vrot.slane %v786, 4
        %v789 = vshll.u32 %v432, 16
        %v791 = vrot.slane %v789, 5
        %v792 = vsel %vm442, %v787, %v791
        %v793 = vshrl.u32 %v432, 16
        %v795 = vrot.slane %v793, 4
        %v796 = vor.u32 %v795, %v791
        %v797 = vrot.slane %v796, 4
        %v799 = vshll.u32 %v433, 16
        %v801 = vrot.slane %v799, 5
        %v802 = vsel %vm442, %v797, %v801
        %v804 = vshrl.u32 %v434, 16
        %v806 = vrot.slane %v804, 4
        %v807 = vshll.u32 %v434, 16
        %v809 = vrot.slane %v807, 5
        %v810 = vor.u32 %v806, %v809
        %v811 = vrot.slane %v810, 4
        %v813 = vshll.u32 %v435, 16
        %v815 = vrot.slane %v813, 5
        %v816 = vsel %vm442, %v811, %v815
        %v817 = vshrl.u32 %v435, 16
        %v819 = vrot.slane %v817, 4
        %v820 = vor.u32 %v819, %v815
        %v821 = vrot.slane %v820, 4
        %v823 = vshll.u32 %v436, 16
        %v825 = vrot.slane %v823, 5
        %v826 = vsel %vm442, %v821, %v825
        %v827 = vld [vmem:[%s1] sm:$0xf]
        %v828 = vld [vmem:[%s2] sm:$0x3]
        %v830 = vlaneseq
        %v831 = vshrl.u32 %v830, 7
        %v832 = vsub.s32 0, %v831
        %v833 = vrot.slane %v828, %v832
        %v834 = vlaneseq
        %v835 = vshrl.u32 %v834, 7
        %v836 = vsub.s32 1, %v835
        %v837 = vrot.slane %v828, %v836
        %v840 = vunpack.c.l.b16 %v456
        %v841 = vunpack.c.l.b16 %v466
        %v842 = vunpack.c.l.b16 %v480
        %v843 = vunpack.c.l.b16 %v490
        %v844 = vunpack.c.l.b16 %v504
        %v845 = vunpack.c.l.b16 %v514
        %v846 = vunpack.c.l.b16 %v528
        %v847 = vunpack.c.l.b16 %v538
        %v848 = vunpack.c.l.b16 %v552
        %v849 = vunpack.c.l.b16 %v562
        %v850 = vunpack.c.l.b16 %v576
        %v851 = vunpack.c.l.b16 %v586
        %v852 = vunpack.c.l.b16 %v600
        %v853 = vunpack.c.l.b16 %v610
        %v854 = vunpack.c.l.b16 %v624
        %v855 = vunpack.c.l.b16 %v634
        %v856 = vunpack.c.l.b16 %v648
        %v857 = vunpack.c.l.b16 %v658
        %v858 = vunpack.c.l.b16 %v672
        %v859 = vunpack.c.l.b16 %v682
        %v860 = vunpack.c.l.b16 %v696
        %v861 = vunpack.c.l.b16 %v706
        %v862 = vunpack.c.l.b16 %v720
        %v863 = vunpack.c.l.b16 %v730
        %v864 = vunpack.c.l.b16 %v744
        %v865 = vunpack.c.l.b16 %v754
        %v866 = vunpack.c.l.b16 %v768
        %v867 = vunpack.c.l.b16 %v778
        %v868 = vunpack.c.l.b16 %v792
        %v869 = vunpack.c.l.b16 %v802
        %v870 = vunpack.c.l.b16 %v816
        %v871 = vunpack.c.l.b16 %v826
        %v872 = vpack.c.b16 %v841, %v840
        %v873 = vpack.c.b16 %v843, %v842
        %v874 = vpack.c.b16 %v845, %v844
        %v875 = vpack.c.b16 %v847, %v846
        %v876 = vpack.c.b16 %v849, %v848
        %v877 = vpack.c.b16 %v851, %v850
        %v878 = vpack.c.b16 %v853, %v852
        %v879 = vpack.c.b16 %v855, %v854
        %v880 = vpack.c.b16 %v857, %v856
        %v881 = vpack.c.b16 %v859, %v858
        %v882 = vpack.c.b16 %v861, %v860
        %v883 = vpack.c.b16 %v863, %v862
        %v884 = vpack.c.b16 %v865, %v864
        %v885 = vpack.c.b16 %v867, %v866
        %v886 = vpack.c.b16 %v869, %v868
        %v887 = vpack.c.b16 %v871, %v870
        %v890 = vunpack.c.l.s4 1983009808
        %v891 = vunpack.c.0.s8 %v890
        %v892 = vlaneseq
        %v893 = vshrl.u32 %v892, 7
        %v894 = vsub.s32 %v891, %v893
        %v895 = vrot.slane %v827, %v894
        %v896 = vcombine.high %v895, %v895
        %vm897 = vcmask 31744
        %v899 = vsel %vm897, %v872, 0
        %v902 = vsel %vm897, %v873, 0
        %v905 = vsel %vm897, %v874, 0
        %v908 = vsel %vm897, %v875, 0
        %v911 = vsel %vm897, %v876, 0
        %v914 = vsel %vm897, %v877, 0
        %v917 = vsel %vm897, %v878, 0
        %v920 = vsel %vm897, %v879, 0
        %v923 = vsel %vm897, %v880, 0
        %v926 = vsel %vm897, %v881, 0
        %v929 = vsel %vm897, %v882, 0
        %v932 = vsel %vm897, %v883, 0
        %v935 = vsel %vm897, %v884, 0
        %v938 = vsel %vm897, %v885, 0
        %v941 = vsel %vm897, %v886, 0
        %v944 = vsel %vm897, %v887, 0
        %vm946 = vcmask 1041408
        %v948 = vsel %vm946, %v895, 0
        %v951 = vsel %vm946, %v896, 0
        %953 = vmatprep.subr.bf16.mxu0 %v951
        %954 = vmatpush1.bf16.msra.mxu0 %v948
        %955 = vmatprep.subr.bf16.mxu0 0
        %956 = vmatpush1.bf16.msra.mxu0 0
        %957 = vmatprep.subr.bf16.mxu0 0
        %958 = vmatpush1.bf16.msra.mxu0 0
        %959 = vmatprep.subr.bf16.mxu0 0
        %960 = vmatpush1.bf16.msra.mxu0 0
        %961 = vmatprep.subr.bf16.mxu0 0
        %962 = vmatpush1.bf16.msra.mxu0 0
        %963 = vmatprep.subr.bf16.mxu0 0
        %964 = vmatpush1.bf16.msra.mxu0 0
        %965 = vmatprep.subr.bf16.mxu0 0
        %966 = vmatpush1.bf16.msra.mxu0 0
        %967 = vmatprep.subr.bf16.mxu0 0
        %968 = vmatpush1.bf16.msra.mxu0 0
        %969 = vmatprep.subr.bf16.mxu0 0
        %970 = vmatpush1.bf16.msra.mxu0 0
        %971 = vmatprep.subr.bf16.mxu0 0
        %972 = vmatpush1.bf16.msra.mxu0 0
        %973 = vmatprep.subr.bf16.mxu0 0
        %974 = vmatpush1.bf16.msra.mxu0 0
        %975 = vmatprep.subr.bf16.mxu0 0
        %976 = vmatpush1.bf16.msra.mxu0 0
        %977 = vmatprep.subr.bf16.mxu0 0
        %978 = vmatpush1.bf16.msra.mxu0 0
        %979 = vmatprep.subr.bf16.mxu0 0
        %980 = vmatpush1.bf16.msra.mxu0 0
        %981 = vmatprep.subr.bf16.mxu0 0
        %982 = vmatpush1.bf16.msra.mxu0 0
        %983 = vmatprep.subr.bf16.mxu0 0
        %984 = vmatpush1.bf16.msra.mxu0 0
        %985 = vmatprep.mubr.bf16.mxu0 0
        %986 = vmatmul.mubr.bf16.gmra.mrb[0].mxu0 %v899
        %v987 = vpop.f32.mrb[0].mxu0
        %v988 = vadd.f32 %v833, %v987
        %v989 = vpop.f32.mrb[0].mxu0
        %v990 = vadd.f32 %v837, %v989
        %v991 = vpop.f32.mrb[0].mxu0
        %v992 = vadd.f32 %v833, %v991
        %v993 = vpop.f32.mrb[0].mxu0
        %v994 = vadd.f32 %v837, %v993
        %995 = vmatprep.mubr.bf16.mxu0 0
        %996 = vmatmul.mubr.bf16.gmra.mrb[0].mxu0 %v902
        %v997 = vpop.f32.mrb[0].mxu0
        %v998 = vadd.f32 %v833, %v997
        %v999 = vpop.f32.mrb[0].mxu0
        %v1000 = vadd.f32 %v837, %v999
        %v1001 = vpop.f32.mrb[0].mxu0
        %v1002 = vadd.f32 %v833, %v1001
        %v1003 = vpop.f32.mrb[0].mxu0
        %v1004 = vadd.f32 %v837, %v1003
        %1005 = vmatprep.mubr.bf16.mxu0 0
        %1006 = vmatmul.mubr.bf16.gmra.mrb[0].mxu0 %v905
        %v1007 = vpop.f32.mrb[0].mxu0
        %v1008 = vadd.f32 %v833, %v1007
        %v1009 = vpop.f32.mrb[0].mxu0
        %v1010 = vadd.f32 %v837, %v1009
        %v1011 = vpop.f32.mrb[0].mxu0
        %v1012 = vadd.f32 %v833, %v1011
        %v1013 = vpop.f32.mrb[0].mxu0
        %v1014 = vadd.f32 %v837, %v1013
        %1015 = vmatprep.mubr.bf16.mxu0 0
        %1016 = vmatmul.mubr.bf16.gmra.mrb[0].mxu0 %v908
        %v1017 = vpop.f32.mrb[0].mxu0
        %v1018 = vadd.f32 %v833, %v1017
        %v1019 = vpop.f32.mrb[0].mxu0
        %v1020 = vadd.f32 %v837, %v1019
        %v1021 = vpop.f32.mrb[0].mxu0
        %v1022 = vadd.f32 %v833, %v1021
        %v1023 = vpop.f32.mrb[0].mxu0
        %v1024 = vadd.f32 %v837, %v1023
        %1025 = vmatprep.mubr.bf16.mxu0 0
        %1026 = vmatmul.mubr.bf16.gmra.mrb[0].mxu0 %v911
        %v1027 = vpop.f32.mrb[0].mxu0
        %v1028 = vadd.f32 %v833, %v1027
        %v1029 = vpop.f32.mrb[0].mxu0
        %v1030 = vadd.f32 %v837, %v1029
        %v1031 = vpop.f32.mrb[0].mxu0
        %v1032 = vadd.f32 %v833, %v1031
        %v1033 = vpop.f32.mrb[0].mxu0
        %v1034 = vadd.f32 %v837, %v1033
        %1035 = vmatprep.mubr.bf16.mxu0 0
        %1036 = vmatmul.mubr.bf16.gmra.mrb[0].mxu0 %v914
        %v1037 = vpop.f32.mrb[0].mxu0
        %v1038 = vadd.f32 %v833, %v1037
        %v1039 = vpop.f32.mrb[0].mxu0
        %v1040 = vadd.f32 %v837, %v1039
        %v1041 = vpop.f32.mrb[0].mxu0
        %v1042 = vadd.f32 %v833, %v1041
        %v1043 = vpop.f32.mrb[0].mxu0
        %v1044 = vadd.f32 %v837, %v1043
        %1045 = vmatprep.mubr.bf16.mxu0 0
        %1046 = vmatmul.mubr.bf16.gmra.mrb[0].mxu0 %v917
        %v1047 = vpop.f32.mrb[0].mxu0
        %v1048 = vadd.f32 %v833, %v1047
        %v1049 = vpop.f32.mrb[0].mxu0
        %v1050 = vadd.f32 %v837, %v1049
        %v1051 = vpop.f32.mrb[0].mxu0
        %v1052 = vadd.f32 %v833, %v1051
        %v1053 = vpop.f32.mrb[0].mxu0
        %v1054 = vadd.f32 %v837, %v1053
        %1055 = vmatprep.mubr.bf16.mxu0 0
        %1056 = vmatmul.mubr.bf16.gmra.mrb[0].mxu0 %v920
        %v1057 = vpop.f32.mrb[0].mxu0
        %v1058 = vadd.f32 %v833, %v1057
        %v1059 = vpop.f32.mrb[0].mxu0
        %v1060 = vadd.f32 %v837, %v1059
        %v1061 = vpop.f32.mrb[0].mxu0
        %v1062 = vadd.f32 %v833, %v1061
        %v1063 = vpop.f32.mrb[0].mxu0
        %v1064 = vadd.f32 %v837, %v1063
        %1065 = vmatprep.mubr.bf16.mxu0 0
        %1066 = vmatmul.mubr.bf16.gmra.mrb[0].mxu0 %v923
        %v1067 = vpop.f32.mrb[0].mxu0
        %v1068 = vadd.f32 %v833, %v1067
        %v1069 = vpop.f32.mrb[0].mxu0
        %v1070 = vadd.f32 %v837, %v1069
        %v1071 = vpop.f32.mrb[0].mxu0
        %v1072 = vadd.f32 %v833, %v1071
        %v1073 = vpop.f32.mrb[0].mxu0
        %v1074 = vadd.f32 %v837, %v1073
        %1075 = vmatprep.mubr.bf16.mxu0 0
        %1076 = vmatmul.mubr.bf16.gmra.mrb[0].mxu0 %v926
        %v1077 = vpop.f32.mrb[0].mxu0
        %v1078 = vadd.f32 %v833, %v1077
        %v1079 = vpop.f32.mrb[0].mxu0
        %v1080 = vadd.f32 %v837, %v1079
        %v1081 = vpop.f32.mrb[0].mxu0
        %v1082 = vadd.f32 %v833, %v1081
        %v1083 = vpop.f32.mrb[0].mxu0
        %v1084 = vadd.f32 %v837, %v1083
        %1085 = vmatprep.mubr.bf16.mxu0 0
        %1086 = vmatmul.mubr.bf16.gmra.mrb[0].mxu0 %v929
        %v1087 = vpop.f32.mrb[0].mxu0
        %v1088 = vadd.f32 %v833, %v1087
        %v1089 = vpop.f32.mrb[0].mxu0
        %v1090 = vadd.f32 %v837, %v1089
        %v1091 = vpop.f32.mrb[0].mxu0
        %v1092 = vadd.f32 %v833, %v1091
        %v1093 = vpop.f32.mrb[0].mxu0
        %v1094 = vadd.f32 %v837, %v1093
        %1095 = vmatprep.mubr.bf16.mxu0 0
        %1096 = vmatmul.mubr.bf16.gmra.mrb[0].mxu0 %v932
        %v1097 = vpop.f32.mrb[0].mxu0
        %v1098 = vadd.f32 %v833, %v1097
        %v1099 = vpop.f32.mrb[0].mxu0
        %v1100 = vadd.f32 %v837, %v1099
        %v1101 = vpop.f32.mrb[0].mxu0
        %v1102 = vadd.f32 %v833, %v1101
        %v1103 = vpop.f32.mrb[0].mxu0
        %v1104 = vadd.f32 %v837, %v1103
        %1105 = vmatprep.mubr.bf16.mxu0 0
        %1106 = vmatmul.mubr.bf16.gmra.mrb[0].mxu0 %v935
        %v1107 = vpop.f32.mrb[0].mxu0
        %v1108 = vadd.f32 %v833, %v1107
        %v1109 = vpop.f32.mrb[0].mxu0
        %v1110 = vadd.f32 %v837, %v1109
        %v1111 = vpop.f32.mrb[0].mxu0
        %v1112 = vadd.f32 %v833, %v1111
        %v1113 = vpop.f32.mrb[0].mxu0
        %v1114 = vadd.f32 %v837, %v1113
        %1115 = vmatprep.mubr.bf16.mxu0 0
        %1116 = vmatmul.mubr.bf16.gmra.mrb[0].mxu0 %v938
        %v1117 = vpop.f32.mrb[0].mxu0
        %v1118 = vadd.f32 %v833, %v1117
        %v1119 = vpop.f32.mrb[0].mxu0
        %v1120 = vadd.f32 %v837, %v1119
        %v1121 = vpop.f32.mrb[0].mxu0
        %v1122 = vadd.f32 %v833, %v1121
        %v1123 = vpop.f32.mrb[0].mxu0
        %v1124 = vadd.f32 %v837, %v1123
        %1125 = vmatprep.mubr.bf16.mxu0 0
        %1126 = vmatmul.mubr.bf16.gmra.mrb[0].mxu0 %v941
        %v1127 = vpop.f32.mrb[0].mxu0
        %v1128 = vadd.f32 %v833, %v1127
        %v1129 = vpop.f32.mrb[0].mxu0
        %v1130 = vadd.f32 %v837, %v1129
        %v1131 = vpop.f32.mrb[0].mxu0
        %v1132 = vadd.f32 %v833, %v1131
        %v1133 = vpop.f32.mrb[0].mxu0
        %v1134 = vadd.f32 %v837, %v1133
        %1135 = vmatprep.mubr.bf16.mxu0 0
        %1136 = vmatmul.mubr.bf16.gmra.mrb[0].mxu0 %v944
        %v1137 = vpop.f32.mrb[0].mxu0
        %v1138 = vadd.f32 %v833, %v1137
        %v1139 = vpop.f32.mrb[0].mxu0
        %v1140 = vadd.f32 %v837, %v1139
        %v1141 = vpop.f32.mrb[0].mxu0
        %v1142 = vadd.f32 %v833, %v1141
        %v1143 = vpop.f32.mrb[0].mxu0
        %v1144 = vadd.f32 %v837, %v1143
        %1145 = vdwg.mxu0
        %v1146 = vmax.f32 %v988, 0.0
        %v1147 = vmax.f32 %v990, 0.0
        %v1148 = vmax.f32 %v992, 0.0
        %v1149 = vmax.f32 %v994, 0.0
        %v1150 = vmax.f32 %v998, 0.0
        %v1151 = vmax.f32 %v1000, 0.0
        %v1152 = vmax.f32 %v1002, 0.0
        %v1153 = vmax.f32 %v1004, 0.0
        %v1154 = vmax.f32 %v1008, 0.0
        %v1155 = vmax.f32 %v1010, 0.0
        %v1156 = vmax.f32 %v1012, 0.0
        %v1157 = vmax.f32 %v1014, 0.0
        %v1158 = vmax.f32 %v1018, 0.0
        %v1159 = vmax.f32 %v1020, 0.0
        %v1160 = vmax.f32 %v1022, 0.0
        %v1161 = vmax.f32 %v1024, 0.0
        %v1162 = vmax.f32 %v1028, 0.0
        %v1163 = vmax.f32 %v1030, 0.0
        %v1164 = vmax.f32 %v1032, 0.0
        %v1165 = vmax.f32 %v1034, 0.0
        %v1166 = vmax.f32 %v1038, 0.0
        %v1167 = vmax.f32 %v1040, 0.0
        %v1168 = vmax.f32 %v1042, 0.0
        %v1169 = vmax.f32 %v1044, 0.0
        %v1170 = vmax.f32 %v1048, 0.0
        %v1171 = vmax.f32 %v1050, 0.0
        %v1172 = vmax.f32 %v1052, 0.0
        %v1173 = vmax.f32 %v1054, 0.0
        %v1174 = vmax.f32 %v1058, 0.0
        %v1175 = vmax.f32 %v1060, 0.0
        %v1176 = vmax.f32 %v1062, 0.0
        %v1177 = vmax.f32 %v1064, 0.0
        %v1178 = vmax.f32 %v1068, 0.0
        %v1179 = vmax.f32 %v1070, 0.0
        %v1180 = vmax.f32 %v1072, 0.0
        %v1181 = vmax.f32 %v1074, 0.0
        %v1182 = vmax.f32 %v1078, 0.0
        %v1183 = vmax.f32 %v1080, 0.0
        %v1184 = vmax.f32 %v1082, 0.0
        %v1185 = vmax.f32 %v1084, 0.0
        %v1186 = vmax.f32 %v1088, 0.0
        %v1187 = vmax.f32 %v1090, 0.0
        %v1188 = vmax.f32 %v1092, 0.0
        %v1189 = vmax.f32 %v1094, 0.0
        %v1190 = vmax.f32 %v1098, 0.0
        %v1191 = vmax.f32 %v1100, 0.0
        %v1192 = vmax.f32 %v1102, 0.0
        %v1193 = vmax.f32 %v1104, 0.0
        %v1194 = vmax.f32 %v1108, 0.0
        %v1195 = vmax.f32 %v1110, 0.0
        %v1196 = vmax.f32 %v1112, 0.0
        %v1197 = vmax.f32 %v1114, 0.0
        %v1198 = vmax.f32 %v1118, 0.0
        %v1199 = vmax.f32 %v1120, 0.0
        %v1200 = vmax.f32 %v1122, 0.0
        %v1201 = vmax.f32 %v1124, 0.0
        %v1202 = vmax.f32 %v1128, 0.0
        %v1203 = vmax.f32 %v1130, 0.0
        %v1204 = vmax.f32 %v1132, 0.0
        %v1205 = vmax.f32 %v1134, 0.0
        %v1206 = vmax.f32 %v1138, 0.0
        %v1207 = vmax.f32 %v1140, 0.0
        %v1208 = vmax.f32 %v1142, 0.0
        %v1209 = vmax.f32 %v1144, 0.0
        %v1210 = vpack.c.bf16 %v1148, %v1146
        %v1211 = vpack.c.bf16 %v1152, %v1150
        %v1212 = vpack.c.bf16 %v1156, %v1154
        %v1213 = vpack.c.bf16 %v1160, %v1158
        %v1214 = vpack.c.bf16 %v1164, %v1162
        %v1215 = vpack.c.bf16 %v1168, %v1166
        %v1216 = vpack.c.bf16 %v1172, %v1170
        %v1217 = vpack.c.bf16 %v1176, %v1174
        %v1218 = vpack.c.bf16 %v1180, %v1178
        %v1219 = vpack.c.bf16 %v1184, %v1182
        %v1220 = vpack.c.bf16 %v1188, %v1186
        %v1221 = vpack.c.bf16 %v1192, %v1190
        %v1222 = vpack.c.bf16 %v1196, %v1194
        %v1223 = vpack.c.bf16 %v1200, %v1198
        %v1224 = vpack.c.bf16 %v1204, %v1202
        %v1225 = vpack.c.bf16 %v1208, %v1206
        %v1226 = vpack.c.bf16 %v1149, %v1147
        %v1227 = vpack.c.bf16 %v1153, %v1151
        %v1228 = vpack.c.bf16 %v1157, %v1155
        %v1229 = vpack.c.bf16 %v1161, %v1159
        %v1230 = vpack.c.bf16 %v1165, %v1163
        %v1231 = vpack.c.bf16 %v1169, %v1167
        %v1232 = vpack.c.bf16 %v1173, %v1171
        %v1233 = vpack.c.bf16 %v1177, %v1175
        %v1234 = vpack.c.bf16 %v1181, %v1179
        %v1235 = vpack.c.bf16 %v1185, %v1183
        %v1236 = vpack.c.bf16 %v1189, %v1187
        %v1237 = vpack.c.bf16 %v1193, %v1191
        %v1238 = vpack.c.bf16 %v1197, %v1195
        %v1239 = vpack.c.bf16 %v1201, %v1199
        %v1240 = vpack.c.bf16 %v1205, %v1203
        %v1241 = vpack.c.bf16 %v1209, %v1207
        %v1242 = vunpack.c.l.bf16 %v386
        %v1243 = vunpack.c.l.bf16 %v387
        %v1244 = vunpack.c.l.bf16 %v388
        %v1245 = vunpack.c.l.bf16 %v389
        %v1246 = vunpack.c.l.bf16 %v390
        %v1247 = vunpack.c.l.bf16 %v391
        %v1248 = vunpack.c.l.bf16 %v392
        %v1249 = vunpack.c.l.bf16 %v393
        %v1250 = vunpack.c.l.bf16 %v394
        %v1251 = vunpack.c.l.bf16 %v395
        %v1252 = vunpack.c.l.bf16 %v396
        %v1253 = vunpack.c.l.bf16 %v397
        %v1254 = vunpack.c.l.bf16 %v398
        %v1255 = vunpack.c.l.bf16 %v399
        %v1256 = vunpack.c.l.bf16 %v400
        %v1257 = vunpack.c.l.bf16 %v401
        %v1258 = vunpack.c.l.bf16 %v402
        %v1259 = vunpack.c.l.bf16 %v403
        %v1260 = vunpack.c.l.bf16 %v404
        %v1261 = vunpack.c.l.bf16 %v405
        %v1262 = vunpack.c.l.bf16 %v406
        %v1263 = vunpack.c.l.bf16 %v407
        %v1264 = vunpack.c.l.bf16 %v408
        %v1265 = vunpack.c.l.bf16 %v409
        %v1266 = vunpack.c.l.bf16 %v410
        %v1267 = vunpack.c.l.bf16 %v411
        %v1268 = vunpack.c.l.bf16 %v412
        %v1269 = vunpack.c.l.bf16 %v413
        %v1270 = vunpack.c.l.bf16 %v414
        %v1271 = vunpack.c.l.bf16 %v415
        %v1272 = vunpack.c.l.bf16 %v416
        %v1273 = vunpack.c.l.bf16 %v417
        %v1274 = vunpack.c.l.bf16 %v418
        %v1275 = vunpack.c.l.bf16 %v419
        %v1276 = vunpack.c.l.bf16 %v420
        %v1277 = vunpack.c.l.bf16 %v421
        %v1278 = vunpack.c.l.bf16 %v422
        %v1279 = vunpack.c.l.bf16 %v423
        %v1280 = vunpack.c.l.bf16 %v424
        %v1281 = vunpack.c.l.bf16 %v425
        %v1282 = vunpack.c.l.bf16 %v426
        %v1283 = vunpack.c.l.bf16 %v427
        %v1284 = vunpack.c.l.bf16 %v428
        %v1285 = vunpack.c.l.bf16 %v429
        %v1286 = vunpack.c.l.bf16 %v430
        %v1287 = vunpack.c.l.bf16 %v431
        %v1288 = vunpack.c.l.bf16 %v432
        %v1289 = vunpack.c.l.bf16 %v433
        %v1290 = vunpack.c.l.bf16 %v434
        %v1291 = vunpack.c.l.bf16 %v435
        %v1292 = vunpack.c.l.bf16 %v436
        %v1293 = vunpack.c.l.bf16 %v437
        %v1294 = vunpack.c.l.bf16 %v438
        %v1295 = vunpack.c.l.bf16 %v439
        %vm1350 = vcmask 1046528
        %v1351 = vrot.slane %v1242, 1
        %v1352 = vrot.slane %v1243, 1
        %v1353 = vsel %vm1350, %v1351, %v1352
        %v1354 = vrot.slane %v1244, 1
        %v1355 = vsel %vm1350, %v1352, %v1354
        %v1356 = vrot.slane %v1245, 1
        %v1357 = vrot.slane %v1246, 1
        %v1358 = vsel %vm1350, %v1356, %v1357
        %v1359 = vrot.slane %v1247, 1
        %v1360 = vsel %vm1350, %v1357, %v1359
        %v1361 = vrot.slane %v1248, 1
        %v1362 = vrot.slane %v1249, 1
        %v1363 = vsel %vm1350, %v1361, %v1362
        %v1364 = vrot.slane %v1250, 1
        %v1365 = vsel %vm1350, %v1362, %v1364
        %v1366 = vrot.slane %v1251, 1
        %v1367 = vrot.slane %v1252, 1
        %v1368 = vsel %vm1350, %v1366, %v1367
        %v1369 = vrot.slane %v1253, 1
        %v1370 = vsel %vm1350, %v1367, %v1369
        %v1371 = vrot.slane %v1254, 1
        %v1372 = vrot.slane %v1255, 1
        %v1373 = vsel %vm1350, %v1371, %v1372
        %v1374 = vrot.slane %v1256, 1
        %v1375 = vsel %vm1350, %v1372, %v1374
        %v1376 = vrot.slane %v1257, 1
        %v1377 = vrot.slane %v1258, 1
        %v1378 = vsel %vm1350, %v1376, %v1377
        %v1379 = vrot.slane %v1259, 1
        %v1380 = vsel %vm1350, %v1377, %v1379
        %v1381 = vrot.slane %v1260, 1
        %v1382 = vrot.slane %v1261, 1
        %v1383 = vsel %vm1350, %v1381, %v1382
        %v1384 = vrot.slane %v1262, 1
        %v1385 = vsel %vm1350, %v1382, %v1384
        %v1386 = vrot.slane %v1263, 1
        %v1387 = vrot.slane %v1264, 1
        %v1388 = vsel %vm1350, %v1386, %v1387
        %v1389 = vrot.slane %v1265, 1
        %v1390 = vsel %vm1350, %v1387, %v1389
        %v1391 = vrot.slane %v1266, 1
        %v1392 = vrot.slane %v1267, 1
        %v1393 = vsel %vm1350, %v1391, %v1392
        %v1394 = vrot.slane %v1268, 1
        %v1395 = vsel %vm1350, %v1392, %v1394
        %v1396 = vrot.slane %v1269, 1
        %v1397 = vrot.slane %v1270, 1
        %v1398 = vsel %vm1350, %v1396, %v1397
        %v1399 = vrot.slane %v1271, 1
        %v1400 = vsel %vm1350, %v1397, %v1399
        %v1401 = vrot.slane %v1272, 1
        %v1402 = vrot.slane %v1273, 1
        %v1403 = vsel %vm1350, %v1401, %v1402
        %v1404 = vrot.slane %v1274, 1
        %v1405 = vsel %vm1350, %v1402, %v1404
        %v1406 = vrot.slane %v1275, 1
        %v1407 = vrot.slane %v1276, 1
        %v1408 = vsel %vm1350, %v1406, %v1407
        %v1409 = vrot.slane %v1277, 1
        %v1410 = vsel %vm1350, %v1407, %v1409
        %v1411 = vrot.slane %v1278, 1
        %v1412 = vrot.slane %v1279, 1
        %v1413 = vsel %vm1350, %v1411, %v1412
        %v1414 = vrot.slane %v1280, 1
        %v1415 = vsel %vm1350, %v1412, %v1414
        %v1416 = vrot.slane %v1281, 1
        %v1417 = vrot.slane %v1282, 1
        %v1418 = vsel %vm1350, %v1416, %v1417
        %v1419 = vrot.slane %v1283, 1
        %v1420 = vsel %vm1350, %v1417, %v1419
        %v1421 = vrot.slane %v1284, 1
        %v1422 = vrot.slane %v1285, 1
        %v1423 = vsel %vm1350, %v1421, %v1422
        %v1424 = vrot.slane %v1286, 1
        %v1425 = vsel %vm1350, %v1422, %v1424
        %v1426 = vrot.slane %v1287, 1
        %v1427 = vrot.slane %v1288, 1
        %v1428 = vsel %vm1350, %v1426, %v1427
        %v1429 = vrot.slane %v1289, 1
        %v1430 = vsel %vm1350, %v1427, %v1429
        %v1431 = vrot.slane %v1290, 1
        %v1432 = vrot.slane %v1291, 1
        %v1433 = vsel %vm1350, %v1431, %v1432
        %v1434 = vrot.slane %v1292, 1
        %v1435 = vsel %vm1350, %v1432, %v1434
        %v1436 = vrot.slane %v1293, 1
        %v1437 = vrot.slane %v1294, 1
        %v1438 = vsel %vm1350, %v1436, %v1437
        %v1439 = vrot.slane %v1295, 1
        %v1440 = vsel %vm1350, %v1437, %v1439
        %v1477 = vadd.f32 %v1242, %v1353
        %v1478 = vadd.f32 %v1243, %v1355
        %v1479 = vadd.f32 %v1245, %v1358
        %v1480 = vadd.f32 %v1246, %v1360
        %v1481 = vadd.f32 %v1248, %v1363
        %v1482 = vadd.f32 %v1249, %v1365
        %v1483 = vadd.f32 %v1251, %v1368
        %v1484 = vadd.f32 %v1252, %v1370
        %v1485 = vadd.f32 %v1254, %v1373
        %v1486 = vadd.f32 %v1255, %v1375
        %v1487 = vadd.f32 %v1257, %v1378
        %v1488 = vadd.f32 %v1258, %v1380
        %v1489 = vadd.f32 %v1260, %v1383
        %v1490 = vadd.f32 %v1261, %v1385
        %v1491 = vadd.f32 %v1263, %v1388
        %v1492 = vadd.f32 %v1264, %v1390
        %v1493 = vadd.f32 %v1266, %v1393
        %v1494 = vadd.f32 %v1267, %v1395
        %v1495 = vadd.f32 %v1269, %v1398
        %v1496 = vadd.f32 %v1270, %v1400
        %v1497 = vadd.f32 %v1272, %v1403
        %v1498 = vadd.f32 %v1273, %v1405
        %v1499 = vadd.f32 %v1275, %v1408
        %v1500 = vadd.f32 %v1276, %v1410
        %v1501 = vadd.f32 %v1278, %v1413
        %v1502 = vadd.f32 %v1279, %v1415
        %v1503 = vadd.f32 %v1281, %v1418
        %v1504 = vadd.f32 %v1282, %v1420
        %v1505 = vadd.f32 %v1284, %v1423
        %v1506 = vadd.f32 %v1285, %v1425
        %v1507 = vadd.f32 %v1287, %v1428
        %v1508 = vadd.f32 %v1288, %v1430
        %v1509 = vadd.f32 %v1290, %v1433
        %v1510 = vadd.f32 %v1291, %v1435
        %v1511 = vadd.f32 %v1293, %v1438
        %v1512 = vadd.f32 %v1294, %v1440
        %vm1513 = vcmask 1045504
        %v1514 = vrot.slane %v1242, 2
        %v1515 = vrot.slane %v1243, 2
        %v1516 = vsel %vm1513, %v1514, %v1515
        %v1517 = vrot.slane %v1244, 2
        %v1518 = vsel %vm1513, %v1515, %v1517
        %v1519 = vrot.slane %v1245, 2
        %v1520 = vrot.slane %v1246, 2
        %v1521 = vsel %vm1513, %v1519, %v1520
        %v1522 = vrot.slane %v1247, 2
        %v1523 = vsel %vm1513, %v1520, %v1522
        %v1524 = vrot.slane %v1248, 2
        %v1525 = vrot.slane %v1249, 2
        %v1526 = vsel %vm1513, %v1524, %v1525
        %v1527 = vrot.slane %v1250, 2
        %v1528 = vsel %vm1513, %v1525, %v1527
        %v1529 = vrot.slane %v1251, 2
        %v1530 = vrot.slane %v1252, 2
        %v1531 = vsel %vm1513, %v1529, %v1530
        %v1532 = vrot.slane %v1253, 2
        %v1533 = vsel %vm1513, %v1530, %v1532
        %v1534 = vrot.slane %v1254, 2
        %v1535 = vrot.slane %v1255, 2
        %v1536 = vsel %vm1513, %v1534, %v1535
        %v1537 = vrot.slane %v1256, 2
        %v1538 = vsel %vm1513, %v1535, %v1537
        %v1539 = vrot.slane %v1257, 2
        %v1540 = vrot.slane %v1258, 2
        %v1541 = vsel %vm1513, %v1539, %v1540
        %v1542 = vrot.slane %v1259, 2
        %v1543 = vsel %vm1513, %v1540, %v1542
        %v1544 = vrot.slane %v1260, 2
        %v1545 = vrot.slane %v1261, 2
        %v1546 = vsel %vm1513, %v1544, %v1545
        %v1547 = vrot.slane %v1262, 2
        %v1548 = vsel %vm1513, %v1545, %v1547
        %v1549 = vrot.slane %v1263, 2
        %v1550 = vrot.slane %v1264, 2
        %v1551 = vsel %vm1513, %v1549, %v1550
        %v1552 = vrot.slane %v1265, 2
        %v1553 = vsel %vm1513, %v1550, %v1552
        %v1554 = vrot.slane %v1266, 2
        %v1555 = vrot.slane %v1267, 2
        %v1556 = vsel %vm1513, %v1554, %v1555
        %v1557 = vrot.slane %v1268, 2
        %v1558 = vsel %vm1513, %v1555, %v1557
        %v1559 = vrot.slane %v1269, 2
        %v1560 = vrot.slane %v1270, 2
        %v1561 = vsel %vm1513, %v1559, %v1560
        %v1562 = vrot.slane %v1271, 2
        %v1563 = vsel %vm1513, %v1560, %v1562
        %v1564 = vrot.slane %v1272, 2
        %v1565 = vrot.slane %v1273, 2
        %v1566 = vsel %vm1513, %v1564, %v1565
        %v1567 = vrot.slane %v1274, 2
        %v1568 = vsel %vm1513, %v1565, %v1567
        %v1569 = vrot.slane %v1275, 2
        %v1570 = vrot.slane %v1276, 2
        %v1571 = vsel %vm1513, %v1569, %v1570
        %v1572 = vrot.slane %v1277, 2
        %v1573 = vsel %vm1513, %v1570, %v1572
        %v1574 = vrot.slane %v1278, 2
        %v1575 = vrot.slane %v1279, 2
        %v1576 = vsel %vm1513, %v1574, %v1575
        %v1577 = vrot.slane %v1280, 2
        %v1578 = vsel %vm1513, %v1575, %v1577
        %v1579 = vrot.slane %v1281, 2
        %v1580 = vrot.slane %v1282, 2
        %v1581 = vsel %vm1513, %v1579, %v1580
        %v1582 = vrot.slane %v1283, 2
        %v1583 = vsel %vm1513, %v1580, %v1582
        %v1584 = vrot.slane %v1284, 2
        %v1585 = vrot.slane %v1285, 2
        %v1586 = vsel %vm1513, %v1584, %v1585
        %v1587 = vrot.slane %v1286, 2
        %v1588 = vsel %vm1513, %v1585, %v1587
        %v1589 = vrot.slane %v1287, 2
        %v1590 = vrot.slane %v1288, 2
        %v1591 = vsel %vm1513, %v1589, %v1590
        %v1592 = vrot.slane %v1289, 2
        %v1593 = vsel %vm1513, %v1590, %v1592
        %v1594 = vrot.slane %v1290, 2
        %v1595 = vrot.slane %v1291, 2
        %v1596 = vsel %vm1513, %v1594, %v1595
        %v1597 = vrot.slane %v1292, 2
        %v1598 = vsel %vm1513, %v1595, %v1597
        %v1599 = vrot.slane %v1293, 2
        %v1600 = vrot.slane %v1294, 2
        %v1601 = vsel %vm1513, %v1599, %v1600
        %v1602 = vrot.slane %v1295, 2
        %v1603 = vsel %vm1513, %v1600, %v1602
        %v1640 = vadd.f32 %v1477, %v1516
        %v1641 = vadd.f32 %v1478, %v1518
        %v1642 = vadd.f32 %v1479, %v1521
        %v1643 = vadd.f32 %v1480, %v1523
        %v1644 = vadd.f32 %v1481, %v1526
        %v1645 = vadd.f32 %v1482, %v1528
        %v1646 = vadd.f32 %v1483, %v1531
        %v1647 = vadd.f32 %v1484, %v1533
        %v1648 = vadd.f32 %v1485, %v1536
        %v1649 = vadd.f32 %v1486, %v1538
        %v1650 = vadd.f32 %v1487, %v1541
        %v1651 = vadd.f32 %v1488, %v1543
        %v1652 = vadd.f32 %v1489, %v1546
        %v1653 = vadd.f32 %v1490, %v1548
        %v1654 = vadd.f32 %v1491, %v1551
        %v1655 = vadd.f32 %v1492, %v1553
        %v1656 = vadd.f32 %v1493, %v1556
        %v1657 = vadd.f32 %v1494, %v1558
        %v1658 = vadd.f32 %v1495, %v1561
        %v1659 = vadd.f32 %v1496, %v1563
        %v1660 = vadd.f32 %v1497, %v1566
        %v1661 = vadd.f32 %v1498, %v1568
        %v1662 = vadd.f32 %v1499, %v1571
        %v1663 = vadd.f32 %v1500, %v1573
        %v1664 = vadd.f32 %v1501, %v1576
        %v1665 = vadd.f32 %v1502, %v1578
        %v1666 = vadd.f32 %v1503, %v1581
        %v1667 = vadd.f32 %v1504, %v1583
        %v1668 = vadd.f32 %v1505, %v1586
        %v1669 = vadd.f32 %v1506, %v1588
        %v1670 = vadd.f32 %v1507, %v1591
        %v1671 = vadd.f32 %v1508, %v1593
        %v1672 = vadd.f32 %v1509, %v1596
        %v1673 = vadd.f32 %v1510, %v1598
        %v1674 = vadd.f32 %v1511, %v1601
        %v1675 = vadd.f32 %v1512, %v1603
        %v1676 = vadd.f32 %v1640, %v1642
        %v1677 = vadd.f32 %v1641, %v1643
        %v1678 = vadd.f32 %v1642, %v1644
        %v1679 = vadd.f32 %v1643, %v1645
        %v1680 = vadd.f32 %v1644, %v1646
        %v1681 = vadd.f32 %v1645, %v1647
        %v1682 = vadd.f32 %v1646, %v1648
        %v1683 = vadd.f32 %v1647, %v1649
        %v1684 = vadd.f32 %v1648, %v1650
        %v1685 = vadd.f32 %v1649, %v1651
        %v1686 = vadd.f32 %v1650, %v1652
        %v1687 = vadd.f32 %v1651, %v1653
        %v1688 = vadd.f32 %v1652, %v1654
        %v1689 = vadd.f32 %v1653, %v1655
        %v1690 = vadd.f32 %v1654, %v1656
        %v1691 = vadd.f32 %v1655, %v1657
        %v1692 = vadd.f32 %v1656, %v1658
        %v1693 = vadd.f32 %v1657, %v1659
        %v1694 = vadd.f32 %v1658, %v1660
        %v1695 = vadd.f32 %v1659, %v1661
        %v1696 = vadd.f32 %v1660, %v1662
        %v1697 = vadd.f32 %v1661, %v1663
        %v1698 = vadd.f32 %v1662, %v1664
        %v1699 = vadd.f32 %v1663, %v1665
        %v1700 = vadd.f32 %v1664, %v1666
        %v1701 = vadd.f32 %v1665, %v1667
        %v1702 = vadd.f32 %v1666, %v1668
        %v1703 = vadd.f32 %v1667, %v1669
        %v1704 = vadd.f32 %v1668, %v1670
        %v1705 = vadd.f32 %v1669, %v1671
        %v1706 = vadd.f32 %v1670, %v1672
        %v1707 = vadd.f32 %v1671, %v1673
        %v1708 = vadd.f32 %v1676, %v1644
        %v1709 = vadd.f32 %v1677, %v1645
        %v1710 = vadd.f32 %v1678, %v1646
        %v1711 = vadd.f32 %v1679, %v1647
        %v1712 = vadd.f32 %v1680, %v1648
        %v1713 = vadd.f32 %v1681, %v1649
        %v1714 = vadd.f32 %v1682, %v1650
        %v1715 = vadd.f32 %v1683, %v1651
        %v1716 = vadd.f32 %v1684, %v1652
        %v1717 = vadd.f32 %v1685, %v1653
        %v1718 = vadd.f32 %v1686, %v1654
        %v1719 = vadd.f32 %v1687, %v1655
        %v1720 = vadd.f32 %v1688, %v1656
        %v1721 = vadd.f32 %v1689, %v1657
        %v1722 = vadd.f32 %v1690, %v1658
        %v1723 = vadd.f32 %v1691, %v1659
        %v1724 = vadd.f32 %v1692, %v1660
        %v1725 = vadd.f32 %v1693, %v1661
        %v1726 = vadd.f32 %v1694, %v1662
        %v1727 = vadd.f32 %v1695, %v1663
        %v1728 = vadd.f32 %v1696, %v1664
        %v1729 = vadd.f32 %v1697, %v1665
        %v1730 = vadd.f32 %v1698, %v1666
        %v1731 = vadd.f32 %v1699, %v1667
        %v1732 = vadd.f32 %v1700, %v1668
        %v1733 = vadd.f32 %v1701, %v1669
        %v1734 = vadd.f32 %v1702, %v1670
        %v1735 = vadd.f32 %v1703, %v1671
        %v1736 = vadd.f32 %v1704, %v1672
        %v1737 = vadd.f32 %v1705, %v1673
        %v1738 = vadd.f32 %v1706, %v1674
        %v1739 = vadd.f32 %v1707, %v1675
        %v1740 = vpack.c.bf16 %v1709, %v1708
        %v1741 = vpack.c.bf16 %v1711, %v1710
        %v1742 = vpack.c.bf16 %v1713, %v1712
        %v1743 = vpack.c.bf16 %v1715, %v1714
        %v1744 = vpack.c.bf16 %v1717, %v1716
        %v1745 = vpack.c.bf16 %v1719, %v1718
        %v1746 = vpack.c.bf16 %v1721, %v1720
        %v1747 = vpack.c.bf16 %v1723, %v1722
        %v1748 = vpack.c.bf16 %v1725, %v1724
        %v1749 = vpack.c.bf16 %v1727, %v1726
        %v1750 = vpack.c.bf16 %v1729, %v1728
        %v1751 = vpack.c.bf16 %v1731, %v1730
        %v1752 = vpack.c.bf16 %v1733, %v1732
        %v1753 = vpack.c.bf16 %v1735, %v1734
        %v1754 = vpack.c.bf16 %v1737, %v1736
        %v1755 = vpack.c.bf16 %v1739, %v1738
        %v1756 = vld [vmem:[%s3] sm:$0x3]
        %v1757 = vld [vmem:[%s4] sm:$0x1]
        %v1759 = vlaneseq
        %v1760 = vshrl.u32 %v1759, 7
        %v1761 = vsub.s32 0, %v1760
        %v1762 = vrot.slane %v1757, %v1761
        %v1765 = vsel %vm897, %v1740, 0
        %v1768 = vsel %vm897, %v1741, 0
        %v1771 = vsel %vm897, %v1742, 0
        %v1774 = vsel %vm897, %v1743, 0
        %v1777 = vsel %vm897, %v1744, 0
        %v1780 = vsel %vm897, %v1745, 0
        %v1783 = vsel %vm897, %v1746, 0
        %v1786 = vsel %vm897, %v1747, 0
        %v1789 = vsel %vm897, %v1748, 0
        %v1792 = vsel %vm897, %v1749, 0
        %v1795 = vsel %vm897, %v1750, 0
        %v1798 = vsel %vm897, %v1751, 0
        %v1801 = vsel %vm897, %v1752, 0
        %v1804 = vsel %vm897, %v1753, 0
        %v1807 = vsel %vm897, %v1754, 0
        %v1810 = vsel %vm897, %v1755, 0
        %v1813 = vsel %vm946, %v1756, 0
        %1815 = vmatprep.subr.bf16.mxu0 0
        %1816 = vmatpush1.bf16.msra.mxu0 %v1813
        %1817 = vmatprep.subr.bf16.mxu0 0
        %1818 = vmatpush1.bf16.msra.mxu0 0
        %1819 = vmatprep.subr.bf16.mxu0 0
        %1820 = vmatpush1.bf16.msra.mxu0 0
        %1821 = vmatprep.subr.bf16.mxu0 0
        %1822 = vmatpush1.bf16.msra.mxu0 0
        %1823 = vmatprep.subr.bf16.mxu0 0
        %1824 = vmatpush1.bf16.msra.mxu0 0
        %1825 = vmatprep.subr.bf16.mxu0 0
        %1826 = vmatpush1.bf16.msra.mxu0 0
        %1827 = vmatprep.subr.bf16.mxu0 0
        %1828 = vmatpush1.bf16.msra.mxu0 0
        %1829 = vmatprep.subr.bf16.mxu0 0
        %1830 = vmatpush1.bf16.msra.mxu0 0
        %1831 = vmatprep.subr.bf16.mxu0 0
        %1832 = vmatpush1.bf16.msra.mxu0 0
        %1833 = vmatprep.subr.bf16.mxu0 0
        %1834 = vmatpush1.bf16.msra.mxu0 0
        %1835 = vmatprep.subr.bf16.mxu0 0
        %1836 = vmatpush1.bf16.msra.mxu0 0
        %1837 = vmatprep.subr.bf16.mxu0 0
        %1838 = vmatpush1.bf16.msra.mxu0 0
        %1839 = vmatprep.subr.bf16.mxu0 0
        %1840 = vmatpush1.bf16.msra.mxu0 0
        %1841 = vmatprep.subr.bf16.mxu0 0
        %1842 = vmatpush1.bf16.msra.mxu0 0
        %1843 = vmatprep.subr.bf16.mxu0 0
        %1844 = vmatpush1.bf16.msra.mxu0 0
        %1845 = vmatprep.subr.bf16.mxu0 0
        %1846 = vmatpush1.bf16.msra.mxu0 0
        %1847 = vmatprep.mubr.bf16.mxu0 0
        %1848 = vmatmul.mubr.bf16.gmra.mrb[0].mxu0 %v1765
        %v1849 = vpop.f32.mrb[0].mxu0
        %v1850 = vadd.f32 %v1762, %v1849
        %v1851 = vpop.f32.mrb[0].mxu0
        %v1852 = vpop.f32.mrb[0].mxu0
        %v1853 = vadd.f32 %v1762, %v1852
        %v1854 = vpop.f32.mrb[0].mxu0
        %1855 = vmatprep.mubr.bf16.mxu0 0
        %1856 = vmatmul.mubr.bf16.gmra.mrb[0].mxu0 %v1768
        %v1857 = vpop.f32.mrb[0].mxu0
        %v1858 = vadd.f32 %v1762, %v1857
        %v1859 = vpop.f32.mrb[0].mxu0
        %v1860 = vpop.f32.mrb[0].mxu0
        %v1861 = vadd.f32 %v1762, %v1860
        %v1862 = vpop.f32.mrb[0].mxu0
        %1863 = vmatprep.mubr.bf16.mxu0 0
        %1864 = vmatmul.mubr.bf16.gmra.mrb[0].mxu0 %v1771
        %v1865 = vpop.f32.mrb[0].mxu0
        %v1866 = vadd.f32 %v1762, %v1865
        %v1867 = vpop.f32.mrb[0].mxu0
        %v1868 = vpop.f32.mrb[0].mxu0
        %v1869 = vadd.f32 %v1762, %v1868
        %v1870 = vpop.f32.mrb[0].mxu0
        %1871 = vmatprep.mubr.bf16.mxu0 0
        %1872 = vmatmul.mubr.bf16.gmra.mrb[0].mxu0 %v1774
        %v1873 = vpop.f32.mrb[0].mxu0
        %v1874 = vadd.f32 %v1762, %v1873
        %v1875 = vpop.f32.mrb[0].mxu0
        %v1876 = vpop.f32.mrb[0].mxu0
        %v1877 = vadd.f32 %v1762, %v1876
        %v1878 = vpop.f32.mrb[0].mxu0
        %1879 = vmatprep.mubr.bf16.mxu0 0
        %1880 = vmatmul.mubr.bf16.gmra.mrb[0].mxu0 %v1777
        %v1881 = vpop.f32.mrb[0].mxu0
        %v1882 = vadd.f32 %v1762, %v1881
        %v1883 = vpop.f32.mrb[0].mxu0
        %v1884 = vpop.f32.mrb[0].mxu0
        %v1885 = vadd.f32 %v1762, %v1884
        %v1886 = vpop.f32.mrb[0].mxu0
        %1887 = vmatprep.mubr.bf16.mxu0 0
        %1888 = vmatmul.mubr.bf16.gmra.mrb[0].mxu0 %v1780
        %v1889 = vpop.f32.mrb[0].mxu0
        %v1890 = vadd.f32 %v1762, %v1889
        %v1891 = vpop.f32.mrb[0].mxu0
        %v1892 = vpop.f32.mrb[0].mxu0
        %v1893 = vadd.f32 %v1762, %v1892
        %v1894 = vpop.f32.mrb[0].mxu0
        %1895 = vmatprep.mubr.bf16.mxu0 0
        %1896 = vmatmul.mubr.bf16.gmra.mrb[0].mxu0 %v1783
        %v1897 = vpop.f32.mrb[0].mxu0
        %v1898 = vadd.f32 %v1762, %v1897
        %v1899 = vpop.f32.mrb[0].mxu0
        %v1900 = vpop.f32.mrb[0].mxu0
        %v1901 = vadd.f32 %v1762, %v1900
        %v1902 = vpop.f32.mrb[0].mxu0
        %1903 = vmatprep.mubr.bf16.mxu0 0
        %1904 = vmatmul.mubr.bf16.gmra.mrb[0].mxu0 %v1786
        %v1905 = vpop.f32.mrb[0].mxu0
        %v1906 = vadd.f32 %v1762, %v1905
        %v1907 = vpop.f32.mrb[0].mxu0
        %v1908 = vpop.f32.mrb[0].mxu0
        %v1909 = vadd.f32 %v1762, %v1908
        %v1910 = vpop.f32.mrb[0].mxu0
        %1911 = vmatprep.mubr.bf16.mxu0 0
        %1912 = vmatmul.mubr.bf16.gmra.mrb[0].mxu0 %v1789
        %v1913 = vpop.f32.mrb[0].mxu0
        %v1914 = vadd.f32 %v1762, %v1913
        %v1915 = vpop.f32.mrb[0].mxu0
        %v1916 = vpop.f32.mrb[0].mxu0
        %v1917 = vadd.f32 %v1762, %v1916
        %v1918 = vpop.f32.mrb[0].mxu0
        %1919 = vmatprep.mubr.bf16.mxu0 0
        %1920 = vmatmul.mubr.bf16.gmra.mrb[0].mxu0 %v1792
        %v1921 = vpop.f32.mrb[0].mxu0
        %v1922 = vadd.f32 %v1762, %v1921
        %v1923 = vpop.f32.mrb[0].mxu0
        %v1924 = vpop.f32.mrb[0].mxu0
        %v1925 = vadd.f32 %v1762, %v1924
        %v1926 = vpop.f32.mrb[0].mxu0
        %1927 = vmatprep.mubr.bf16.mxu0 0
        %1928 = vmatmul.mubr.bf16.gmra.mrb[0].mxu0 %v1795
        %v1929 = vpop.f32.mrb[0].mxu0
        %v1930 = vadd.f32 %v1762, %v1929
        %v1931 = vpop.f32.mrb[0].mxu0
        %v1932 = vpop.f32.mrb[0].mxu0
        %v1933 = vadd.f32 %v1762, %v1932
        %v1934 = vpop.f32.mrb[0].mxu0
        %1935 = vmatprep.mubr.bf16.mxu0 0
        %1936 = vmatmul.mubr.bf16.gmra.mrb[0].mxu0 %v1798
        %v1937 = vpop.f32.mrb[0].mxu0
        %v1938 = vadd.f32 %v1762, %v1937
        %v1939 = vpop.f32.mrb[0].mxu0
        %v1940 = vpop.f32.mrb[0].mxu0
        %v1941 = vadd.f32 %v1762, %v1940
        %v1942 = vpop.f32.mrb[0].mxu0
        %1943 = vmatprep.mubr.bf16.mxu0 0
        %1944 = vmatmul.mubr.bf16.gmra.mrb[0].mxu0 %v1801
        %v1945 = vpop.f32.mrb[0].mxu0
        %v1946 = vadd.f32 %v1762, %v1945
        %v1947 = vpop.f32.mrb[0].mxu0
        %v1948 = vpop.f32.mrb[0].mxu0
        %v1949 = vadd.f32 %v1762, %v1948
        %v1950 = vpop.f32.mrb[0].mxu0
        %1951 = vmatprep.mubr.bf16.mxu0 0
        %1952 = vmatmul.mubr.bf16.gmra.mrb[0].mxu0 %v1804
        %v1953 = vpop.f32.mrb[0].mxu0
        %v1954 = vadd.f32 %v1762, %v1953
        %v1955 = vpop.f32.mrb[0].mxu0
        %v1956 = vpop.f32.mrb[0].mxu0
        %v1957 = vadd.f32 %v1762, %v1956
        %v1958 = vpop.f32.mrb[0].mxu0
        %1959 = vmatprep.mubr.bf16.mxu0 0
        %1960 = vmatmul.mubr.bf16.gmra.mrb[0].mxu0 %v1807
        %v1961 = vpop.f32.mrb[0].mxu0
        %v1962 = vadd.f32 %v1762, %v1961
        %v1963 = vpop.f32.mrb[0].mxu0
        %v1964 = vpop.f32.mrb[0].mxu0
        %v1965 = vadd.f32 %v1762, %v1964
        %v1966 = vpop.f32.mrb[0].mxu0
        %1967 = vmatprep.mubr.bf16.mxu0 0
        %1968 = vmatmul.mubr.bf16.gmra.mrb[0].mxu0 %v1810
        %v1969 = vpop.f32.mrb[0].mxu0
        %v1970 = vadd.f32 %v1762, %v1969
        %v1971 = vpop.f32.mrb[0].mxu0
        %v1972 = vpop.f32.mrb[0].mxu0
        %v1973 = vadd.f32 %v1762, %v1972
        %v1974 = vpop.f32.mrb[0].mxu0
        %1975 = vdwg.mxu0
        %v1976 = vmax.f32 %v1850, 0.0
        %v1977 = vmax.f32 %v1853, 0.0
        %v1978 = vmax.f32 %v1858, 0.0
        %v1979 = vmax.f32 %v1861, 0.0
        %v1980 = vmax.f32 %v1866, 0.0
        %v1981 = vmax.f32 %v1869, 0.0
        %v1982 = vmax.f32 %v1874, 0.0
        %v1983 = vmax.f32 %v1877, 0.0
        %v1984 = vmax.f32 %v1882, 0.0
        %v1985 = vmax.f32 %v1885, 0.0
        %v1986 = vmax.f32 %v1890, 0.0
        %v1987 = vmax.f32 %v1893, 0.0
        %v1988 = vmax.f32 %v1898, 0.0
        %v1989 = vmax.f32 %v1901, 0.0
        %v1990 = vmax.f32 %v1906, 0.0
        %v1991 = vmax.f32 %v1909, 0.0
        %v1992 = vmax.f32 %v1914, 0.0
        %v1993 = vmax.f32 %v1917, 0.0
        %v1994 = vmax.f32 %v1922, 0.0
        %v1995 = vmax.f32 %v1925, 0.0
        %v1996 = vmax.f32 %v1930, 0.0
        %v1997 = vmax.f32 %v1933, 0.0
        %v1998 = vmax.f32 %v1938, 0.0
        %v1999 = vmax.f32 %v1941, 0.0
        %v2000 = vmax.f32 %v1946, 0.0
        %v2001 = vmax.f32 %v1949, 0.0
        %v2002 = vmax.f32 %v1954, 0.0
        %v2003 = vmax.f32 %v1957, 0.0
        %v2004 = vmax.f32 %v1962, 0.0
        %v2005 = vmax.f32 %v1965, 0.0
        %v2006 = vmax.f32 %v1970, 0.0
        %v2007 = vmax.f32 %v1973, 0.0
        %vm2008 = vcmask 519168
        %2009 = vst.msk [vmem:[#allocation2] sm:$0xf] %vm2008, 0
        %2010 = vst.msk [vmem:[#allocation2 + $0x4] sm:$0xf] %vm2008, 0
        %2011 = vst.msk [vmem:[#allocation2 + $0x8] sm:$0xf] %vm2008, 0
        %2012 = vst.msk [vmem:[#allocation2 + $0xc] sm:$0xf] %vm2008, 0
        %vm2013 = vcmask 517120
        %2014 = vst.msk [vmem:[#allocation2 + $0x10] sm:$0x3] %vm2013, 0
        %2015 = vst.msk [vmem:[#allocation2 + $0x14] sm:$0xf] %vm2008, 0
        %2016 = vst.msk [vmem:[#allocation2 + $0x18] sm:$0xf] %vm2008, 0
        %2017 = vst.msk [vmem:[#allocation2 + $0x1c] sm:$0xf] %vm2008, 0
        %2018 = vst.msk [vmem:[#allocation2 + $0x20] sm:$0xf] %vm2008, 0
        %2019 = vst.msk [vmem:[#allocation2 + $0x24] sm:$0x3] %vm2013, 0
        %2020 = vst.msk [vmem:[#allocation2 + $0x28] sm:$0xf] %vm2008, 0
        %2021 = vst.msk [vmem:[#allocation2 + $0x2c] sm:$0xf] %vm2008, 0
        %2022 = vst.msk [vmem:[#allocation2 + $0x30] sm:$0xf] %vm2008, 0
        %2023 = vst.msk [vmem:[#allocation2 + $0x34] sm:$0xf] %vm2008, 0
        %2024 = vst.msk [vmem:[#allocation2 + $0x38] sm:$0x3] %vm2013, 0
        %2025 = vst.msk [vmem:[#allocation2 + $0x3c] sm:$0xf] %vm2008, 0
        %2026 = vst.msk [vmem:[#allocation2 + $0x40] sm:$0xf] %vm2008, 0
        %2027 = vst.msk [vmem:[#allocation2 + $0x44] sm:$0xf] %vm2008, 0
        %2028 = vst.msk [vmem:[#allocation2 + $0x48] sm:$0xf] %vm2008, 0
        %2029 = vst.msk [vmem:[#allocation2 + $0x4c] sm:$0x3] %vm2013, 0
        %2030 = vst.msk [vmem:[#allocation2 + $0x50] sm:$0xf] %vm2008, 0
        %2031 = vst.msk [vmem:[#allocation2 + $0x54] sm:$0xf] %vm2008, 0
        %2032 = vst.msk [vmem:[#allocation2 + $0x58] sm:$0xf] %vm2008, 0
        %2033 = vst.msk [vmem:[#allocation2 + $0x5c] sm:$0xf] %vm2008, 0
        %2034 = vst.msk [vmem:[#allocation2 + $0x60] sm:$0x3] %vm2013, 0
        %2035 = vst.msk [vmem:[#allocation2 + $0x64] sm:$0xf] %vm2008, 0
        %2036 = vst.msk [vmem:[#allocation2 + $0x68] sm:$0xf] %vm2008, 0
        %2037 = vst.msk [vmem:[#allocation2 + $0x6c] sm:$0xf] %vm2008, 0
        %2038 = vst.msk [vmem:[#allocation2 + $0x70] sm:$0xf] %vm2008, 0
        %2039 = vst.msk [vmem:[#allocation2 + $0x74] sm:$0x3] %vm2013, 0
        %2040 = vst.msk [vmem:[#allocation2 + $0x78] sm:$0xf] %vm2008, 0
        %2041 = vst.msk [vmem:[#allocation2 + $0x7c] sm:$0xf] %vm2008, 0
        %2042 = vst.msk [vmem:[#allocation2 + $0x80] sm:$0xf] %vm2008, 0
        %2043 = vst.msk [vmem:[#allocation2 + $0x84] sm:$0xf] %vm2008, 0
        %2044 = vst.msk [vmem:[#allocation2 + $0x88] sm:$0x3] %vm2013, 0
        %2045 = vst.msk [vmem:[#allocation2 + $0x8c] sm:$0xf] %vm2008, 0
        %2046 = vst.msk [vmem:[#allocation2 + $0x90] sm:$0xf] %vm2008, 0
        %2047 = vst.msk [vmem:[#allocation2 + $0x94] sm:$0xf] %vm2008, 0
        %2048 = vst.msk [vmem:[#allocation2 + $0x98] sm:$0xf] %vm2008, 0
        %2049 = vst.msk [vmem:[#allocation2 + $0x9c] sm:$0x3] %vm2013, 0
        %2050 = vst.msk [vmem:[#allocation2 + $0xa0] sm:$0xf] %vm2008, 0
        %2051 = vst.msk [vmem:[#allocation2 + $0xa4] sm:$0xf] %vm2008, 0
        %2052 = vst.msk [vmem:[#allocation2 + $0xa8] sm:$0xf] %vm2008, 0
        %2053 = vst.msk [vmem:[#allocation2 + $0xac] sm:$0xf] %vm2008, 0
        %2054 = vst.msk [vmem:[#allocation2 + $0xb0] sm:$0x3] %vm2013, 0
        %2055 = vst.msk [vmem:[#allocation2 + $0xb4] sm:$0xf] %vm2008, 0
        %2056 = vst.msk [vmem:[#allocation2 + $0xb8] sm:$0xf] %vm2008, 0
        %2057 = vst.msk [vmem:[#allocation2 + $0xbc] sm:$0xf] %vm2008, 0
        %2058 = vst.msk [vmem:[#allocation2 + $0xc0] sm:$0xf] %vm2008, 0
        %2059 = vst.msk [vmem:[#allocation2 + $0xc4] sm:$0x3] %vm2013, 0
        %2060 = vst.msk [vmem:[#allocation2 + $0xc8] sm:$0xf] %vm2008, 0
        %2061 = vst.msk [vmem:[#allocation2 + $0xcc] sm:$0xf] %vm2008, 0
        %2062 = vst.msk [vmem:[#allocation2 + $0xd0] sm:$0xf] %vm2008, 0
        %2063 = vst.msk [vmem:[#allocation2 + $0xd4] sm:$0xf] %vm2008, 0
        %2064 = vst.msk [vmem:[#allocation2 + $0xd8] sm:$0x3] %vm2013, 0
        %2065 = vst.msk [vmem:[#allocation2 + $0xdc] sm:$0xf] %vm2008, 0
        %2066 = vst.msk [vmem:[#allocation2 + $0xe0] sm:$0xf] %vm2008, 0
        %2067 = vst.msk [vmem:[#allocation2 + $0xe4] sm:$0xf] %vm2008, 0
        %2068 = vst.msk [vmem:[#allocation2 + $0xe8] sm:$0xf] %vm2008, 0
        %2069 = vst.msk [vmem:[#allocation2 + $0xec] sm:$0x3] %vm2013, 0
        %2070 = vst.msk [vmem:[#allocation2 + $0xf0] sm:$0xf] %vm2008, 0
        %2071 = vst.msk [vmem:[#allocation2 + $0xf4] sm:$0xf] %vm2008, 0
        %2072 = vst.msk [vmem:[#allocation2 + $0xf8] sm:$0xf] %vm2008, 0
        %2073 = vst.msk [vmem:[#allocation2 + $0xfc] sm:$0xf] %vm2008, 0
        %2074 = vst.msk [vmem:[#allocation2 + $0x100] sm:$0x3] %vm2013, 0
        %2075 = vst.msk [vmem:[#allocation2 + $0x104] sm:$0xf] %vm2008, 0
        %2076 = vst.msk [vmem:[#allocation2 + $0x108] sm:$0xf] %vm2008, 0
        %2077 = vst.msk [vmem:[#allocation2 + $0x10c] sm:$0xf] %vm2008, 0
        %2078 = vst.msk [vmem:[#allocation2 + $0x110] sm:$0xf] %vm2008, 0
        %2079 = vst.msk [vmem:[#allocation2 + $0x114] sm:$0x3] %vm2013, 0
        %2080 = vst.msk [vmem:[#allocation2 + $0x118] sm:$0xf] %vm2008, 0
        %2081 = vst.msk [vmem:[#allocation2 + $0x11c] sm:$0xf] %vm2008, 0
        %2082 = vst.msk [vmem:[#allocation2 + $0x120] sm:$0xf] %vm2008, 0
        %2083 = vst.msk [vmem:[#allocation2 + $0x124] sm:$0xf] %vm2008, 0
        %2084 = vst.msk [vmem:[#allocation2 + $0x128] sm:$0x3] %vm2013, 0
        %2085 = vst.msk [vmem:[#allocation2 + $0x12c] sm:$0xf] %vm2008, 0
        %2086 = vst.msk [vmem:[#allocation2 + $0x130] sm:$0xf] %vm2008, 0
        %2087 = vst.msk [vmem:[#allocation2 + $0x134] sm:$0xf] %vm2008, 0
        %2088 = vst.msk [vmem:[#allocation2 + $0x138] sm:$0xf] %vm2008, 0
        %2089 = vst.msk [vmem:[#allocation2 + $0x13c] sm:$0x3] %vm2013, 0
        %2090 = vst.msk [vmem:[#allocation2 + $0x140] sm:$0xf] %vm2008, 0
        %2091 = vst.msk [vmem:[#allocation2 + $0x144] sm:$0xf] %vm2008, 0
        %2092 = vst.msk [vmem:[#allocation2 + $0x148] sm:$0xf] %vm2008, 0
        %2093 = vst.msk [vmem:[#allocation2 + $0x14c] sm:$0xf] %vm2008, 0
        %2094 = vst.msk [vmem:[#allocation2 + $0x150] sm:$0x3] %vm2013, 0
        %2095 = vst.msk [vmem:[#allocation2 + $0x154] sm:$0xf] %vm2008, 0
        %2096 = vst.msk [vmem:[#allocation2 + $0x158] sm:$0xf] %vm2008, 0
        %2097 = vst.msk [vmem:[#allocation2 + $0x15c] sm:$0xf] %vm2008, 0
        %2098 = vst.msk [vmem:[#allocation2 + $0x160] sm:$0xf] %vm2008, 0
        %2099 = vst.msk [vmem:[#allocation2 + $0x164] sm:$0x3] %vm2013, 0
        %v2116 = vunpack.c.l.b16 %v1210
        %v2117 = vunpack.c.h.b16 %v1210
        %v2118 = vunpack.c.l.b16 %v1211
        %v2119 = vunpack.c.h.b16 %v1211
        %v2120 = vunpack.c.l.b16 %v1212
        %v2121 = vunpack.c.h.b16 %v1212
        %v2122 = vunpack.c.l.b16 %v1213
        %v2123 = vunpack.c.h.b16 %v1213
        %v2124 = vunpack.c.l.b16 %v1214
        %v2125 = vunpack.c.h.b16 %v1214
        %v2126 = vunpack.c.l.b16 %v1215
        %v2127 = vunpack.c.h.b16 %v1215
        %v2128 = vunpack.c.l.b16 %v1216
        %v2129 = vunpack.c.h.b16 %v1216
        %v2130 = vunpack.c.l.b16 %v1217
        %v2131 = vunpack.c.h.b16 %v1217
        %v2132 = vunpack.c.l.b16 %v1218
        %v2133 = vunpack.c.h.b16 %v1218
        %v2134 = vunpack.c.l.b16 %v1219
        %v2135 = vunpack.c.h.b16 %v1219
        %v2136 = vunpack.c.l.b16 %v1220
        %v2137 = vunpack.c.h.b16 %v1220
        %v2138 = vunpack.c.l.b16 %v1221
        %v2139 = vunpack.c.h.b16 %v1221
        %v2140 = vunpack.c.l.b16 %v1222
        %v2141 = vunpack.c.h.b16 %v1222
        %v2142 = vunpack.c.l.b16 %v1223
        %v2143 = vunpack.c.h.b16 %v1223
        %v2144 = vunpack.c.l.b16 %v1224
        %v2145 = vunpack.c.h.b16 %v1224
        %v2146 = vunpack.c.l.b16 %v1225
        %v2147 = vunpack.c.h.b16 %v1225
        %v2148 = vpack.c.b16 %v2116, %v2116
        %v2149 = vpack.c.b16 %v2117, %v2117
        %v2150 = vpack.c.b16 %v2118, %v2118
        %v2151 = vpack.c.b16 %v2119, %v2119
        %v2152 = vpack.c.b16 %v2120, %v2120
        %v2153 = vpack.c.b16 %v2121, %v2121
        %v2154 = vpack.c.b16 %v2122, %v2122
        %v2155 = vpack.c.b16 %v2123, %v2123
        %v2156 = vpack.c.b16 %v2124, %v2124
        %v2157 = vpack.c.b16 %v2125, %v2125
        %v2158 = vpack.c.b16 %v2126, %v2126
        %v2159 = vpack.c.b16 %v2127, %v2127
        %v2160 = vpack.c.b16 %v2128, %v2128
        %v2161 = vpack.c.b16 %v2129, %v2129
        %v2162 = vpack.c.b16 %v2130, %v2130
        %v2163 = vpack.c.b16 %v2131, %v2131
        %v2164 = vpack.c.b16 %v2132, %v2132
        %v2165 = vpack.c.b16 %v2133, %v2133
        %v2166 = vpack.c.b16 %v2134, %v2134
        %v2167 = vpack.c.b16 %v2135, %v2135
        %v2168 = vpack.c.b16 %v2136, %v2136
        %v2169 = vpack.c.b16 %v2137, %v2137
        %v2170 = vpack.c.b16 %v2138, %v2138
        %v2171 = vpack.c.b16 %v2139, %v2139
        %v2172 = vpack.c.b16 %v2140, %v2140
        %v2173 = vpack.c.b16 %v2141, %v2141
        %v2174 = vpack.c.b16 %v2142, %v2142
        %v2175 = vpack.c.b16 %v2143, %v2143
        %v2176 = vpack.c.b16 %v2144, %v2144
        %v2177 = vpack.c.b16 %v2145, %v2145
        %v2178 = vpack.c.b16 %v2146, %v2146
        %v2179 = vpack.c.b16 %v2147, %v2147
        %s2212 = scalar_lea.vmem [#allocation2], 20
        %2213 = vst.msk [vmem:[%s2212 + $0x8] sm:$0xf] %vm2008, %v2148
        %2214 = vst.msk [vmem:[%s2212 + $0xc] sm:$0xf] %vm2008, %v2149
        %2215 = vst.msk [vmem:[%s2212 + $0x1c] sm:$0xf] %vm2008, %v2150
        %2216 = vst.msk [vmem:[%s2212 + $0x20] sm:$0xf] %vm2008, %v2151
        %2217 = vst.msk [vmem:[%s2212 + $0x30] sm:$0xf] %vm2008, %v2152
        %2218 = vst.msk [vmem:[%s2212 + $0x34] sm:$0xf] %vm2008, %v2153
        %2219 = vst.msk [vmem:[%s2212 + $0x44] sm:$0xf] %vm2008, %v2154
        %2220 = vst.msk [vmem:[%s2212 + $0x48] sm:$0xf] %vm2008, %v2155
        %2221 = vst.msk [vmem:[%s2212 + $0x58] sm:$0xf] %vm2008, %v2156
        %2222 = vst.msk [vmem:[%s2212 + $0x5c] sm:$0xf] %vm2008, %v2157
        %2223 = vst.msk [vmem:[%s2212 + $0x6c] sm:$0xf] %vm2008, %v2158
        %2224 = vst.msk [vmem:[%s2212 + $0x70] sm:$0xf] %vm2008, %v2159
        %2225 = vst.msk [vmem:[%s2212 + $0x80] sm:$0xf] %vm2008, %v2160
        %2226 = vst.msk [vmem:[%s2212 + $0x84] sm:$0xf] %vm2008, %v2161
        %2227 = vst.msk [vmem:[%s2212 + $0x94] sm:$0xf] %vm2008, %v2162
        %2228 = vst.msk [vmem:[%s2212 + $0x98] sm:$0xf] %vm2008, %v2163
        %2229 = vst.msk [vmem:[%s2212 + $0xa8] sm:$0xf] %vm2008, %v2164
        %2230 = vst.msk [vmem:[%s2212 + $0xac] sm:$0xf] %vm2008, %v2165
        %2231 = vst.msk [vmem:[%s2212 + $0xbc] sm:$0xf] %vm2008, %v2166
        %2232 = vst.msk [vmem:[%s2212 + $0xc0] sm:$0xf] %vm2008, %v2167
        %2233 = vst.msk [vmem:[%s2212 + $0xd0] sm:$0xf] %vm2008, %v2168
        %2234 = vst.msk [vmem:[%s2212 + $0xd4] sm:$0xf] %vm2008, %v2169
        %2235 = vst.msk [vmem:[%s2212 + $0xe4] sm:$0xf] %vm2008, %v2170
        %2236 = vst.msk [vmem:[%s2212 + $0xe8] sm:$0xf] %vm2008, %v2171
        %2237 = vst.msk [vmem:[%s2212 + $0xf8] sm:$0xf] %vm2008, %v2172
        %2238 = vst.msk [vmem:[%s2212 + $0xfc] sm:$0xf] %vm2008, %v2173
        %2239 = vst.msk [vmem:[%s2212 + $0x10c] sm:$0xf] %vm2008, %v2174
        %2240 = vst.msk [vmem:[%s2212 + $0x110] sm:$0xf] %vm2008, %v2175
        %2241 = vst.msk [vmem:[%s2212 + $0x120] sm:$0xf] %vm2008, %v2176
        %2242 = vst.msk [vmem:[%s2212 + $0x124] sm:$0xf] %vm2008, %v2177
        %2243 = vst.msk [vmem:[%s2212 + $0x134] sm:$0xf] %vm2008, %v2178
        %2244 = vst.msk [vmem:[%s2212 + $0x138] sm:$0xf] %vm2008, %v2179
        %v2245 = vld [vmem:[#allocation2 + $0x4] sm:$0xf]
        %v2246 = vld [vmem:[#allocation2 + $0x8] sm:$0xf]
        %v2247 = vld [vmem:[#allocation2 + $0xc] sm:$0xf]
        %v2248 = vld [vmem:[#allocation2 + $0x10] sm:$0x3]
        %v2249 = vld [vmem:[#allocation2 + $0x18] sm:$0xf]
        %v2250 = vld [vmem:[#allocation2 + $0x1c] sm:$0xf]
        %v2251 = vld [vmem:[#allocation2 + $0x20] sm:$0xf]
        %v2252 = vld [vmem:[#allocation2 + $0x24] sm:$0x3]
        %v2253 = vld [vmem:[#allocation2 + $0x2c] sm:$0xf]
        %v2254 = vld [vmem:[#allocation2 + $0x30] sm:$0xf]
        %v2255 = vld [vmem:[#allocation2 + $0x34] sm:$0xf]
        %v2256 = vld [vmem:[#allocation2 + $0x38] sm:$0x3]
        %v2257 = vld [vmem:[#allocation2 + $0x40] sm:$0xf]
        %v2258 = vld [vmem:[#allocation2 + $0x44] sm:$0xf]
        %v2259 = vld [vmem:[#allocation2 + $0x48] sm:$0xf]
        %v2260 = vld [vmem:[#allocation2 + $0x4c] sm:$0x3]
        %v2261 = vld [vmem:[#allocation2 + $0x54] sm:$0xf]
        %v2262 = vld [vmem:[#allocation2 + $0x58] sm:$0xf]
        %v2263 = vld [vmem:[#allocation2 + $0x5c] sm:$0xf]
        %v2264 = vld [vmem:[#allocation2 + $0x60] sm:$0x3]
        %v2265 = vld [vmem:[#allocation2 + $0x68] sm:$0xf]
        %v2266 = vld [vmem:[#allocation2 + $0x6c] sm:$0xf]
        %v2267 = vld [vmem:[#allocation2 + $0x70] sm:$0xf]
        %v2268 = vld [vmem:[#allocation2 + $0x74] sm:$0x3]
        %v2269 = vld [vmem:[#allocation2 + $0x7c] sm:$0xf]
        %v2270 = vld [vmem:[#allocation2 + $0x80] sm:$0xf]
        %v2271 = vld [vmem:[#allocation2 + $0x84] sm:$0xf]
        %v2272 = vld [vmem:[#allocation2 + $0x88] sm:$0x3]
        %v2273 = vld [vmem:[#allocation2 + $0x90] sm:$0xf]
        %v2274 = vld [vmem:[#allocation2 + $0x94] sm:$0xf]
        %v2275 = vld [vmem:[#allocation2 + $0x98] sm:$0xf]
        %v2276 = vld [vmem:[#allocation2 + $0x9c] sm:$0x3]
        %v2277 = vld [vmem:[#allocation2 + $0xa4] sm:$0xf]
        %v2278 = vld [vmem:[#allocation2 + $0xa8] sm:$0xf]
        %v2279 = vld [vmem:[#allocation2 + $0xac] sm:$0xf]
        %v2280 = vld [vmem:[#allocation2 + $0xb0] sm:$0x3]
        %v2281 = vld [vmem:[#allocation2 + $0xb8] sm:$0xf]
        %v2282 = vld [vmem:[#allocation2 + $0xbc] sm:$0xf]
        %v2283 = vld [vmem:[#allocation2 + $0xc0] sm:$0xf]
        %v2284 = vld [vmem:[#allocation2 + $0xc4] sm:$0x3]
        %v2285 = vld [vmem:[#allocation2 + $0xcc] sm:$0xf]
        %v2286 = vld [vmem:[#allocation2 + $0xd0] sm:$0xf]
        %v2287 = vld [vmem:[#allocation2 + $0xd4] sm:$0xf]
        %v2288 = vld [vmem:[#allocation2 + $0xd8] sm:$0x3]
        %v2289 = vld [vmem:[#allocation2 + $0xe0] sm:$0xf]
        %v2290 = vld [vmem:[#allocation2 + $0xe4] sm:$0xf]
        %v2291 = vld [vmem:[#allocation2 + $0xe8] sm:$0xf]
        %v2292 = vld [vmem:[#allocation2 + $0xec] sm:$0x3]
        %v2293 = vld [vmem:[#allocation2 + $0xf4] sm:$0xf]
        %v2294 = vld [vmem:[#allocation2 + $0xf8] sm:$0xf]
        %v2295 = vld [vmem:[#allocation2 + $0xfc] sm:$0xf]
        %v2296 = vld [vmem:[#allocation2 + $0x100] sm:$0x3]
        %v2297 = vld [vmem:[#allocation2 + $0x108] sm:$0xf]
        %v2298 = vld [vmem:[#allocation2 + $0x10c] sm:$0xf]
        %v2299 = vld [vmem:[#allocation2 + $0x110] sm:$0xf]
        %v2300 = vld [vmem:[#allocation2 + $0x114] sm:$0x3]
        %v2301 = vld [vmem:[#allocation2 + $0x11c] sm:$0xf]
        %v2302 = vld [vmem:[#allocation2 + $0x120] sm:$0xf]
        %v2303 = vld [vmem:[#allocation2 + $0x124] sm:$0xf]
        %v2304 = vld [vmem:[#allocation2 + $0x128] sm:$0x3]
        %v2305 = vld [vmem:[#allocation2 + $0x130] sm:$0xf]
        %v2306 = vld [vmem:[#allocation2 + $0x134] sm:$0xf]
        %v2307 = vld [vmem:[#allocation2 + $0x138] sm:$0xf]
        %v2308 = vld [vmem:[#allocation2 + $0x13c] sm:$0x3]
        %v2309 = vld [vmem:[#allocation2 + $0x144] sm:$0xf]
        %v2310 = vld [vmem:[#allocation2 + $0x148] sm:$0xf]
        %v2311 = vld [vmem:[#allocation2 + $0x14c] sm:$0xf]
        %v2312 = vld [vmem:[#allocation2 + $0x150] sm:$0x3]
        %v2313 = vld [vmem:[#allocation2 + $0x158] sm:$0xf]
        %v2314 = vld [vmem:[#allocation2 + $0x15c] sm:$0xf]
        %v2315 = vld [vmem:[#allocation2 + $0x160] sm:$0xf]
        %v2316 = vld [vmem:[#allocation2 + $0x164] sm:$0x3]
        %v2371 = vunpack.c.l.b16 %v2245
        %v2372 = vunpack.c.l.b16 %v2246
        %v2373 = vunpack.c.l.b16 %v2247
        %v2374 = vunpack.c.l.b16 %v2249
        %v2375 = vunpack.c.l.b16 %v2250
        %v2376 = vunpack.c.l.b16 %v2251
        %v2377 = vunpack.c.l.b16 %v2253
        %v2378 = vunpack.c.l.b16 %v2254
        %v2379 = vunpack.c.l.b16 %v2255
        %v2380 = vunpack.c.l.b16 %v2257
        %v2381 = vunpack.c.l.b16 %v2258
        %v2382 = vunpack.c.l.b16 %v2259
        %v2383 = vunpack.c.l.b16 %v2261
        %v2384 = vunpack.c.l.b16 %v2262
        %v2385 = vunpack.c.l.b16 %v2263
        %v2386 = vunpack.c.l.b16 %v2265
        %v2387 = vunpack.c.l.b16 %v2266
        %v2388 = vunpack.c.l.b16 %v2267
        %v2389 = vunpack.c.l.b16 %v2269
        %v2390 = vunpack.c.l.b16 %v2270
        %v2391 = vunpack.c.l.b16 %v2271
        %v2392 = vunpack.c.l.b16 %v2273
        %v2393 = vunpack.c.l.b16 %v2274
        %v2394 = vunpack.c.l.b16 %v2275
        %v2395 = vunpack.c.l.b16 %v2277
        %v2396 = vunpack.c.l.b16 %v2278
        %v2397 = vunpack.c.l.b16 %v2279
        %v2398 = vunpack.c.l.b16 %v2281
        %v2399 = vunpack.c.l.b16 %v2282
        %v2400 = vunpack.c.l.b16 %v2283
        %v2401 = vunpack.c.l.b16 %v2285
        %v2402 = vunpack.c.l.b16 %v2286
        %v2403 = vunpack.c.l.b16 %v2287
        %v2404 = vunpack.c.l.b16 %v2289
        %v2405 = vunpack.c.l.b16 %v2290
        %v2406 = vunpack.c.l.b16 %v2291
        %v2407 = vunpack.c.l.b16 %v2293
        %v2408 = vunpack.c.l.b16 %v2294
        %v2409 = vunpack.c.l.b16 %v2295
        %v2410 = vunpack.c.l.b16 %v2297
        %v2411 = vunpack.c.l.b16 %v2298
        %v2412 = vunpack.c.l.b16 %v2299
        %v2413 = vunpack.c.l.b16 %v2301
        %v2414 = vunpack.c.l.b16 %v2302
        %v2415 = vunpack.c.l.b16 %v2303
        %v2416 = vunpack.c.l.b16 %v2305
        %v2417 = vunpack.c.l.b16 %v2306
        %v2418 = vunpack.c.l.b16 %v2307
        %v2419 = vunpack.c.l.b16 %v2309
        %v2420 = vunpack.c.l.b16 %v2310
        %v2421 = vunpack.c.l.b16 %v2311
        %v2422 = vunpack.c.l.b16 %v2313
        %v2423 = vunpack.c.l.b16 %v2314
        %v2424 = vunpack.c.l.b16 %v2315
        %v2425 = vpack.c.b16 %v2372, %v2371
        %v2426 = vpack.c.b16 %v2373, %v2373
        %v2427 = vpack.c.b16 %v2375, %v2374
        %v2428 = vpack.c.b16 %v2376, %v2376
        %v2429 = vpack.c.b16 %v2378, %v2377
        %v2430 = vpack.c.b16 %v2379, %v2379
        %v2431 = vpack.c.b16 %v2381, %v2380
        %v2432 = vpack.c.b16 %v2382, %v2382
        %v2433 = vpack.c.b16 %v2384, %v2383
        %v2434 = vpack.c.b16 %v2385, %v2385
        %v2435 = vpack.c.b16 %v2387, %v2386
        %v2436 = vpack.c.b16 %v2388, %v2388
        %v2437 = vpack.c.b16 %v2390, %v2389
        %v2438 = vpack.c.b16 %v2391, %v2391
        %v2439 = vpack.c.b16 %v2393, %v2392
        %v2440 = vpack.c.b16 %v2394, %v2394
        %v2441 = vpack.c.b16 %v2396, %v2395
        %v2442 = vpack.c.b16 %v2397, %v2397
        %v2443 = vpack.c.b16 %v2399, %v2398
        %v2444 = vpack.c.b16 %v2400, %v2400
        %v2445 = vpack.c.b16 %v2402, %v2401
        %v2446 = vpack.c.b16 %v2403, %v2403
        %v2447 = vpack.c.b16 %v2405, %v2404
        %v2448 = vpack.c.b16 %v2406, %v2406
        %v2449 = vpack.c.b16 %v2408, %v2407
        %v2450 = vpack.c.b16 %v2409, %v2409
        %v2451 = vpack.c.b16 %v2411, %v2410
        %v2452 = vpack.c.b16 %v2412, %v2412
        %v2453 = vpack.c.b16 %v2414, %v2413
        %v2454 = vpack.c.b16 %v2415, %v2415
        %v2455 = vpack.c.b16 %v2417, %v2416
        %v2456 = vpack.c.b16 %v2418, %v2418
        %v2457 = vpack.c.b16 %v2420, %v2419
        %v2458 = vpack.c.b16 %v2421, %v2421
        %v2459 = vpack.c.b16 %v2423, %v2422
        %v2460 = vpack.c.b16 %v2424, %v2424
        %v2461 = vpack.c.b16 %v2373, %v2372
        %v2462 = vpack.c.b16 %v2376, %v2375
        %v2463 = vpack.c.b16 %v2379, %v2378
        %v2464 = vpack.c.b16 %v2382, %v2381
        %v2465 = vpack.c.b16 %v2385, %v2384
        %v2466 = vpack.c.b16 %v2388, %v2387
        %v2467 = vpack.c.b16 %v2391, %v2390
        %v2468 = vpack.c.b16 %v2394, %v2393
        %v2469 = vpack.c.b16 %v2397, %v2396
        %v2470 = vpack.c.b16 %v2400, %v2399
        %v2471 = vpack.c.b16 %v2403, %v2402
        %v2472 = vpack.c.b16 %v2406, %v2405
        %v2473 = vpack.c.b16 %v2409, %v2408
        %v2474 = vpack.c.b16 %v2412, %v2411
        %v2475 = vpack.c.b16 %v2415, %v2414
        %v2476 = vpack.c.b16 %v2418, %v2417
        %v2477 = vpack.c.b16 %v2421, %v2420
        %v2478 = vpack.c.b16 %v2424, %v2423
        %v2480 = vshrl.u32 %v2461, 16
        %v2482 = vrot.slane %v2480, 4
        %v2483 = vshll.u32 %v2461, 16
        %v2485 = vrot.slane %v2483, 5
        %v2486 = vor.u32 %v2482, %v2485
        %v2488 = vshrl.u32 %v2462, 16
        %v2490 = vrot.slane %v2488, 4
        %v2491 = vshll.u32 %v2462, 16
        %v2493 = vrot.slane %v2491, 5
        %v2494 = vor.u32 %v2490, %v2493
        %v2496 = vshrl.u32 %v2463, 16
        %v2498 = vrot.slane %v2496, 4
        %v2499 = vshll.u32 %v2463, 16
        %v2501 = vrot.slane %v2499, 5
        %v2502 = vor.u32 %v2498, %v2501
        %v2504 = vshrl.u32 %v2464, 16
        %v2506 = vrot.slane %v2504, 4
        %v2507 = vshll.u32 %v2464, 16
        %v2509 = vrot.slane %v2507, 5
        %v2510 = vor.u32 %v2506, %v2509
        %v2512 = vshrl.u32 %v2465, 16
        %v2514 = vrot.slane %v2512, 4
        %v2515 = vshll.u32 %v2465, 16
        %v2517 = vrot.slane %v2515, 5
        %v2518 = vor.u32 %v2514, %v2517
        %v2520 = vshrl.u32 %v2466, 16
        %v2522 = vrot.slane %v2520, 4
        %v2523 = vshll.u32 %v2466, 16
        %v2525 = vrot.slane %v2523, 5
        %v2526 = vor.u32 %v2522, %v2525
        %v2528 = vshrl.u32 %v2467, 16
        %v2530 = vrot.slane %v2528, 4
        %v2531 = vshll.u32 %v2467, 16
        %v2533 = vrot.slane %v2531, 5
        %v2534 = vor.u32 %v2530, %v2533
        %v2536 = vshrl.u32 %v2468, 16
        %v2538 = vrot.slane %v2536, 4
        %v2539 = vshll.u32 %v2468, 16
        %v2541 = vrot.slane %v2539, 5
        %v2542 = vor.u32 %v2538, %v2541
        %v2544 = vshrl.u32 %v2469, 16
        %v2546 = vrot.slane %v2544, 4
        %v2547 = vshll.u32 %v2469, 16
        %v2549 = vrot.slane %v2547, 5
        %v2550 = vor.u32 %v2546, %v2549
        %v2552 = vshrl.u32 %v2470, 16
        %v2554 = vrot.slane %v2552, 4
        %v2555 = vshll.u32 %v2470, 16
        %v2557 = vrot.slane %v2555, 5
        %v2558 = vor.u32 %v2554, %v2557
        %v2560 = vshrl.u32 %v2471, 16
        %v2562 = vrot.slane %v2560, 4
        %v2563 = vshll.u32 %v2471, 16
        %v2565 = vrot.slane %v2563, 5
        %v2566 = vor.u32 %v2562, %v2565
        %v2568 = vshrl.u32 %v2472, 16
        %v2570 = vrot.slane %v2568, 4
        %v2571 = vshll.u32 %v2472, 16
        %v2573 = vrot.slane %v2571, 5
        %v2574 = vor.u32 %v2570, %v2573
        %v2576 = vshrl.u32 %v2473, 16
        %v2578 = vrot.slane %v2576, 4
        %v2579 = vshll.u32 %v2473, 16
        %v2581 = vrot.slane %v2579, 5
        %v2582 = vor.u32 %v2578, %v2581
        %v2584 = vshrl.u32 %v2474, 16
        %v2586 = vrot.slane %v2584, 4
        %v2587 = vshll.u32 %v2474, 16
        %v2589 = vrot.slane %v2587, 5
        %v2590 = vor.u32 %v2586, %v2589
        %v2592 = vshrl.u32 %v2475, 16
        %v2594 = vrot.slane %v2592, 4
        %v2595 = vshll.u32 %v2475, 16
        %v2597 = vrot.slane %v2595, 5
        %v2598 = vor.u32 %v2594, %v2597
        %v2600 = vshrl.u32 %v2476, 16
        %v2602 = vrot.slane %v2600, 4
        %v2603 = vshll.u32 %v2476, 16
        %v2605 = vrot.slane %v2603, 5
        %v2606 = vor.u32 %v2602, %v2605
        %v2608 = vshrl.u32 %v2477, 16
        %v2610 = vrot.slane %v2608, 4
        %v2611 = vshll.u32 %v2477, 16
        %v2613 = vrot.slane %v2611, 5
        %v2614 = vor.u32 %v2610, %v2613
        %v2616 = vshrl.u32 %v2478, 16
        %v2618 = vrot.slane %v2616, 4
        %v2619 = vshll.u32 %v2478, 16
        %v2621 = vrot.slane %v2619, 5
        %v2622 = vor.u32 %v2618, %v2621
        %2623 = vrot.lane.b32.xlu0 %v2486, 64
        %v2624 = vpop.permute.xlu0 %2623
        %2625 = vrot.lane.b32.xlu0 %v2494, 64
        %v2626 = vpop.permute.xlu0 %2625
        %2627 = vrot.lane.b32.xlu0 %v2502, 64
        %v2628 = vpop.permute.xlu0 %2627
        %2629 = vrot.lane.b32.xlu0 %v2510, 64
        %v2630 = vpop.permute.xlu0 %2629
        %2631 = vrot.lane.b32.xlu0 %v2518, 64
        %v2632 = vpop.permute.xlu0 %2631
        %2633 = vrot.lane.b32.xlu0 %v2526, 64
        %v2634 = vpop.permute.xlu0 %2633
        %2635 = vrot.lane.b32.xlu0 %v2534, 64
        %v2636 = vpop.permute.xlu0 %2635
        %2637 = vrot.lane.b32.xlu0 %v2542, 64
        %v2638 = vpop.permute.xlu0 %2637
        %2639 = vrot.lane.b32.xlu0 %v2550, 64
        %v2640 = vpop.permute.xlu0 %2639
        %2641 = vrot.lane.b32.xlu0 %v2558, 64
        %v2642 = vpop.permute.xlu0 %2641
        %2643 = vrot.lane.b32.xlu0 %v2566, 64
        %v2644 = vpop.permute.xlu0 %2643
        %2645 = vrot.lane.b32.xlu0 %v2574, 64
        %v2646 = vpop.permute.xlu0 %2645
        %2647 = vrot.lane.b32.xlu0 %v2582, 64
        %v2648 = vpop.permute.xlu0 %2647
        %2649 = vrot.lane.b32.xlu0 %v2590, 64
        %v2650 = vpop.permute.xlu0 %2649
        %2651 = vrot.lane.b32.xlu0 %v2598, 64
        %v2652 = vpop.permute.xlu0 %2651
        %2653 = vrot.lane.b32.xlu0 %v2606, 64
        %v2654 = vpop.permute.xlu0 %2653
        %2655 = vrot.lane.b32.xlu0 %v2614, 64
        %v2656 = vpop.permute.xlu0 %2655
        %2657 = vrot.lane.b32.xlu0 %v2622, 64
        %v2658 = vpop.permute.xlu0 %2657
        %v2677 = vunpack.c.l.b16 %v2248
        %v2678 = vunpack.c.l.b16 %v2252
        %v2679 = vunpack.c.l.b16 %v2256
        %v2680 = vunpack.c.l.b16 %v2260
        %v2681 = vunpack.c.l.b16 %v2264
        %v2682 = vunpack.c.l.b16 %v2268
        %v2683 = vunpack.c.l.b16 %v2272
        %v2684 = vunpack.c.l.b16 %v2276
        %v2685 = vunpack.c.l.b16 %v2280
        %v2686 = vunpack.c.l.b16 %v2284
        %v2687 = vunpack.c.l.b16 %v2288
        %v2688 = vunpack.c.l.b16 %v2292
        %v2689 = vunpack.c.l.b16 %v2296
        %v2690 = vunpack.c.l.b16 %v2300
        %v2691 = vunpack.c.l.b16 %v2304
        %v2692 = vunpack.c.l.b16 %v2308
        %v2693 = vunpack.c.l.b16 %v2312
        %v2694 = vunpack.c.l.b16 %v2316
        %v2695 = vpack.c.b16 %v2677, %v2677
        %v2696 = vpack.c.b16 %v2678, %v2678
        %v2697 = vpack.c.b16 %v2679, %v2679
        %v2698 = vpack.c.b16 %v2680, %v2680
        %v2699 = vpack.c.b16 %v2681, %v2681
        %v2700 = vpack.c.b16 %v2682, %v2682
        %v2701 = vpack.c.b16 %v2683, %v2683
        %v2702 = vpack.c.b16 %v2684, %v2684
        %v2703 = vpack.c.b16 %v2685, %v2685
        %v2704 = vpack.c.b16 %v2686, %v2686
        %v2705 = vpack.c.b16 %v2687, %v2687
        %v2706 = vpack.c.b16 %v2688, %v2688
        %v2707 = vpack.c.b16 %v2689, %v2689
        %v2708 = vpack.c.b16 %v2690, %v2690
        %v2709 = vpack.c.b16 %v2691, %v2691
        %v2710 = vpack.c.b16 %v2692, %v2692
        %v2711 = vpack.c.b16 %v2693, %v2693
        %v2712 = vpack.c.b16 %v2694, %v2694
        %vm2713 = vcmask 1042432
        %v2714 = vrot.slane %v2461, 5
        %v2715 = vrot.slane %v2695, 5
        %v2716 = vsel %vm2713, %v2714, %v2715
        %v2717 = vrot.slane %v2462, 5
        %v2718 = vrot.slane %v2696, 5
        %v2719 = vsel %vm2713, %v2717, %v2718
        %v2720 = vrot.slane %v2463, 5
        %v2721 = vrot.slane %v2697, 5
        %v2722 = vsel %vm2713, %v2720, %v2721
        %v2723 = vrot.slane %v2464, 5
        %v2724 = vrot.slane %v2698, 5
        %v2725 = vsel %vm2713, %v2723, %v2724
        %v2726 = vrot.slane %v2465, 5
        %v2727 = vrot.slane %v2699, 5
        %v2728 = vsel %vm2713, %v2726, %v2727
        %v2729 = vrot.slane %v2466, 5
        %v2730 = vrot.slane %v2700, 5
        %v2731 = vsel %vm2713, %v2729, %v2730
        %v2732 = vrot.slane %v2467, 5
        %v2733 = vrot.slane %v2701, 5
        %v2734 = vsel %vm2713, %v2732, %v2733
        %v2735 = vrot.slane %v2468, 5
        %v2736 = vrot.slane %v2702, 5
        %v2737 = vsel %vm2713, %v2735, %v2736
        %v2738 = vrot.slane %v2469, 5
        %v2739 = vrot.slane %v2703, 5
        %v2740 = vsel %vm2713, %v2738, %v2739
        %v2741 = vrot.slane %v2470, 5
        %v2742 = vrot.slane %v2704, 5
        %v2743 = vsel %vm2713, %v2741, %v2742
        %v2744 = vrot.slane %v2471, 5
        %v2745 = vrot.slane %v2705, 5
        %v2746 = vsel %vm2713, %v2744, %v2745
        %v2747 = vrot.slane %v2472, 5
        %v2748 = vrot.slane %v2706, 5
        %v2749 = vsel %vm2713, %v2747, %v2748
        %v2750 = vrot.slane %v2473, 5
        %v2751 = vrot.slane %v2707, 5
        %v2752 = vsel %vm2713, %v2750, %v2751
        %v2753 = vrot.slane %v2474, 5
        %v2754 = vrot.slane %v2708, 5
        %v2755 = vsel %vm2713, %v2753, %v2754
        %v2756 = vrot.slane %v2475, 5
        %v2757 = vrot.slane %v2709, 5
        %v2758 = vsel %vm2713, %v2756, %v2757
        %v2759 = vrot.slane %v2476, 5
        %v2760 = vrot.slane %v2710, 5
        %v2761 = vsel %vm2713, %v2759, %v2760
        %v2762 = vrot.slane %v2477, 5
        %v2763 = vrot.slane %v2711, 5
        %v2764 = vsel %vm2713, %v2762, %v2763
        %v2765 = vrot.slane %v2478, 5
        %v2766 = vrot.slane %v2712, 5
        %v2767 = vsel %vm2713, %v2765, %v2766
        %vm2768 = vcmask 523264
        %v2771 = vsel %vm2768, %v2425, %v2624
        %v2773 = vsel %vm2768, %v2426, %v2624
        %v2776 = vsel %vm2768, %v2427, %v2626
        %v2778 = vsel %vm2768, %v2428, %v2626
        %v2781 = vsel %vm2768, %v2429, %v2628
        %v2783 = vsel %vm2768, %v2430, %v2628
        %v2786 = vsel %vm2768, %v2431, %v2630
        %v2788 = vsel %vm2768, %v2432, %v2630
        %v2791 = vsel %vm2768, %v2433, %v2632
        %v2793 = vsel %vm2768, %v2434, %v2632
        %v2796 = vsel %vm2768, %v2435, %v2634
        %v2798 = vsel %vm2768, %v2436, %v2634
        %v2801 = vsel %vm2768, %v2437, %v2636
        %v2803 = vsel %vm2768, %v2438, %v2636
        %v2806 = vsel %vm2768, %v2439, %v2638
        %v2808 = vsel %vm2768, %v2440, %v2638
        %v2811 = vsel %vm2768, %v2441, %v2640
        %v2813 = vsel %vm2768, %v2442, %v2640
        %v2816 = vsel %vm2768, %v2443, %v2642
        %v2818 = vsel %vm2768, %v2444, %v2642
        %v2821 = vsel %vm2768, %v2445, %v2644
        %v2823 = vsel %vm2768, %v2446, %v2644
        %v2826 = vsel %vm2768, %v2447, %v2646
        %v2828 = vsel %vm2768, %v2448, %v2646
        %v2831 = vsel %vm2768, %v2449, %v2648
        %v2833 = vsel %vm2768, %v2450, %v2648
        %v2836 = vsel %vm2768, %v2451, %v2650
        %v2838 = vsel %vm2768, %v2452, %v2650
        %v2841 = vsel %vm2768, %v2453, %v2652
        %v2843 = vsel %vm2768, %v2454, %v2652
        %v2846 = vsel %vm2768, %v2455, %v2654
        %v2848 = vsel %vm2768, %v2456, %v2654
        %v2851 = vsel %vm2768, %v2457, %v2656
        %v2853 = vsel %vm2768, %v2458, %v2656
        %v2856 = vsel %vm2768, %v2459, %v2658
        %v2858 = vsel %vm2768, %v2460, %v2658
        %vm2859 = vsmask.f32 4352
        %v2860 = vshrl.u32 %v2771, 16
        %v2862 = vrot.slane %v2860, 3
        %v2863 = vshll.u32 %v2771, 16
        %v2865 = vrot.slane %v2863, 4
        %v2866 = vor.u32 %v2862, %v2865
        %v2867 = vshrl.u32 %v2773, 16
        %v2869 = vrot.slane %v2867, 3
        %v2870 = vshll.u32 %v2773, 16
        %v2872 = vrot.slane %v2870, 4
        %v2873 = vor.u32 %v2869, %v2872
        %v2874 = vsel %vm2859, %v2866, %v2873
        %v2876 = vshrl.u32 %v2714, 16
        %v2878 = vrot.slane %v2876, 3
        %v2879 = vshll.u32 %v2714, 16
        %v2881 = vrot.slane %v2879, 4
        %v2882 = vor.u32 %v2878, %v2881
        %v2884 = vshrl.u32 %v2716, 16
        %v2886 = vrot.slane %v2884, 3
        %v2887 = vshll.u32 %v2716, 16
        %v2889 = vrot.slane %v2887, 4
        %v2890 = vor.u32 %v2886, %v2889
        %v2891 = vsel %vm2859, %v2882, %v2890
        %v2892 = vshrl.u32 %v2776, 16
        %v2894 = vrot.slane %v2892, 3
        %v2895 = vshll.u32 %v2776, 16
        %v2897 = vrot.slane %v2895, 4
        %v2898 = vor.u32 %v2894, %v2897
        %v2899 = vshrl.u32 %v2778, 16
        %v2901 = vrot.slane %v2899, 3
        %v2902 = vshll.u32 %v2778, 16
        %v2904 = vrot.slane %v2902, 4
        %v2905 = vor.u32 %v2901, %v2904
        %v2906 = vsel %vm2859, %v2898, %v2905
        %v2908 = vshrl.u32 %v2717, 16
        %v2910 = vrot.slane %v2908, 3
        %v2911 = vshll.u32 %v2717, 16
        %v2913 = vrot.slane %v2911, 4
        %v2914 = vor.u32 %v2910, %v2913
        %v2916 = vshrl.u32 %v2719, 16
        %v2918 = vrot.slane %v2916, 3
        %v2919 = vshll.u32 %v2719, 16
        %v2921 = vrot.slane %v2919, 4
        %v2922 = vor.u32 %v2918, %v2921
        %v2923 = vsel %vm2859, %v2914, %v2922
        %v2924 = vshrl.u32 %v2781, 16
        %v2926 = vrot.slane %v2924, 3
        %v2927 = vshll.u32 %v2781, 16
        %v2929 = vrot.slane %v2927, 4
        %v2930 = vor.u32 %v2926, %v2929
        %v2931 = vshrl.u32 %v2783, 16
        %v2933 = vrot.slane %v2931, 3
        %v2934 = vshll.u32 %v2783, 16
        %v2936 = vrot.slane %v2934, 4
        %v2937 = vor.u32 %v2933, %v2936
        %v2938 = vsel %vm2859, %v2930, %v2937
        %v2940 = vshrl.u32 %v2720, 16
        %v2942 = vrot.slane %v2940, 3
        %v2943 = vshll.u32 %v2720, 16
        %v2945 = vrot.slane %v2943, 4
        %v2946 = vor.u32 %v2942, %v2945
        %v2948 = vshrl.u32 %v2722, 16
        %v2950 = vrot.slane %v2948, 3
        %v2951 = vshll.u32 %v2722, 16
        %v2953 = vrot.slane %v2951, 4
        %v2954 = vor.u32 %v2950, %v2953
        %v2955 = vsel %vm2859, %v2946, %v2954
        %v2956 = vshrl.u32 %v2786, 16
        %v2958 = vrot.slane %v2956, 3
        %v2959 = vshll.u32 %v2786, 16
        %v2961 = vrot.slane %v2959, 4
        %v2962 = vor.u32 %v2958, %v2961
        %v2963 = vshrl.u32 %v2788, 16
        %v2965 = vrot.slane %v2963, 3
        %v2966 = vshll.u32 %v2788, 16
        %v2968 = vrot.slane %v2966, 4
        %v2969 = vor.u32 %v2965, %v2968
        %v2970 = vsel %vm2859, %v2962, %v2969
        %v2972 = vshrl.u32 %v2723, 16
        %v2974 = vrot.slane %v2972, 3
        %v2975 = vshll.u32 %v2723, 16
        %v2977 = vrot.slane %v2975, 4
        %v2978 = vor.u32 %v2974, %v2977
        %v2980 = vshrl.u32 %v2725, 16
        %v2982 = vrot.slane %v2980, 3
        %v2983 = vshll.u32 %v2725, 16
        %v2985 = vrot.slane %v2983, 4
        %v2986 = vor.u32 %v2982, %v2985
        %v2987 = vsel %vm2859, %v2978, %v2986
        %v2988 = vshrl.u32 %v2791, 16
        %v2990 = vrot.slane %v2988, 3
        %v2991 = vshll.u32 %v2791, 16
        %v2993 = vrot.slane %v2991, 4
        %v2994 = vor.u32 %v2990, %v2993
        %v2995 = vshrl.u32 %v2793, 16
        %v2997 = vrot.slane %v2995, 3
        %v2998 = vshll.u32 %v2793, 16
        %v3000 = vrot.slane %v2998, 4
        %v3001 = vor.u32 %v2997, %v3000
        %v3002 = vsel %vm2859, %v2994, %v3001
        %v3004 = vshrl.u32 %v2726, 16
        %v3006 = vrot.slane %v3004, 3
        %v3007 = vshll.u32 %v2726, 16
        %v3009 = vrot.slane %v3007, 4
        %v3010 = vor.u32 %v3006, %v3009
        %v3012 = vshrl.u32 %v2728, 16
        %v3014 = vrot.slane %v3012, 3
        %v3015 = vshll.u32 %v2728, 16
        %v3017 = vrot.slane %v3015, 4
        %v3018 = vor.u32 %v3014, %v3017
        %v3019 = vsel %vm2859, %v3010, %v3018
        %v3020 = vshrl.u32 %v2796, 16
        %v3022 = vrot.slane %v3020, 3
        %v3023 = vshll.u32 %v2796, 16
        %v3025 = vrot.slane %v3023, 4
        %v3026 = vor.u32 %v3022, %v3025
        %v3027 = vshrl.u32 %v2798, 16
        %v3029 = vrot.slane %v3027, 3
        %v3030 = vshll.u32 %v2798, 16
        %v3032 = vrot.slane %v3030, 4
        %v3033 = vor.u32 %v3029, %v3032
        %v3034 = vsel %vm2859, %v3026, %v3033
        %v3036 = vshrl.u32 %v2729, 16
        %v3038 = vrot.slane %v3036, 3
        %v3039 = vshll.u32 %v2729, 16
        %v3041 = vrot.slane %v3039, 4
        %v3042 = vor.u32 %v3038, %v3041
        %v3044 = vshrl.u32 %v2731, 16
        %v3046 = vrot.slane %v3044, 3
        %v3047 = vshll.u32 %v2731, 16
        %v3049 = vrot.slane %v3047, 4
        %v3050 = vor.u32 %v3046, %v3049
        %v3051 = vsel %vm2859, %v3042, %v3050
        %v3052 = vshrl.u32 %v2801, 16
        %v3054 = vrot.slane %v3052, 3
        %v3055 = vshll.u32 %v2801, 16
        %v3057 = vrot.slane %v3055, 4
        %v3058 = vor.u32 %v3054, %v3057
        %v3059 = vshrl.u32 %v2803, 16
        %v3061 = vrot.slane %v3059, 3
        %v3062 = vshll.u32 %v2803, 16
        %v3064 = vrot.slane %v3062, 4
        %v3065 = vor.u32 %v3061, %v3064
        %v3066 = vsel %vm2859, %v3058, %v3065
        %v3068 = vshrl.u32 %v2732, 16
        %v3070 = vrot.slane %v3068, 3
        %v3071 = vshll.u32 %v2732, 16
        %v3073 = vrot.slane %v3071, 4
        %v3074 = vor.u32 %v3070, %v3073
        %v3076 = vshrl.u32 %v2734, 16
        %v3078 = vrot.slane %v3076, 3
        %v3079 = vshll.u32 %v2734, 16
        %v3081 = vrot.slane %v3079, 4
        %v3082 = vor.u32 %v3078, %v3081
        %v3083 = vsel %vm2859, %v3074, %v3082
        %v3084 = vshrl.u32 %v2806, 16
        %v3086 = vrot.slane %v3084, 3
        %v3087 = vshll.u32 %v2806, 16
        %v3089 = vrot.slane %v3087, 4
        %v3090 = vor.u32 %v3086, %v3089
        %v3091 = vshrl.u32 %v2808, 16
        %v3093 = vrot.slane %v3091, 3
        %v3094 = vshll.u32 %v2808, 16
        %v3096 = vrot.slane %v3094, 4
        %v3097 = vor.u32 %v3093, %v3096
        %v3098 = vsel %vm2859, %v3090, %v3097
        %v3100 = vshrl.u32 %v2735, 16
        %v3102 = vrot.slane %v3100, 3
        %v3103 = vshll.u32 %v2735, 16
        %v3105 = vrot.slane %v3103, 4
        %v3106 = vor.u32 %v3102, %v3105
        %v3108 = vshrl.u32 %v2737, 16
        %v3110 = vrot.slane %v3108, 3
        %v3111 = vshll.u32 %v2737, 16
        %v3113 = vrot.slane %v3111, 4
        %v3114 = vor.u32 %v3110, %v3113
        %v3115 = vsel %vm2859, %v3106, %v3114
        %v3116 = vshrl.u32 %v2811, 16
        %v3118 = vrot.slane %v3116, 3
        %v3119 = vshll.u32 %v2811, 16
        %v3121 = vrot.slane %v3119, 4
        %v3122 = vor.u32 %v3118, %v3121
        %v3123 = vshrl.u32 %v2813, 16
        %v3125 = vrot.slane %v3123, 3
        %v3126 = vshll.u32 %v2813, 16
        %v3128 = vrot.slane %v3126, 4
        %v3129 = vor.u32 %v3125, %v3128
        %v3130 = vsel %vm2859, %v3122, %v3129
        %v3132 = vshrl.u32 %v2738, 16
        %v3134 = vrot.slane %v3132, 3
        %v3135 = vshll.u32 %v2738, 16
        %v3137 = vrot.slane %v3135, 4
        %v3138 = vor.u32 %v3134, %v3137
        %v3140 = vshrl.u32 %v2740, 16
        %v3142 = vrot.slane %v3140, 3
        %v3143 = vshll.u32 %v2740, 16
        %v3145 = vrot.slane %v3143, 4
        %v3146 = vor.u32 %v3142, %v3145
        %v3147 = vsel %vm2859, %v3138, %v3146
        %v3148 = vshrl.u32 %v2816, 16
        %v3150 = vrot.slane %v3148, 3
        %v3151 = vshll.u32 %v2816, 16
        %v3153 = vrot.slane %v3151, 4
        %v3154 = vor.u32 %v3150, %v3153
        %v3155 = vshrl.u32 %v2818, 16
        %v3157 = vrot.slane %v3155, 3
        %v3158 = vshll.u32 %v2818, 16
        %v3160 = vrot.slane %v3158, 4
        %v3161 = vor.u32 %v3157, %v3160
        %v3162 = vsel %vm2859, %v3154, %v3161
        %v3164 = vshrl.u32 %v2741, 16
        %v3166 = vrot.slane %v3164, 3
        %v3167 = vshll.u32 %v2741, 16
        %v3169 = vrot.slane %v3167, 4
        %v3170 = vor.u32 %v3166, %v3169
        %v3172 = vshrl.u32 %v2743, 16
        %v3174 = vrot.slane %v3172, 3
        %v3175 = vshll.u32 %v2743, 16
        %v3177 = vrot.slane %v3175, 4
        %v3178 = vor.u32 %v3174, %v3177
        %v3179 = vsel %vm2859, %v3170, %v3178
        %v3180 = vshrl.u32 %v2821, 16
        %v3182 = vrot.slane %v3180, 3
        %v3183 = vshll.u32 %v2821, 16
        %v3185 = vrot.slane %v3183, 4
        %v3186 = vor.u32 %v3182, %v3185
        %v3187 = vshrl.u32 %v2823, 16
        %v3189 = vrot.slane %v3187, 3
        %v3190 = vshll.u32 %v2823, 16
        %v3192 = vrot.slane %v3190, 4
        %v3193 = vor.u32 %v3189, %v3192
        %v3194 = vsel %vm2859, %v3186, %v3193
        %v3196 = vshrl.u32 %v2744, 16
        %v3198 = vrot.slane %v3196, 3
        %v3199 = vshll.u32 %v2744, 16
        %v3201 = vrot.slane %v3199, 4
        %v3202 = vor.u32 %v3198, %v3201
        %v3204 = vshrl.u32 %v2746, 16
        %v3206 = vrot.slane %v3204, 3
        %v3207 = vshll.u32 %v2746, 16
        %v3209 = vrot.slane %v3207, 4
        %v3210 = vor.u32 %v3206, %v3209
        %v3211 = vsel %vm2859, %v3202, %v3210
        %v3212 = vshrl.u32 %v2826, 16
        %v3214 = vrot.slane %v3212, 3
        %v3215 = vshll.u32 %v2826, 16
        %v3217 = vrot.slane %v3215, 4
        %v3218 = vor.u32 %v3214, %v3217
        %v3219 = vshrl.u32 %v2828, 16
        %v3221 = vrot.slane %v3219, 3
        %v3222 = vshll.u32 %v2828, 16
        %v3224 = vrot.slane %v3222, 4
        %v3225 = vor.u32 %v3221, %v3224
        %v3226 = vsel %vm2859, %v3218, %v3225
        %v3228 = vshrl.u32 %v2747, 16
        %v3230 = vrot.slane %v3228, 3
        %v3231 = vshll.u32 %v2747, 16
        %v3233 = vrot.slane %v3231, 4
        %v3234 = vor.u32 %v3230, %v3233
        %v3236 = vshrl.u32 %v2749, 16
        %v3238 = vrot.slane %v3236, 3
        %v3239 = vshll.u32 %v2749, 16
        %v3241 = vrot.slane %v3239, 4
        %v3242 = vor.u32 %v3238, %v3241
        %v3243 = vsel %vm2859, %v3234, %v3242
        %v3244 = vshrl.u32 %v2831, 16
        %v3246 = vrot.slane %v3244, 3
        %v3247 = vshll.u32 %v2831, 16
        %v3249 = vrot.slane %v3247, 4
        %v3250 = vor.u32 %v3246, %v3249
        %v3251 = vshrl.u32 %v2833, 16
        %v3253 = vrot.slane %v3251, 3
        %v3254 = vshll.u32 %v2833, 16
        %v3256 = vrot.slane %v3254, 4
        %v3257 = vor.u32 %v3253, %v3256
        %v3258 = vsel %vm2859, %v3250, %v3257
        %v3260 = vshrl.u32 %v2750, 16
        %v3262 = vrot.slane %v3260, 3
        %v3263 = vshll.u32 %v2750, 16
        %v3265 = vrot.slane %v3263, 4
        %v3266 = vor.u32 %v3262, %v3265
        %v3268 = vshrl.u32 %v2752, 16
        %v3270 = vrot.slane %v3268, 3
        %v3271 = vshll.u32 %v2752, 16
        %v3273 = vrot.slane %v3271, 4
        %v3274 = vor.u32 %v3270, %v3273
        %v3275 = vsel %vm2859, %v3266, %v3274
        %v3276 = vshrl.u32 %v2836, 16
        %v3278 = vrot.slane %v3276, 3
        %v3279 = vshll.u32 %v2836, 16
        %v3281 = vrot.slane %v3279, 4
        %v3282 = vor.u32 %v3278, %v3281
        %v3283 = vshrl.u32 %v2838, 16
        %v3285 = vrot.slane %v3283, 3
        %v3286 = vshll.u32 %v2838, 16
        %v3288 = vrot.slane %v3286, 4
        %v3289 = vor.u32 %v3285, %v3288
        %v3290 = vsel %vm2859, %v3282, %v3289
        %v3292 = vshrl.u32 %v2753, 16
        %v3294 = vrot.slane %v3292, 3
        %v3295 = vshll.u32 %v2753, 16
        %v3297 = vrot.slane %v3295, 4
        %v3298 = vor.u32 %v3294, %v3297
        %v3300 = vshrl.u32 %v2755, 16
        %v3302 = vrot.slane %v3300, 3
        %v3303 = vshll.u32 %v2755, 16
        %v3305 = vrot.slane %v3303, 4
        %v3306 = vor.u32 %v3302, %v3305
        %v3307 = vsel %vm2859, %v3298, %v3306
        %v3308 = vshrl.u32 %v2841, 16
        %v3310 = vrot.slane %v3308, 3
        %v3311 = vshll.u32 %v2841, 16
        %v3313 = vrot.slane %v3311, 4
        %v3314 = vor.u32 %v3310, %v3313
        %v3315 = vshrl.u32 %v2843, 16
        %v3317 = vrot.slane %v3315, 3
        %v3318 = vshll.u32 %v2843, 16
        %v3320 = vrot.slane %v3318, 4
        %v3321 = vor.u32 %v3317, %v3320
        %v3322 = vsel %vm2859, %v3314, %v3321
        %v3324 = vshrl.u32 %v2756, 16
        %v3326 = vrot.slane %v3324, 3
        %v3327 = vshll.u32 %v2756, 16
        %v3329 = vrot.slane %v3327, 4
        %v3330 = vor.u32 %v3326, %v3329
        %v3332 = vshrl.u32 %v2758, 16
        %v3334 = vrot.slane %v3332, 3
        %v3335 = vshll.u32 %v2758, 16
        %v3337 = vrot.slane %v3335, 4
        %v3338 = vor.u32 %v3334, %v3337
        %v3339 = vsel %vm2859, %v3330, %v3338
        %v3340 = vshrl.u32 %v2846, 16
        %v3342 = vrot.slane %v3340, 3
        %v3343 = vshll.u32 %v2846, 16
        %v3345 = vrot.slane %v3343, 4
        %v3346 = vor.u32 %v3342, %v3345
        %v3347 = vshrl.u32 %v2848, 16
        %v3349 = vrot.slane %v3347, 3
        %v3350 = vshll.u32 %v2848, 16
        %v3352 = vrot.slane %v3350, 4
        %v3353 = vor.u32 %v3349, %v3352
        %v3354 = vsel %vm2859, %v3346, %v3353
        %v3356 = vshrl.u32 %v2759, 16
        %v3358 = vrot.slane %v3356, 3
        %v3359 = vshll.u32 %v2759, 16
        %v3361 = vrot.slane %v3359, 4
        %v3362 = vor.u32 %v3358, %v3361
        %v3364 = vshrl.u32 %v2761, 16
        %v3366 = vrot.slane %v3364, 3
        %v3367 = vshll.u32 %v2761, 16
        %v3369 = vrot.slane %v3367, 4
        %v3370 = vor.u32 %v3366, %v3369
        %v3371 = vsel %vm2859, %v3362, %v3370
        %v3388 = vld [vmem:[%s5] sm:$0xf]
        %v3389 = vld [vmem:[%s5 + $0x4] sm:$0xf]
        %v3390 = vld [vmem:[%s5 + $0x8] sm:$0xf]
        %v3391 = vld [vmem:[%s5 + $0xc] sm:$0xf]
        %v3392 = vld [vmem:[%s5 + $0x10] sm:$0xf]
        %v3393 = vld [vmem:[%s5 + $0x14] sm:$0xf]
        %v3394 = vld [vmem:[%s5 + $0x18] sm:$0xf]
        %v3395 = vld [vmem:[%s5 + $0x1c] sm:$0xf]
        %v3396 = vld [vmem:[%s5 + $0x20] sm:$0xf]
        %v3397 = vld [vmem:[%s5 + $0x24] sm:$0xf]
        %v3398 = vld [vmem:[%s5 + $0x28] sm:$0xf]
        %v3399 = vld [vmem:[%s5 + $0x2c] sm:$0xf]
        %v3400 = vld [vmem:[%s5 + $0x30] sm:$0xf]
        %v3401 = vld [vmem:[%s5 + $0x34] sm:$0xf]
        %v3402 = vld [vmem:[%s5 + $0x38] sm:$0xf]
        %v3403 = vld [vmem:[%s5 + $0x3c] sm:$0xf]
        %v3404 = vld [vmem:[%s5 + $0x40] sm:$0xf]
        %v3405 = vld [vmem:[%s5 + $0x44] sm:$0xf]
        %v3406 = vld [vmem:[%s5 + $0x48] sm:$0xf]
        %v3407 = vld [vmem:[%s5 + $0x4c] sm:$0xf]
        %v3408 = vld [vmem:[%s5 + $0x50] sm:$0xf]
        %v3409 = vld [vmem:[%s5 + $0x54] sm:$0xf]
        %v3410 = vld [vmem:[%s5 + $0x58] sm:$0xf]
        %v3411 = vld [vmem:[%s5 + $0x5c] sm:$0xf]
        %v3412 = vshrl.u32 %v2851, 16
        %v3414 = vrot.slane %v3412, 3
        %v3415 = vshll.u32 %v2851, 16
        %v3417 = vrot.slane %v3415, 4
        %v3418 = vor.u32 %v3414, %v3417
        %v3419 = vshrl.u32 %v2853, 16
        %v3421 = vrot.slane %v3419, 3
        %v3422 = vshll.u32 %v2853, 16
        %v3424 = vrot.slane %v3422, 4
        %v3425 = vor.u32 %v3421, %v3424
        %v3426 = vsel %vm2859, %v3418, %v3425
        %v3428 = vshrl.u32 %v2762, 16
        %v3430 = vrot.slane %v3428, 3
        %v3431 = vshll.u32 %v2762, 16
        %v3433 = vrot.slane %v3431, 4
        %v3434 = vor.u32 %v3430, %v3433
        %v3436 = vshrl.u32 %v2764, 16
        %v3438 = vrot.slane %v3436, 3
        %v3439 = vshll.u32 %v2764, 16
        %v3441 = vrot.slane %v3439, 4
        %v3442 = vor.u32 %v3438, %v3441
        %v3443 = vsel %vm2859, %v3434, %v3442
        %s3445 = scalar_lea.vmem %s5, 96
        %v3446 = vld [vmem:[%s3445] sm:$0xf]
        %v3447 = vld [vmem:[%s3445 + $0x4] sm:$0xf]
        %v3448 = vld [vmem:[%s3445 + $0x8] sm:$0xf]
        %v3449 = vld [vmem:[%s3445 + $0xc] sm:$0xf]
        %v3450 = vld [vmem:[%s3445 + $0x10] sm:$0xf]
        %v3451 = vld [vmem:[%s3445 + $0x14] sm:$0xf]
        %v3452 = vld [vmem:[%s3445 + $0x18] sm:$0xf]
        %v3453 = vld [vmem:[%s3445 + $0x1c] sm:$0xf]
        %v3454 = vld [vmem:[%s3445 + $0x20] sm:$0xf]
        %v3455 = vld [vmem:[%s3445 + $0x24] sm:$0xf]
        %v3456 = vld [vmem:[%s3445 + $0x28] sm:$0xf]
        %v3457 = vld [vmem:[%s3445 + $0x2c] sm:$0xf]
        %v3458 = vld [vmem:[%s3445 + $0x30] sm:$0xf]
        %v3459 = vld [vmem:[%s3445 + $0x34] sm:$0xf]
        %v3460 = vld [vmem:[%s3445 + $0x38] sm:$0xf]
        %v3461 = vld [vmem:[%s3445 + $0x3c] sm:$0xf]
        %v3462 = vld [vmem:[%s3445 + $0x40] sm:$0xf]
        %v3463 = vld [vmem:[%s3445 + $0x44] sm:$0xf]
        %v3464 = vld [vmem:[%s3445 + $0x48] sm:$0xf]
        %v3465 = vld [vmem:[%s3445 + $0x4c] sm:$0xf]
        %v3466 = vld [vmem:[%s3445 + $0x50] sm:$0xf]
        %v3467 = vld [vmem:[%s3445 + $0x54] sm:$0xf]
        %v3468 = vld [vmem:[%s3445 + $0x58] sm:$0xf]
        %v3469 = vld [vmem:[%s3445 + $0x5c] sm:$0xf]
        %v3494 = vunpack.c.l.b16 %v3446
        %v3495 = vunpack.c.l.b16 %v3447
        %v3496 = vunpack.c.l.b16 %v3448
        %v3497 = vunpack.c.l.b16 %v3449
        %v3498 = vunpack.c.l.b16 %v3450
        %v3499 = vunpack.c.l.b16 %v3451
        %v3500 = vunpack.c.l.b16 %v3452
        %v3501 = vunpack.c.l.b16 %v3453
        %v3502 = vunpack.c.l.b16 %v3454
        %v3503 = vunpack.c.l.b16 %v3455
        %v3504 = vunpack.c.l.b16 %v3456
        %v3505 = vunpack.c.l.b16 %v3457
        %v3506 = vunpack.c.l.b16 %v3458
        %v3507 = vunpack.c.l.b16 %v3459
        %v3508 = vunpack.c.l.b16 %v3460
        %v3509 = vunpack.c.l.b16 %v3461
        %v3510 = vunpack.c.l.b16 %v3462
        %v3511 = vunpack.c.l.b16 %v3463
        %v3512 = vunpack.c.l.b16 %v3464
        %v3513 = vunpack.c.l.b16 %v3465
        %v3514 = vunpack.c.l.b16 %v3466
        %v3515 = vunpack.c.l.b16 %v3467
        %v3516 = vunpack.c.l.b16 %v3468
        %v3517 = vunpack.c.l.b16 %v3469
        %v3518 = vpack.c.b16 %v3495, %v3494
        %v3519 = vpack.c.b16 %v3497, %v3496
        %v3520 = vpack.c.b16 %v3499, %v3498
        %v3521 = vpack.c.b16 %v3501, %v3500
        %v3522 = vpack.c.b16 %v3503, %v3502
        %v3523 = vpack.c.b16 %v3505, %v3504
        %v3524 = vpack.c.b16 %v3507, %v3506
        %v3525 = vpack.c.b16 %v3509, %v3508
        %v3526 = vpack.c.b16 %v3511, %v3510
        %v3527 = vpack.c.b16 %v3513, %v3512
        %v3528 = vpack.c.b16 %v3515, %v3514
        %v3529 = vpack.c.b16 %v3517, %v3516
        %v3543 = vsel %vm2768, %v2923, 0
        %v3546 = vsel %vm2768, %v2955, 0
        %v3549 = vsel %vm2768, %v2987, 0
        %v3552 = vsel %vm2768, %v3019, 0
        %v3555 = vsel %vm2768, %v3051, 0
        %v3558 = vsel %vm2768, %v3083, 0
        %v3561 = vsel %vm2768, %v3115, 0
        %v3564 = vsel %vm2768, %v3147, 0
        %v3567 = vsel %vm2768, %v3179, 0
        %v3570 = vsel %vm2768, %v3211, 0
        %v3573 = vsel %vm2768, %v3243, 0
        %v3576 = vsel %vm2768, %v3275, 0
        %v3579 = vsel %vm2768, %v3307, 0
        %v3582 = vsel %vm2768, %v3339, 0
        %v3585 = vsel %vm2768, %v3371, 0
        %v3588 = vsel %vm2768, %v3443, 0
        %3590 = vmatprep.subr.bf16.mxu0 0
        %3591 = vmatpush1.bf16.msra.mxu0 %v3518
        %3592 = vmatprep.subr.bf16.mxu0 0
        %3593 = vmatpush1.bf16.msra.mxu0 %v3519
        %3594 = vmatprep.subr.bf16.mxu0 0
        %3595 = vmatpush1.bf16.msra.mxu0 %v3520
        %3596 = vmatprep.subr.bf16.mxu0 0
        %3597 = vmatpush1.bf16.msra.mxu0 %v3521
        %3598 = vmatprep.subr.bf16.mxu0 0
        %3599 = vmatpush1.bf16.msra.mxu0 %v3522
        %3600 = vmatprep.subr.bf16.mxu0 0
        %3601 = vmatpush1.bf16.msra.mxu0 %v3523
        %3602 = vmatprep.subr.bf16.mxu0 0
        %3603 = vmatpush1.bf16.msra.mxu0 %v3524
        %3604 = vmatprep.subr.bf16.mxu0 0
        %3605 = vmatpush1.bf16.msra.mxu0 %v3525
        %3606 = vmatprep.subr.bf16.mxu0 0
        %3607 = vmatpush1.bf16.msra.mxu0 %v3526
        %3608 = vmatprep.subr.bf16.mxu0 0
        %3609 = vmatpush1.bf16.msra.mxu0 %v3527
        %3610 = vmatprep.subr.bf16.mxu0 0
        %3611 = vmatpush1.bf16.msra.mxu0 %v3528
        %3612 = vmatprep.subr.bf16.mxu0 0
        %3613 = vmatpush1.bf16.msra.mxu0 %v3529
        %3614 = vmatprep.subr.bf16.mxu0 0
        %3615 = vmatpush1.bf16.msra.mxu0 0
        %3616 = vmatprep.subr.bf16.mxu0 0
        %3617 = vmatpush1.bf16.msra.mxu0 0
        %3618 = vmatprep.subr.bf16.mxu0 0
        %3619 = vmatpush1.bf16.msra.mxu0 0
        %3620 = vmatprep.subr.bf16.mxu0 0
        %3621 = vmatpush1.bf16.msra.mxu0 0
        %3622 = vmatprep.mubr.bf16.mxu0 %v3543
        %3623 = vmatmul.mubr.bf16.gmra.mrb[0].mxu0 %v2906
        %v3624 = vpop.f32.mrb[0].mxu0
        %v3625 = vadd.f32 0.0, %v3624
        %v3626 = vpop.f32.mrb[0].mxu0
        %v3627 = vpop.f32.mrb[0].mxu0
        %v3628 = vadd.f32 0.0, %v3627
        %v3629 = vpop.f32.mrb[0].mxu0
        %3630 = vmatprep.mubr.bf16.mxu0 %v3546
        %3631 = vmatmul.mubr.bf16.gmra.mrb[0].mxu0 %v2938
        %v3632 = vpop.f32.mrb[0].mxu0
        %v3633 = vadd.f32 0.0, %v3632
        %v3634 = vpop.f32.mrb[0].mxu0
        %v3635 = vpop.f32.mrb[0].mxu0
        %v3636 = vadd.f32 0.0, %v3635
        %v3637 = vpop.f32.mrb[0].mxu0
        %3638 = vmatprep.mubr.bf16.mxu0 %v3549
        %3639 = vmatmul.mubr.bf16.gmra.mrb[0].mxu0 %v2970
        %v3640 = vpop.f32.mrb[0].mxu0
        %v3641 = vadd.f32 0.0, %v3640
        %v3642 = vpop.f32.mrb[0].mxu0
        %v3643 = vpop.f32.mrb[0].mxu0
        %v3644 = vadd.f32 0.0, %v3643
        %v3645 = vpop.f32.mrb[0].mxu0
        %3646 = vmatprep.mubr.bf16.mxu0 %v3552
        %3647 = vmatmul.mubr.bf16.gmra.mrb[0].mxu0 %v3002
        %v3648 = vpop.f32.mrb[0].mxu0
        %v3649 = vadd.f32 0.0, %v3648
        %v3650 = vpop.f32.mrb[0].mxu0
        %v3651 = vpop.f32.mrb[0].mxu0
        %v3652 = vadd.f32 0.0, %v3651
        %v3653 = vpop.f32.mrb[0].mxu0
        %3654 = vmatprep.mubr.bf16.mxu0 %v3555
        %3655 = vmatmul.mubr.bf16.gmra.mrb[0].mxu0 %v3034
        %v3656 = vpop.f32.mrb[0].mxu0
        %v3657 = vadd.f32 0.0, %v3656
        %v3658 = vpop.f32.mrb[0].mxu0
        %v3659 = vpop.f32.mrb[0].mxu0
        %v3660 = vadd.f32 0.0, %v3659
        %v3661 = vpop.f32.mrb[0].mxu0
        %3662 = vmatprep.mubr.bf16.mxu0 %v3558
        %3663 = vmatmul.mubr.bf16.gmra.mrb[0].mxu0 %v3066
        %v3664 = vpop.f32.mrb[0].mxu0
        %v3665 = vadd.f32 0.0, %v3664
        %v3666 = vpop.f32.mrb[0].mxu0
        %v3667 = vpop.f32.mrb[0].mxu0
        %v3668 = vadd.f32 0.0, %v3667
        %v3669 = vpop.f32.mrb[0].mxu0
        %3670 = vmatprep.mubr.bf16.mxu0 %v3561
        %3671 = vmatmul.mubr.bf16.gmra.mrb[0].mxu0 %v3098
        %v3672 = vpop.f32.mrb[0].mxu0
        %v3673 = vadd.f32 0.0, %v3672
        %v3674 = vpop.f32.mrb[0].mxu0
        %v3675 = vpop.f32.mrb[0].mxu0
        %v3676 = vadd.f32 0.0, %v3675
        %v3677 = vpop.f32.mrb[0].mxu0
        %3678 = vmatprep.mubr.bf16.mxu0 %v3564
        %3679 = vmatmul.mubr.bf16.gmra.mrb[0].mxu0 %v3130
        %v3680 = vpop.f32.mrb[0].mxu0
        %v3681 = vadd.f32 0.0, %v3680
        %v3682 = vpop.f32.mrb[0].mxu0
        %v3683 = vpop.f32.mrb[0].mxu0
        %v3684 = vadd.f32 0.0, %v3683
        %v3685 = vpop.f32.mrb[0].mxu0
        %3686 = vmatprep.mubr.bf16.mxu0 %v3567
        %3687 = vmatmul.mubr.bf16.gmra.mrb[0].mxu0 %v3162
        %v3688 = vpop.f32.mrb[0].mxu0
        %v3689 = vadd.f32 0.0, %v3688
        %v3690 = vpop.f32.mrb[0].mxu0
        %v3691 = vpop.f32.mrb[0].mxu0
        %v3692 = vadd.f32 0.0, %v3691
        %v3693 = vpop.f32.mrb[0].mxu0
        %3694 = vmatprep.mubr.bf16.mxu0 %v3570
        %3695 = vmatmul.mubr.bf16.gmra.mrb[0].mxu0 %v3194
        %v3696 = vpop.f32.mrb[0].mxu0
        %v3697 = vadd.f32 0.0, %v3696
        %v3698 = vpop.f32.mrb[0].mxu0
        %v3699 = vpop.f32.mrb[0].mxu0
        %v3700 = vadd.f32 0.0, %v3699
        %v3701 = vpop.f32.mrb[0].mxu0
        %3702 = vmatprep.mubr.bf16.mxu0 %v3573
        %3703 = vmatmul.mubr.bf16.gmra.mrb[0].mxu0 %v3226
        %v3704 = vpop.f32.mrb[0].mxu0
        %v3705 = vadd.f32 0.0, %v3704
        %v3706 = vpop.f32.mrb[0].mxu0
        %v3707 = vpop.f32.mrb[0].mxu0
        %v3708 = vadd.f32 0.0, %v3707
        %v3709 = vpop.f32.mrb[0].mxu0
        %3710 = vmatprep.mubr.bf16.mxu0 %v3576
        %3711 = vmatmul.mubr.bf16.gmra.mrb[0].mxu0 %v3258
        %v3712 = vpop.f32.mrb[0].mxu0
        %v3713 = vadd.f32 0.0, %v3712
        %v3714 = vpop.f32.mrb[0].mxu0
        %v3715 = vpop.f32.mrb[0].mxu0
        %v3716 = vadd.f32 0.0, %v3715
        %v3717 = vpop.f32.mrb[0].mxu0
        %3718 = vmatprep.mubr.bf16.mxu0 %v3579
        %3719 = vmatmul.mubr.bf16.gmra.mrb[0].mxu0 %v3290
        %v3720 = vpop.f32.mrb[0].mxu0
        %v3721 = vadd.f32 0.0, %v3720
        %v3722 = vpop.f32.mrb[0].mxu0
        %v3723 = vpop.f32.mrb[0].mxu0
        %v3724 = vadd.f32 0.0, %v3723
        %v3725 = vpop.f32.mrb[0].mxu0
        %3726 = vmatprep.mubr.bf16.mxu0 %v3582
        %3727 = vmatmul.mubr.bf16.gmra.mrb[0].mxu0 %v3322
        %v3728 = vpop.f32.mrb[0].mxu0
        %v3729 = vadd.f32 0.0, %v3728
        %v3730 = vpop.f32.mrb[0].mxu0
        %v3731 = vpop.f32.mrb[0].mxu0
        %v3732 = vadd.f32 0.0, %v3731
        %v3733 = vpop.f32.mrb[0].mxu0
        %3734 = vmatprep.mubr.bf16.mxu0 %v3585
        %3735 = vmatmul.mubr.bf16.gmra.mrb[0].mxu0 %v3354
        %v3736 = vpop.f32.mrb[0].mxu0
        %v3737 = vadd.f32 0.0, %v3736
        %v3738 = vpop.f32.mrb[0].mxu0
        %v3739 = vpop.f32.mrb[0].mxu0
        %v3740 = vadd.f32 0.0, %v3739
        %v3741 = vpop.f32.mrb[0].mxu0
        %3742 = vmatprep.mubr.bf16.mxu0 %v3588
        %3743 = vmatmul.mubr.bf16.gmra.mrb[0].mxu0 %v3426
        %v3744 = vpop.f32.mrb[0].mxu0
        %v3745 = vadd.f32 0.0, %v3744
        %v3746 = vpop.f32.mrb[0].mxu0
        %v3747 = vpop.f32.mrb[0].mxu0
        %v3748 = vadd.f32 0.0, %v3747
        %v3749 = vpop.f32.mrb[0].mxu0
        %3750 = vdwg.mxu0
        %v3775 = vunpack.c.l.b16 %v3388
        %v3776 = vunpack.c.l.b16 %v3389
        %v3777 = vunpack.c.l.b16 %v3390
        %v3778 = vunpack.c.l.b16 %v3391
        %v3779 = vunpack.c.l.b16 %v3392
        %v3780 = vunpack.c.l.b16 %v3393
        %v3781 = vunpack.c.l.b16 %v3394
        %v3782 = vunpack.c.l.b16 %v3395
        %v3783 = vunpack.c.l.b16 %v3396
        %v3784 = vunpack.c.l.b16 %v3397
        %v3785 = vunpack.c.l.b16 %v3398
        %v3786 = vunpack.c.l.b16 %v3399
        %v3787 = vunpack.c.l.b16 %v3400
        %v3788 = vunpack.c.l.b16 %v3401
        %v3789 = vunpack.c.l.b16 %v3402
        %v3790 = vunpack.c.l.b16 %v3403
        %v3791 = vunpack.c.l.b16 %v3404
        %v3792 = vunpack.c.l.b16 %v3405
        %v3793 = vunpack.c.l.b16 %v3406
        %v3794 = vunpack.c.l.b16 %v3407
        %v3795 = vunpack.c.l.b16 %v3408
        %v3796 = vunpack.c.l.b16 %v3409
        %v3797 = vunpack.c.l.b16 %v3410
        %v3798 = vunpack.c.l.b16 %v3411
        %v3799 = vpack.c.b16 %v3776, %v3775
        %v3800 = vpack.c.b16 %v3778, %v3777
        %v3801 = vpack.c.b16 %v3780, %v3779
        %v3802 = vpack.c.b16 %v3782, %v3781
        %v3803 = vpack.c.b16 %v3784, %v3783
        %v3804 = vpack.c.b16 %v3786, %v3785
        %v3805 = vpack.c.b16 %v3788, %v3787
        %v3806 = vpack.c.b16 %v3790, %v3789
        %v3807 = vpack.c.b16 %v3792, %v3791
        %v3808 = vpack.c.b16 %v3794, %v3793
        %v3809 = vpack.c.b16 %v3796, %v3795
        %v3810 = vpack.c.b16 %v3798, %v3797
        %v3824 = vsel %vm2768, %v2891, 0
        %3826 = vmatprep.subr.bf16.mxu0 0
        %3827 = vmatpush1.bf16.msra.mxu0 %v3799
        %3828 = vmatprep.subr.bf16.mxu0 0
        %3829 = vmatpush1.bf16.msra.mxu0 %v3800
        %3830 = vmatprep.subr.bf16.mxu0 0
        %3831 = vmatpush1.bf16.msra.mxu0 %v3801
        %3832 = vmatprep.subr.bf16.mxu0 0
        %3833 = vmatpush1.bf16.msra.mxu0 %v3802
        %3834 = vmatprep.subr.bf16.mxu0 0
        %3835 = vmatpush1.bf16.msra.mxu0 %v3803
        %3836 = vmatprep.subr.bf16.mxu0 0
        %3837 = vmatpush1.bf16.msra.mxu0 %v3804
        %3838 = vmatprep.subr.bf16.mxu0 0
        %3839 = vmatpush1.bf16.msra.mxu0 %v3805
        %3840 = vmatprep.subr.bf16.mxu0 0
        %3841 = vmatpush1.bf16.msra.mxu0 %v3806
        %3842 = vmatprep.subr.bf16.mxu0 0
        %3843 = vmatpush1.bf16.msra.mxu0 %v3807
        %3844 = vmatprep.subr.bf16.mxu0 0
        %3845 = vmatpush1.bf16.msra.mxu0 %v3808
        %3846 = vmatprep.subr.bf16.mxu0 0
        %3847 = vmatpush1.bf16.msra.mxu0 %v3809
        %3848 = vmatprep.subr.bf16.mxu0 0
        %3849 = vmatpush1.bf16.msra.mxu0 %v3810
        %3850 = vmatprep.subr.bf16.mxu0 0
        %3851 = vmatpush1.bf16.msra.mxu0 0
        %3852 = vmatprep.subr.bf16.mxu0 0
        %3853 = vmatpush1.bf16.msra.mxu0 0
        %3854 = vmatprep.subr.bf16.mxu0 0
        %3855 = vmatpush1.bf16.msra.mxu0 0
        %3856 = vmatprep.subr.bf16.mxu0 0
        %3857 = vmatpush1.bf16.msra.mxu0 0
        %3858 = vmatprep.mubr.bf16.mxu0 %v3824
        %3859 = vmatmul.mubr.bf16.gmra.mrb[0].mxu0 %v2874
        %v3860 = vpop.f32.mrb[0].mxu0
        %v3861 = vadd.f32 %v3625, %v3860
        %v3862 = vpop.f32.mrb[0].mxu0
        %v3863 = vpop.f32.mrb[0].mxu0
        %v3864 = vadd.f32 %v3628, %v3863
        %v3865 = vpop.f32.mrb[0].mxu0
        %3866 = vmatprep.mubr.bf16.mxu0 %v3543
        %3867 = vmatmul.mubr.bf16.gmra.mrb[0].mxu0 %v2906
        %v3868 = vpop.f32.mrb[0].mxu0
        %v3869 = vadd.f32 %v3633, %v3868
        %v3870 = vpop.f32.mrb[0].mxu0
        %v3871 = vpop.f32.mrb[0].mxu0
        %v3872 = vadd.f32 %v3636, %v3871
        %v3873 = vpop.f32.mrb[0].mxu0
        %3874 = vmatprep.mubr.bf16.mxu0 %v3546
        %3875 = vmatmul.mubr.bf16.gmra.mrb[0].mxu0 %v2938
        %v3876 = vpop.f32.mrb[0].mxu0
        %v3877 = vadd.f32 %v3641, %v3876
        %v3878 = vpop.f32.mrb[0].mxu0
        %v3879 = vpop.f32.mrb[0].mxu0
        %v3880 = vadd.f32 %v3644, %v3879
        %v3881 = vpop.f32.mrb[0].mxu0
        %3882 = vmatprep.mubr.bf16.mxu0 %v3549
        %3883 = vmatmul.mubr.bf16.gmra.mrb[0].mxu0 %v2970
        %v3884 = vpop.f32.mrb[0].mxu0
        %v3885 = vadd.f32 %v3649, %v3884
        %v3886 = vpop.f32.mrb[0].mxu0
        %v3887 = vpop.f32.mrb[0].mxu0
        %v3888 = vadd.f32 %v3652, %v3887
        %v3889 = vpop.f32.mrb[0].mxu0
        %3890 = vmatprep.mubr.bf16.mxu0 %v3552
        %3891 = vmatmul.mubr.bf16.gmra.mrb[0].mxu0 %v3002
        %v3892 = vpop.f32.mrb[0].mxu0
        %v3893 = vadd.f32 %v3657, %v3892
        %v3894 = vpop.f32.mrb[0].mxu0
        %v3895 = vpop.f32.mrb[0].mxu0
        %v3896 = vadd.f32 %v3660, %v3895
        %v3897 = vpop.f32.mrb[0].mxu0
        %3898 = vmatprep.mubr.bf16.mxu0 %v3555
        %3899 = vmatmul.mubr.bf16.gmra.mrb[0].mxu0 %v3034
        %v3900 = vpop.f32.mrb[0].mxu0
        %v3901 = vadd.f32 %v3665, %v3900
        %v3902 = vpop.f32.mrb[0].mxu0
        %v3903 = vpop.f32.mrb[0].mxu0
        %v3904 = vadd.f32 %v3668, %v3903
        %v3905 = vpop.f32.mrb[0].mxu0
        %3906 = vmatprep.mubr.bf16.mxu0 %v3558
        %3907 = vmatmul.mubr.bf16.gmra.mrb[0].mxu0 %v3066
        %v3908 = vpop.f32.mrb[0].mxu0
        %v3909 = vadd.f32 %v3673, %v3908
        %v3910 = vpop.f32.mrb[0].mxu0
        %v3911 = vpop.f32.mrb[0].mxu0
        %v3912 = vadd.f32 %v3676, %v3911
        %v3913 = vpop.f32.mrb[0].mxu0
        %3914 = vmatprep.mubr.bf16.mxu0 %v3561
        %3915 = vmatmul.mubr.bf16.gmra.mrb[0].mxu0 %v3098
        %v3916 = vpop.f32.mrb[0].mxu0
        %v3917 = vadd.f32 %v3681, %v3916
        %v3918 = vpop.f32.mrb[0].mxu0
        %v3919 = vpop.f32.mrb[0].mxu0
        %v3920 = vadd.f32 %v3684, %v3919
        %v3921 = vpop.f32.mrb[0].mxu0
        %3922 = vmatprep.mubr.bf16.mxu0 %v3564
        %3923 = vmatmul.mubr.bf16.gmra.mrb[0].mxu0 %v3130
        %v3924 = vpop.f32.mrb[0].mxu0
        %v3925 = vadd.f32 %v3689, %v3924
        %v3926 = vpop.f32.mrb[0].mxu0
        %v3927 = vpop.f32.mrb[0].mxu0
        %v3928 = vadd.f32 %v3692, %v3927
        %v3929 = vpop.f32.mrb[0].mxu0
        %3930 = vmatprep.mubr.bf16.mxu0 %v3567
        %3931 = vmatmul.mubr.bf16.gmra.mrb[0].mxu0 %v3162
        %v3932 = vpop.f32.mrb[0].mxu0
        %v3933 = vadd.f32 %v3697, %v3932
        %v3934 = vpop.f32.mrb[0].mxu0
        %v3935 = vpop.f32.mrb[0].mxu0
        %v3936 = vadd.f32 %v3700, %v3935
        %v3937 = vpop.f32.mrb[0].mxu0
        %3938 = vmatprep.mubr.bf16.mxu0 %v3570
        %3939 = vmatmul.mubr.bf16.gmra.mrb[0].mxu0 %v3194
        %v3940 = vpop.f32.mrb[0].mxu0
        %v3941 = vadd.f32 %v3705, %v3940
        %v3942 = vpop.f32.mrb[0].mxu0
        %v3943 = vpop.f32.mrb[0].mxu0
        %v3944 = vadd.f32 %v3708, %v3943
        %v3945 = vpop.f32.mrb[0].mxu0
        %3946 = vmatprep.mubr.bf16.mxu0 %v3573
        %3947 = vmatmul.mubr.bf16.gmra.mrb[0].mxu0 %v3226
        %v3948 = vpop.f32.mrb[0].mxu0
        %v3949 = vadd.f32 %v3713, %v3948
        %v3950 = vpop.f32.mrb[0].mxu0
        %v3951 = vpop.f32.mrb[0].mxu0
        %v3952 = vadd.f32 %v3716, %v3951
        %v3953 = vpop.f32.mrb[0].mxu0
        %3954 = vmatprep.mubr.bf16.mxu0 %v3576
        %3955 = vmatmul.mubr.bf16.gmra.mrb[0].mxu0 %v3258
        %v3956 = vpop.f32.mrb[0].mxu0
        %v3957 = vadd.f32 %v3721, %v3956
        %v3958 = vpop.f32.mrb[0].mxu0
        %v3959 = vpop.f32.mrb[0].mxu0
        %v3960 = vadd.f32 %v3724, %v3959
        %v3961 = vpop.f32.mrb[0].mxu0
        %3962 = vmatprep.mubr.bf16.mxu0 %v3579
        %3963 = vmatmul.mubr.bf16.gmra.mrb[0].mxu0 %v3290
        %v3964 = vpop.f32.mrb[0].mxu0
        %v3965 = vadd.f32 %v3729, %v3964
        %v3966 = vpop.f32.mrb[0].mxu0
        %v3967 = vpop.f32.mrb[0].mxu0
        %v3968 = vadd.f32 %v3732, %v3967
        %v3969 = vpop.f32.mrb[0].mxu0
        %3970 = vmatprep.mubr.bf16.mxu0 %v3582
        %3971 = vmatmul.mubr.bf16.gmra.mrb[0].mxu0 %v3322
        %v3972 = vpop.f32.mrb[0].mxu0
        %v3973 = vadd.f32 %v3737, %v3972
        %v3974 = vpop.f32.mrb[0].mxu0
        %v3975 = vpop.f32.mrb[0].mxu0
        %v3976 = vadd.f32 %v3740, %v3975
        %v3977 = vpop.f32.mrb[0].mxu0
        %3978 = vmatprep.mubr.bf16.mxu0 %v3585
        %3979 = vmatmul.mubr.bf16.gmra.mrb[0].mxu0 %v3354
        %v3980 = vpop.f32.mrb[0].mxu0
        %v3981 = vadd.f32 %v3745, %v3980
        %v3982 = vpop.f32.mrb[0].mxu0
        %v3983 = vpop.f32.mrb[0].mxu0
        %v3984 = vadd.f32 %v3748, %v3983
        %v3985 = vpop.f32.mrb[0].mxu0
        %3986 = vdwg.mxu0
        %v3987 = vshrl.u32 %v2856, 16
        %v3989 = vrot.slane %v3987, 3
        %v3990 = vshll.u32 %v2856, 16
        %v3992 = vrot.slane %v3990, 4
        %v3993 = vor.u32 %v3989, %v3992
        %v3994 = vshrl.u32 %v2858, 16
        %v3996 = vrot.slane %v3994, 3
        %v3997 = vshll.u32 %v2858, 16
        %v3999 = vrot.slane %v3997, 4
        %v4000 = vor.u32 %v3996, %v3999
        %v4001 = vsel %vm2859, %v3993, %v4000
        %v4003 = vshrl.u32 %v2765, 16
        %v4005 = vrot.slane %v4003, 3
        %v4006 = vshll.u32 %v2765, 16
        %v4008 = vrot.slane %v4006, 4
        %v4009 = vor.u32 %v4005, %v4008
        %v4011 = vshrl.u32 %v2767, 16
        %v4013 = vrot.slane %v4011, 3
        %v4014 = vshll.u32 %v2767, 16
        %v4016 = vrot.slane %v4014, 4
        %v4017 = vor.u32 %v4013, %v4016
        %v4018 = vsel %vm2859, %v4009, %v4017
        %s4020 = scalar_lea.vmem %s5, 192
        %v4021 = vld [vmem:[%s4020] sm:$0xf]
        %v4022 = vld [vmem:[%s4020 + $0x4] sm:$0xf]
        %v4023 = vld [vmem:[%s4020 + $0x8] sm:$0xf]
        %v4024 = vld [vmem:[%s4020 + $0xc] sm:$0xf]
        %v4025 = vld [vmem:[%s4020 + $0x10] sm:$0xf]
        %v4026 = vld [vmem:[%s4020 + $0x14] sm:$0xf]
        %v4027 = vld [vmem:[%s4020 + $0x18] sm:$0xf]
        %v4028 = vld [vmem:[%s4020 + $0x1c] sm:$0xf]
        %v4029 = vld [vmem:[%s4020 + $0x20] sm:$0xf]
        %v4030 = vld [vmem:[%s4020 + $0x24] sm:$0xf]
        %v4031 = vld [vmem:[%s4020 + $0x28] sm:$0xf]
        %v4032 = vld [vmem:[%s4020 + $0x2c] sm:$0xf]
        %v4033 = vld [vmem:[%s4020 + $0x30] sm:$0xf]
        %v4034 = vld [vmem:[%s4020 + $0x34] sm:$0xf]
        %v4035 = vld [vmem:[%s4020 + $0x38] sm:$0xf]
        %v4036 = vld [vmem:[%s4020 + $0x3c] sm:$0xf]
        %v4037 = vld [vmem:[%s4020 + $0x40] sm:$0xf]
        %v4038 = vld [vmem:[%s4020 + $0x44] sm:$0xf]
        %v4039 = vld [vmem:[%s4020 + $0x48] sm:$0xf]
        %v4040 = vld [vmem:[%s4020 + $0x4c] sm:$0xf]
        %v4041 = vld [vmem:[%s4020 + $0x50] sm:$0xf]
        %v4042 = vld [vmem:[%s4020 + $0x54] sm:$0xf]
        %v4043 = vld [vmem:[%s4020 + $0x58] sm:$0xf]
        %v4044 = vld [vmem:[%s4020 + $0x5c] sm:$0xf]
        %v4069 = vunpack.c.l.b16 %v4021
        %v4070 = vunpack.c.l.b16 %v4022
        %v4071 = vunpack.c.l.b16 %v4023
        %v4072 = vunpack.c.l.b16 %v4024
        %v4073 = vunpack.c.l.b16 %v4025
        %v4074 = vunpack.c.l.b16 %v4026
        %v4075 = vunpack.c.l.b16 %v4027
        %v4076 = vunpack.c.l.b16 %v4028
        %v4077 = vunpack.c.l.b16 %v4029
        %v4078 = vunpack.c.l.b16 %v4030
        %v4079 = vunpack.c.l.b16 %v4031
        %v4080 = vunpack.c.l.b16 %v4032
        %v4081 = vunpack.c.l.b16 %v4033
        %v4082 = vunpack.c.l.b16 %v4034
        %v4083 = vunpack.c.l.b16 %v4035
        %v4084 = vunpack.c.l.b16 %v4036
        %v4085 = vunpack.c.l.b16 %v4037
        %v4086 = vunpack.c.l.b16 %v4038
        %v4087 = vunpack.c.l.b16 %v4039
        %v4088 = vunpack.c.l.b16 %v4040
        %v4089 = vunpack.c.l.b16 %v4041
        %v4090 = vunpack.c.l.b16 %v4042
        %v4091 = vunpack.c.l.b16 %v4043
        %v4092 = vunpack.c.l.b16 %v4044
        %v4093 = vpack.c.b16 %v4070, %v4069
        %v4094 = vpack.c.b16 %v4072, %v4071
        %v4095 = vpack.c.b16 %v4074, %v4073
        %v4096 = vpack.c.b16 %v4076, %v4075
        %v4097 = vpack.c.b16 %v4078, %v4077
        %v4098 = vpack.c.b16 %v4080, %v4079
        %v4099 = vpack.c.b16 %v4082, %v4081
        %v4100 = vpack.c.b16 %v4084, %v4083
        %v4101 = vpack.c.b16 %v4086, %v4085
        %v4102 = vpack.c.b16 %v4088, %v4087
        %v4103 = vpack.c.b16 %v4090, %v4089
        %v4104 = vpack.c.b16 %v4092, %v4091
        %v4118 = vsel %vm2768, %v4018, 0
        %4120 = vmatprep.subr.bf16.mxu0 0
        %4121 = vmatpush1.bf16.msra.mxu0 %v4093
        %4122 = vmatprep.subr.bf16.mxu0 0
        %4123 = vmatpush1.bf16.msra.mxu0 %v4094
        %4124 = vmatprep.subr.bf16.mxu0 0
        %4125 = vmatpush1.bf16.msra.mxu0 %v4095
        %4126 = vmatprep.subr.bf16.mxu0 0
        %4127 = vmatpush1.bf16.msra.mxu0 %v4096
        %4128 = vmatprep.subr.bf16.mxu0 0
        %4129 = vmatpush1.bf16.msra.mxu0 %v4097
        %4130 = vmatprep.subr.bf16.mxu0 0
        %4131 = vmatpush1.bf16.msra.mxu0 %v4098
        %4132 = vmatprep.subr.bf16.mxu0 0
        %4133 = vmatpush1.bf16.msra.mxu0 %v4099
        %4134 = vmatprep.subr.bf16.mxu0 0
        %4135 = vmatpush1.bf16.msra.mxu0 %v4100
        %4136 = vmatprep.subr.bf16.mxu0 0
        %4137 = vmatpush1.bf16.msra.mxu0 %v4101
        %4138 = vmatprep.subr.bf16.mxu0 0
        %4139 = vmatpush1.bf16.msra.mxu0 %v4102
        %4140 = vmatprep.subr.bf16.mxu0 0
        %4141 = vmatpush1.bf16.msra.mxu0 %v4103
        %4142 = vmatprep.subr.bf16.mxu0 0
        %4143 = vmatpush1.bf16.msra.mxu0 %v4104
        %4144 = vmatprep.subr.bf16.mxu0 0
        %4145 = vmatpush1.bf16.msra.mxu0 0
        %4146 = vmatprep.subr.bf16.mxu0 0
        %4147 = vmatpush1.bf16.msra.mxu0 0
        %4148 = vmatprep.subr.bf16.mxu0 0
        %4149 = vmatpush1.bf16.msra.mxu0 0
        %4150 = vmatprep.subr.bf16.mxu0 0
        %4151 = vmatpush1.bf16.msra.mxu0 0
        %4152 = vmatprep.mubr.bf16.mxu0 %v3546
        %4153 = vmatmul.mubr.bf16.gmra.mrb[0].mxu0 %v2938
        %v4154 = vpop.f32.mrb[0].mxu0
        %v4155 = vadd.f32 0.0, %v4154
        %v4156 = vpop.f32.mrb[0].mxu0
        %v4157 = vpop.f32.mrb[0].mxu0
        %v4158 = vadd.f32 0.0, %v4157
        %v4159 = vpop.f32.mrb[0].mxu0
        %4160 = vmatprep.mubr.bf16.mxu0 %v3549
        %4161 = vmatmul.mubr.bf16.gmra.mrb[0].mxu0 %v2970
        %v4162 = vpop.f32.mrb[0].mxu0
        %v4163 = vadd.f32 0.0, %v4162
        %v4164 = vpop.f32.mrb[0].mxu0
        %v4165 = vpop.f32.mrb[0].mxu0
        %v4166 = vadd.f32 0.0, %v4165
        %v4167 = vpop.f32.mrb[0].mxu0
        %4168 = vmatprep.mubr.bf16.mxu0 %v3552
        %4169 = vmatmul.mubr.bf16.gmra.mrb[0].mxu0 %v3002
        %v4170 = vpop.f32.mrb[0].mxu0
        %v4171 = vadd.f32 0.0, %v4170
        %v4172 = vpop.f32.mrb[0].mxu0
        %v4173 = vpop.f32.mrb[0].mxu0
        %v4174 = vadd.f32 0.0, %v4173
        %v4175 = vpop.f32.mrb[0].mxu0
        %4176 = vmatprep.mubr.bf16.mxu0 %v3555
        %4177 = vmatmul.mubr.bf16.gmra.mrb[0].mxu0 %v3034
        %v4178 = vpop.f32.mrb[0].mxu0
        %v4179 = vadd.f32 0.0, %v4178
        %v4180 = vpop.f32.mrb[0].mxu0
        %v4181 = vpop.f32.mrb[0].mxu0
        %v4182 = vadd.f32 0.0, %v4181
        %v4183 = vpop.f32.mrb[0].mxu0
        %4184 = vmatprep.mubr.bf16.mxu0 %v3558
        %4185 = vmatmul.mubr.bf16.gmra.mrb[0].mxu0 %v3066
        %v4186 = vpop.f32.mrb[0].mxu0
        %v4187 = vadd.f32 0.0, %v4186
        %v4188 = vpop.f32.mrb[0].mxu0
        %v4189 = vpop.f32.mrb[0].mxu0
        %v4190 = vadd.f32 0.0, %v4189
        %v4191 = vpop.f32.mrb[0].mxu0
        %4192 = vmatprep.mubr.bf16.mxu0 %v3561
        %4193 = vmatmul.mubr.bf16.gmra.mrb[0].mxu0 %v3098
        %v4194 = vpop.f32.mrb[0].mxu0
        %v4195 = vadd.f32 0.0, %v4194
        %v4196 = vpop.f32.mrb[0].mxu0
        %v4197 = vpop.f32.mrb[0].mxu0
        %v4198 = vadd.f32 0.0, %v4197
        %v4199 = vpop.f32.mrb[0].mxu0
        %4200 = vmatprep.mubr.bf16.mxu0 %v3564
        %4201 = vmatmul.mubr.bf16.gmra.mrb[0].mxu0 %v3130
        %v4202 = vpop.f32.mrb[0].mxu0
        %v4203 = vadd.f32 0.0, %v4202
        %v4204 = vpop.f32.mrb[0].mxu0
        %v4205 = vpop.f32.mrb[0].mxu0
        %v4206 = vadd.f32 0.0, %v4205
        %v4207 = vpop.f32.mrb[0].mxu0
        %4208 = vmatprep.mubr.bf16.mxu0 %v3567
        %4209 = vmatmul.mubr.bf16.gmra.mrb[0].mxu0 %v3162
        %v4210 = vpop.f32.mrb[0].mxu0
        %v4211 = vadd.f32 0.0, %v4210
        %v4212 = vpop.f32.mrb[0].mxu0
        %v4213 = vpop.f32.mrb[0].mxu0
        %v4214 = vadd.f32 0.0, %v4213
        %v4215 = vpop.f32.mrb[0].mxu0
        %4216 = vmatprep.mubr.bf16.mxu0 %v3570
        %4217 = vmatmul.mubr.bf16.gmra.mrb[0].mxu0 %v3194
        %v4218 = vpop.f32.mrb[0].mxu0
        %v4219 = vadd.f32 0.0, %v4218
        %v4220 = vpop.f32.mrb[0].mxu0
        %v4221 = vpop.f32.mrb[0].mxu0
        %v4222 = vadd.f32 0.0, %v4221
        %v4223 = vpop.f32.mrb[0].mxu0
        %4224 = vmatprep.mubr.bf16.mxu0 %v3573
        %4225 = vmatmul.mubr.bf16.gmra.mrb[0].mxu0 %v3226
        %v4226 = vpop.f32.mrb[0].mxu0
        %v4227 = vadd.f32 0.0, %v4226
        %v4228 = vpop.f32.mrb[0].mxu0
        %v4229 = vpop.f32.mrb[0].mxu0
        %v4230 = vadd.f32 0.0, %v4229
        %v4231 = vpop.f32.mrb[0].mxu0
        %4232 = vmatprep.mubr.bf16.mxu0 %v3576
        %4233 = vmatmul.mubr.bf16.gmra.mrb[0].mxu0 %v3258
        %v4234 = vpop.f32.mrb[0].mxu0
        %v4235 = vadd.f32 0.0, %v4234
        %v4236 = vpop.f32.mrb[0].mxu0
        %v4237 = vpop.f32.mrb[0].mxu0
        %v4238 = vadd.f32 0.0, %v4237
        %v4239 = vpop.f32.mrb[0].mxu0
        %4240 = vmatprep.mubr.bf16.mxu0 %v3579
        %4241 = vmatmul.mubr.bf16.gmra.mrb[0].mxu0 %v3290
        %v4242 = vpop.f32.mrb[0].mxu0
        %v4243 = vadd.f32 0.0, %v4242
        %v4244 = vpop.f32.mrb[0].mxu0
        %v4245 = vpop.f32.mrb[0].mxu0
        %v4246 = vadd.f32 0.0, %v4245
        %v4247 = vpop.f32.mrb[0].mxu0
        %4248 = vmatprep.mubr.bf16.mxu0 %v3582
        %4249 = vmatmul.mubr.bf16.gmra.mrb[0].mxu0 %v3322
        %v4250 = vpop.f32.mrb[0].mxu0
        %v4251 = vadd.f32 0.0, %v4250
        %v4252 = vpop.f32.mrb[0].mxu0
        %v4253 = vpop.f32.mrb[0].mxu0
        %v4254 = vadd.f32 0.0, %v4253
        %v4255 = vpop.f32.mrb[0].mxu0
        %4256 = vmatprep.mubr.bf16.mxu0 %v3585
        %4257 = vmatmul.mubr.bf16.gmra.mrb[0].mxu0 %v3354
        %v4258 = vpop.f32.mrb[0].mxu0
        %v4259 = vadd.f32 0.0, %v4258
        %v4260 = vpop.f32.mrb[0].mxu0
        %v4261 = vpop.f32.mrb[0].mxu0
        %v4262 = vadd.f32 0.0, %v4261
        %v4263 = vpop.f32.mrb[0].mxu0
        %4264 = vmatprep.mubr.bf16.mxu0 %v3588
        %4265 = vmatmul.mubr.bf16.gmra.mrb[0].mxu0 %v3426
        %v4266 = vpop.f32.mrb[0].mxu0
        %v4267 = vadd.f32 0.0, %v4266
        %v4268 = vpop.f32.mrb[0].mxu0
        %v4269 = vpop.f32.mrb[0].mxu0
        %v4270 = vadd.f32 0.0, %v4269
        %v4271 = vpop.f32.mrb[0].mxu0
        %4272 = vmatprep.mubr.bf16.mxu0 %v4118
        %4273 = vmatmul.mubr.bf16.gmra.mrb[0].mxu0 %v4001
        %v4274 = vpop.f32.mrb[0].mxu0
        %v4275 = vadd.f32 0.0, %v4274
        %v4276 = vpop.f32.mrb[0].mxu0
        %v4277 = vpop.f32.mrb[0].mxu0
        %v4278 = vadd.f32 0.0, %v4277
        %v4279 = vpop.f32.mrb[0].mxu0
        %4280 = vdwg.mxu0
        %v4281 = vadd.f32 %v3861, %v4155
        %v4282 = vadd.f32 %v3864, %v4158
        %v4283 = vadd.f32 %v3869, %v4163
        %v4284 = vadd.f32 %v3872, %v4166
        %v4285 = vadd.f32 %v3877, %v4171
        %v4286 = vadd.f32 %v3880, %v4174
        %v4287 = vadd.f32 %v3885, %v4179
        %v4288 = vadd.f32 %v3888, %v4182
        %v4289 = vadd.f32 %v3893, %v4187
        %v4290 = vadd.f32 %v3896, %v4190
        %v4291 = vadd.f32 %v3901, %v4195
        %v4292 = vadd.f32 %v3904, %v4198
        %v4293 = vadd.f32 %v3909, %v4203
        %v4294 = vadd.f32 %v3912, %v4206
        %v4295 = vadd.f32 %v3917, %v4211
        %v4296 = vadd.f32 %v3920, %v4214
        %v4297 = vadd.f32 %v3925, %v4219
        %v4298 = vadd.f32 %v3928, %v4222
        %v4299 = vadd.f32 %v3933, %v4227
        %v4300 = vadd.f32 %v3936, %v4230
        %v4301 = vadd.f32 %v3941, %v4235
        %v4302 = vadd.f32 %v3944, %v4238
        %v4303 = vadd.f32 %v3949, %v4243
        %v4304 = vadd.f32 %v3952, %v4246
        %v4305 = vadd.f32 %v3957, %v4251
        %v4306 = vadd.f32 %v3960, %v4254
        %v4307 = vadd.f32 %v3965, %v4259
        %v4308 = vadd.f32 %v3968, %v4262
        %v4309 = vadd.f32 %v3973, %v4267
        %v4310 = vadd.f32 %v3976, %v4270
        %v4311 = vadd.f32 %v3981, %v4275
        %v4312 = vadd.f32 %v3984, %v4278
        %v4313 = vld [vmem:[%s6] sm:$0x1]
        %v4315 = vlaneseq
        %v4316 = vshrl.u32 %v4315, 7
        %v4317 = vsub.s32 0, %v4316
        %v4318 = vrot.slane %v4313, %v4317
        %v4320 = vadd.f32 %v4281, %v4318
        %v4321 = vadd.f32 %v4282, %v4318
        %v4322 = vadd.f32 %v4283, %v4318
        %v4323 = vadd.f32 %v4284, %v4318
        %v4324 = vadd.f32 %v4285, %v4318
        %v4325 = vadd.f32 %v4286, %v4318
        %v4326 = vadd.f32 %v4287, %v4318
        %v4327 = vadd.f32 %v4288, %v4318
        %v4328 = vadd.f32 %v4289, %v4318
        %v4329 = vadd.f32 %v4290, %v4318
        %v4330 = vadd.f32 %v4291, %v4318
        %v4331 = vadd.f32 %v4292, %v4318
        %v4332 = vadd.f32 %v4293, %v4318
        %v4333 = vadd.f32 %v4294, %v4318
        %v4334 = vadd.f32 %v4295, %v4318
        %v4335 = vadd.f32 %v4296, %v4318
        %v4336 = vadd.f32 %v4297, %v4318
        %v4337 = vadd.f32 %v4298, %v4318
        %v4338 = vadd.f32 %v4299, %v4318
        %v4339 = vadd.f32 %v4300, %v4318
        %v4340 = vadd.f32 %v4301, %v4318
        %v4341 = vadd.f32 %v4302, %v4318
        %v4342 = vadd.f32 %v4303, %v4318
        %v4343 = vadd.f32 %v4304, %v4318
        %v4344 = vadd.f32 %v4305, %v4318
        %v4345 = vadd.f32 %v4306, %v4318
        %v4346 = vadd.f32 %v4307, %v4318
        %v4347 = vadd.f32 %v4308, %v4318
        %v4348 = vadd.f32 %v4309, %v4318
        %v4349 = vadd.f32 %v4310, %v4318
        %v4350 = vadd.f32 %v4311, %v4318
        %v4351 = vadd.f32 %v4312, %v4318
        %v4352 = vmax.f32 %v4320, 0.0
        %v4353 = vmax.f32 %v4321, 0.0
        %v4354 = vmax.f32 %v4322, 0.0
        %v4355 = vmax.f32 %v4323, 0.0
        %v4356 = vmax.f32 %v4324, 0.0
        %v4357 = vmax.f32 %v4325, 0.0
        %v4358 = vmax.f32 %v4326, 0.0
        %v4359 = vmax.f32 %v4327, 0.0
        %v4360 = vmax.f32 %v4328, 0.0
        %v4361 = vmax.f32 %v4329, 0.0
        %v4362 = vmax.f32 %v4330, 0.0
        %v4363 = vmax.f32 %v4331, 0.0
        %v4364 = vmax.f32 %v4332, 0.0
        %v4365 = vmax.f32 %v4333, 0.0
        %v4366 = vmax.f32 %v4334, 0.0
        %v4367 = vmax.f32 %v4335, 0.0
        %v4368 = vmax.f32 %v4336, 0.0
        %v4369 = vmax.f32 %v4337, 0.0
        %v4370 = vmax.f32 %v4338, 0.0
        %v4371 = vmax.f32 %v4339, 0.0
        %v4372 = vmax.f32 %v4340, 0.0
        %v4373 = vmax.f32 %v4341, 0.0
        %v4374 = vmax.f32 %v4342, 0.0
        %v4375 = vmax.f32 %v4343, 0.0
        %v4376 = vmax.f32 %v4344, 0.0
        %v4377 = vmax.f32 %v4345, 0.0
        %v4378 = vmax.f32 %v4346, 0.0
        %v4379 = vmax.f32 %v4347, 0.0
        %v4380 = vmax.f32 %v4348, 0.0
        %v4381 = vmax.f32 %v4349, 0.0
        %v4382 = vmax.f32 %v4350, 0.0
        %v4383 = vmax.f32 %v4351, 0.0
        %vm4384 = vcmask 781312
        %4385 = vst.msk [vmem:[#allocation3] sm:$0xf] %vm4384, 0
        %4386 = vst.msk [vmem:[#allocation3 + $0x4] sm:$0xf] %vm4384, 0
        %4387 = vst.msk [vmem:[#allocation3 + $0x8] sm:$0xf] %vm4384, 0
        %4388 = vst.msk [vmem:[#allocation3 + $0xc] sm:$0xf] %vm4384, 0
        %vm4389 = vcmask 779264
        %4390 = vst.msk [vmem:[#allocation3 + $0x10] sm:$0x3] %vm4389, 0
        %4391 = vst.msk [vmem:[#allocation3 + $0x14] sm:$0xf] %vm4384, 0
        %4392 = vst.msk [vmem:[#allocation3 + $0x18] sm:$0xf] %vm4384, 0
        %4393 = vst.msk [vmem:[#allocation3 + $0x1c] sm:$0xf] %vm4384, 0
        %4394 = vst.msk [vmem:[#allocation3 + $0x20] sm:$0xf] %vm4384, 0
        %4395 = vst.msk [vmem:[#allocation3 + $0x24] sm:$0x3] %vm4389, 0
        %4396 = vst.msk [vmem:[#allocation3 + $0x28] sm:$0xf] %vm4384, 0
        %4397 = vst.msk [vmem:[#allocation3 + $0x2c] sm:$0xf] %vm4384, 0
        %4398 = vst.msk [vmem:[#allocation3 + $0x30] sm:$0xf] %vm4384, 0
        %4399 = vst.msk [vmem:[#allocation3 + $0x34] sm:$0xf] %vm4384, 0
        %4400 = vst.msk [vmem:[#allocation3 + $0x38] sm:$0x3] %vm4389, 0
        %4401 = vst.msk [vmem:[#allocation3 + $0x3c] sm:$0xf] %vm4384, 0
        %4402 = vst.msk [vmem:[#allocation3 + $0x40] sm:$0xf] %vm4384, 0
        %4403 = vst.msk [vmem:[#allocation3 + $0x44] sm:$0xf] %vm4384, 0
        %4404 = vst.msk [vmem:[#allocation3 + $0x48] sm:$0xf] %vm4384, 0
        %4405 = vst.msk [vmem:[#allocation3 + $0x4c] sm:$0x3] %vm4389, 0
        %4406 = vst.msk [vmem:[#allocation3 + $0x50] sm:$0xf] %vm4384, 0
        %4407 = vst.msk [vmem:[#allocation3 + $0x54] sm:$0xf] %vm4384, 0
        %4408 = vst.msk [vmem:[#allocation3 + $0x58] sm:$0xf] %vm4384, 0
        %4409 = vst.msk [vmem:[#allocation3 + $0x5c] sm:$0xf] %vm4384, 0
        %4410 = vst.msk [vmem:[#allocation3 + $0x60] sm:$0x3] %vm4389, 0
        %4411 = vst.msk [vmem:[#allocation3 + $0x64] sm:$0xf] %vm4384, 0
        %4412 = vst.msk [vmem:[#allocation3 + $0x68] sm:$0xf] %vm4384, 0
        %4413 = vst.msk [vmem:[#allocation3 + $0x6c] sm:$0xf] %vm4384, 0
        %4414 = vst.msk [vmem:[#allocation3 + $0x70] sm:$0xf] %vm4384, 0
        %4415 = vst.msk [vmem:[#allocation3 + $0x74] sm:$0x3] %vm4389, 0
        %4416 = vst.msk [vmem:[#allocation3 + $0x78] sm:$0xf] %vm4384, 0
        %4417 = vst.msk [vmem:[#allocation3 + $0x7c] sm:$0xf] %vm4384, 0
        %4418 = vst.msk [vmem:[#allocation3 + $0x80] sm:$0xf] %vm4384, 0
        %4419 = vst.msk [vmem:[#allocation3 + $0x84] sm:$0xf] %vm4384, 0
        %4420 = vst.msk [vmem:[#allocation3 + $0x88] sm:$0x3] %vm4389, 0
        %4421 = vst.msk [vmem:[#allocation3 + $0x8c] sm:$0xf] %vm4384, 0
        %4422 = vst.msk [vmem:[#allocation3 + $0x90] sm:$0xf] %vm4384, 0
        %4423 = vst.msk [vmem:[#allocation3 + $0x94] sm:$0xf] %vm4384, 0
        %4424 = vst.msk [vmem:[#allocation3 + $0x98] sm:$0xf] %vm4384, 0
        %4425 = vst.msk [vmem:[#allocation3 + $0x9c] sm:$0x3] %vm4389, 0
        %4426 = vst.msk [vmem:[#allocation3 + $0xa0] sm:$0xf] %vm4384, 0
        %4427 = vst.msk [vmem:[#allocation3 + $0xa4] sm:$0xf] %vm4384, 0
        %4428 = vst.msk [vmem:[#allocation3 + $0xa8] sm:$0xf] %vm4384, 0
        %4429 = vst.msk [vmem:[#allocation3 + $0xac] sm:$0xf] %vm4384, 0
        %4430 = vst.msk [vmem:[#allocation3 + $0xb0] sm:$0x3] %vm4389, 0
        %4431 = vst.msk [vmem:[#allocation3 + $0xb4] sm:$0xf] %vm4384, 0
        %4432 = vst.msk [vmem:[#allocation3 + $0xb8] sm:$0xf] %vm4384, 0
        %4433 = vst.msk [vmem:[#allocation3 + $0xbc] sm:$0xf] %vm4384, 0
        %4434 = vst.msk [vmem:[#allocation3 + $0xc0] sm:$0xf] %vm4384, 0
        %4435 = vst.msk [vmem:[#allocation3 + $0xc4] sm:$0x3] %vm4389, 0
        %4436 = vst.msk [vmem:[#allocation3 + $0xc8] sm:$0xf] %vm4384, 0
        %4437 = vst.msk [vmem:[#allocation3 + $0xcc] sm:$0xf] %vm4384, 0
        %4438 = vst.msk [vmem:[#allocation3 + $0xd0] sm:$0xf] %vm4384, 0
        %4439 = vst.msk [vmem:[#allocation3 + $0xd4] sm:$0xf] %vm4384, 0
        %4440 = vst.msk [vmem:[#allocation3 + $0xd8] sm:$0x3] %vm4389, 0
        %4441 = vst.msk [vmem:[#allocation3 + $0xdc] sm:$0xf] %vm4384, 0
        %4442 = vst.msk [vmem:[#allocation3 + $0xe0] sm:$0xf] %vm4384, 0
        %4443 = vst.msk [vmem:[#allocation3 + $0xe4] sm:$0xf] %vm4384, 0
        %4444 = vst.msk [vmem:[#allocation3 + $0xe8] sm:$0xf] %vm4384, 0
        %4445 = vst.msk [vmem:[#allocation3 + $0xec] sm:$0x3] %vm4389, 0
        %4446 = vst.msk [vmem:[#allocation3 + $0xf0] sm:$0xf] %vm4384, 0
        %4447 = vst.msk [vmem:[#allocation3 + $0xf4] sm:$0xf] %vm4384, 0
        %4448 = vst.msk [vmem:[#allocation3 + $0xf8] sm:$0xf] %vm4384, 0
        %4449 = vst.msk [vmem:[#allocation3 + $0xfc] sm:$0xf] %vm4384, 0
        %4450 = vst.msk [vmem:[#allocation3 + $0x100] sm:$0x3] %vm4389, 0
        %4451 = vst.msk [vmem:[#allocation3 + $0x104] sm:$0xf] %vm4384, 0
        %4452 = vst.msk [vmem:[#allocation3 + $0x108] sm:$0xf] %vm4384, 0
        %4453 = vst.msk [vmem:[#allocation3 + $0x10c] sm:$0xf] %vm4384, 0
        %4454 = vst.msk [vmem:[#allocation3 + $0x110] sm:$0xf] %vm4384, 0
        %4455 = vst.msk [vmem:[#allocation3 + $0x114] sm:$0x3] %vm4389, 0
        %4456 = vst.msk [vmem:[#allocation3 + $0x118] sm:$0xf] %vm4384, 0
        %4457 = vst.msk [vmem:[#allocation3 + $0x11c] sm:$0xf] %vm4384, 0
        %4458 = vst.msk [vmem:[#allocation3 + $0x120] sm:$0xf] %vm4384, 0
        %4459 = vst.msk [vmem:[#allocation3 + $0x124] sm:$0xf] %vm4384, 0
        %4460 = vst.msk [vmem:[#allocation3 + $0x128] sm:$0x3] %vm4389, 0
        %4461 = vst.msk [vmem:[#allocation3 + $0x12c] sm:$0xf] %vm4384, 0
        %4462 = vst.msk [vmem:[#allocation3 + $0x130] sm:$0xf] %vm4384, 0
        %4463 = vst.msk [vmem:[#allocation3 + $0x134] sm:$0xf] %vm4384, 0
        %4464 = vst.msk [vmem:[#allocation3 + $0x138] sm:$0xf] %vm4384, 0
        %4465 = vst.msk [vmem:[#allocation3 + $0x13c] sm:$0x3] %vm4389, 0
        %4466 = vst.msk [vmem:[#allocation3 + $0x140] sm:$0xf] %vm4384, 0
        %4467 = vst.msk [vmem:[#allocation3 + $0x144] sm:$0xf] %vm4384, 0
        %4468 = vst.msk [vmem:[#allocation3 + $0x148] sm:$0xf] %vm4384, 0
        %4469 = vst.msk [vmem:[#allocation3 + $0x14c] sm:$0xf] %vm4384, 0
        %4470 = vst.msk [vmem:[#allocation3 + $0x150] sm:$0x3] %vm4389, 0
        %4471 = vst.msk [vmem:[#allocation3 + $0x154] sm:$0xf] %vm4384, 0
        %4472 = vst.msk [vmem:[#allocation3 + $0x158] sm:$0xf] %vm4384, 0
        %4473 = vst.msk [vmem:[#allocation3 + $0x15c] sm:$0xf] %vm4384, 0
        %4474 = vst.msk [vmem:[#allocation3 + $0x160] sm:$0xf] %vm4384, 0
        %4475 = vst.msk [vmem:[#allocation3 + $0x164] sm:$0x3] %vm4389, 0
        %v4476 = vpack.c.bf16 %v4353, %v4352
        %v4477 = vpack.c.bf16 %v4355, %v4354
        %v4478 = vpack.c.bf16 %v4357, %v4356
        %v4479 = vpack.c.bf16 %v4359, %v4358
        %v4480 = vpack.c.bf16 %v4361, %v4360
        %v4481 = vpack.c.bf16 %v4363, %v4362
        %v4482 = vpack.c.bf16 %v4365, %v4364
        %v4483 = vpack.c.bf16 %v4367, %v4366
        %v4484 = vpack.c.bf16 %v4369, %v4368
        %v4485 = vpack.c.bf16 %v4371, %v4370
        %v4486 = vpack.c.bf16 %v4373, %v4372
        %v4487 = vpack.c.bf16 %v4375, %v4374
        %v4488 = vpack.c.bf16 %v4377, %v4376
        %v4489 = vpack.c.bf16 %v4379, %v4378
        %v4490 = vpack.c.bf16 %v4381, %v4380
        %v4491 = vpack.c.bf16 %v4383, %v4382
        %v4508 = vunpack.c.l.b16 %v4476
        %v4509 = vunpack.c.h.b16 %v4476
        %v4510 = vunpack.c.l.b16 %v4477
        %v4511 = vunpack.c.h.b16 %v4477
        %v4512 = vunpack.c.l.b16 %v4478
        %v4513 = vunpack.c.h.b16 %v4478
        %v4514 = vunpack.c.l.b16 %v4479
        %v4515 = vunpack.c.h.b16 %v4479
        %v4516 = vunpack.c.l.b16 %v4480
        %v4517 = vunpack.c.h.b16 %v4480
        %v4518 = vunpack.c.l.b16 %v4481
        %v4519 = vunpack.c.h.b16 %v4481
        %v4520 = vunpack.c.l.b16 %v4482
        %v4521 = vunpack.c.h.b16 %v4482
        %v4522 = vunpack.c.l.b16 %v4483
        %v4523 = vunpack.c.h.b16 %v4483
        %v4524 = vunpack.c.l.b16 %v4484
        %v4525 = vunpack.c.h.b16 %v4484
        %v4526 = vunpack.c.l.b16 %v4485
        %v4527 = vunpack.c.h.b16 %v4485
        %v4528 = vunpack.c.l.b16 %v4486
        %v4529 = vunpack.c.h.b16 %v4486
        %v4530 = vunpack.c.l.b16 %v4487
        %v4531 = vunpack.c.h.b16 %v4487
        %v4532 = vunpack.c.l.b16 %v4488
        %v4533 = vunpack.c.h.b16 %v4488
        %v4534 = vunpack.c.l.b16 %v4489
        %v4535 = vunpack.c.h.b16 %v4489
        %v4536 = vunpack.c.l.b16 %v4490
        %v4537 = vunpack.c.h.b16 %v4490
        %v4538 = vunpack.c.l.b16 %v4491
        %v4539 = vunpack.c.h.b16 %v4491
        %v4540 = vpack.c.b16 %v4508, %v4508
        %v4541 = vpack.c.b16 %v4509, %v4509
        %v4542 = vpack.c.b16 %v4510, %v4510
        %v4543 = vpack.c.b16 %v4511, %v4511
        %v4544 = vpack.c.b16 %v4512, %v4512
        %v4545 = vpack.c.b16 %v4513, %v4513
        %v4546 = vpack.c.b16 %v4514, %v4514
        %v4547 = vpack.c.b16 %v4515, %v4515
        %v4548 = vpack.c.b16 %v4516, %v4516
        %v4549 = vpack.c.b16 %v4517, %v4517
        %v4550 = vpack.c.b16 %v4518, %v4518
        %v4551 = vpack.c.b16 %v4519, %v4519
        %v4552 = vpack.c.b16 %v4520, %v4520
        %v4553 = vpack.c.b16 %v4521, %v4521
        %v4554 = vpack.c.b16 %v4522, %v4522
        %v4555 = vpack.c.b16 %v4523, %v4523
        %v4556 = vpack.c.b16 %v4524, %v4524
        %v4557 = vpack.c.b16 %v4525, %v4525
        %v4558 = vpack.c.b16 %v4526, %v4526
        %v4559 = vpack.c.b16 %v4527, %v4527
        %v4560 = vpack.c.b16 %v4528, %v4528
        %v4561 = vpack.c.b16 %v4529, %v4529
        %v4562 = vpack.c.b16 %v4530, %v4530
        %v4563 = vpack.c.b16 %v4531, %v4531
        %v4564 = vpack.c.b16 %v4532, %v4532
        %v4565 = vpack.c.b16 %v4533, %v4533
        %v4566 = vpack.c.b16 %v4534, %v4534
        %v4567 = vpack.c.b16 %v4535, %v4535
        %v4568 = vpack.c.b16 %v4536, %v4536
        %v4569 = vpack.c.b16 %v4537, %v4537
        %v4570 = vpack.c.b16 %v4538, %v4538
        %v4571 = vpack.c.b16 %v4539, %v4539
        %s4604 = scalar_lea.vmem [#allocation3], 20
        %4605 = vst.msk [vmem:[%s4604 + $0x8] sm:$0xf] %vm4384, %v4540
        %4606 = vst.msk [vmem:[%s4604 + $0xc] sm:$0xf] %vm4384, %v4541
        %4607 = vst.msk [vmem:[%s4604 + $0x1c] sm:$0xf] %vm4384, %v4542
        %4608 = vst.msk [vmem:[%s4604 + $0x20] sm:$0xf] %vm4384, %v4543
        %4609 = vst.msk [vmem:[%s4604 + $0x30] sm:$0xf] %vm4384, %v4544
        %4610 = vst.msk [vmem:[%s4604 + $0x34] sm:$0xf] %vm4384, %v4545
        %4611 = vst.msk [vmem:[%s4604 + $0x44] sm:$0xf] %vm4384, %v4546
        %4612 = vst.msk [vmem:[%s4604 + $0x48] sm:$0xf] %vm4384, %v4547
        %4613 = vst.msk [vmem:[%s4604 + $0x58] sm:$0xf] %vm4384, %v4548
        %4614 = vst.msk [vmem:[%s4604 + $0x5c] sm:$0xf] %vm4384, %v4549
        %4615 = vst.msk [vmem:[%s4604 + $0x6c] sm:$0xf] %vm4384, %v4550
        %4616 = vst.msk [vmem:[%s4604 + $0x70] sm:$0xf] %vm4384, %v4551
        %4617 = vst.msk [vmem:[%s4604 + $0x80] sm:$0xf] %vm4384, %v4552
        %4618 = vst.msk [vmem:[%s4604 + $0x84] sm:$0xf] %vm4384, %v4553
        %4619 = vst.msk [vmem:[%s4604 + $0x94] sm:$0xf] %vm4384, %v4554
        %4620 = vst.msk [vmem:[%s4604 + $0x98] sm:$0xf] %vm4384, %v4555
        %4621 = vst.msk [vmem:[%s4604 + $0xa8] sm:$0xf] %vm4384, %v4556
        %4622 = vst.msk [vmem:[%s4604 + $0xac] sm:$0xf] %vm4384, %v4557
        %4623 = vst.msk [vmem:[%s4604 + $0xbc] sm:$0xf] %vm4384, %v4558
        %4624 = vst.msk [vmem:[%s4604 + $0xc0] sm:$0xf] %vm4384, %v4559
        %4625 = vst.msk [vmem:[%s4604 + $0xd0] sm:$0xf] %vm4384, %v4560
        %4626 = vst.msk [vmem:[%s4604 + $0xd4] sm:$0xf] %vm4384, %v4561
        %4627 = vst.msk [vmem:[%s4604 + $0xe4] sm:$0xf] %vm4384, %v4562
        %4628 = vst.msk [vmem:[%s4604 + $0xe8] sm:$0xf] %vm4384, %v4563
        %4629 = vst.msk [vmem:[%s4604 + $0xf8] sm:$0xf] %vm4384, %v4564
        %4630 = vst.msk [vmem:[%s4604 + $0xfc] sm:$0xf] %vm4384, %v4565
        %4631 = vst.msk [vmem:[%s4604 + $0x10c] sm:$0xf] %vm4384, %v4566
        %4632 = vst.msk [vmem:[%s4604 + $0x110] sm:$0xf] %vm4384, %v4567
        %4633 = vst.msk [vmem:[%s4604 + $0x120] sm:$0xf] %vm4384, %v4568
        %4634 = vst.msk [vmem:[%s4604 + $0x124] sm:$0xf] %vm4384, %v4569
        %4635 = vst.msk [vmem:[%s4604 + $0x134] sm:$0xf] %vm4384, %v4570
        %4636 = vst.msk [vmem:[%s4604 + $0x138] sm:$0xf] %vm4384, %v4571
        %v4637 = vld [vmem:[#allocation3 + $0x4] sm:$0xf]
        %v4638 = vld [vmem:[#allocation3 + $0x8] sm:$0xf]
        %v4639 = vld [vmem:[#allocation3 + $0xc] sm:$0xf]
        %v4640 = vld [vmem:[#allocation3 + $0x10] sm:$0x3]
        %v4641 = vld [vmem:[#allocation3 + $0x18] sm:$0xf]
        %v4642 = vld [vmem:[#allocation3 + $0x1c] sm:$0xf]
        %v4643 = vld [vmem:[#allocation3 + $0x20] sm:$0xf]
        %v4644 = vld [vmem:[#allocation3 + $0x24] sm:$0x3]
        %v4645 = vld [vmem:[#allocation3 + $0x2c] sm:$0xf]
        %v4646 = vld [vmem:[#allocation3 + $0x30] sm:$0xf]
        %v4647 = vld [vmem:[#allocation3 + $0x34] sm:$0xf]
        %v4648 = vld [vmem:[#allocation3 + $0x38] sm:$0x3]
        %v4649 = vld [vmem:[#allocation3 + $0x40] sm:$0xf]
        %v4650 = vld [vmem:[#allocation3 + $0x44] sm:$0xf]
        %v4651 = vld [vmem:[#allocation3 + $0x48] sm:$0xf]
        %v4652 = vld [vmem:[#allocation3 + $0x4c] sm:$0x3]
        %v4653 = vld [vmem:[#allocation3 + $0x54] sm:$0xf]
        %v4654 = vld [vmem:[#allocation3 + $0x58] sm:$0xf]
        %v4655 = vld [vmem:[#allocation3 + $0x5c] sm:$0xf]
        %v4656 = vld [vmem:[#allocation3 + $0x60] sm:$0x3]
        %v4657 = vld [vmem:[#allocation3 + $0x68] sm:$0xf]
        %v4658 = vld [vmem:[#allocation3 + $0x6c] sm:$0xf]
        %v4659 = vld [vmem:[#allocation3 + $0x70] sm:$0xf]
        %v4660 = vld [vmem:[#allocation3 + $0x74] sm:$0x3]
        %v4661 = vld [vmem:[#allocation3 + $0x7c] sm:$0xf]
        %v4662 = vld [vmem:[#allocation3 + $0x80] sm:$0xf]
        %v4663 = vld [vmem:[#allocation3 + $0x84] sm:$0xf]
        %v4664 = vld [vmem:[#allocation3 + $0x88] sm:$0x3]
        %v4665 = vld [vmem:[#allocation3 + $0x90] sm:$0xf]
        %v4666 = vld [vmem:[#allocation3 + $0x94] sm:$0xf]
        %v4667 = vld [vmem:[#allocation3 + $0x98] sm:$0xf]
        %v4668 = vld [vmem:[#allocation3 + $0x9c] sm:$0x3]
        %v4669 = vld [vmem:[#allocation3 + $0xa4] sm:$0xf]
        %v4670 = vld [vmem:[#allocation3 + $0xa8] sm:$0xf]
        %v4671 = vld [vmem:[#allocation3 + $0xac] sm:$0xf]
        %v4672 = vld [vmem:[#allocation3 + $0xb0] sm:$0x3]
        %v4673 = vld [vmem:[#allocation3 + $0xb8] sm:$0xf]
        %v4674 = vld [vmem:[#allocation3 + $0xbc] sm:$0xf]
        %v4675 = vld [vmem:[#allocation3 + $0xc0] sm:$0xf]
        %v4676 = vld [vmem:[#allocation3 + $0xc4] sm:$0x3]
        %v4677 = vld [vmem:[#allocation3 + $0xcc] sm:$0xf]
        %v4678 = vld [vmem:[#allocation3 + $0xd0] sm:$0xf]
        %v4679 = vld [vmem:[#allocation3 + $0xd4] sm:$0xf]
        %v4680 = vld [vmem:[#allocation3 + $0xd8] sm:$0x3]
        %v4681 = vld [vmem:[#allocation3 + $0xe0] sm:$0xf]
        %v4682 = vld [vmem:[#allocation3 + $0xe4] sm:$0xf]
        %v4683 = vld [vmem:[#allocation3 + $0xe8] sm:$0xf]
        %v4684 = vld [vmem:[#allocation3 + $0xec] sm:$0x3]
        %v4685 = vld [vmem:[#allocation3 + $0xf4] sm:$0xf]
        %v4686 = vld [vmem:[#allocation3 + $0xf8] sm:$0xf]
        %v4687 = vld [vmem:[#allocation3 + $0xfc] sm:$0xf]
        %v4688 = vld [vmem:[#allocation3 + $0x100] sm:$0x3]
        %v4689 = vld [vmem:[#allocation3 + $0x108] sm:$0xf]
        %v4690 = vld [vmem:[#allocation3 + $0x10c] sm:$0xf]
        %v4691 = vld [vmem:[#allocation3 + $0x110] sm:$0xf]
        %v4692 = vld [vmem:[#allocation3 + $0x114] sm:$0x3]
        %v4693 = vld [vmem:[#allocation3 + $0x11c] sm:$0xf]
        %v4694 = vld [vmem:[#allocation3 + $0x120] sm:$0xf]
        %v4695 = vld [vmem:[#allocation3 + $0x124] sm:$0xf]
        %v4696 = vld [vmem:[#allocation3 + $0x128] sm:$0x3]
        %v4697 = vld [vmem:[#allocation3 + $0x130] sm:$0xf]
        %v4698 = vld [vmem:[#allocation3 + $0x134] sm:$0xf]
        %v4699 = vld [vmem:[#allocation3 + $0x138] sm:$0xf]
        %v4700 = vld [vmem:[#allocation3 + $0x13c] sm:$0x3]
        %v4701 = vld [vmem:[#allocation3 + $0x144] sm:$0xf]
        %v4702 = vld [vmem:[#allocation3 + $0x148] sm:$0xf]
        %v4703 = vld [vmem:[#allocation3 + $0x14c] sm:$0xf]
        %v4704 = vld [vmem:[#allocation3 + $0x150] sm:$0x3]
        %v4705 = vld [vmem:[#allocation3 + $0x158] sm:$0xf]
        %v4706 = vld [vmem:[#allocation3 + $0x15c] sm:$0xf]
        %v4707 = vld [vmem:[#allocation3 + $0x160] sm:$0xf]
        %v4708 = vld [vmem:[#allocation3 + $0x164] sm:$0x3]
        %v4763 = vunpack.c.l.b16 %v4637
        %v4764 = vunpack.c.l.b16 %v4638
        %v4765 = vunpack.c.l.b16 %v4639
        %v4766 = vunpack.c.l.b16 %v4641
        %v4767 = vunpack.c.l.b16 %v4642
        %v4768 = vunpack.c.l.b16 %v4643
        %v4769 = vunpack.c.l.b16 %v4645
        %v4770 = vunpack.c.l.b16 %v4646
        %v4771 = vunpack.c.l.b16 %v4647
        %v4772 = vunpack.c.l.b16 %v4649
        %v4773 = vunpack.c.l.b16 %v4650
        %v4774 = vunpack.c.l.b16 %v4651
        %v4775 = vunpack.c.l.b16 %v4653
        %v4776 = vunpack.c.l.b16 %v4654
        %v4777 = vunpack.c.l.b16 %v4655
        %v4778 = vunpack.c.l.b16 %v4657
        %v4779 = vunpack.c.l.b16 %v4658
        %v4780 = vunpack.c.l.b16 %v4659
        %v4781 = vunpack.c.l.b16 %v4661
        %v4782 = vunpack.c.l.b16 %v4662
        %v4783 = vunpack.c.l.b16 %v4663
        %v4784 = vunpack.c.l.b16 %v4665
        %v4785 = vunpack.c.l.b16 %v4666
        %v4786 = vunpack.c.l.b16 %v4667
        %v4787 = vunpack.c.l.b16 %v4669
        %v4788 = vunpack.c.l.b16 %v4670
        %v4789 = vunpack.c.l.b16 %v4671
        %v4790 = vunpack.c.l.b16 %v4673
        %v4791 = vunpack.c.l.b16 %v4674
        %v4792 = vunpack.c.l.b16 %v4675
        %v4793 = vunpack.c.l.b16 %v4677
        %v4794 = vunpack.c.l.b16 %v4678
        %v4795 = vunpack.c.l.b16 %v4679
        %v4796 = vunpack.c.l.b16 %v4681
        %v4797 = vunpack.c.l.b16 %v4682
        %v4798 = vunpack.c.l.b16 %v4683
        %v4799 = vunpack.c.l.b16 %v4685
        %v4800 = vunpack.c.l.b16 %v4686
        %v4801 = vunpack.c.l.b16 %v4687
        %v4802 = vunpack.c.l.b16 %v4689
        %v4803 = vunpack.c.l.b16 %v4690
        %v4804 = vunpack.c.l.b16 %v4691
        %v4805 = vunpack.c.l.b16 %v4693
        %v4806 = vunpack.c.l.b16 %v4694
        %v4807 = vunpack.c.l.b16 %v4695
        %v4808 = vunpack.c.l.b16 %v4697
        %v4809 = vunpack.c.l.b16 %v4698
        %v4810 = vunpack.c.l.b16 %v4699
        %v4811 = vunpack.c.l.b16 %v4701
        %v4812 = vunpack.c.l.b16 %v4702
        %v4813 = vunpack.c.l.b16 %v4703
        %v4814 = vunpack.c.l.b16 %v4705
        %v4815 = vunpack.c.l.b16 %v4706
        %v4816 = vunpack.c.l.b16 %v4707
        %v4817 = vpack.c.b16 %v4764, %v4763
        %v4818 = vpack.c.b16 %v4765, %v4765
        %v4819 = vpack.c.b16 %v4767, %v4766
        %v4820 = vpack.c.b16 %v4768, %v4768
        %v4821 = vpack.c.b16 %v4770, %v4769
        %v4822 = vpack.c.b16 %v4771, %v4771
        %v4823 = vpack.c.b16 %v4773, %v4772
        %v4824 = vpack.c.b16 %v4774, %v4774
        %v4825 = vpack.c.b16 %v4776, %v4775
        %v4826 = vpack.c.b16 %v4777, %v4777
        %v4827 = vpack.c.b16 %v4779, %v4778
        %v4828 = vpack.c.b16 %v4780, %v4780
        %v4829 = vpack.c.b16 %v4782, %v4781
        %v4830 = vpack.c.b16 %v4783, %v4783
        %v4831 = vpack.c.b16 %v4785, %v4784
        %v4832 = vpack.c.b16 %v4786, %v4786
        %v4833 = vpack.c.b16 %v4788, %v4787
        %v4834 = vpack.c.b16 %v4789, %v4789
        %v4835 = vpack.c.b16 %v4791, %v4790
        %v4836 = vpack.c.b16 %v4792, %v4792
        %v4837 = vpack.c.b16 %v4794, %v4793
        %v4838 = vpack.c.b16 %v4795, %v4795
        %v4839 = vpack.c.b16 %v4797, %v4796
        %v4840 = vpack.c.b16 %v4798, %v4798
        %v4841 = vpack.c.b16 %v4800, %v4799
        %v4842 = vpack.c.b16 %v4801, %v4801
        %v4843 = vpack.c.b16 %v4803, %v4802
        %v4844 = vpack.c.b16 %v4804, %v4804
        %v4845 = vpack.c.b16 %v4806, %v4805
        %v4846 = vpack.c.b16 %v4807, %v4807
        %v4847 = vpack.c.b16 %v4809, %v4808
        %v4848 = vpack.c.b16 %v4810, %v4810
        %v4849 = vpack.c.b16 %v4812, %v4811
        %v4850 = vpack.c.b16 %v4813, %v4813
        %v4851 = vpack.c.b16 %v4815, %v4814
        %v4852 = vpack.c.b16 %v4816, %v4816
        %v4853 = vpack.c.b16 %v4765, %v4764
        %v4854 = vpack.c.b16 %v4768, %v4767
        %v4855 = vpack.c.b16 %v4771, %v4770
        %v4856 = vpack.c.b16 %v4774, %v4773
        %v4857 = vpack.c.b16 %v4777, %v4776
        %v4858 = vpack.c.b16 %v4780, %v4779
        %v4859 = vpack.c.b16 %v4783, %v4782
        %v4860 = vpack.c.b16 %v4786, %v4785
        %v4861 = vpack.c.b16 %v4789, %v4788
        %v4862 = vpack.c.b16 %v4792, %v4791
        %v4863 = vpack.c.b16 %v4795, %v4794
        %v4864 = vpack.c.b16 %v4798, %v4797
        %v4865 = vpack.c.b16 %v4801, %v4800
        %v4866 = vpack.c.b16 %v4804, %v4803
        %v4867 = vpack.c.b16 %v4807, %v4806
        %v4868 = vpack.c.b16 %v4810, %v4809
        %v4869 = vpack.c.b16 %v4813, %v4812
        %v4870 = vpack.c.b16 %v4816, %v4815
        %v4872 = vshrl.u32 %v4853, 16
        %v4874 = vrot.slane %v4872, 4
        %v4875 = vshll.u32 %v4853, 16
        %v4877 = vrot.slane %v4875, 5
        %v4878 = vor.u32 %v4874, %v4877
        %v4880 = vshrl.u32 %v4854, 16
        %v4882 = vrot.slane %v4880, 4
        %v4883 = vshll.u32 %v4854, 16
        %v4885 = vrot.slane %v4883, 5
        %v4886 = vor.u32 %v4882, %v4885
        %v4888 = vshrl.u32 %v4855, 16
        %v4890 = vrot.slane %v4888, 4
        %v4891 = vshll.u32 %v4855, 16
        %v4893 = vrot.slane %v4891, 5
        %v4894 = vor.u32 %v4890, %v4893
        %v4896 = vshrl.u32 %v4856, 16
        %v4898 = vrot.slane %v4896, 4
        %v4899 = vshll.u32 %v4856, 16
        %v4901 = vrot.slane %v4899, 5
        %v4902 = vor.u32 %v4898, %v4901
        %v4904 = vshrl.u32 %v4857, 16
        %v4906 = vrot.slane %v4904, 4
        %v4907 = vshll.u32 %v4857, 16
        %v4909 = vrot.slane %v4907, 5
        %v4910 = vor.u32 %v4906, %v4909
        %v4912 = vshrl.u32 %v4858, 16
        %v4914 = vrot.slane %v4912, 4
        %v4915 = vshll.u32 %v4858, 16
        %v4917 = vrot.slane %v4915, 5
        %v4918 = vor.u32 %v4914, %v4917
        %v4920 = vshrl.u32 %v4859, 16
        %v4922 = vrot.slane %v4920, 4
        %v4923 = vshll.u32 %v4859, 16
        %v4925 = vrot.slane %v4923, 5
        %v4926 = vor.u32 %v4922, %v4925
        %v4928 = vshrl.u32 %v4860, 16
        %v4930 = vrot.slane %v4928, 4
        %v4931 = vshll.u32 %v4860, 16
        %v4933 = vrot.slane %v4931, 5
        %v4934 = vor.u32 %v4930, %v4933
        %v4936 = vshrl.u32 %v4861, 16
        %v4938 = vrot.slane %v4936, 4
        %v4939 = vshll.u32 %v4861, 16
        %v4941 = vrot.slane %v4939, 5
        %v4942 = vor.u32 %v4938, %v4941
        %v4944 = vshrl.u32 %v4862, 16
        %v4946 = vrot.slane %v4944, 4
        %v4947 = vshll.u32 %v4862, 16
        %v4949 = vrot.slane %v4947, 5
        %v4950 = vor.u32 %v4946, %v4949
        %v4952 = vshrl.u32 %v4863, 16
        %v4954 = vrot.slane %v4952, 4
        %v4955 = vshll.u32 %v4863, 16
        %v4957 = vrot.slane %v4955, 5
        %v4958 = vor.u32 %v4954, %v4957
        %v4960 = vshrl.u32 %v4864, 16
        %v4962 = vrot.slane %v4960, 4
        %v4963 = vshll.u32 %v4864, 16
        %v4965 = vrot.slane %v4963, 5
        %v4966 = vor.u32 %v4962, %v4965
        %v4968 = vshrl.u32 %v4865, 16
        %v4970 = vrot.slane %v4968, 4
        %v4971 = vshll.u32 %v4865, 16
        %v4973 = vrot.slane %v4971, 5
        %v4974 = vor.u32 %v4970, %v4973
        %v4976 = vshrl.u32 %v4866, 16
        %v4978 = vrot.slane %v4976, 4
        %v4979 = vshll.u32 %v4866, 16
        %v4981 = vrot.slane %v4979, 5
        %v4982 = vor.u32 %v4978, %v4981
        %v4984 = vshrl.u32 %v4867, 16
        %v4986 = vrot.slane %v4984, 4
        %v4987 = vshll.u32 %v4867, 16
        %v4989 = vrot.slane %v4987, 5
        %v4990 = vor.u32 %v4986, %v4989
        %v4992 = vshrl.u32 %v4868, 16
        %v4994 = vrot.slane %v4992, 4
        %v4995 = vshll.u32 %v4868, 16
        %v4997 = vrot.slane %v4995, 5
        %v4998 = vor.u32 %v4994, %v4997
        %v5000 = vshrl.u32 %v4869, 16
        %v5002 = vrot.slane %v5000, 4
        %v5003 = vshll.u32 %v4869, 16
        %v5005 = vrot.slane %v5003, 5
        %v5006 = vor.u32 %v5002, %v5005
        %v5008 = vshrl.u32 %v4870, 16
        %v5010 = vrot.slane %v5008, 4
        %v5011 = vshll.u32 %v4870, 16
        %v5013 = vrot.slane %v5011, 5
        %v5014 = vor.u32 %v5010, %v5013
        %5015 = vrot.lane.b32.xlu0 %v4878, 96
        %v5016 = vpop.permute.xlu0 %5015
        %5017 = vrot.lane.b32.xlu0 %v4886, 96
        %v5018 = vpop.permute.xlu0 %5017
        %5019 = vrot.lane.b32.xlu0 %v4894, 96
        %v5020 = vpop.permute.xlu0 %5019
        %5021 = vrot.lane.b32.xlu0 %v4902, 96
        %v5022 = vpop.permute.xlu0 %5021
        %5023 = vrot.lane.b32.xlu0 %v4910, 96
        %v5024 = vpop.permute.xlu0 %5023
        %5025 = vrot.lane.b32.xlu0 %v4918, 96
        %v5026 = vpop.permute.xlu0 %5025
        %5027 = vrot.lane.b32.xlu0 %v4926, 96
        %v5028 = vpop.permute.xlu0 %5027
        %5029 = vrot.lane.b32.xlu0 %v4934, 96
        %v5030 = vpop.permute.xlu0 %5029
        %5031 = vrot.lane.b32.xlu0 %v4942, 96
        %v5032 = vpop.permute.xlu0 %5031
        %5033 = vrot.lane.b32.xlu0 %v4950, 96
        %v5034 = vpop.permute.xlu0 %5033
        %5035 = vrot.lane.b32.xlu0 %v4958, 96
        %v5036 = vpop.permute.xlu0 %5035
        %5037 = vrot.lane.b32.xlu0 %v4966, 96
        %v5038 = vpop.permute.xlu0 %5037
        %5039 = vrot.lane.b32.xlu0 %v4974, 96
        %v5040 = vpop.permute.xlu0 %5039
        %5041 = vrot.lane.b32.xlu0 %v4982, 96
        %v5042 = vpop.permute.xlu0 %5041
        %5043 = vrot.lane.b32.xlu0 %v4990, 96
        %v5044 = vpop.permute.xlu0 %5043
        %5045 = vrot.lane.b32.xlu0 %v4998, 96
        %v5046 = vpop.permute.xlu0 %5045
        %5047 = vrot.lane.b32.xlu0 %v5006, 96
        %v5048 = vpop.permute.xlu0 %5047
        %5049 = vrot.lane.b32.xlu0 %v5014, 96
        %v5050 = vpop.permute.xlu0 %5049
        %v5069 = vunpack.c.l.b16 %v4640
        %v5070 = vunpack.c.l.b16 %v4644
        %v5071 = vunpack.c.l.b16 %v4648
        %v5072 = vunpack.c.l.b16 %v4652
        %v5073 = vunpack.c.l.b16 %v4656
        %v5074 = vunpack.c.l.b16 %v4660
        %v5075 = vunpack.c.l.b16 %v4664
        %v5076 = vunpack.c.l.b16 %v4668
        %v5077 = vunpack.c.l.b16 %v4672
        %v5078 = vunpack.c.l.b16 %v4676
        %v5079 = vunpack.c.l.b16 %v4680
        %v5080 = vunpack.c.l.b16 %v4684
        %v5081 = vunpack.c.l.b16 %v4688
        %v5082 = vunpack.c.l.b16 %v4692
        %v5083 = vunpack.c.l.b16 %v4696
        %v5084 = vunpack.c.l.b16 %v4700
        %v5085 = vunpack.c.l.b16 %v4704
        %v5086 = vunpack.c.l.b16 %v4708
        %v5087 = vpack.c.b16 %v5069, %v5069
        %v5088 = vpack.c.b16 %v5070, %v5070
        %v5089 = vpack.c.b16 %v5071, %v5071
        %v5090 = vpack.c.b16 %v5072, %v5072
        %v5091 = vpack.c.b16 %v5073, %v5073
        %v5092 = vpack.c.b16 %v5074, %v5074
        %v5093 = vpack.c.b16 %v5075, %v5075
        %v5094 = vpack.c.b16 %v5076, %v5076
        %v5095 = vpack.c.b16 %v5077, %v5077
        %v5096 = vpack.c.b16 %v5078, %v5078
        %v5097 = vpack.c.b16 %v5079, %v5079
        %v5098 = vpack.c.b16 %v5080, %v5080
        %v5099 = vpack.c.b16 %v5081, %v5081
        %v5100 = vpack.c.b16 %v5082, %v5082
        %v5101 = vpack.c.b16 %v5083, %v5083
        %v5102 = vpack.c.b16 %v5084, %v5084
        %v5103 = vpack.c.b16 %v5085, %v5085
        %v5104 = vpack.c.b16 %v5086, %v5086
        %v5105 = vrot.slane %v4853, 5
        %v5106 = vrot.slane %v5087, 5
        %v5107 = vsel %vm2713, %v5105, %v5106
        %v5108 = vrot.slane %v4854, 5
        %v5109 = vrot.slane %v5088, 5
        %v5110 = vsel %vm2713, %v5108, %v5109
        %v5111 = vrot.slane %v4855, 5
        %v5112 = vrot.slane %v5089, 5
        %v5113 = vsel %vm2713, %v5111, %v5112
        %v5114 = vrot.slane %v4856, 5
        %v5115 = vrot.slane %v5090, 5
        %v5116 = vsel %vm2713, %v5114, %v5115
        %v5117 = vrot.slane %v4857, 5
        %v5118 = vrot.slane %v5091, 5
        %v5119 = vsel %vm2713, %v5117, %v5118
        %v5120 = vrot.slane %v4858, 5
        %v5121 = vrot.slane %v5092, 5
        %v5122 = vsel %vm2713, %v5120, %v5121
        %v5123 = vrot.slane %v4859, 5
        %v5124 = vrot.slane %v5093, 5
        %v5125 = vsel %vm2713, %v5123, %v5124
        %v5126 = vrot.slane %v4860, 5
        %v5127 = vrot.slane %v5094, 5
        %v5128 = vsel %vm2713, %v5126, %v5127
        %v5129 = vrot.slane %v4861, 5
        %v5130 = vrot.slane %v5095, 5
        %v5131 = vsel %vm2713, %v5129, %v5130
        %v5132 = vrot.slane %v4862, 5
        %v5133 = vrot.slane %v5096, 5
        %v5134 = vsel %vm2713, %v5132, %v5133
        %v5135 = vrot.slane %v4863, 5
        %v5136 = vrot.slane %v5097, 5
        %v5137 = vsel %vm2713, %v5135, %v5136
        %v5138 = vrot.slane %v4864, 5
        %v5139 = vrot.slane %v5098, 5
        %v5140 = vsel %vm2713, %v5138, %v5139
        %v5141 = vrot.slane %v4865, 5
        %v5142 = vrot.slane %v5099, 5
        %v5143 = vsel %vm2713, %v5141, %v5142
        %v5144 = vrot.slane %v4866, 5
        %v5145 = vrot.slane %v5100, 5
        %v5146 = vsel %vm2713, %v5144, %v5145
        %v5147 = vrot.slane %v4867, 5
        %v5148 = vrot.slane %v5101, 5
        %v5149 = vsel %vm2713, %v5147, %v5148
        %v5150 = vrot.slane %v4868, 5
        %v5151 = vrot.slane %v5102, 5
        %v5152 = vsel %vm2713, %v5150, %v5151
        %v5153 = vrot.slane %v4869, 5
        %v5154 = vrot.slane %v5103, 5
        %v5155 = vsel %vm2713, %v5153, %v5154
        %v5156 = vrot.slane %v4870, 5
        %v5157 = vrot.slane %v5104, 5
        %v5158 = vsel %vm2713, %v5156, %v5157
        %5159 = vrot.lane.b32.xlu0 %v5105, 64
        %v5160 = vpop.permute.xlu0 %5159
        %5161 = vrot.lane.b32.xlu0 %v5107, 64
        %v5162 = vpop.permute.xlu0 %5161
        %5163 = vrot.lane.b32.xlu0 %v5108, 64
        %v5164 = vpop.permute.xlu0 %5163
        %5165 = vrot.lane.b32.xlu0 %v5110, 64
        %v5166 = vpop.permute.xlu0 %5165
        %5167 = vrot.lane.b32.xlu0 %v5111, 64
        %v5168 = vpop.permute.xlu0 %5167
        %5169 = vrot.lane.b32.xlu0 %v5113, 64
        %v5170 = vpop.permute.xlu0 %5169
        %5171 = vrot.lane.b32.xlu0 %v5114, 64
        %v5172 = vpop.permute.xlu0 %5171
        %5173 = vrot.lane.b32.xlu0 %v5116, 64
        %v5174 = vpop.permute.xlu0 %5173
        %5175 = vrot.lane.b32.xlu0 %v5117, 64
        %v5176 = vpop.permute.xlu0 %5175
        %5177 = vrot.lane.b32.xlu0 %v5119, 64
        %v5178 = vpop.permute.xlu0 %5177
        %5179 = vrot.lane.b32.xlu0 %v5120, 64
        %v5180 = vpop.permute.xlu0 %5179
        %5181 = vrot.lane.b32.xlu0 %v5122, 64
        %v5182 = vpop.permute.xlu0 %5181
        %5183 = vrot.lane.b32.xlu0 %v5123, 64
        %v5184 = vpop.permute.xlu0 %5183
        %5185 = vrot.lane.b32.xlu0 %v5125, 64
        %v5186 = vpop.permute.xlu0 %5185
        %5187 = vrot.lane.b32.xlu0 %v5126, 64
        %v5188 = vpop.permute.xlu0 %5187
        %5189 = vrot.lane.b32.xlu0 %v5128, 64
        %v5190 = vpop.permute.xlu0 %5189
        %5191 = vrot.lane.b32.xlu0 %v5129, 64
        %v5192 = vpop.permute.xlu0 %5191
        %5193 = vrot.lane.b32.xlu0 %v5131, 64
        %v5194 = vpop.permute.xlu0 %5193
        %5195 = vrot.lane.b32.xlu0 %v5132, 64
        %v5196 = vpop.permute.xlu0 %5195
        %5197 = vrot.lane.b32.xlu0 %v5134, 64
        %v5198 = vpop.permute.xlu0 %5197
        %5199 = vrot.lane.b32.xlu0 %v5135, 64
        %v5200 = vpop.permute.xlu0 %5199
        %5201 = vrot.lane.b32.xlu0 %v5137, 64
        %v5202 = vpop.permute.xlu0 %5201
        %5203 = vrot.lane.b32.xlu0 %v5138, 64
        %v5204 = vpop.permute.xlu0 %5203
        %5205 = vrot.lane.b32.xlu0 %v5140, 64
        %v5206 = vpop.permute.xlu0 %5205
        %5207 = vrot.lane.b32.xlu0 %v5141, 64
        %v5208 = vpop.permute.xlu0 %5207
        %5209 = vrot.lane.b32.xlu0 %v5143, 64
        %v5210 = vpop.permute.xlu0 %5209
        %5211 = vrot.lane.b32.xlu0 %v5144, 64
        %v5212 = vpop.permute.xlu0 %5211
        %5213 = vrot.lane.b32.xlu0 %v5146, 64
        %v5214 = vpop.permute.xlu0 %5213
        %5215 = vrot.lane.b32.xlu0 %v5147, 64
        %v5216 = vpop.permute.xlu0 %5215
        %5217 = vrot.lane.b32.xlu0 %v5149, 64
        %v5218 = vpop.permute.xlu0 %5217
        %5219 = vrot.lane.b32.xlu0 %v5150, 64
        %v5220 = vpop.permute.xlu0 %5219
        %5221 = vrot.lane.b32.xlu0 %v5152, 64
        %v5222 = vpop.permute.xlu0 %5221
        %5223 = vrot.lane.b32.xlu0 %v5153, 64
        %v5224 = vpop.permute.xlu0 %5223
        %5225 = vrot.lane.b32.xlu0 %v5155, 64
        %v5226 = vpop.permute.xlu0 %5225
        %5227 = vrot.lane.b32.xlu0 %v5156, 64
        %v5228 = vpop.permute.xlu0 %5227
        %5229 = vrot.lane.b32.xlu0 %v5158, 64
        %v5230 = vpop.permute.xlu0 %5229
        %vm5231 = vcmask 785408
        %v5234 = vsel %vm5231, %v4817, %v5016
        %v5236 = vsel %vm5231, %v4818, %v5016
        %v5239 = vsel %vm5231, %v4819, %v5018
        %v5241 = vsel %vm5231, %v4820, %v5018
        %v5244 = vsel %vm5231, %v4821, %v5020
        %v5246 = vsel %vm5231, %v4822, %v5020
        %v5249 = vsel %vm5231, %v4823, %v5022
        %v5251 = vsel %vm5231, %v4824, %v5022
        %v5254 = vsel %vm5231, %v4825, %v5024
        %v5256 = vsel %vm5231, %v4826, %v5024
        %v5259 = vsel %vm5231, %v4827, %v5026
        %v5261 = vsel %vm5231, %v4828, %v5026
        %v5264 = vsel %vm5231, %v4829, %v5028
        %v5266 = vsel %vm5231, %v4830, %v5028
        %v5269 = vsel %vm5231, %v4831, %v5030
        %v5271 = vsel %vm5231, %v4832, %v5030
        %v5274 = vsel %vm5231, %v4833, %v5032
        %v5276 = vsel %vm5231, %v4834, %v5032
        %v5279 = vsel %vm5231, %v4835, %v5034
        %v5281 = vsel %vm5231, %v4836, %v5034
        %v5284 = vsel %vm5231, %v4837, %v5036
        %v5286 = vsel %vm5231, %v4838, %v5036
        %v5289 = vsel %vm5231, %v4839, %v5038
        %v5291 = vsel %vm5231, %v4840, %v5038
        %v5294 = vsel %vm5231, %v4841, %v5040
        %v5296 = vsel %vm5231, %v4842, %v5040
        %v5299 = vsel %vm5231, %v4843, %v5042
        %v5301 = vsel %vm5231, %v4844, %v5042
        %v5304 = vsel %vm5231, %v4845, %v5044
        %v5306 = vsel %vm5231, %v4846, %v5044
        %v5309 = vsel %vm5231, %v4847, %v5046
        %v5311 = vsel %vm5231, %v4848, %v5046
        %v5314 = vsel %vm5231, %v4849, %v5048
        %v5316 = vsel %vm5231, %v4850, %v5048
        %v5319 = vsel %vm5231, %v4851, %v5050
        %v5321 = vsel %vm5231, %v4852, %v5050
        %v5323 = vsel %vm2768, %v5016, %v5160
        %v5325 = vsel %vm2768, %v5016, %v5162
        %v5327 = vsel %vm2768, %v5018, %v5164
        %v5329 = vsel %vm2768, %v5018, %v5166
        %v5331 = vsel %vm2768, %v5020, %v5168
        %v5333 = vsel %vm2768, %v5020, %v5170
        %v5335 = vsel %vm2768, %v5022, %v5172
        %v5337 = vsel %vm2768, %v5022, %v5174
        %v5339 = vsel %vm2768, %v5024, %v5176
        %v5341 = vsel %vm2768, %v5024, %v5178
        %v5343 = vsel %vm2768, %v5026, %v5180
        %v5345 = vsel %vm2768, %v5026, %v5182
        %v5347 = vsel %vm2768, %v5028, %v5184
        %v5349 = vsel %vm2768, %v5028, %v5186
        %v5351 = vsel %vm2768, %v5030, %v5188
        %v5353 = vsel %vm2768, %v5030, %v5190
        %v5355 = vsel %vm2768, %v5032, %v5192
        %v5357 = vsel %vm2768, %v5032, %v5194
        %v5359 = vsel %vm2768, %v5034, %v5196
        %v5361 = vsel %vm2768, %v5034, %v5198
        %v5363 = vsel %vm2768, %v5036, %v5200
        %v5365 = vsel %vm2768, %v5036, %v5202
        %v5367 = vsel %vm2768, %v5038, %v5204
        %v5369 = vsel %vm2768, %v5038, %v5206
        %v5371 = vsel %vm2768, %v5040, %v5208
        %v5373 = vsel %vm2768, %v5040, %v5210
        %v5375 = vsel %vm2768, %v5042, %v5212
        %v5377 = vsel %vm2768, %v5042, %v5214
        %v5379 = vsel %vm2768, %v5044, %v5216
        %v5381 = vsel %vm2768, %v5044, %v5218
        %v5383 = vsel %vm2768, %v5046, %v5220
        %v5385 = vsel %vm2768, %v5046, %v5222
        %v5387 = vsel %vm2768, %v5048, %v5224
        %v5389 = vsel %vm2768, %v5048, %v5226
        %v5391 = vsel %vm2768, %v5050, %v5228
        %v5393 = vsel %vm2768, %v5050, %v5230
        %v5394 = vshrl.u32 %v5234, 16
        %v5396 = vrot.slane %v5394, 3
        %v5397 = vshll.u32 %v5234, 16
        %v5399 = vrot.slane %v5397, 4
        %v5400 = vor.u32 %v5396, %v5399
        %v5401 = vshrl.u32 %v5236, 16
        %v5403 = vrot.slane %v5401, 3
        %v5404 = vshll.u32 %v5236, 16
        %v5406 = vrot.slane %v5404, 4
        %v5407 = vor.u32 %v5403, %v5406
        %v5408 = vsel %vm2859, %v5400, %v5407
        %v5409 = vshrl.u32 %v5323, 16
        %v5411 = vrot.slane %v5409, 3
        %v5412 = vshll.u32 %v5323, 16
        %v5414 = vrot.slane %v5412, 4
        %v5415 = vor.u32 %v5411, %v5414
        %v5416 = vshrl.u32 %v5325, 16
        %v5418 = vrot.slane %v5416, 3
        %v5419 = vshll.u32 %v5325, 16
        %v5421 = vrot.slane %v5419, 4
        %v5422 = vor.u32 %v5418, %v5421
        %v5423 = vsel %vm2859, %v5415, %v5422
        %v5424 = vshrl.u32 %v5160, 16
        %v5426 = vrot.slane %v5424, 3
        %v5427 = vshll.u32 %v5160, 16
        %v5429 = vrot.slane %v5427, 4
        %v5430 = vor.u32 %v5426, %v5429
        %v5431 = vshrl.u32 %v5162, 16
        %v5433 = vrot.slane %v5431, 3
        %v5434 = vshll.u32 %v5162, 16
        %v5436 = vrot.slane %v5434, 4
        %v5437 = vor.u32 %v5433, %v5436
        %v5438 = vsel %vm2859, %v5430, %v5437
        %v5439 = vshrl.u32 %v5239, 16
        %v5441 = vrot.slane %v5439, 3
        %v5442 = vshll.u32 %v5239, 16
        %v5444 = vrot.slane %v5442, 4
        %v5445 = vor.u32 %v5441, %v5444
        %v5446 = vshrl.u32 %v5241, 16
        %v5448 = vrot.slane %v5446, 3
        %v5449 = vshll.u32 %v5241, 16
        %v5451 = vrot.slane %v5449, 4
        %v5452 = vor.u32 %v5448, %v5451
        %v5453 = vsel %vm2859, %v5445, %v5452
        %v5454 = vshrl.u32 %v5327, 16
        %v5456 = vrot.slane %v5454, 3
        %v5457 = vshll.u32 %v5327, 16
        %v5459 = vrot.slane %v5457, 4
        %v5460 = vor.u32 %v5456, %v5459
        %v5461 = vshrl.u32 %v5329, 16
        %v5463 = vrot.slane %v5461, 3
        %v5464 = vshll.u32 %v5329, 16
        %v5466 = vrot.slane %v5464, 4
        %v5467 = vor.u32 %v5463, %v5466
        %v5468 = vsel %vm2859, %v5460, %v5467
        %v5469 = vshrl.u32 %v5164, 16
        %v5471 = vrot.slane %v5469, 3
        %v5472 = vshll.u32 %v5164, 16
        %v5474 = vrot.slane %v5472, 4
        %v5475 = vor.u32 %v5471, %v5474
        %v5476 = vshrl.u32 %v5166, 16
        %v5478 = vrot.slane %v5476, 3
        %v5479 = vshll.u32 %v5166, 16
        %v5481 = vrot.slane %v5479, 4
        %v5482 = vor.u32 %v5478, %v5481
        %v5483 = vsel %vm2859, %v5475, %v5482
        %v5484 = vshrl.u32 %v5244, 16
        %v5486 = vrot.slane %v5484, 3
        %v5487 = vshll.u32 %v5244, 16
        %v5489 = vrot.slane %v5487, 4
        %v5490 = vor.u32 %v5486, %v5489
        %v5491 = vshrl.u32 %v5246, 16
        %v5493 = vrot.slane %v5491, 3
        %v5494 = vshll.u32 %v5246, 16
        %v5496 = vrot.slane %v5494, 4
        %v5497 = vor.u32 %v5493, %v5496
        %v5498 = vsel %vm2859, %v5490, %v5497
        %v5499 = vshrl.u32 %v5331, 16
        %v5501 = vrot.slane %v5499, 3
        %v5502 = vshll.u32 %v5331, 16
        %v5504 = vrot.slane %v5502, 4
        %v5505 = vor.u32 %v5501, %v5504
        %v5506 = vshrl.u32 %v5333, 16
        %v5508 = vrot.slane %v5506, 3
        %v5509 = vshll.u32 %v5333, 16
        %v5511 = vrot.slane %v5509, 4
        %v5512 = vor.u32 %v5508, %v5511
        %v5513 = vsel %vm2859, %v5505, %v5512
        %v5514 = vshrl.u32 %v5168, 16
        %v5516 = vrot.slane %v5514, 3
        %v5517 = vshll.u32 %v5168, 16
        %v5519 = vrot.slane %v5517, 4
        %v5520 = vor.u32 %v5516, %v5519
        %v5521 = vshrl.u32 %v5170, 16
        %v5523 = vrot.slane %v5521, 3
        %v5524 = vshll.u32 %v5170, 16
        %v5526 = vrot.slane %v5524, 4
        %v5527 = vor.u32 %v5523, %v5526
        %v5528 = vsel %vm2859, %v5520, %v5527
        %v5529 = vshrl.u32 %v5249, 16
        %v5531 = vrot.slane %v5529, 3
        %v5532 = vshll.u32 %v5249, 16
        %v5534 = vrot.slane %v5532, 4
        %v5535 = vor.u32 %v5531, %v5534
        %v5536 = vshrl.u32 %v5251, 16
        %v5538 = vrot.slane %v5536, 3
        %v5539 = vshll.u32 %v5251, 16
        %v5541 = vrot.slane %v5539, 4
        %v5542 = vor.u32 %v5538, %v5541
        %v5543 = vsel %vm2859, %v5535, %v5542
        %v5544 = vshrl.u32 %v5335, 16
        %v5546 = vrot.slane %v5544, 3
        %v5547 = vshll.u32 %v5335, 16
        %v5549 = vrot.slane %v5547, 4
        %v5550 = vor.u32 %v5546, %v5549
        %v5551 = vshrl.u32 %v5337, 16
        %v5553 = vrot.slane %v5551, 3
        %v5554 = vshll.u32 %v5337, 16
        %v5556 = vrot.slane %v5554, 4
        %v5557 = vor.u32 %v5553, %v5556
        %v5558 = vsel %vm2859, %v5550, %v5557
        %v5559 = vshrl.u32 %v5172, 16
        %v5561 = vrot.slane %v5559, 3
        %v5562 = vshll.u32 %v5172, 16
        %v5564 = vrot.slane %v5562, 4
        %v5565 = vor.u32 %v5561, %v5564
        %v5566 = vshrl.u32 %v5174, 16
        %v5568 = vrot.slane %v5566, 3
        %v5569 = vshll.u32 %v5174, 16
        %v5571 = vrot.slane %v5569, 4
        %v5572 = vor.u32 %v5568, %v5571
        %v5573 = vsel %vm2859, %v5565, %v5572
        %v5574 = vshrl.u32 %v5254, 16
        %v5576 = vrot.slane %v5574, 3
        %v5577 = vshll.u32 %v5254, 16
        %v5579 = vrot.slane %v5577, 4
        %v5580 = vor.u32 %v5576, %v5579
        %v5581 = vshrl.u32 %v5256, 16
        %v5583 = vrot.slane %v5581, 3
        %v5584 = vshll.u32 %v5256, 16
        %v5586 = vrot.slane %v5584, 4
        %v5587 = vor.u32 %v5583, %v5586
        %v5588 = vsel %vm2859, %v5580, %v5587
        %v5589 = vshrl.u32 %v5339, 16
        %v5591 = vrot.slane %v5589, 3
        %v5592 = vshll.u32 %v5339, 16
        %v5594 = vrot.slane %v5592, 4
        %v5595 = vor.u32 %v5591, %v5594
        %v5596 = vshrl.u32 %v5341, 16
        %v5598 = vrot.slane %v5596, 3
        %v5599 = vshll.u32 %v5341, 16
        %v5601 = vrot.slane %v5599, 4
        %v5602 = vor.u32 %v5598, %v5601
        %v5603 = vsel %vm2859, %v5595, %v5602
        %v5604 = vshrl.u32 %v5176, 16
        %v5606 = vrot.slane %v5604, 3
        %v5607 = vshll.u32 %v5176, 16
        %v5609 = vrot.slane %v5607, 4
        %v5610 = vor.u32 %v5606, %v5609
        %v5611 = vshrl.u32 %v5178, 16
        %v5613 = vrot.slane %v5611, 3
        %v5614 = vshll.u32 %v5178, 16
        %v5616 = vrot.slane %v5614, 4
        %v5617 = vor.u32 %v5613, %v5616
        %v5618 = vsel %vm2859, %v5610, %v5617
        %v5619 = vshrl.u32 %v5259, 16
        %v5621 = vrot.slane %v5619, 3
        %v5622 = vshll.u32 %v5259, 16
        %v5624 = vrot.slane %v5622, 4
        %v5625 = vor.u32 %v5621, %v5624
        %v5626 = vshrl.u32 %v5261, 16
        %v5628 = vrot.slane %v5626, 3
        %v5629 = vshll.u32 %v5261, 16
        %v5631 = vrot.slane %v5629, 4
        %v5632 = vor.u32 %v5628, %v5631
        %v5633 = vsel %vm2859, %v5625, %v5632
        %v5634 = vshrl.u32 %v5343, 16
        %v5636 = vrot.slane %v5634, 3
        %v5637 = vshll.u32 %v5343, 16
        %v5639 = vrot.slane %v5637, 4
        %v5640 = vor.u32 %v5636, %v5639
        %v5641 = vshrl.u32 %v5345, 16
        %v5643 = vrot.slane %v5641, 3
        %v5644 = vshll.u32 %v5345, 16
        %v5646 = vrot.slane %v5644, 4
        %v5647 = vor.u32 %v5643, %v5646
        %v5648 = vsel %vm2859, %v5640, %v5647
        %v5649 = vshrl.u32 %v5180, 16
        %v5651 = vrot.slane %v5649, 3
        %v5652 = vshll.u32 %v5180, 16
        %v5654 = vrot.slane %v5652, 4
        %v5655 = vor.u32 %v5651, %v5654
        %v5656 = vshrl.u32 %v5182, 16
        %v5658 = vrot.slane %v5656, 3
        %v5659 = vshll.u32 %v5182, 16
        %v5661 = vrot.slane %v5659, 4
        %v5662 = vor.u32 %v5658, %v5661
        %v5663 = vsel %vm2859, %v5655, %v5662
        %v5664 = vshrl.u32 %v5264, 16
        %v5666 = vrot.slane %v5664, 3
        %v5667 = vshll.u32 %v5264, 16
        %v5669 = vrot.slane %v5667, 4
        %v5670 = vor.u32 %v5666, %v5669
        %v5671 = vshrl.u32 %v5266, 16
        %v5673 = vrot.slane %v5671, 3
        %v5674 = vshll.u32 %v5266, 16
        %v5676 = vrot.slane %v5674, 4
        %v5677 = vor.u32 %v5673, %v5676
        %v5678 = vsel %vm2859, %v5670, %v5677
        %v5679 = vshrl.u32 %v5347, 16
        %v5681 = vrot.slane %v5679, 3
        %v5682 = vshll.u32 %v5347, 16
        %v5684 = vrot.slane %v5682, 4
        %v5685 = vor.u32 %v5681, %v5684
        %v5686 = vshrl.u32 %v5349, 16
        %v5688 = vrot.slane %v5686, 3
        %v5689 = vshll.u32 %v5349, 16
        %v5691 = vrot.slane %v5689, 4
        %v5692 = vor.u32 %v5688, %v5691
        %v5693 = vsel %vm2859, %v5685, %v5692
        %v5694 = vshrl.u32 %v5184, 16
        %v5696 = vrot.slane %v5694, 3
        %v5697 = vshll.u32 %v5184, 16
        %v5699 = vrot.slane %v5697, 4
        %v5700 = vor.u32 %v5696, %v5699
        %v5701 = vshrl.u32 %v5186, 16
        %v5703 = vrot.slane %v5701, 3
        %v5704 = vshll.u32 %v5186, 16
        %v5706 = vrot.slane %v5704, 4
        %v5707 = vor.u32 %v5703, %v5706
        %v5708 = vsel %vm2859, %v5700, %v5707
        %v5709 = vshrl.u32 %v5269, 16
        %v5711 = vrot.slane %v5709, 3
        %v5712 = vshll.u32 %v5269, 16
        %v5714 = vrot.slane %v5712, 4
        %v5715 = vor.u32 %v5711, %v5714
        %v5716 = vshrl.u32 %v5271, 16
        %v5718 = vrot.slane %v5716, 3
        %v5719 = vshll.u32 %v5271, 16
        %v5721 = vrot.slane %v5719, 4
        %v5722 = vor.u32 %v5718, %v5721
        %v5723 = vsel %vm2859, %v5715, %v5722
        %v5724 = vshrl.u32 %v5351, 16
        %v5726 = vrot.slane %v5724, 3
        %v5727 = vshll.u32 %v5351, 16
        %v5729 = vrot.slane %v5727, 4
        %v5730 = vor.u32 %v5726, %v5729
        %v5731 = vshrl.u32 %v5353, 16
        %v5733 = vrot.slane %v5731, 3
        %v5734 = vshll.u32 %v5353, 16
        %v5736 = vrot.slane %v5734, 4
        %v5737 = vor.u32 %v5733, %v5736
        %v5738 = vsel %vm2859, %v5730, %v5737
        %v5739 = vshrl.u32 %v5188, 16
        %v5741 = vrot.slane %v5739, 3
        %v5742 = vshll.u32 %v5188, 16
        %v5744 = vrot.slane %v5742, 4
        %v5745 = vor.u32 %v5741, %v5744
        %v5746 = vshrl.u32 %v5190, 16
        %v5748 = vrot.slane %v5746, 3
        %v5749 = vshll.u32 %v5190, 16
        %v5751 = vrot.slane %v5749, 4
        %v5752 = vor.u32 %v5748, %v5751
        %v5753 = vsel %vm2859, %v5745, %v5752
        %v5754 = vshrl.u32 %v5274, 16
        %v5756 = vrot.slane %v5754, 3
        %v5757 = vshll.u32 %v5274, 16
        %v5759 = vrot.slane %v5757, 4
        %v5760 = vor.u32 %v5756, %v5759
        %v5761 = vshrl.u32 %v5276, 16
        %v5763 = vrot.slane %v5761, 3
        %v5764 = vshll.u32 %v5276, 16
        %v5766 = vrot.slane %v5764, 4
        %v5767 = vor.u32 %v5763, %v5766
        %v5768 = vsel %vm2859, %v5760, %v5767
        %v5769 = vshrl.u32 %v5355, 16
        %v5771 = vrot.slane %v5769, 3
        %v5772 = vshll.u32 %v5355, 16
        %v5774 = vrot.slane %v5772, 4
        %v5775 = vor.u32 %v5771, %v5774
        %v5776 = vshrl.u32 %v5357, 16
        %v5778 = vrot.slane %v5776, 3
        %v5779 = vshll.u32 %v5357, 16
        %v5781 = vrot.slane %v5779, 4
        %v5782 = vor.u32 %v5778, %v5781
        %v5783 = vsel %vm2859, %v5775, %v5782
        %v5784 = vshrl.u32 %v5192, 16
        %v5786 = vrot.slane %v5784, 3
        %v5787 = vshll.u32 %v5192, 16
        %v5789 = vrot.slane %v5787, 4
        %v5790 = vor.u32 %v5786, %v5789
        %v5791 = vshrl.u32 %v5194, 16
        %v5793 = vrot.slane %v5791, 3
        %v5794 = vshll.u32 %v5194, 16
        %v5796 = vrot.slane %v5794, 4
        %v5797 = vor.u32 %v5793, %v5796
        %v5798 = vsel %vm2859, %v5790, %v5797
        %v5799 = vshrl.u32 %v5279, 16
        %v5801 = vrot.slane %v5799, 3
        %v5802 = vshll.u32 %v5279, 16
        %v5804 = vrot.slane %v5802, 4
        %v5805 = vor.u32 %v5801, %v5804
        %v5806 = vshrl.u32 %v5281, 16
        %v5808 = vrot.slane %v5806, 3
        %v5809 = vshll.u32 %v5281, 16
        %v5811 = vrot.slane %v5809, 4
        %v5812 = vor.u32 %v5808, %v5811
        %v5813 = vsel %vm2859, %v5805, %v5812
        %v5814 = vshrl.u32 %v5359, 16
        %v5816 = vrot.slane %v5814, 3
        %v5817 = vshll.u32 %v5359, 16
        %v5819 = vrot.slane %v5817, 4
        %v5820 = vor.u32 %v5816, %v5819
        %v5821 = vshrl.u32 %v5361, 16
        %v5823 = vrot.slane %v5821, 3
        %v5824 = vshll.u32 %v5361, 16
        %v5826 = vrot.slane %v5824, 4
        %v5827 = vor.u32 %v5823, %v5826
        %v5828 = vsel %vm2859, %v5820, %v5827
        %v5829 = vshrl.u32 %v5196, 16
        %v5831 = vrot.slane %v5829, 3
        %v5832 = vshll.u32 %v5196, 16
        %v5834 = vrot.slane %v5832, 4
        %v5835 = vor.u32 %v5831, %v5834
        %v5836 = vshrl.u32 %v5198, 16
        %v5838 = vrot.slane %v5836, 3
        %v5839 = vshll.u32 %v5198, 16
        %v5841 = vrot.slane %v5839, 4
        %v5842 = vor.u32 %v5838, %v5841
        %v5843 = vsel %vm2859, %v5835, %v5842
        %v5844 = vshrl.u32 %v5284, 16
        %v5846 = vrot.slane %v5844, 3
        %v5847 = vshll.u32 %v5284, 16
        %v5849 = vrot.slane %v5847, 4
        %v5850 = vor.u32 %v5846, %v5849
        %v5851 = vshrl.u32 %v5286, 16
        %v5853 = vrot.slane %v5851, 3
        %v5854 = vshll.u32 %v5286, 16
        %v5856 = vrot.slane %v5854, 4
        %v5857 = vor.u32 %v5853, %v5856
        %v5858 = vsel %vm2859, %v5850, %v5857
        %v5859 = vshrl.u32 %v5363, 16
        %v5861 = vrot.slane %v5859, 3
        %v5862 = vshll.u32 %v5363, 16
        %v5864 = vrot.slane %v5862, 4
        %v5865 = vor.u32 %v5861, %v5864
        %v5866 = vshrl.u32 %v5365, 16
        %v5868 = vrot.slane %v5866, 3
        %v5869 = vshll.u32 %v5365, 16
        %v5871 = vrot.slane %v5869, 4
        %v5872 = vor.u32 %v5868, %v5871
        %v5873 = vsel %vm2859, %v5865, %v5872
        %v5874 = vshrl.u32 %v5200, 16
        %v5876 = vrot.slane %v5874, 3
        %v5877 = vshll.u32 %v5200, 16
        %v5879 = vrot.slane %v5877, 4
        %v5880 = vor.u32 %v5876, %v5879
        %v5881 = vshrl.u32 %v5202, 16
        %v5883 = vrot.slane %v5881, 3
        %v5884 = vshll.u32 %v5202, 16
        %v5886 = vrot.slane %v5884, 4
        %v5887 = vor.u32 %v5883, %v5886
        %v5888 = vsel %vm2859, %v5880, %v5887
        %v5889 = vshrl.u32 %v5289, 16
        %v5891 = vrot.slane %v5889, 3
        %v5892 = vshll.u32 %v5289, 16
        %v5894 = vrot.slane %v5892, 4
        %v5895 = vor.u32 %v5891, %v5894
        %v5896 = vshrl.u32 %v5291, 16
        %v5898 = vrot.slane %v5896, 3
        %v5899 = vshll.u32 %v5291, 16
        %v5901 = vrot.slane %v5899, 4
        %v5902 = vor.u32 %v5898, %v5901
        %v5903 = vsel %vm2859, %v5895, %v5902
        %v5904 = vshrl.u32 %v5367, 16
        %v5906 = vrot.slane %v5904, 3
        %v5907 = vshll.u32 %v5367, 16
        %v5909 = vrot.slane %v5907, 4
        %v5910 = vor.u32 %v5906, %v5909
        %v5911 = vshrl.u32 %v5369, 16
        %v5913 = vrot.slane %v5911, 3
        %v5914 = vshll.u32 %v5369, 16
        %v5916 = vrot.slane %v5914, 4
        %v5917 = vor.u32 %v5913, %v5916
        %v5918 = vsel %vm2859, %v5910, %v5917
        %v5919 = vshrl.u32 %v5204, 16
        %v5921 = vrot.slane %v5919, 3
        %v5922 = vshll.u32 %v5204, 16
        %v5924 = vrot.slane %v5922, 4
        %v5925 = vor.u32 %v5921, %v5924
        %v5926 = vshrl.u32 %v5206, 16
        %v5928 = vrot.slane %v5926, 3
        %v5929 = vshll.u32 %v5206, 16
        %v5931 = vrot.slane %v5929, 4
        %v5932 = vor.u32 %v5928, %v5931
        %v5933 = vsel %vm2859, %v5925, %v5932
        %v5934 = vshrl.u32 %v5294, 16
        %v5936 = vrot.slane %v5934, 3
        %v5937 = vshll.u32 %v5294, 16
        %v5939 = vrot.slane %v5937, 4
        %v5940 = vor.u32 %v5936, %v5939
        %v5941 = vshrl.u32 %v5296, 16
        %v5943 = vrot.slane %v5941, 3
        %v5944 = vshll.u32 %v5296, 16
        %v5946 = vrot.slane %v5944, 4
        %v5947 = vor.u32 %v5943, %v5946
        %v5948 = vsel %vm2859, %v5940, %v5947
        %v5949 = vshrl.u32 %v5371, 16
        %v5951 = vrot.slane %v5949, 3
        %v5952 = vshll.u32 %v5371, 16
        %v5954 = vrot.slane %v5952, 4
        %v5955 = vor.u32 %v5951, %v5954
        %v5956 = vshrl.u32 %v5373, 16
        %v5958 = vrot.slane %v5956, 3
        %v5959 = vshll.u32 %v5373, 16
        %v5961 = vrot.slane %v5959, 4
        %v5962 = vor.u32 %v5958, %v5961
        %v5963 = vsel %vm2859, %v5955, %v5962
        %v5964 = vshrl.u32 %v5208, 16
        %v5966 = vrot.slane %v5964, 3
        %v5967 = vshll.u32 %v5208, 16
        %v5969 = vrot.slane %v5967, 4
        %v5970 = vor.u32 %v5966, %v5969
        %v5971 = vshrl.u32 %v5210, 16
        %v5973 = vrot.slane %v5971, 3
        %v5974 = vshll.u32 %v5210, 16
        %v5976 = vrot.slane %v5974, 4
        %v5977 = vor.u32 %v5973, %v5976
        %v5978 = vsel %vm2859, %v5970, %v5977
        %v5979 = vshrl.u32 %v5299, 16
        %v5981 = vrot.slane %v5979, 3
        %v5982 = vshll.u32 %v5299, 16
        %v5984 = vrot.slane %v5982, 4
        %v5985 = vor.u32 %v5981, %v5984
        %v5986 = vshrl.u32 %v5301, 16
        %v5988 = vrot.slane %v5986, 3
        %v5989 = vshll.u32 %v5301, 16
        %v5991 = vrot.slane %v5989, 4
        %v5992 = vor.u32 %v5988, %v5991
        %v5993 = vsel %vm2859, %v5985, %v5992
        %v5994 = vshrl.u32 %v5375, 16
        %v5996 = vrot.slane %v5994, 3
        %v5997 = vshll.u32 %v5375, 16
        %v5999 = vrot.slane %v5997, 4
        %v6000 = vor.u32 %v5996, %v5999
        %v6001 = vshrl.u32 %v5377, 16
        %v6003 = vrot.slane %v6001, 3
        %v6004 = vshll.u32 %v5377, 16
        %v6006 = vrot.slane %v6004, 4
        %v6007 = vor.u32 %v6003, %v6006
        %v6008 = vsel %vm2859, %v6000, %v6007
        %v6009 = vshrl.u32 %v5212, 16
        %v6011 = vrot.slane %v6009, 3
        %v6012 = vshll.u32 %v5212, 16
        %v6014 = vrot.slane %v6012, 4
        %v6015 = vor.u32 %v6011, %v6014
        %v6016 = vshrl.u32 %v5214, 16
        %v6018 = vrot.slane %v6016, 3
        %v6019 = vshll.u32 %v5214, 16
        %v6021 = vrot.slane %v6019, 4
        %v6022 = vor.u32 %v6018, %v6021
        %v6023 = vsel %vm2859, %v6015, %v6022
        %v6024 = vshrl.u32 %v5304, 16
        %v6026 = vrot.slane %v6024, 3
        %v6027 = vshll.u32 %v5304, 16
        %v6029 = vrot.slane %v6027, 4
        %v6030 = vor.u32 %v6026, %v6029
        %v6031 = vshrl.u32 %v5306, 16
        %v6033 = vrot.slane %v6031, 3
        %v6034 = vshll.u32 %v5306, 16
        %v6036 = vrot.slane %v6034, 4
        %v6037 = vor.u32 %v6033, %v6036
        %v6038 = vsel %vm2859, %v6030, %v6037
        %v6039 = vshrl.u32 %v5379, 16
        %v6041 = vrot.slane %v6039, 3
        %v6042 = vshll.u32 %v5379, 16
        %v6044 = vrot.slane %v6042, 4
        %v6045 = vor.u32 %v6041, %v6044
        %v6046 = vshrl.u32 %v5381, 16
        %v6048 = vrot.slane %v6046, 3
        %v6049 = vshll.u32 %v5381, 16
        %v6051 = vrot.slane %v6049, 4
        %v6052 = vor.u32 %v6048, %v6051
        %v6053 = vsel %vm2859, %v6045, %v6052
        %v6054 = vshrl.u32 %v5216, 16
        %v6056 = vrot.slane %v6054, 3
        %v6057 = vshll.u32 %v5216, 16
        %v6059 = vrot.slane %v6057, 4
        %v6060 = vor.u32 %v6056, %v6059
        %v6061 = vshrl.u32 %v5218, 16
        %v6063 = vrot.slane %v6061, 3
        %v6064 = vshll.u32 %v5218, 16
        %v6066 = vrot.slane %v6064, 4
        %v6067 = vor.u32 %v6063, %v6066
        %v6068 = vsel %vm2859, %v6060, %v6067
        %v6069 = vshrl.u32 %v5309, 16
        %v6071 = vrot.slane %v6069, 3
        %v6072 = vshll.u32 %v5309, 16
        %v6074 = vrot.slane %v6072, 4
        %v6075 = vor.u32 %v6071, %v6074
        %v6076 = vshrl.u32 %v5311, 16
        %v6078 = vrot.slane %v6076, 3
        %v6079 = vshll.u32 %v5311, 16
        %v6081 = vrot.slane %v6079, 4
        %v6082 = vor.u32 %v6078, %v6081
        %v6083 = vsel %vm2859, %v6075, %v6082
        %v6084 = vshrl.u32 %v5383, 16
        %v6086 = vrot.slane %v6084, 3
        %v6087 = vshll.u32 %v5383, 16
        %v6089 = vrot.slane %v6087, 4
        %v6090 = vor.u32 %v6086, %v6089
        %v6091 = vshrl.u32 %v5385, 16
        %v6093 = vrot.slane %v6091, 3
        %v6094 = vshll.u32 %v5385, 16
        %v6096 = vrot.slane %v6094, 4
        %v6097 = vor.u32 %v6093, %v6096
        %v6098 = vsel %vm2859, %v6090, %v6097
        %v6099 = vshrl.u32 %v5220, 16
        %v6101 = vrot.slane %v6099, 3
        %v6102 = vshll.u32 %v5220, 16
        %v6104 = vrot.slane %v6102, 4
        %v6105 = vor.u32 %v6101, %v6104
        %v6106 = vshrl.u32 %v5222, 16
        %v6108 = vrot.slane %v6106, 3
        %v6109 = vshll.u32 %v5222, 16
        %v6111 = vrot.slane %v6109, 4
        %v6112 = vor.u32 %v6108, %v6111
        %v6113 = vsel %vm2859, %v6105, %v6112
        %v6146 = vld [vmem:[%s7] sm:$0xf]
        %v6147 = vld [vmem:[%s7 + $0x4] sm:$0xf]
        %v6148 = vld [vmem:[%s7 + $0x8] sm:$0xf]
        %v6149 = vld [vmem:[%s7 + $0xc] sm:$0xf]
        %v6150 = vld [vmem:[%s7 + $0x10] sm:$0xf]
        %v6151 = vld [vmem:[%s7 + $0x14] sm:$0xf]
        %v6152 = vld [vmem:[%s7 + $0x18] sm:$0xf]
        %v6153 = vld [vmem:[%s7 + $0x1c] sm:$0xf]
        %v6154 = vld [vmem:[%s7 + $0x20] sm:$0xf]
        %v6155 = vld [vmem:[%s7 + $0x24] sm:$0xf]
        %v6156 = vld [vmem:[%s7 + $0x28] sm:$0xf]
        %v6157 = vld [vmem:[%s7 + $0x2c] sm:$0xf]
        %v6158 = vld [vmem:[%s7 + $0x30] sm:$0xf]
        %v6159 = vld [vmem:[%s7 + $0x34] sm:$0xf]
        %v6160 = vld [vmem:[%s7 + $0x38] sm:$0xf]
        %v6161 = vld [vmem:[%s7 + $0x3c] sm:$0xf]
        %v6162 = vld [vmem:[%s7 + $0x40] sm:$0xf]
        %v6163 = vld [vmem:[%s7 + $0x44] sm:$0xf]
        %v6164 = vld [vmem:[%s7 + $0x48] sm:$0xf]
        %v6165 = vld [vmem:[%s7 + $0x4c] sm:$0xf]
        %v6166 = vld [vmem:[%s7 + $0x50] sm:$0xf]
        %v6167 = vld [vmem:[%s7 + $0x54] sm:$0xf]
        %v6168 = vld [vmem:[%s7 + $0x58] sm:$0xf]
        %v6169 = vld [vmem:[%s7 + $0x5c] sm:$0xf]
        %v6170 = vld [vmem:[%s7 + $0x60] sm:$0xf]
        %v6171 = vld [vmem:[%s7 + $0x64] sm:$0xf]
        %v6172 = vld [vmem:[%s7 + $0x68] sm:$0xf]
        %v6173 = vld [vmem:[%s7 + $0x6c] sm:$0xf]
        %v6174 = vld [vmem:[%s7 + $0x70] sm:$0xf]
        %v6175 = vld [vmem:[%s7 + $0x74] sm:$0xf]
        %v6176 = vld [vmem:[%s7 + $0x78] sm:$0xf]
        %v6177 = vld [vmem:[%s7 + $0x7c] sm:$0xf]
        %v6178 = vld [vmem:[%s7 + $0x80] sm:$0xf]
        %v6179 = vld [vmem:[%s7 + $0x84] sm:$0xf]
        %v6180 = vld [vmem:[%s7 + $0x88] sm:$0xf]
        %v6181 = vld [vmem:[%s7 + $0x8c] sm:$0xf]
        %v6182 = vshrl.u32 %v5314, 16
        %v6184 = vrot.slane %v6182, 3
        %v6185 = vshll.u32 %v5314, 16
        %v6187 = vrot.slane %v6185, 4
        %v6188 = vor.u32 %v6184, %v6187
        %v6189 = vshrl.u32 %v5316, 16
        %v6191 = vrot.slane %v6189, 3
        %v6192 = vshll.u32 %v5316, 16
        %v6194 = vrot.slane %v6192, 4
        %v6195 = vor.u32 %v6191, %v6194
        %v6196 = vsel %vm2859, %v6188, %v6195
        %v6197 = vshrl.u32 %v5387, 16
        %v6199 = vrot.slane %v6197, 3
        %v6200 = vshll.u32 %v5387, 16
        %v6202 = vrot.slane %v6200, 4
        %v6203 = vor.u32 %v6199, %v6202
        %v6204 = vshrl.u32 %v5389, 16
        %v6206 = vrot.slane %v6204, 3
        %v6207 = vshll.u32 %v5389, 16
        %v6209 = vrot.slane %v6207, 4
        %v6210 = vor.u32 %v6206, %v6209
        %v6211 = vsel %vm2859, %v6203, %v6210
        %v6212 = vshrl.u32 %v5224, 16
        %v6214 = vrot.slane %v6212, 3
        %v6215 = vshll.u32 %v5224, 16
        %v6217 = vrot.slane %v6215, 4
        %v6218 = vor.u32 %v6214, %v6217
        %v6219 = vshrl.u32 %v5226, 16
        %v6221 = vrot.slane %v6219, 3
        %v6222 = vshll.u32 %v5226, 16
        %v6224 = vrot.slane %v6222, 4
        %v6225 = vor.u32 %v6221, %v6224
        %v6226 = vsel %vm2859, %v6218, %v6225
        %s6229 = scalar_lea.vmem %s7, 144
        %v6230 = vld [vmem:[%s6229] sm:$0xf]
        %v6231 = vld [vmem:[%s6229 + $0x4] sm:$0xf]
        %v6232 = vld [vmem:[%s6229 + $0x8] sm:$0xf]
        %v6233 = vld [vmem:[%s6229 + $0xc] sm:$0xf]
        %v6234 = vld [vmem:[%s6229 + $0x10] sm:$0xf]
        %v6235 = vld [vmem:[%s6229 + $0x14] sm:$0xf]
        %v6236 = vld [vmem:[%s6229 + $0x18] sm:$0xf]
        %v6237 = vld [vmem:[%s6229 + $0x1c] sm:$0xf]
        %v6238 = vld [vmem:[%s6229 + $0x20] sm:$0xf]
        %v6239 = vld [vmem:[%s6229 + $0x24] sm:$0xf]
        %v6240 = vld [vmem:[%s6229 + $0x28] sm:$0xf]
        %v6241 = vld [vmem:[%s6229 + $0x2c] sm:$0xf]
        %v6242 = vld [vmem:[%s6229 + $0x30] sm:$0xf]
        %v6243 = vld [vmem:[%s6229 + $0x34] sm:$0xf]
        %v6244 = vld [vmem:[%s6229 + $0x38] sm:$0xf]
        %v6245 = vld [vmem:[%s6229 + $0x3c] sm:$0xf]
        %v6246 = vld [vmem:[%s6229 + $0x40] sm:$0xf]
        %v6247 = vld [vmem:[%s6229 + $0x44] sm:$0xf]
        %v6248 = vld [vmem:[%s6229 + $0x48] sm:$0xf]
        %v6249 = vld [vmem:[%s6229 + $0x4c] sm:$0xf]
        %v6250 = vld [vmem:[%s6229 + $0x50] sm:$0xf]
        %v6251 = vld [vmem:[%s6229 + $0x54] sm:$0xf]
        %v6252 = vld [vmem:[%s6229 + $0x58] sm:$0xf]
        %v6253 = vld [vmem:[%s6229 + $0x5c] sm:$0xf]
        %v6254 = vld [vmem:[%s6229 + $0x60] sm:$0xf]
        %v6255 = vld [vmem:[%s6229 + $0x64] sm:$0xf]
        %v6256 = vld [vmem:[%s6229 + $0x68] sm:$0xf]
        %v6257 = vld [vmem:[%s6229 + $0x6c] sm:$0xf]
        %v6258 = vld [vmem:[%s6229 + $0x70] sm:$0xf]
        %v6259 = vld [vmem:[%s6229 + $0x74] sm:$0xf]
        %v6260 = vld [vmem:[%s6229 + $0x78] sm:$0xf]
        %v6261 = vld [vmem:[%s6229 + $0x7c] sm:$0xf]
        %v6262 = vld [vmem:[%s6229 + $0x80] sm:$0xf]
        %v6263 = vld [vmem:[%s6229 + $0x84] sm:$0xf]
        %v6264 = vld [vmem:[%s6229 + $0x88] sm:$0xf]
        %v6265 = vld [vmem:[%s6229 + $0x8c] sm:$0xf]
        %v6302 = vunpack.c.l.b16 %v6230
        %v6303 = vunpack.c.l.b16 %v6231
        %v6304 = vunpack.c.l.b16 %v6232
        %v6305 = vunpack.c.l.b16 %v6233
        %v6306 = vunpack.c.l.b16 %v6234
        %v6307 = vunpack.c.l.b16 %v6235
        %v6308 = vunpack.c.l.b16 %v6236
        %v6309 = vunpack.c.l.b16 %v6237
        %v6310 = vunpack.c.l.b16 %v6238
        %v6311 = vunpack.c.l.b16 %v6239
        %v6312 = vunpack.c.l.b16 %v6240
        %v6313 = vunpack.c.l.b16 %v6241
        %v6314 = vunpack.c.l.b16 %v6242
        %v6315 = vunpack.c.l.b16 %v6243
        %v6316 = vunpack.c.l.b16 %v6244
        %v6317 = vunpack.c.l.b16 %v6245
        %v6318 = vunpack.c.l.b16 %v6246
        %v6319 = vunpack.c.l.b16 %v6247
        %v6320 = vunpack.c.l.b16 %v6248
        %v6321 = vunpack.c.l.b16 %v6249
        %v6322 = vunpack.c.l.b16 %v6250
        %v6323 = vunpack.c.l.b16 %v6251
        %v6324 = vunpack.c.l.b16 %v6252
        %v6325 = vunpack.c.l.b16 %v6253
        %v6326 = vunpack.c.l.b16 %v6254
        %v6327 = vunpack.c.l.b16 %v6255
        %v6328 = vunpack.c.l.b16 %v6256
        %v6329 = vunpack.c.l.b16 %v6257
        %v6330 = vunpack.c.l.b16 %v6258
        %v6331 = vunpack.c.l.b16 %v6259
        %v6332 = vunpack.c.l.b16 %v6260
        %v6333 = vunpack.c.l.b16 %v6261
        %v6334 = vunpack.c.l.b16 %v6262
        %v6335 = vunpack.c.l.b16 %v6263
        %v6336 = vunpack.c.l.b16 %v6264
        %v6337 = vunpack.c.l.b16 %v6265
        %v6338 = vpack.c.b16 %v6303, %v6302
        %v6339 = vpack.c.b16 %v6305, %v6304
        %v6340 = vpack.c.b16 %v6307, %v6306
        %v6341 = vpack.c.b16 %v6309, %v6308
        %v6342 = vpack.c.b16 %v6311, %v6310
        %v6343 = vpack.c.b16 %v6313, %v6312
        %v6344 = vpack.c.b16 %v6315, %v6314
        %v6345 = vpack.c.b16 %v6317, %v6316
        %v6346 = vpack.c.b16 %v6319, %v6318
        %v6347 = vpack.c.b16 %v6321, %v6320
        %v6348 = vpack.c.b16 %v6323, %v6322
        %v6349 = vpack.c.b16 %v6325, %v6324
        %v6350 = vpack.c.b16 %v6327, %v6326
        %v6351 = vpack.c.b16 %v6329, %v6328
        %v6352 = vpack.c.b16 %v6331, %v6330
        %v6353 = vpack.c.b16 %v6333, %v6332
        %v6354 = vpack.c.b16 %v6335, %v6334
        %v6355 = vpack.c.b16 %v6337, %v6336
        %vm6374 = vcmask 261120
        %v6376 = vsel %vm6374, %v5483, 0
        %v6379 = vsel %vm6374, %v5528, 0
        %v6382 = vsel %vm6374, %v5573, 0
        %v6385 = vsel %vm6374, %v5618, 0
        %v6388 = vsel %vm6374, %v5663, 0
        %v6391 = vsel %vm6374, %v5708, 0
        %v6394 = vsel %vm6374, %v5753, 0
        %v6397 = vsel %vm6374, %v5798, 0
        %v6400 = vsel %vm6374, %v5843, 0
        %v6403 = vsel %vm6374, %v5888, 0
        %v6406 = vsel %vm6374, %v5933, 0
        %v6409 = vsel %vm6374, %v5978, 0
        %v6412 = vsel %vm6374, %v6023, 0
        %v6415 = vsel %vm6374, %v6068, 0
        %v6418 = vsel %vm6374, %v6113, 0
        %v6421 = vsel %vm6374, %v6226, 0
        %6423 = vmatprep.subr.bf16.mxu0 0
        %6424 = vmatpush1.bf16.msra.mxu0 %v6338
        %6425 = vmatprep.subr.bf16.mxu0 0
        %6426 = vmatpush1.bf16.msra.mxu0 %v6339
        %6427 = vmatprep.subr.bf16.mxu0 0
        %6428 = vmatpush1.bf16.msra.mxu0 %v6340
        %6429 = vmatprep.subr.bf16.mxu0 0
        %6430 = vmatpush1.bf16.msra.mxu0 %v6341
        %6431 = vmatprep.subr.bf16.mxu0 0
        %6432 = vmatpush1.bf16.msra.mxu0 %v6342
        %6433 = vmatprep.subr.bf16.mxu0 0
        %6434 = vmatpush1.bf16.msra.mxu0 %v6343
        %6435 = vmatprep.subr.bf16.mxu0 0
        %6436 = vmatpush1.bf16.msra.mxu0 %v6344
        %6437 = vmatprep.subr.bf16.mxu0 0
        %6438 = vmatpush1.bf16.msra.mxu0 %v6345
        %6439 = vmatprep.subr.bf16.mxu0 0
        %6440 = vmatpush1.bf16.msra.mxu0 %v6346
        %6441 = vmatprep.subr.bf16.mxu0 0
        %6442 = vmatpush1.bf16.msra.mxu0 %v6347
        %6443 = vmatprep.subr.bf16.mxu0 0
        %6444 = vmatpush1.bf16.msra.mxu0 %v6348
        %6445 = vmatprep.subr.bf16.mxu0 0
        %6446 = vmatpush1.bf16.msra.mxu0 %v6349
        %6447 = vmatprep.subr.bf16.mxu0 0
        %6448 = vmatpush1.bf16.msra.mxu0 %v6350
        %6449 = vmatprep.subr.bf16.mxu0 0
        %6450 = vmatpush1.bf16.msra.mxu0 %v6351
        %6451 = vmatprep.subr.bf16.mxu0 0
        %6452 = vmatpush1.bf16.msra.mxu0 %v6352
        %6453 = vmatprep.subr.bf16.mxu0 0
        %6454 = vmatpush1.bf16.msra.mxu0 %v6353
        %6455 = vmatprep.mubr.bf16.mxu0 %v5468
        %6456 = vmatmul.mubr.bf16.gmra.mrb[0].mxu0 %v5453
        %v6457 = vpop.f32.mrb[0].mxu0
        %v6458 = vadd.f32 0.0, %v6457
        %v6459 = vpop.f32.mrb[0].mxu0
        %v6460 = vpop.f32.mrb[0].mxu0
        %v6461 = vadd.f32 0.0, %v6460
        %v6462 = vpop.f32.mrb[0].mxu0
        %6463 = vmatprep.mubr.bf16.mxu0 %v5513
        %6464 = vmatmul.mubr.bf16.gmra.mrb[0].mxu0 %v5498
        %v6465 = vpop.f32.mrb[0].mxu0
        %v6466 = vadd.f32 0.0, %v6465
        %v6467 = vpop.f32.mrb[0].mxu0
        %v6468 = vpop.f32.mrb[0].mxu0
        %v6469 = vadd.f32 0.0, %v6468
        %v6470 = vpop.f32.mrb[0].mxu0
        %6471 = vmatprep.mubr.bf16.mxu0 %v5558
        %6472 = vmatmul.mubr.bf16.gmra.mrb[0].mxu0 %v5543
        %v6473 = vpop.f32.mrb[0].mxu0
        %v6474 = vadd.f32 0.0, %v6473
        %v6475 = vpop.f32.mrb[0].mxu0
        %v6476 = vpop.f32.mrb[0].mxu0
        %v6477 = vadd.f32 0.0, %v6476
        %v6478 = vpop.f32.mrb[0].mxu0
        %6479 = vmatprep.mubr.bf16.mxu0 %v5603
        %6480 = vmatmul.mubr.bf16.gmra.mrb[0].mxu0 %v5588
        %v6481 = vpop.f32.mrb[0].mxu0
        %v6482 = vadd.f32 0.0, %v6481
        %v6483 = vpop.f32.mrb[0].mxu0
        %v6484 = vpop.f32.mrb[0].mxu0
        %v6485 = vadd.f32 0.0, %v6484
        %v6486 = vpop.f32.mrb[0].mxu0
        %6487 = vmatprep.mubr.bf16.mxu0 %v5648
        %6488 = vmatmul.mubr.bf16.gmra.mrb[0].mxu0 %v5633
        %v6489 = vpop.f32.mrb[0].mxu0
        %v6490 = vadd.f32 0.0, %v6489
        %v6491 = vpop.f32.mrb[0].mxu0
        %v6492 = vpop.f32.mrb[0].mxu0
        %v6493 = vadd.f32 0.0, %v6492
        %v6494 = vpop.f32.mrb[0].mxu0
        %6495 = vmatprep.mubr.bf16.mxu0 %v5693
        %6496 = vmatmul.mubr.bf16.gmra.mrb[0].mxu0 %v5678
        %v6497 = vpop.f32.mrb[0].mxu0
        %v6498 = vadd.f32 0.0, %v6497
        %v6499 = vpop.f32.mrb[0].mxu0
        %v6500 = vpop.f32.mrb[0].mxu0
        %v6501 = vadd.f32 0.0, %v6500
        %v6502 = vpop.f32.mrb[0].mxu0
        %6503 = vmatprep.mubr.bf16.mxu0 %v5738
        %6504 = vmatmul.mubr.bf16.gmra.mrb[0].mxu0 %v5723
        %v6505 = vpop.f32.mrb[0].mxu0
        %v6506 = vadd.f32 0.0, %v6505
        %v6507 = vpop.f32.mrb[0].mxu0
        %v6508 = vpop.f32.mrb[0].mxu0
        %v6509 = vadd.f32 0.0, %v6508
        %v6510 = vpop.f32.mrb[0].mxu0
        %6511 = vmatprep.mubr.bf16.mxu0 %v5783
        %6512 = vmatmul.mubr.bf16.gmra.mrb[0].mxu0 %v5768
        %v6513 = vpop.f32.mrb[0].mxu0
        %v6514 = vadd.f32 0.0, %v6513
        %v6515 = vpop.f32.mrb[0].mxu0
        %v6516 = vpop.f32.mrb[0].mxu0
        %v6517 = vadd.f32 0.0, %v6516
        %v6518 = vpop.f32.mrb[0].mxu0
        %6519 = vmatprep.mubr.bf16.mxu0 %v5828
        %6520 = vmatmul.mubr.bf16.gmra.mrb[0].mxu0 %v5813
        %v6521 = vpop.f32.mrb[0].mxu0
        %v6522 = vadd.f32 0.0, %v6521
        %v6523 = vpop.f32.mrb[0].mxu0
        %v6524 = vpop.f32.mrb[0].mxu0
        %v6525 = vadd.f32 0.0, %v6524
        %v6526 = vpop.f32.mrb[0].mxu0
        %6527 = vmatprep.mubr.bf16.mxu0 %v5873
        %6528 = vmatmul.mubr.bf16.gmra.mrb[0].mxu0 %v5858
        %v6529 = vpop.f32.mrb[0].mxu0
        %v6530 = vadd.f32 0.0, %v6529
        %v6531 = vpop.f32.mrb[0].mxu0
        %v6532 = vpop.f32.mrb[0].mxu0
        %v6533 = vadd.f32 0.0, %v6532
        %v6534 = vpop.f32.mrb[0].mxu0
        %6535 = vmatprep.mubr.bf16.mxu0 %v5918
        %6536 = vmatmul.mubr.bf16.gmra.mrb[0].mxu0 %v5903
        %v6537 = vpop.f32.mrb[0].mxu0
        %v6538 = vadd.f32 0.0, %v6537
        %v6539 = vpop.f32.mrb[0].mxu0
        %v6540 = vpop.f32.mrb[0].mxu0
        %v6541 = vadd.f32 0.0, %v6540
        %v6542 = vpop.f32.mrb[0].mxu0
        %6543 = vmatprep.mubr.bf16.mxu0 %v5963
        %6544 = vmatmul.mubr.bf16.gmra.mrb[0].mxu0 %v5948
        %v6545 = vpop.f32.mrb[0].mxu0
        %v6546 = vadd.f32 0.0, %v6545
        %v6547 = vpop.f32.mrb[0].mxu0
        %v6548 = vpop.f32.mrb[0].mxu0
        %v6549 = vadd.f32 0.0, %v6548
        %v6550 = vpop.f32.mrb[0].mxu0
        %6551 = vmatprep.mubr.bf16.mxu0 %v6008
        %6552 = vmatmul.mubr.bf16.gmra.mrb[0].mxu0 %v5993
        %v6553 = vpop.f32.mrb[0].mxu0
        %v6554 = vadd.f32 0.0, %v6553
        %v6555 = vpop.f32.mrb[0].mxu0
        %v6556 = vpop.f32.mrb[0].mxu0
        %v6557 = vadd.f32 0.0, %v6556
        %v6558 = vpop.f32.mrb[0].mxu0
        %6559 = vmatprep.mubr.bf16.mxu0 %v6053
        %6560 = vmatmul.mubr.bf16.gmra.mrb[0].mxu0 %v6038
        %v6561 = vpop.f32.mrb[0].mxu0
        %v6562 = vadd.f32 0.0, %v6561
        %v6563 = vpop.f32.mrb[0].mxu0
        %v6564 = vpop.f32.mrb[0].mxu0
        %v6565 = vadd.f32 0.0, %v6564
        %v6566 = vpop.f32.mrb[0].mxu0
        %6567 = vmatprep.mubr.bf16.mxu0 %v6098
        %6568 = vmatmul.mubr.bf16.gmra.mrb[0].mxu0 %v6083
        %v6569 = vpop.f32.mrb[0].mxu0
        %v6570 = vadd.f32 0.0, %v6569
        %v6571 = vpop.f32.mrb[0].mxu0
        %v6572 = vpop.f32.mrb[0].mxu0
        %v6573 = vadd.f32 0.0, %v6572
        %v6574 = vpop.f32.mrb[0].mxu0
        %6575 = vmatprep.mubr.bf16.mxu0 %v6211
        %6576 = vmatmul.mubr.bf16.gmra.mrb[0].mxu0 %v6196
        %v6577 = vpop.f32.mrb[0].mxu0
        %v6578 = vadd.f32 0.0, %v6577
        %v6579 = vpop.f32.mrb[0].mxu0
        %v6580 = vpop.f32.mrb[0].mxu0
        %v6581 = vadd.f32 0.0, %v6580
        %v6582 = vpop.f32.mrb[0].mxu0
        %6583 = vdwg.mxu0
        %6584 = vmatprep.subr.bf16.mxu0 0
        %6585 = vmatpush1.bf16.msra.mxu0 %v6354
        %6586 = vmatprep.subr.bf16.mxu0 0
        %6587 = vmatpush1.bf16.msra.mxu0 %v6355
        %6588 = vmatprep.subr.bf16.mxu0 0
        %6589 = vmatpush1.bf16.msra.mxu0 0
        %6590 = vmatprep.subr.bf16.mxu0 0
        %6591 = vmatpush1.bf16.msra.mxu0 0
        %6592 = vmatprep.subr.bf16.mxu0 0
        %6593 = vmatpush1.bf16.msra.mxu0 0
        %6594 = vmatprep.subr.bf16.mxu0 0
        %6595 = vmatpush1.bf16.msra.mxu0 0
        %6596 = vmatprep.subr.bf16.mxu0 0
        %6597 = vmatpush1.bf16.msra.mxu0 0
        %6598 = vmatprep.subr.bf16.mxu0 0
        %6599 = vmatpush1.bf16.msra.mxu0 0
        %6600 = vmatprep.subr.bf16.mxu0 0
        %6601 = vmatpush1.bf16.msra.mxu0 0
        %6602 = vmatprep.subr.bf16.mxu0 0
        %6603 = vmatpush1.bf16.msra.mxu0 0
        %6604 = vmatprep.subr.bf16.mxu0 0
        %6605 = vmatpush1.bf16.msra.mxu0 0
        %6606 = vmatprep.subr.bf16.mxu0 0
        %6607 = vmatpush1.bf16.msra.mxu0 0
        %6608 = vmatprep.subr.bf16.mxu0 0
        %6609 = vmatpush1.bf16.msra.mxu0 0
        %6610 = vmatprep.subr.bf16.mxu0 0
        %6611 = vmatpush1.bf16.msra.mxu0 0
        %6612 = vmatprep.subr.bf16.mxu0 0
        %6613 = vmatpush1.bf16.msra.mxu0 0
        %6614 = vmatprep.subr.bf16.mxu0 0
        %6615 = vmatpush1.bf16.msra.mxu0 0
        %6616 = vmatprep.mubr.bf16.mxu0 0
        %6617 = vmatmul.mubr.bf16.gmra.mrb[0].mxu0 %v6376
        %v6618 = vpop.f32.mrb[0].mxu0
        %v6619 = vadd.f32 %v6458, %v6618
        %v6620 = vpop.f32.mrb[0].mxu0
        %v6621 = vpop.f32.mrb[0].mxu0
        %v6622 = vadd.f32 %v6461, %v6621
        %v6623 = vpop.f32.mrb[0].mxu0
        %6624 = vmatprep.mubr.bf16.mxu0 0
        %6625 = vmatmul.mubr.bf16.gmra.mrb[0].mxu0 %v6379
        %v6626 = vpop.f32.mrb[0].mxu0
        %v6627 = vadd.f32 %v6466, %v6626
        %v6628 = vpop.f32.mrb[0].mxu0
        %v6629 = vpop.f32.mrb[0].mxu0
        %v6630 = vadd.f32 %v6469, %v6629
        %v6631 = vpop.f32.mrb[0].mxu0
        %6632 = vmatprep.mubr.bf16.mxu0 0
        %6633 = vmatmul.mubr.bf16.gmra.mrb[0].mxu0 %v6382
        %v6634 = vpop.f32.mrb[0].mxu0
        %v6635 = vadd.f32 %v6474, %v6634
        %v6636 = vpop.f32.mrb[0].mxu0
        %v6637 = vpop.f32.mrb[0].mxu0
        %v6638 = vadd.f32 %v6477, %v6637
        %v6639 = vpop.f32.mrb[0].mxu0
        %6640 = vmatprep.mubr.bf16.mxu0 0
        %6641 = vmatmul.mubr.bf16.gmra.mrb[0].mxu0 %v6385
        %v6642 = vpop.f32.mrb[0].mxu0
        %v6643 = vadd.f32 %v6482, %v6642
        %v6644 = vpop.f32.mrb[0].mxu0
        %v6645 = vpop.f32.mrb[0].mxu0
        %v6646 = vadd.f32 %v6485, %v6645
        %v6647 = vpop.f32.mrb[0].mxu0
        %6648 = vmatprep.mubr.bf16.mxu0 0
        %6649 = vmatmul.mubr.bf16.gmra.mrb[0].mxu0 %v6388
        %v6650 = vpop.f32.mrb[0].mxu0
        %v6651 = vadd.f32 %v6490, %v6650
        %v6652 = vpop.f32.mrb[0].mxu0
        %v6653 = vpop.f32.mrb[0].mxu0
        %v6654 = vadd.f32 %v6493, %v6653
        %v6655 = vpop.f32.mrb[0].mxu0
        %6656 = vmatprep.mubr.bf16.mxu0 0
        %6657 = vmatmul.mubr.bf16.gmra.mrb[0].mxu0 %v6391
        %v6658 = vpop.f32.mrb[0].mxu0
        %v6659 = vadd.f32 %v6498, %v6658
        %v6660 = vpop.f32.mrb[0].mxu0
        %v6661 = vpop.f32.mrb[0].mxu0
        %v6662 = vadd.f32 %v6501, %v6661
        %v6663 = vpop.f32.mrb[0].mxu0
        %6664 = vmatprep.mubr.bf16.mxu0 0
        %6665 = vmatmul.mubr.bf16.gmra.mrb[0].mxu0 %v6394
        %v6666 = vpop.f32.mrb[0].mxu0
        %v6667 = vadd.f32 %v6506, %v6666
        %v6668 = vpop.f32.mrb[0].mxu0
        %v6669 = vpop.f32.mrb[0].mxu0
        %v6670 = vadd.f32 %v6509, %v6669
        %v6671 = vpop.f32.mrb[0].mxu0
        %6672 = vmatprep.mubr.bf16.mxu0 0
        %6673 = vmatmul.mubr.bf16.gmra.mrb[0].mxu0 %v6397
        %v6674 = vpop.f32.mrb[0].mxu0
        %v6675 = vadd.f32 %v6514, %v6674
        %v6676 = vpop.f32.mrb[0].mxu0
        %v6677 = vpop.f32.mrb[0].mxu0
        %v6678 = vadd.f32 %v6517, %v6677
        %v6679 = vpop.f32.mrb[0].mxu0
        %6680 = vmatprep.mubr.bf16.mxu0 0
        %6681 = vmatmul.mubr.bf16.gmra.mrb[0].mxu0 %v6400
        %v6682 = vpop.f32.mrb[0].mxu0
        %v6683 = vadd.f32 %v6522, %v6682
        %v6684 = vpop.f32.mrb[0].mxu0
        %v6685 = vpop.f32.mrb[0].mxu0
        %v6686 = vadd.f32 %v6525, %v6685
        %v6687 = vpop.f32.mrb[0].mxu0
        %6688 = vmatprep.mubr.bf16.mxu0 0
        %6689 = vmatmul.mubr.bf16.gmra.mrb[0].mxu0 %v6403
        %v6690 = vpop.f32.mrb[0].mxu0
        %v6691 = vadd.f32 %v6530, %v6690
        %v6692 = vpop.f32.mrb[0].mxu0
        %v6693 = vpop.f32.mrb[0].mxu0
        %v6694 = vadd.f32 %v6533, %v6693
        %v6695 = vpop.f32.mrb[0].mxu0
        %6696 = vmatprep.mubr.bf16.mxu0 0
        %6697 = vmatmul.mubr.bf16.gmra.mrb[0].mxu0 %v6406
        %v6698 = vpop.f32.mrb[0].mxu0
        %v6699 = vadd.f32 %v6538, %v6698
        %v6700 = vpop.f32.mrb[0].mxu0
        %v6701 = vpop.f32.mrb[0].mxu0
        %v6702 = vadd.f32 %v6541, %v6701
        %v6703 = vpop.f32.mrb[0].mxu0
        %6704 = vmatprep.mubr.bf16.mxu0 0
        %6705 = vmatmul.mubr.bf16.gmra.mrb[0].mxu0 %v6409
        %v6706 = vpop.f32.mrb[0].mxu0
        %v6707 = vadd.f32 %v6546, %v6706
        %v6708 = vpop.f32.mrb[0].mxu0
        %v6709 = vpop.f32.mrb[0].mxu0
        %v6710 = vadd.f32 %v6549, %v6709
        %v6711 = vpop.f32.mrb[0].mxu0
        %6712 = vmatprep.mubr.bf16.mxu0 0
        %6713 = vmatmul.mubr.bf16.gmra.mrb[0].mxu0 %v6412
        %v6714 = vpop.f32.mrb[0].mxu0
        %v6715 = vadd.f32 %v6554, %v6714
        %v6716 = vpop.f32.mrb[0].mxu0
        %v6717 = vpop.f32.mrb[0].mxu0
        %v6718 = vadd.f32 %v6557, %v6717
        %v6719 = vpop.f32.mrb[0].mxu0
        %6720 = vmatprep.mubr.bf16.mxu0 0
        %6721 = vmatmul.mubr.bf16.gmra.mrb[0].mxu0 %v6415
        %v6722 = vpop.f32.mrb[0].mxu0
        %v6723 = vadd.f32 %v6562, %v6722
        %v6724 = vpop.f32.mrb[0].mxu0
        %v6725 = vpop.f32.mrb[0].mxu0
        %v6726 = vadd.f32 %v6565, %v6725
        %v6727 = vpop.f32.mrb[0].mxu0
        %6728 = vmatprep.mubr.bf16.mxu0 0
        %6729 = vmatmul.mubr.bf16.gmra.mrb[0].mxu0 %v6418
        %v6730 = vpop.f32.mrb[0].mxu0
        %v6731 = vadd.f32 %v6570, %v6730
        %v6732 = vpop.f32.mrb[0].mxu0
        %v6733 = vpop.f32.mrb[0].mxu0
        %v6734 = vadd.f32 %v6573, %v6733
        %v6735 = vpop.f32.mrb[0].mxu0
        %6736 = vmatprep.mubr.bf16.mxu0 0
        %6737 = vmatmul.mubr.bf16.gmra.mrb[0].mxu0 %v6421
        %v6738 = vpop.f32.mrb[0].mxu0
        %v6739 = vadd.f32 %v6578, %v6738
        %v6740 = vpop.f32.mrb[0].mxu0
        %v6741 = vpop.f32.mrb[0].mxu0
        %v6742 = vadd.f32 %v6581, %v6741
        %v6743 = vpop.f32.mrb[0].mxu0
        %6744 = vdwg.mxu0
        %v6781 = vunpack.c.l.b16 %v6146
        %v6782 = vunpack.c.l.b16 %v6147
        %v6783 = vunpack.c.l.b16 %v6148
        %v6784 = vunpack.c.l.b16 %v6149
        %v6785 = vunpack.c.l.b16 %v6150
        %v6786 = vunpack.c.l.b16 %v6151
        %v6787 = vunpack.c.l.b16 %v6152
        %v6788 = vunpack.c.l.b16 %v6153
        %v6789 = vunpack.c.l.b16 %v6154
        %v6790 = vunpack.c.l.b16 %v6155
        %v6791 = vunpack.c.l.b16 %v6156
        %v6792 = vunpack.c.l.b16 %v6157
        %v6793 = vunpack.c.l.b16 %v6158
        %v6794 = vunpack.c.l.b16 %v6159
        %v6795 = vunpack.c.l.b16 %v6160
        %v6796 = vunpack.c.l.b16 %v6161
        %v6797 = vunpack.c.l.b16 %v6162
        %v6798 = vunpack.c.l.b16 %v6163
        %v6799 = vunpack.c.l.b16 %v6164
        %v6800 = vunpack.c.l.b16 %v6165
        %v6801 = vunpack.c.l.b16 %v6166
        %v6802 = vunpack.c.l.b16 %v6167
        %v6803 = vunpack.c.l.b16 %v6168
        %v6804 = vunpack.c.l.b16 %v6169
        %v6805 = vunpack.c.l.b16 %v6170
        %v6806 = vunpack.c.l.b16 %v6171
        %v6807 = vunpack.c.l.b16 %v6172
        %v6808 = vunpack.c.l.b16 %v6173
        %v6809 = vunpack.c.l.b16 %v6174
        %v6810 = vunpack.c.l.b16 %v6175
        %v6811 = vunpack.c.l.b16 %v6176
        %v6812 = vunpack.c.l.b16 %v6177
        %v6813 = vunpack.c.l.b16 %v6178
        %v6814 = vunpack.c.l.b16 %v6179
        %v6815 = vunpack.c.l.b16 %v6180
        %v6816 = vunpack.c.l.b16 %v6181
        %v6817 = vpack.c.b16 %v6782, %v6781
        %v6818 = vpack.c.b16 %v6784, %v6783
        %v6819 = vpack.c.b16 %v6786, %v6785
        %v6820 = vpack.c.b16 %v6788, %v6787
        %v6821 = vpack.c.b16 %v6790, %v6789
        %v6822 = vpack.c.b16 %v6792, %v6791
        %v6823 = vpack.c.b16 %v6794, %v6793
        %v6824 = vpack.c.b16 %v6796, %v6795
        %v6825 = vpack.c.b16 %v6798, %v6797
        %v6826 = vpack.c.b16 %v6800, %v6799
        %v6827 = vpack.c.b16 %v6802, %v6801
        %v6828 = vpack.c.b16 %v6804, %v6803
        %v6829 = vpack.c.b16 %v6806, %v6805
        %v6830 = vpack.c.b16 %v6808, %v6807
        %v6831 = vpack.c.b16 %v6810, %v6809
        %v6832 = vpack.c.b16 %v6812, %v6811
        %v6833 = vpack.c.b16 %v6814, %v6813
        %v6834 = vpack.c.b16 %v6816, %v6815
        %v6854 = vsel %vm6374, %v5438, 0
        %6856 = vmatprep.subr.bf16.mxu0 0
        %6857 = vmatpush1.bf16.msra.mxu0 %v6817
        %6858 = vmatprep.subr.bf16.mxu0 0
        %6859 = vmatpush1.bf16.msra.mxu0 %v6818
        %6860 = vmatprep.subr.bf16.mxu0 0
        %6861 = vmatpush1.bf16.msra.mxu0 %v6819
        %6862 = vmatprep.subr.bf16.mxu0 0
        %6863 = vmatpush1.bf16.msra.mxu0 %v6820
        %6864 = vmatprep.subr.bf16.mxu0 0
        %6865 = vmatpush1.bf16.msra.mxu0 %v6821
        %6866 = vmatprep.subr.bf16.mxu0 0
        %6867 = vmatpush1.bf16.msra.mxu0 %v6822
        %6868 = vmatprep.subr.bf16.mxu0 0
        %6869 = vmatpush1.bf16.msra.mxu0 %v6823
        %6870 = vmatprep.subr.bf16.mxu0 0
        %6871 = vmatpush1.bf16.msra.mxu0 %v6824
        %6872 = vmatprep.subr.bf16.mxu0 0
        %6873 = vmatpush1.bf16.msra.mxu0 %v6825
        %6874 = vmatprep.subr.bf16.mxu0 0
        %6875 = vmatpush1.bf16.msra.mxu0 %v6826
        %6876 = vmatprep.subr.bf16.mxu0 0
        %6877 = vmatpush1.bf16.msra.mxu0 %v6827
        %6878 = vmatprep.subr.bf16.mxu0 0
        %6879 = vmatpush1.bf16.msra.mxu0 %v6828
        %6880 = vmatprep.subr.bf16.mxu0 0
        %6881 = vmatpush1.bf16.msra.mxu0 %v6829
        %6882 = vmatprep.subr.bf16.mxu0 0
        %6883 = vmatpush1.bf16.msra.mxu0 %v6830
        %6884 = vmatprep.subr.bf16.mxu0 0
        %6885 = vmatpush1.bf16.msra.mxu0 %v6831
        %6886 = vmatprep.subr.bf16.mxu0 0
        %6887 = vmatpush1.bf16.msra.mxu0 %v6832
        %6888 = vmatprep.mubr.bf16.mxu0 %v5423
        %6889 = vmatmul.mubr.bf16.gmra.mrb[0].mxu0 %v5408
        %v6890 = vpop.f32.mrb[0].mxu0
        %v6891 = vadd.f32 %v6619, %v6890
        %v6892 = vpop.f32.mrb[0].mxu0
        %v6893 = vpop.f32.mrb[0].mxu0
        %v6894 = vadd.f32 %v6622, %v6893
        %v6895 = vpop.f32.mrb[0].mxu0
        %6896 = vmatprep.mubr.bf16.mxu0 %v5468
        %6897 = vmatmul.mubr.bf16.gmra.mrb[0].mxu0 %v5453
        %v6898 = vpop.f32.mrb[0].mxu0
        %v6899 = vadd.f32 %v6627, %v6898
        %v6900 = vpop.f32.mrb[0].mxu0
        %v6901 = vpop.f32.mrb[0].mxu0
        %v6902 = vadd.f32 %v6630, %v6901
        %v6903 = vpop.f32.mrb[0].mxu0
        %6904 = vmatprep.mubr.bf16.mxu0 %v5513
        %6905 = vmatmul.mubr.bf16.gmra.mrb[0].mxu0 %v5498
        %v6906 = vpop.f32.mrb[0].mxu0
        %v6907 = vadd.f32 %v6635, %v6906
        %v6908 = vpop.f32.mrb[0].mxu0
        %v6909 = vpop.f32.mrb[0].mxu0
        %v6910 = vadd.f32 %v6638, %v6909
        %v6911 = vpop.f32.mrb[0].mxu0
        %6912 = vmatprep.mubr.bf16.mxu0 %v5558
        %6913 = vmatmul.mubr.bf16.gmra.mrb[0].mxu0 %v5543
        %v6914 = vpop.f32.mrb[0].mxu0
        %v6915 = vadd.f32 %v6643, %v6914
        %v6916 = vpop.f32.mrb[0].mxu0
        %v6917 = vpop.f32.mrb[0].mxu0
        %v6918 = vadd.f32 %v6646, %v6917
        %v6919 = vpop.f32.mrb[0].mxu0
        %6920 = vmatprep.mubr.bf16.mxu0 %v5603
        %6921 = vmatmul.mubr.bf16.gmra.mrb[0].mxu0 %v5588
        %v6922 = vpop.f32.mrb[0].mxu0
        %v6923 = vadd.f32 %v6651, %v6922
        %v6924 = vpop.f32.mrb[0].mxu0
        %v6925 = vpop.f32.mrb[0].mxu0
        %v6926 = vadd.f32 %v6654, %v6925
        %v6927 = vpop.f32.mrb[0].mxu0
        %6928 = vmatprep.mubr.bf16.mxu0 %v5648
        %6929 = vmatmul.mubr.bf16.gmra.mrb[0].mxu0 %v5633
        %v6930 = vpop.f32.mrb[0].mxu0
        %v6931 = vadd.f32 %v6659, %v6930
        %v6932 = vpop.f32.mrb[0].mxu0
        %v6933 = vpop.f32.mrb[0].mxu0
        %v6934 = vadd.f32 %v6662, %v6933
        %v6935 = vpop.f32.mrb[0].mxu0
        %6936 = vmatprep.mubr.bf16.mxu0 %v5693
        %6937 = vmatmul.mubr.bf16.gmra.mrb[0].mxu0 %v5678
        %v6938 = vpop.f32.mrb[0].mxu0
        %v6939 = vadd.f32 %v6667, %v6938
        %v6940 = vpop.f32.mrb[0].mxu0
        %v6941 = vpop.f32.mrb[0].mxu0
        %v6942 = vadd.f32 %v6670, %v6941
        %v6943 = vpop.f32.mrb[0].mxu0
        %6944 = vmatprep.mubr.bf16.mxu0 %v5738
        %6945 = vmatmul.mubr.bf16.gmra.mrb[0].mxu0 %v5723
        %v6946 = vpop.f32.mrb[0].mxu0
        %v6947 = vadd.f32 %v6675, %v6946
        %v6948 = vpop.f32.mrb[0].mxu0
        %v6949 = vpop.f32.mrb[0].mxu0
        %v6950 = vadd.f32 %v6678, %v6949
        %v6951 = vpop.f32.mrb[0].mxu0
        %6952 = vmatprep.mubr.bf16.mxu0 %v5783
        %6953 = vmatmul.mubr.bf16.gmra.mrb[0].mxu0 %v5768
        %v6954 = vpop.f32.mrb[0].mxu0
        %v6955 = vadd.f32 %v6683, %v6954
        %v6956 = vpop.f32.mrb[0].mxu0
        %v6957 = vpop.f32.mrb[0].mxu0
        %v6958 = vadd.f32 %v6686, %v6957
        %v6959 = vpop.f32.mrb[0].mxu0
        %6960 = vmatprep.mubr.bf16.mxu0 %v5828
        %6961 = vmatmul.mubr.bf16.gmra.mrb[0].mxu0 %v5813
        %v6962 = vpop.f32.mrb[0].mxu0
        %v6963 = vadd.f32 %v6691, %v6962
        %v6964 = vpop.f32.mrb[0].mxu0
        %v6965 = vpop.f32.mrb[0].mxu0
        %v6966 = vadd.f32 %v6694, %v6965
        %v6967 = vpop.f32.mrb[0].mxu0
        %6968 = vmatprep.mubr.bf16.mxu0 %v5873
        %6969 = vmatmul.mubr.bf16.gmra.mrb[0].mxu0 %v5858
        %v6970 = vpop.f32.mrb[0].mxu0
        %v6971 = vadd.f32 %v6699, %v6970
        %v6972 = vpop.f32.mrb[0].mxu0
        %v6973 = vpop.f32.mrb[0].mxu0
        %v6974 = vadd.f32 %v6702, %v6973
        %v6975 = vpop.f32.mrb[0].mxu0
        %6976 = vmatprep.mubr.bf16.mxu0 %v5918
        %6977 = vmatmul.mubr.bf16.gmra.mrb[0].mxu0 %v5903
        %v6978 = vpop.f32.mrb[0].mxu0
        %v6979 = vadd.f32 %v6707, %v6978
        %v6980 = vpop.f32.mrb[0].mxu0
        %v6981 = vpop.f32.mrb[0].mxu0
        %v6982 = vadd.f32 %v6710, %v6981
        %v6983 = vpop.f32.mrb[0].mxu0
        %6984 = vmatprep.mubr.bf16.mxu0 %v5963
        %6985 = vmatmul.mubr.bf16.gmra.mrb[0].mxu0 %v5948
        %v6986 = vpop.f32.mrb[0].mxu0
        %v6987 = vadd.f32 %v6715, %v6986
        %v6988 = vpop.f32.mrb[0].mxu0
        %v6989 = vpop.f32.mrb[0].mxu0
        %v6990 = vadd.f32 %v6718, %v6989
        %v6991 = vpop.f32.mrb[0].mxu0
        %6992 = vmatprep.mubr.bf16.mxu0 %v6008
        %6993 = vmatmul.mubr.bf16.gmra.mrb[0].mxu0 %v5993
        %v6994 = vpop.f32.mrb[0].mxu0
        %v6995 = vadd.f32 %v6723, %v6994
        %v6996 = vpop.f32.mrb[0].mxu0
        %v6997 = vpop.f32.mrb[0].mxu0
        %v6998 = vadd.f32 %v6726, %v6997
        %v6999 = vpop.f32.mrb[0].mxu0
        %7000 = vmatprep.mubr.bf16.mxu0 %v6053
        %7001 = vmatmul.mubr.bf16.gmra.mrb[0].mxu0 %v6038
        %v7002 = vpop.f32.mrb[0].mxu0
        %v7003 = vadd.f32 %v6731, %v7002
        %v7004 = vpop.f32.mrb[0].mxu0
        %v7005 = vpop.f32.mrb[0].mxu0
        %v7006 = vadd.f32 %v6734, %v7005
        %v7007 = vpop.f32.mrb[0].mxu0
        %7008 = vmatprep.mubr.bf16.mxu0 %v6098
        %7009 = vmatmul.mubr.bf16.gmra.mrb[0].mxu0 %v6083
        %v7010 = vpop.f32.mrb[0].mxu0
        %v7011 = vadd.f32 %v6739, %v7010
        %v7012 = vpop.f32.mrb[0].mxu0
        %v7013 = vpop.f32.mrb[0].mxu0
        %v7014 = vadd.f32 %v6742, %v7013
        %v7015 = vpop.f32.mrb[0].mxu0
        %7016 = vdwg.mxu0
        %7017 = vmatprep.subr.bf16.mxu0 0
        %7018 = vmatpush1.bf16.msra.mxu0 %v6833
        %7019 = vmatprep.subr.bf16.mxu0 0
        %7020 = vmatpush1.bf16.msra.mxu0 %v6834
        %7021 = vmatprep.subr.bf16.mxu0 0
        %7022 = vmatpush1.bf16.msra.mxu0 0
        %7023 = vmatprep.subr.bf16.mxu0 0
        %7024 = vmatpush1.bf16.msra.mxu0 0
        %7025 = vmatprep.subr.bf16.mxu0 0
        %7026 = vmatpush1.bf16.msra.mxu0 0
        %7027 = vmatprep.subr.bf16.mxu0 0
        %7028 = vmatpush1.bf16.msra.mxu0 0
        %7029 = vmatprep.subr.bf16.mxu0 0
        %7030 = vmatpush1.bf16.msra.mxu0 0
        %7031 = vmatprep.subr.bf16.mxu0 0
        %7032 = vmatpush1.bf16.msra.mxu0 0
        %7033 = vmatprep.subr.bf16.mxu0 0
        %7034 = vmatpush1.bf16.msra.mxu0 0
        %7035 = vmatprep.subr.bf16.mxu0 0
        %7036 = vmatpush1.bf16.msra.mxu0 0
        %7037 = vmatprep.subr.bf16.mxu0 0
        %7038 = vmatpush1.bf16.msra.mxu0 0
        %7039 = vmatprep.subr.bf16.mxu0 0
        %7040 = vmatpush1.bf16.msra.mxu0 0
        %7041 = vmatprep.subr.bf16.mxu0 0
        %7042 = vmatpush1.bf16.msra.mxu0 0
        %7043 = vmatprep.subr.bf16.mxu0 0
        %7044 = vmatpush1.bf16.msra.mxu0 0
        %7045 = vmatprep.subr.bf16.mxu0 0
        %7046 = vmatpush1.bf16.msra.mxu0 0
        %7047 = vmatprep.subr.bf16.mxu0 0
        %7048 = vmatpush1.bf16.msra.mxu0 0
        %7049 = vmatprep.mubr.bf16.mxu0 0
        %7050 = vmatmul.mubr.bf16.gmra.mrb[0].mxu0 %v6854
        %v7051 = vpop.f32.mrb[0].mxu0
        %v7052 = vadd.f32 %v6891, %v7051
        %v7053 = vpop.f32.mrb[0].mxu0
        %v7054 = vpop.f32.mrb[0].mxu0
        %v7055 = vadd.f32 %v6894, %v7054
        %v7056 = vpop.f32.mrb[0].mxu0
        %7057 = vmatprep.mubr.bf16.mxu0 0
        %7058 = vmatmul.mubr.bf16.gmra.mrb[0].mxu0 %v6376
        %v7059 = vpop.f32.mrb[0].mxu0
        %v7060 = vadd.f32 %v6899, %v7059
        %v7061 = vpop.f32.mrb[0].mxu0
        %v7062 = vpop.f32.mrb[0].mxu0
        %v7063 = vadd.f32 %v6902, %v7062
        %v7064 = vpop.f32.mrb[0].mxu0
        %7065 = vmatprep.mubr.bf16.mxu0 0
        %7066 = vmatmul.mubr.bf16.gmra.mrb[0].mxu0 %v6379
        %v7067 = vpop.f32.mrb[0].mxu0
        %v7068 = vadd.f32 %v6907, %v7067
        %v7069 = vpop.f32.mrb[0].mxu0
        %v7070 = vpop.f32.mrb[0].mxu0
        %v7071 = vadd.f32 %v6910, %v7070
        %v7072 = vpop.f32.mrb[0].mxu0
        %7073 = vmatprep.mubr.bf16.mxu0 0
        %7074 = vmatmul.mubr.bf16.gmra.mrb[0].mxu0 %v6382
        %v7075 = vpop.f32.mrb[0].mxu0
        %v7076 = vadd.f32 %v6915, %v7075
        %v7077 = vpop.f32.mrb[0].mxu0
        %v7078 = vpop.f32.mrb[0].mxu0
        %v7079 = vadd.f32 %v6918, %v7078
        %v7080 = vpop.f32.mrb[0].mxu0
        %7081 = vmatprep.mubr.bf16.mxu0 0
        %7082 = vmatmul.mubr.bf16.gmra.mrb[0].mxu0 %v6385
        %v7083 = vpop.f32.mrb[0].mxu0
        %v7084 = vadd.f32 %v6923, %v7083
        %v7085 = vpop.f32.mrb[0].mxu0
        %v7086 = vpop.f32.mrb[0].mxu0
        %v7087 = vadd.f32 %v6926, %v7086
        %v7088 = vpop.f32.mrb[0].mxu0
        %7089 = vmatprep.mubr.bf16.mxu0 0
        %7090 = vmatmul.mubr.bf16.gmra.mrb[0].mxu0 %v6388
        %v7091 = vpop.f32.mrb[0].mxu0
        %v7092 = vadd.f32 %v6931, %v7091
        %v7093 = vpop.f32.mrb[0].mxu0
        %v7094 = vpop.f32.mrb[0].mxu0
        %v7095 = vadd.f32 %v6934, %v7094
        %v7096 = vpop.f32.mrb[0].mxu0
        %7097 = vmatprep.mubr.bf16.mxu0 0
        %7098 = vmatmul.mubr.bf16.gmra.mrb[0].mxu0 %v6391
        %v7099 = vpop.f32.mrb[0].mxu0
        %v7100 = vadd.f32 %v6939, %v7099
        %v7101 = vpop.f32.mrb[0].mxu0
        %v7102 = vpop.f32.mrb[0].mxu0
        %v7103 = vadd.f32 %v6942, %v7102
        %v7104 = vpop.f32.mrb[0].mxu0
        %7105 = vmatprep.mubr.bf16.mxu0 0
        %7106 = vmatmul.mubr.bf16.gmra.mrb[0].mxu0 %v6394
        %v7107 = vpop.f32.mrb[0].mxu0
        %v7108 = vadd.f32 %v6947, %v7107
        %v7109 = vpop.f32.mrb[0].mxu0
        %v7110 = vpop.f32.mrb[0].mxu0
        %v7111 = vadd.f32 %v6950, %v7110
        %v7112 = vpop.f32.mrb[0].mxu0
        %7113 = vmatprep.mubr.bf16.mxu0 0
        %7114 = vmatmul.mubr.bf16.gmra.mrb[0].mxu0 %v6397
        %v7115 = vpop.f32.mrb[0].mxu0
        %v7116 = vadd.f32 %v6955, %v7115
        %v7117 = vpop.f32.mrb[0].mxu0
        %v7118 = vpop.f32.mrb[0].mxu0
        %v7119 = vadd.f32 %v6958, %v7118
        %v7120 = vpop.f32.mrb[0].mxu0
        %7121 = vmatprep.mubr.bf16.mxu0 0
        %7122 = vmatmul.mubr.bf16.gmra.mrb[0].mxu0 %v6400
        %v7123 = vpop.f32.mrb[0].mxu0
        %v7124 = vadd.f32 %v6963, %v7123
        %v7125 = vpop.f32.mrb[0].mxu0
        %v7126 = vpop.f32.mrb[0].mxu0
        %v7127 = vadd.f32 %v6966, %v7126
        %v7128 = vpop.f32.mrb[0].mxu0
        %7129 = vmatprep.mubr.bf16.mxu0 0
        %7130 = vmatmul.mubr.bf16.gmra.mrb[0].mxu0 %v6403
        %v7131 = vpop.f32.mrb[0].mxu0
        %v7132 = vadd.f32 %v6971, %v7131
        %v7133 = vpop.f32.mrb[0].mxu0
        %v7134 = vpop.f32.mrb[0].mxu0
        %v7135 = vadd.f32 %v6974, %v7134
        %v7136 = vpop.f32.mrb[0].mxu0
        %7137 = vmatprep.mubr.bf16.mxu0 0
        %7138 = vmatmul.mubr.bf16.gmra.mrb[0].mxu0 %v6406
        %v7139 = vpop.f32.mrb[0].mxu0
        %v7140 = vadd.f32 %v6979, %v7139
        %v7141 = vpop.f32.mrb[0].mxu0
        %v7142 = vpop.f32.mrb[0].mxu0
        %v7143 = vadd.f32 %v6982, %v7142
        %v7144 = vpop.f32.mrb[0].mxu0
        %7145 = vmatprep.mubr.bf16.mxu0 0
        %7146 = vmatmul.mubr.bf16.gmra.mrb[0].mxu0 %v6409
        %v7147 = vpop.f32.mrb[0].mxu0
        %v7148 = vadd.f32 %v6987, %v7147
        %v7149 = vpop.f32.mrb[0].mxu0
        %v7150 = vpop.f32.mrb[0].mxu0
        %v7151 = vadd.f32 %v6990, %v7150
        %v7152 = vpop.f32.mrb[0].mxu0
        %7153 = vmatprep.mubr.bf16.mxu0 0
        %7154 = vmatmul.mubr.bf16.gmra.mrb[0].mxu0 %v6412
        %v7155 = vpop.f32.mrb[0].mxu0
        %v7156 = vadd.f32 %v6995, %v7155
        %v7157 = vpop.f32.mrb[0].mxu0
        %v7158 = vpop.f32.mrb[0].mxu0
        %v7159 = vadd.f32 %v6998, %v7158
        %v7160 = vpop.f32.mrb[0].mxu0
        %7161 = vmatprep.mubr.bf16.mxu0 0
        %7162 = vmatmul.mubr.bf16.gmra.mrb[0].mxu0 %v6415
        %v7163 = vpop.f32.mrb[0].mxu0
        %v7164 = vadd.f32 %v7003, %v7163
        %v7165 = vpop.f32.mrb[0].mxu0
        %v7166 = vpop.f32.mrb[0].mxu0
        %v7167 = vadd.f32 %v7006, %v7166
        %v7168 = vpop.f32.mrb[0].mxu0
        %7169 = vmatprep.mubr.bf16.mxu0 0
        %7170 = vmatmul.mubr.bf16.gmra.mrb[0].mxu0 %v6418
        %v7171 = vpop.f32.mrb[0].mxu0
        %v7172 = vadd.f32 %v7011, %v7171
        %v7173 = vpop.f32.mrb[0].mxu0
        %v7174 = vpop.f32.mrb[0].mxu0
        %v7175 = vadd.f32 %v7014, %v7174
        %v7176 = vpop.f32.mrb[0].mxu0
        %7177 = vdwg.mxu0
        %v7178 = vshrl.u32 %v5319, 16
        %v7180 = vrot.slane %v7178, 3
        %v7181 = vshll.u32 %v5319, 16
        %v7183 = vrot.slane %v7181, 4
        %v7184 = vor.u32 %v7180, %v7183
        %v7185 = vshrl.u32 %v5321, 16
        %v7187 = vrot.slane %v7185, 3
        %v7188 = vshll.u32 %v5321, 16
        %v7190 = vrot.slane %v7188, 4
        %v7191 = vor.u32 %v7187, %v7190
        %v7192 = vsel %vm2859, %v7184, %v7191
        %v7193 = vshrl.u32 %v5391, 16
        %v7195 = vrot.slane %v7193, 3
        %v7196 = vshll.u32 %v5391, 16
        %v7198 = vrot.slane %v7196, 4
        %v7199 = vor.u32 %v7195, %v7198
        %v7200 = vshrl.u32 %v5393, 16
        %v7202 = vrot.slane %v7200, 3
        %v7203 = vshll.u32 %v5393, 16
        %v7205 = vrot.slane %v7203, 4
        %v7206 = vor.u32 %v7202, %v7205
        %v7207 = vsel %vm2859, %v7199, %v7206
        %v7208 = vshrl.u32 %v5228, 16
        %v7210 = vrot.slane %v7208, 3
        %v7211 = vshll.u32 %v5228, 16
        %v7213 = vrot.slane %v7211, 4
        %v7214 = vor.u32 %v7210, %v7213
        %v7215 = vshrl.u32 %v5230, 16
        %v7217 = vrot.slane %v7215, 3
        %v7218 = vshll.u32 %v5230, 16
        %v7220 = vrot.slane %v7218, 4
        %v7221 = vor.u32 %v7217, %v7220
        %v7222 = vsel %vm2859, %v7214, %v7221
        %s7225 = scalar_lea.vmem %s7, 288
        %v7226 = vld [vmem:[%s7225] sm:$0xf]
        %v7227 = vld [vmem:[%s7225 + $0x4] sm:$0xf]
        %v7228 = vld [vmem:[%s7225 + $0x8] sm:$0xf]
        %v7229 = vld [vmem:[%s7225 + $0xc] sm:$0xf]
        %v7230 = vld [vmem:[%s7225 + $0x10] sm:$0xf]
        %v7231 = vld [vmem:[%s7225 + $0x14] sm:$0xf]
        %v7232 = vld [vmem:[%s7225 + $0x18] sm:$0xf]
        %v7233 = vld [vmem:[%s7225 + $0x1c] sm:$0xf]
        %v7234 = vld [vmem:[%s7225 + $0x20] sm:$0xf]
        %v7235 = vld [vmem:[%s7225 + $0x24] sm:$0xf]
        %v7236 = vld [vmem:[%s7225 + $0x28] sm:$0xf]
        %v7237 = vld [vmem:[%s7225 + $0x2c] sm:$0xf]
        %v7238 = vld [vmem:[%s7225 + $0x30] sm:$0xf]
        %v7239 = vld [vmem:[%s7225 + $0x34] sm:$0xf]
        %v7240 = vld [vmem:[%s7225 + $0x38] sm:$0xf]
        %v7241 = vld [vmem:[%s7225 + $0x3c] sm:$0xf]
        %v7242 = vld [vmem:[%s7225 + $0x40] sm:$0xf]
        %v7243 = vld [vmem:[%s7225 + $0x44] sm:$0xf]
        %v7244 = vld [vmem:[%s7225 + $0x48] sm:$0xf]
        %v7245 = vld [vmem:[%s7225 + $0x4c] sm:$0xf]
        %v7246 = vld [vmem:[%s7225 + $0x50] sm:$0xf]
        %v7247 = vld [vmem:[%s7225 + $0x54] sm:$0xf]
        %v7248 = vld [vmem:[%s7225 + $0x58] sm:$0xf]
        %v7249 = vld [vmem:[%s7225 + $0x5c] sm:$0xf]
        %v7250 = vld [vmem:[%s7225 + $0x60] sm:$0xf]
        %v7251 = vld [vmem:[%s7225 + $0x64] sm:$0xf]
        %v7252 = vld [vmem:[%s7225 + $0x68] sm:$0xf]
        %v7253 = vld [vmem:[%s7225 + $0x6c] sm:$0xf]
        %v7254 = vld [vmem:[%s7225 + $0x70] sm:$0xf]
        %v7255 = vld [vmem:[%s7225 + $0x74] sm:$0xf]
        %v7256 = vld [vmem:[%s7225 + $0x78] sm:$0xf]
        %v7257 = vld [vmem:[%s7225 + $0x7c] sm:$0xf]
        %v7258 = vld [vmem:[%s7225 + $0x80] sm:$0xf]
        %v7259 = vld [vmem:[%s7225 + $0x84] sm:$0xf]
        %v7260 = vld [vmem:[%s7225 + $0x88] sm:$0xf]
        %v7261 = vld [vmem:[%s7225 + $0x8c] sm:$0xf]
        %v7298 = vunpack.c.l.b16 %v7226
        %v7299 = vunpack.c.l.b16 %v7227
        %v7300 = vunpack.c.l.b16 %v7228
        %v7301 = vunpack.c.l.b16 %v7229
        %v7302 = vunpack.c.l.b16 %v7230
        %v7303 = vunpack.c.l.b16 %v7231
        %v7304 = vunpack.c.l.b16 %v7232
        %v7305 = vunpack.c.l.b16 %v7233
        %v7306 = vunpack.c.l.b16 %v7234
        %v7307 = vunpack.c.l.b16 %v7235
        %v7308 = vunpack.c.l.b16 %v7236
        %v7309 = vunpack.c.l.b16 %v7237
        %v7310 = vunpack.c.l.b16 %v7238
        %v7311 = vunpack.c.l.b16 %v7239
        %v7312 = vunpack.c.l.b16 %v7240
        %v7313 = vunpack.c.l.b16 %v7241
        %v7314 = vunpack.c.l.b16 %v7242
        %v7315 = vunpack.c.l.b16 %v7243
        %v7316 = vunpack.c.l.b16 %v7244
        %v7317 = vunpack.c.l.b16 %v7245
        %v7318 = vunpack.c.l.b16 %v7246
        %v7319 = vunpack.c.l.b16 %v7247
        %v7320 = vunpack.c.l.b16 %v7248
        %v7321 = vunpack.c.l.b16 %v7249
        %v7322 = vunpack.c.l.b16 %v7250
        %v7323 = vunpack.c.l.b16 %v7251
        %v7324 = vunpack.c.l.b16 %v7252
        %v7325 = vunpack.c.l.b16 %v7253
        %v7326 = vunpack.c.l.b16 %v7254
        %v7327 = vunpack.c.l.b16 %v7255
        %v7328 = vunpack.c.l.b16 %v7256
        %v7329 = vunpack.c.l.b16 %v7257
        %v7330 = vunpack.c.l.b16 %v7258
        %v7331 = vunpack.c.l.b16 %v7259
        %v7332 = vunpack.c.l.b16 %v7260
        %v7333 = vunpack.c.l.b16 %v7261
        %v7334 = vpack.c.b16 %v7299, %v7298
        %v7335 = vpack.c.b16 %v7301, %v7300
        %v7336 = vpack.c.b16 %v7303, %v7302
        %v7337 = vpack.c.b16 %v7305, %v7304
        %v7338 = vpack.c.b16 %v7307, %v7306
        %v7339 = vpack.c.b16 %v7309, %v7308
        %v7340 = vpack.c.b16 %v7311, %v7310
        %v7341 = vpack.c.b16 %v7313, %v7312
        %v7342 = vpack.c.b16 %v7315, %v7314
        %v7343 = vpack.c.b16 %v7317, %v7316
        %v7344 = vpack.c.b16 %v7319, %v7318
        %v7345 = vpack.c.b16 %v7321, %v7320
        %v7346 = vpack.c.b16 %v7323, %v7322
        %v7347 = vpack.c.b16 %v7325, %v7324
        %v7348 = vpack.c.b16 %v7327, %v7326
        %v7349 = vpack.c.b16 %v7329, %v7328
        %v7350 = vpack.c.b16 %v7331, %v7330
        %v7351 = vpack.c.b16 %v7333, %v7332
        %v7371 = vsel %vm6374, %v7222, 0
        %7373 = vmatprep.subr.bf16.mxu0 0
        %7374 = vmatpush1.bf16.msra.mxu0 %v7334
        %7375 = vmatprep.subr.bf16.mxu0 0
        %7376 = vmatpush1.bf16.msra.mxu0 %v7335
        %7377 = vmatprep.subr.bf16.mxu0 0
        %7378 = vmatpush1.bf16.msra.mxu0 %v7336
        %7379 = vmatprep.subr.bf16.mxu0 0
        %7380 = vmatpush1.bf16.msra.mxu0 %v7337
        %7381 = vmatprep.subr.bf16.mxu0 0
        %7382 = vmatpush1.bf16.msra.mxu0 %v7338
        %7383 = vmatprep.subr.bf16.mxu0 0
        %7384 = vmatpush1.bf16.msra.mxu0 %v7339
        %7385 = vmatprep.subr.bf16.mxu0 0
        %7386 = vmatpush1.bf16.msra.mxu0 %v7340
        %7387 = vmatprep.subr.bf16.mxu0 0
        %7388 = vmatpush1.bf16.msra.mxu0 %v7341
        %7389 = vmatprep.subr.bf16.mxu0 0
        %7390 = vmatpush1.bf16.msra.mxu0 %v7342
        %7391 = vmatprep.subr.bf16.mxu0 0
        %7392 = vmatpush1.bf16.msra.mxu0 %v7343
        %7393 = vmatprep.subr.bf16.mxu0 0
        %7394 = vmatpush1.bf16.msra.mxu0 %v7344
        %7395 = vmatprep.subr.bf16.mxu0 0
        %7396 = vmatpush1.bf16.msra.mxu0 %v7345
        %7397 = vmatprep.subr.bf16.mxu0 0
        %7398 = vmatpush1.bf16.msra.mxu0 %v7346
        %7399 = vmatprep.subr.bf16.mxu0 0
        %7400 = vmatpush1.bf16.msra.mxu0 %v7347
        %7401 = vmatprep.subr.bf16.mxu0 0
        %7402 = vmatpush1.bf16.msra.mxu0 %v7348
        %7403 = vmatprep.subr.bf16.mxu0 0
        %7404 = vmatpush1.bf16.msra.mxu0 %v7349
        %7405 = vmatprep.mubr.bf16.mxu0 %v5513
        %7406 = vmatmul.mubr.bf16.gmra.mrb[0].mxu0 %v5498
        %v7407 = vpop.f32.mrb[0].mxu0
        %v7408 = vadd.f32 0.0, %v7407
        %v7409 = vpop.f32.mrb[0].mxu0
        %v7410 = vpop.f32.mrb[0].mxu0
        %v7411 = vadd.f32 0.0, %v7410
        %v7412 = vpop.f32.mrb[0].mxu0
        %7413 = vmatprep.mubr.bf16.mxu0 %v5558
        %7414 = vmatmul.mubr.bf16.gmra.mrb[0].mxu0 %v5543
        %v7415 = vpop.f32.mrb[0].mxu0
        %v7416 = vadd.f32 0.0, %v7415
        %v7417 = vpop.f32.mrb[0].mxu0
        %v7418 = vpop.f32.mrb[0].mxu0
        %v7419 = vadd.f32 0.0, %v7418
        %v7420 = vpop.f32.mrb[0].mxu0
        %7421 = vmatprep.mubr.bf16.mxu0 %v5603
        %7422 = vmatmul.mubr.bf16.gmra.mrb[0].mxu0 %v5588
        %v7423 = vpop.f32.mrb[0].mxu0
        %v7424 = vadd.f32 0.0, %v7423
        %v7425 = vpop.f32.mrb[0].mxu0
        %v7426 = vpop.f32.mrb[0].mxu0
        %v7427 = vadd.f32 0.0, %v7426
        %v7428 = vpop.f32.mrb[0].mxu0
        %7429 = vmatprep.mubr.bf16.mxu0 %v5648
        %7430 = vmatmul.mubr.bf16.gmra.mrb[0].mxu0 %v5633
        %v7431 = vpop.f32.mrb[0].mxu0
        %v7432 = vadd.f32 0.0, %v7431
        %v7433 = vpop.f32.mrb[0].mxu0
        %v7434 = vpop.f32.mrb[0].mxu0
        %v7435 = vadd.f32 0.0, %v7434
        %v7436 = vpop.f32.mrb[0].mxu0
        %7437 = vmatprep.mubr.bf16.mxu0 %v5693
        %7438 = vmatmul.mubr.bf16.gmra.mrb[0].mxu0 %v5678
        %v7439 = vpop.f32.mrb[0].mxu0
        %v7440 = vadd.f32 0.0, %v7439
        %v7441 = vpop.f32.mrb[0].mxu0
        %v7442 = vpop.f32.mrb[0].mxu0
        %v7443 = vadd.f32 0.0, %v7442
        %v7444 = vpop.f32.mrb[0].mxu0
        %7445 = vmatprep.mubr.bf16.mxu0 %v5738
        %7446 = vmatmul.mubr.bf16.gmra.mrb[0].mxu0 %v5723
        %v7447 = vpop.f32.mrb[0].mxu0
        %v7448 = vadd.f32 0.0, %v7447
        %v7449 = vpop.f32.mrb[0].mxu0
        %v7450 = vpop.f32.mrb[0].mxu0
        %v7451 = vadd.f32 0.0, %v7450
        %v7452 = vpop.f32.mrb[0].mxu0
        %7453 = vmatprep.mubr.bf16.mxu0 %v5783
        %7454 = vmatmul.mubr.bf16.gmra.mrb[0].mxu0 %v5768
        %v7455 = vpop.f32.mrb[0].mxu0
        %v7456 = vadd.f32 0.0, %v7455
        %v7457 = vpop.f32.mrb[0].mxu0
        %v7458 = vpop.f32.mrb[0].mxu0
        %v7459 = vadd.f32 0.0, %v7458
        %v7460 = vpop.f32.mrb[0].mxu0
        %7461 = vmatprep.mubr.bf16.mxu0 %v5828
        %7462 = vmatmul.mubr.bf16.gmra.mrb[0].mxu0 %v5813
        %v7463 = vpop.f32.mrb[0].mxu0
        %v7464 = vadd.f32 0.0, %v7463
        %v7465 = vpop.f32.mrb[0].mxu0
        %v7466 = vpop.f32.mrb[0].mxu0
        %v7467 = vadd.f32 0.0, %v7466
        %v7468 = vpop.f32.mrb[0].mxu0
        %7469 = vmatprep.mubr.bf16.mxu0 %v5873
        %7470 = vmatmul.mubr.bf16.gmra.mrb[0].mxu0 %v5858
        %v7471 = vpop.f32.mrb[0].mxu0
        %v7472 = vadd.f32 0.0, %v7471
        %v7473 = vpop.f32.mrb[0].mxu0
        %v7474 = vpop.f32.mrb[0].mxu0
        %v7475 = vadd.f32 0.0, %v7474
        %v7476 = vpop.f32.mrb[0].mxu0
        %7477 = vmatprep.mubr.bf16.mxu0 %v5918
        %7478 = vmatmul.mubr.bf16.gmra.mrb[0].mxu0 %v5903
        %v7479 = vpop.f32.mrb[0].mxu0
        %v7480 = vadd.f32 0.0, %v7479
        %v7481 = vpop.f32.mrb[0].mxu0
        %v7482 = vpop.f32.mrb[0].mxu0
        %v7483 = vadd.f32 0.0, %v7482
        %v7484 = vpop.f32.mrb[0].mxu0
        %7485 = vmatprep.mubr.bf16.mxu0 %v5963
        %7486 = vmatmul.mubr.bf16.gmra.mrb[0].mxu0 %v5948
        %v7487 = vpop.f32.mrb[0].mxu0
        %v7488 = vadd.f32 0.0, %v7487
        %v7489 = vpop.f32.mrb[0].mxu0
        %v7490 = vpop.f32.mrb[0].mxu0
        %v7491 = vadd.f32 0.0, %v7490
        %v7492 = vpop.f32.mrb[0].mxu0
        %7493 = vmatprep.mubr.bf16.mxu0 %v6008
        %7494 = vmatmul.mubr.bf16.gmra.mrb[0].mxu0 %v5993
        %v7495 = vpop.f32.mrb[0].mxu0
        %v7496 = vadd.f32 0.0, %v7495
        %v7497 = vpop.f32.mrb[0].mxu0
        %v7498 = vpop.f32.mrb[0].mxu0
        %v7499 = vadd.f32 0.0, %v7498
        %v7500 = vpop.f32.mrb[0].mxu0
        %7501 = vmatprep.mubr.bf16.mxu0 %v6053
        %7502 = vmatmul.mubr.bf16.gmra.mrb[0].mxu0 %v6038
        %v7503 = vpop.f32.mrb[0].mxu0
        %v7504 = vadd.f32 0.0, %v7503
        %v7505 = vpop.f32.mrb[0].mxu0
        %v7506 = vpop.f32.mrb[0].mxu0
        %v7507 = vadd.f32 0.0, %v7506
        %v7508 = vpop.f32.mrb[0].mxu0
        %7509 = vmatprep.mubr.bf16.mxu0 %v6098
        %7510 = vmatmul.mubr.bf16.gmra.mrb[0].mxu0 %v6083
        %v7511 = vpop.f32.mrb[0].mxu0
        %v7512 = vadd.f32 0.0, %v7511
        %v7513 = vpop.f32.mrb[0].mxu0
        %v7514 = vpop.f32.mrb[0].mxu0
        %v7515 = vadd.f32 0.0, %v7514
        %v7516 = vpop.f32.mrb[0].mxu0
        %7517 = vmatprep.mubr.bf16.mxu0 %v6211
        %7518 = vmatmul.mubr.bf16.gmra.mrb[0].mxu0 %v6196
        %v7519 = vpop.f32.mrb[0].mxu0
        %v7520 = vadd.f32 0.0, %v7519
        %v7521 = vpop.f32.mrb[0].mxu0
        %v7522 = vpop.f32.mrb[0].mxu0
        %v7523 = vadd.f32 0.0, %v7522
        %v7524 = vpop.f32.mrb[0].mxu0
        %7525 = vmatprep.mubr.bf16.mxu0 %v7207
        %7526 = vmatmul.mubr.bf16.gmra.mrb[0].mxu0 %v7192
        %v7527 = vpop.f32.mrb[0].mxu0
        %v7528 = vadd.f32 0.0, %v7527
        %v7529 = vpop.f32.mrb[0].mxu0
        %v7530 = vpop.f32.mrb[0].mxu0
        %v7531 = vadd.f32 0.0, %v7530
        %v7532 = vpop.f32.mrb[0].mxu0
        %7533 = vdwg.mxu0
        %7534 = vmatprep.subr.bf16.mxu0 0
        %7535 = vmatpush1.bf16.msra.mxu0 %v7350
        %7536 = vmatprep.subr.bf16.mxu0 0
        %7537 = vmatpush1.bf16.msra.mxu0 %v7351
        %7538 = vmatprep.subr.bf16.mxu0 0
        %7539 = vmatpush1.bf16.msra.mxu0 0
        %7540 = vmatprep.subr.bf16.mxu0 0
        %7541 = vmatpush1.bf16.msra.mxu0 0
        %7542 = vmatprep.subr.bf16.mxu0 0
        %7543 = vmatpush1.bf16.msra.mxu0 0
        %7544 = vmatprep.subr.bf16.mxu0 0
        %7545 = vmatpush1.bf16.msra.mxu0 0
        %7546 = vmatprep.subr.bf16.mxu0 0
        %7547 = vmatpush1.bf16.msra.mxu0 0
        %7548 = vmatprep.subr.bf16.mxu0 0
        %7549 = vmatpush1.bf16.msra.mxu0 0
        %7550 = vmatprep.subr.bf16.mxu0 0
        %7551 = vmatpush1.bf16.msra.mxu0 0
        %7552 = vmatprep.subr.bf16.mxu0 0
        %7553 = vmatpush1.bf16.msra.mxu0 0
        %7554 = vmatprep.subr.bf16.mxu0 0
        %7555 = vmatpush1.bf16.msra.mxu0 0
        %7556 = vmatprep.subr.bf16.mxu0 0
        %7557 = vmatpush1.bf16.msra.mxu0 0
        %7558 = vmatprep.subr.bf16.mxu0 0
        %7559 = vmatpush1.bf16.msra.mxu0 0
        %7560 = vmatprep.subr.bf16.mxu0 0
        %7561 = vmatpush1.bf16.msra.mxu0 0
        %7562 = vmatprep.subr.bf16.mxu0 0
        %7563 = vmatpush1.bf16.msra.mxu0 0
        %7564 = vmatprep.subr.bf16.mxu0 0
        %7565 = vmatpush1.bf16.msra.mxu0 0
        %7566 = vmatprep.mubr.bf16.mxu0 0
        %7567 = vmatmul.mubr.bf16.gmra.mrb[0].mxu0 %v6379
        %v7568 = vpop.f32.mrb[0].mxu0
        %v7569 = vadd.f32 %v7408, %v7568
        %v7570 = vpop.f32.mrb[0].mxu0
        %v7571 = vpop.f32.mrb[0].mxu0
        %v7572 = vadd.f32 %v7411, %v7571
        %v7573 = vpop.f32.mrb[0].mxu0
        %7574 = vmatprep.mubr.bf16.mxu0 0
        %7575 = vmatmul.mubr.bf16.gmra.mrb[0].mxu0 %v6382
        %v7576 = vpop.f32.mrb[0].mxu0
        %v7577 = vadd.f32 %v7416, %v7576
        %v7578 = vpop.f32.mrb[0].mxu0
        %v7579 = vpop.f32.mrb[0].mxu0
        %v7580 = vadd.f32 %v7419, %v7579
        %v7581 = vpop.f32.mrb[0].mxu0
        %7582 = vmatprep.mubr.bf16.mxu0 0
        %7583 = vmatmul.mubr.bf16.gmra.mrb[0].mxu0 %v6385
        %v7584 = vpop.f32.mrb[0].mxu0
        %v7585 = vadd.f32 %v7424, %v7584
        %v7586 = vpop.f32.mrb[0].mxu0
        %v7587 = vpop.f32.mrb[0].mxu0
        %v7588 = vadd.f32 %v7427, %v7587
        %v7589 = vpop.f32.mrb[0].mxu0
        %7590 = vmatprep.mubr.bf16.mxu0 0
        %7591 = vmatmul.mubr.bf16.gmra.mrb[0].mxu0 %v6388
        %v7592 = vpop.f32.mrb[0].mxu0
        %v7593 = vadd.f32 %v7432, %v7592
        %v7594 = vpop.f32.mrb[0].mxu0
        %v7595 = vpop.f32.mrb[0].mxu0
        %v7596 = vadd.f32 %v7435, %v7595
        %v7597 = vpop.f32.mrb[0].mxu0
        %7598 = vmatprep.mubr.bf16.mxu0 0
        %7599 = vmatmul.mubr.bf16.gmra.mrb[0].mxu0 %v6391
        %v7600 = vpop.f32.mrb[0].mxu0
        %v7601 = vadd.f32 %v7440, %v7600
        %v7602 = vpop.f32.mrb[0].mxu0
        %v7603 = vpop.f32.mrb[0].mxu0
        %v7604 = vadd.f32 %v7443, %v7603
        %v7605 = vpop.f32.mrb[0].mxu0
        %7606 = vmatprep.mubr.bf16.mxu0 0
        %7607 = vmatmul.mubr.bf16.gmra.mrb[0].mxu0 %v6394
        %v7608 = vpop.f32.mrb[0].mxu0
        %v7609 = vadd.f32 %v7448, %v7608
        %v7610 = vpop.f32.mrb[0].mxu0
        %v7611 = vpop.f32.mrb[0].mxu0
        %v7612 = vadd.f32 %v7451, %v7611
        %v7613 = vpop.f32.mrb[0].mxu0
        %7614 = vmatprep.mubr.bf16.mxu0 0
        %7615 = vmatmul.mubr.bf16.gmra.mrb[0].mxu0 %v6397
        %v7616 = vpop.f32.mrb[0].mxu0
        %v7617 = vadd.f32 %v7456, %v7616
        %v7618 = vpop.f32.mrb[0].mxu0
        %v7619 = vpop.f32.mrb[0].mxu0
        %v7620 = vadd.f32 %v7459, %v7619
        %v7621 = vpop.f32.mrb[0].mxu0
        %7622 = vmatprep.mubr.bf16.mxu0 0
        %7623 = vmatmul.mubr.bf16.gmra.mrb[0].mxu0 %v6400
        %v7624 = vpop.f32.mrb[0].mxu0
        %v7625 = vadd.f32 %v7464, %v7624
        %v7626 = vpop.f32.mrb[0].mxu0
        %v7627 = vpop.f32.mrb[0].mxu0
        %v7628 = vadd.f32 %v7467, %v7627
        %v7629 = vpop.f32.mrb[0].mxu0
        %7630 = vmatprep.mubr.bf16.mxu0 0
        %7631 = vmatmul.mubr.bf16.gmra.mrb[0].mxu0 %v6403
        %v7632 = vpop.f32.mrb[0].mxu0
        %v7633 = vadd.f32 %v7472, %v7632
        %v7634 = vpop.f32.mrb[0].mxu0
        %v7635 = vpop.f32.mrb[0].mxu0
        %v7636 = vadd.f32 %v7475, %v7635
        %v7637 = vpop.f32.mrb[0].mxu0
        %7638 = vmatprep.mubr.bf16.mxu0 0
        %7639 = vmatmul.mubr.bf16.gmra.mrb[0].mxu0 %v6406
        %v7640 = vpop.f32.mrb[0].mxu0
        %v7641 = vadd.f32 %v7480, %v7640
        %v7642 = vpop.f32.mrb[0].mxu0
        %v7643 = vpop.f32.mrb[0].mxu0
        %v7644 = vadd.f32 %v7483, %v7643
        %v7645 = vpop.f32.mrb[0].mxu0
        %7646 = vmatprep.mubr.bf16.mxu0 0
        %7647 = vmatmul.mubr.bf16.gmra.mrb[0].mxu0 %v6409
        %v7648 = vpop.f32.mrb[0].mxu0
        %v7649 = vadd.f32 %v7488, %v7648
        %v7650 = vpop.f32.mrb[0].mxu0
        %v7651 = vpop.f32.mrb[0].mxu0
        %v7652 = vadd.f32 %v7491, %v7651
        %v7653 = vpop.f32.mrb[0].mxu0
        %7654 = vmatprep.mubr.bf16.mxu0 0
        %7655 = vmatmul.mubr.bf16.gmra.mrb[0].mxu0 %v6412
        %v7656 = vpop.f32.mrb[0].mxu0
        %v7657 = vadd.f32 %v7496, %v7656
        %v7658 = vpop.f32.mrb[0].mxu0
        %v7659 = vpop.f32.mrb[0].mxu0
        %v7660 = vadd.f32 %v7499, %v7659
        %v7661 = vpop.f32.mrb[0].mxu0
        %7662 = vmatprep.mubr.bf16.mxu0 0
        %7663 = vmatmul.mubr.bf16.gmra.mrb[0].mxu0 %v6415
        %v7664 = vpop.f32.mrb[0].mxu0
        %v7665 = vadd.f32 %v7504, %v7664
        %v7666 = vpop.f32.mrb[0].mxu0
        %v7667 = vpop.f32.mrb[0].mxu0
        %v7668 = vadd.f32 %v7507, %v7667
        %v7669 = vpop.f32.mrb[0].mxu0
        %7670 = vmatprep.mubr.bf16.mxu0 0
        %7671 = vmatmul.mubr.bf16.gmra.mrb[0].mxu0 %v6418
        %v7672 = vpop.f32.mrb[0].mxu0
        %v7673 = vadd.f32 %v7512, %v7672
        %v7674 = vpop.f32.mrb[0].mxu0
        %v7675 = vpop.f32.mrb[0].mxu0
        %v7676 = vadd.f32 %v7515, %v7675
        %v7677 = vpop.f32.mrb[0].mxu0
        %7678 = vmatprep.mubr.bf16.mxu0 0
        %7679 = vmatmul.mubr.bf16.gmra.mrb[0].mxu0 %v6421
        %v7680 = vpop.f32.mrb[0].mxu0
        %v7681 = vadd.f32 %v7520, %v7680
        %v7682 = vpop.f32.mrb[0].mxu0
        %v7683 = vpop.f32.mrb[0].mxu0
        %v7684 = vadd.f32 %v7523, %v7683
        %v7685 = vpop.f32.mrb[0].mxu0
        %7686 = vmatprep.mubr.bf16.mxu0 0
        %7687 = vmatmul.mubr.bf16.gmra.mrb[0].mxu0 %v7371
        %v7688 = vpop.f32.mrb[0].mxu0
        %v7689 = vadd.f32 %v7528, %v7688
        %v7690 = vpop.f32.mrb[0].mxu0
        %v7691 = vpop.f32.mrb[0].mxu0
        %v7692 = vadd.f32 %v7531, %v7691
        %v7693 = vpop.f32.mrb[0].mxu0
        %7694 = vdwg.mxu0
        %v7695 = vadd.f32 %v7052, %v7569
        %v7696 = vadd.f32 %v7055, %v7572
        %v7697 = vadd.f32 %v7060, %v7577
        %v7698 = vadd.f32 %v7063, %v7580
        %v7699 = vadd.f32 %v7068, %v7585
        %v7700 = vadd.f32 %v7071, %v7588
        %v7701 = vadd.f32 %v7076, %v7593
        %v7702 = vadd.f32 %v7079, %v7596
        %v7703 = vadd.f32 %v7084, %v7601
        %v7704 = vadd.f32 %v7087, %v7604
        %v7705 = vadd.f32 %v7092, %v7609
        %v7706 = vadd.f32 %v7095, %v7612
        %v7707 = vadd.f32 %v7100, %v7617
        %v7708 = vadd.f32 %v7103, %v7620
        %v7709 = vadd.f32 %v7108, %v7625
        %v7710 = vadd.f32 %v7111, %v7628
        %v7711 = vadd.f32 %v7116, %v7633
        %v7712 = vadd.f32 %v7119, %v7636
        %v7713 = vadd.f32 %v7124, %v7641
        %v7714 = vadd.f32 %v7127, %v7644
        %v7715 = vadd.f32 %v7132, %v7649
        %v7716 = vadd.f32 %v7135, %v7652
        %v7717 = vadd.f32 %v7140, %v7657
        %v7718 = vadd.f32 %v7143, %v7660
        %v7719 = vadd.f32 %v7148, %v7665
        %v7720 = vadd.f32 %v7151, %v7668
        %v7721 = vadd.f32 %v7156, %v7673
        %v7722 = vadd.f32 %v7159, %v7676
        %v7723 = vadd.f32 %v7164, %v7681
        %v7724 = vadd.f32 %v7167, %v7684
        %v7725 = vadd.f32 %v7172, %v7689
        %v7726 = vadd.f32 %v7175, %v7692
        %v7727 = vld [vmem:[%s8] sm:$0x1]
        %v7729 = vlaneseq
        %v7730 = vshrl.u32 %v7729, 7
        %v7731 = vsub.s32 0, %v7730
        %v7732 = vrot.slane %v7727, %v7731
        %v7734 = vadd.f32 %v7695, %v7732
        %v7735 = vadd.f32 %v7696, %v7732
        %v7736 = vadd.f32 %v7697, %v7732
        %v7737 = vadd.f32 %v7698, %v7732
        %v7738 = vadd.f32 %v7699, %v7732
        %v7739 = vadd.f32 %v7700, %v7732
        %v7740 = vadd.f32 %v7701, %v7732
        %v7741 = vadd.f32 %v7702, %v7732
        %v7742 = vadd.f32 %v7703, %v7732
        %v7743 = vadd.f32 %v7704, %v7732
        %v7744 = vadd.f32 %v7705, %v7732
        %v7745 = vadd.f32 %v7706, %v7732
        %v7746 = vadd.f32 %v7707, %v7732
        %v7747 = vadd.f32 %v7708, %v7732
        %v7748 = vadd.f32 %v7709, %v7732
        %v7749 = vadd.f32 %v7710, %v7732
        %v7750 = vadd.f32 %v7711, %v7732
        %v7751 = vadd.f32 %v7712, %v7732
        %v7752 = vadd.f32 %v7713, %v7732
        %v7753 = vadd.f32 %v7714, %v7732
        %v7754 = vadd.f32 %v7715, %v7732
        %v7755 = vadd.f32 %v7716, %v7732
        %v7756 = vadd.f32 %v7717, %v7732
        %v7757 = vadd.f32 %v7718, %v7732
        %v7758 = vadd.f32 %v7719, %v7732
        %v7759 = vadd.f32 %v7720, %v7732
        %v7760 = vadd.f32 %v7721, %v7732
        %v7761 = vadd.f32 %v7722, %v7732
        %v7762 = vadd.f32 %v7723, %v7732
        %v7763 = vadd.f32 %v7724, %v7732
        %v7764 = vadd.f32 %v7725, %v7732
        %v7765 = vadd.f32 %v7726, %v7732
        %v7766 = vmax.f32 %v7734, 0.0
        %v7767 = vmax.f32 %v7735, 0.0
        %v7768 = vmax.f32 %v7736, 0.0
        %v7769 = vmax.f32 %v7737, 0.0
        %v7770 = vmax.f32 %v7738, 0.0
        %v7771 = vmax.f32 %v7739, 0.0
        %v7772 = vmax.f32 %v7740, 0.0
        %v7773 = vmax.f32 %v7741, 0.0
        %v7774 = vmax.f32 %v7742, 0.0
        %v7775 = vmax.f32 %v7743, 0.0
        %v7776 = vmax.f32 %v7744, 0.0
        %v7777 = vmax.f32 %v7745, 0.0
        %v7778 = vmax.f32 %v7746, 0.0
        %v7779 = vmax.f32 %v7747, 0.0
        %v7780 = vmax.f32 %v7748, 0.0
        %v7781 = vmax.f32 %v7749, 0.0
        %v7782 = vmax.f32 %v7750, 0.0
        %v7783 = vmax.f32 %v7751, 0.0
        %v7784 = vmax.f32 %v7752, 0.0
        %v7785 = vmax.f32 %v7753, 0.0
        %v7786 = vmax.f32 %v7754, 0.0
        %v7787 = vmax.f32 %v7755, 0.0
        %v7788 = vmax.f32 %v7756, 0.0
        %v7789 = vmax.f32 %v7757, 0.0
        %v7790 = vmax.f32 %v7758, 0.0
        %v7791 = vmax.f32 %v7759, 0.0
        %v7792 = vmax.f32 %v7760, 0.0
        %v7793 = vmax.f32 %v7761, 0.0
        %v7794 = vmax.f32 %v7762, 0.0
        %v7795 = vmax.f32 %v7763, 0.0
        %v7796 = vmax.f32 %v7764, 0.0
        %v7797 = vmax.f32 %v7765, 0.0
        %vm7798 = vcmask 388096
        %7799 = vst.msk [vmem:[#allocation4] sm:$0xf] %vm7798, 0
        %7800 = vst.msk [vmem:[#allocation4 + $0x4] sm:$0xf] %vm7798, 0
        %7801 = vst.msk [vmem:[#allocation4 + $0x8] sm:$0xf] %vm7798, 0
        %7802 = vst.msk [vmem:[#allocation4 + $0xc] sm:$0xf] %vm7798, 0
        %vm7803 = vcmask 386048
        %7804 = vst.msk [vmem:[#allocation4 + $0x10] sm:$0x3] %vm7803, 0
        %7805 = vst.msk [vmem:[#allocation4 + $0x14] sm:$0xf] %vm7798, 0
        %7806 = vst.msk [vmem:[#allocation4 + $0x18] sm:$0xf] %vm7798, 0
        %7807 = vst.msk [vmem:[#allocation4 + $0x1c] sm:$0xf] %vm7798, 0
        %7808 = vst.msk [vmem:[#allocation4 + $0x20] sm:$0xf] %vm7798, 0
        %7809 = vst.msk [vmem:[#allocation4 + $0x24] sm:$0x3] %vm7803, 0
        %7810 = vst.msk [vmem:[#allocation4 + $0x28] sm:$0xf] %vm7798, 0
        %7811 = vst.msk [vmem:[#allocation4 + $0x2c] sm:$0xf] %vm7798, 0
        %7812 = vst.msk [vmem:[#allocation4 + $0x30] sm:$0xf] %vm7798, 0
        %7813 = vst.msk [vmem:[#allocation4 + $0x34] sm:$0xf] %vm7798, 0
        %7814 = vst.msk [vmem:[#allocation4 + $0x38] sm:$0x3] %vm7803, 0
        %7815 = vst.msk [vmem:[#allocation4 + $0x3c] sm:$0xf] %vm7798, 0
        %7816 = vst.msk [vmem:[#allocation4 + $0x40] sm:$0xf] %vm7798, 0
        %7817 = vst.msk [vmem:[#allocation4 + $0x44] sm:$0xf] %vm7798, 0
        %7818 = vst.msk [vmem:[#allocation4 + $0x48] sm:$0xf] %vm7798, 0
        %7819 = vst.msk [vmem:[#allocation4 + $0x4c] sm:$0x3] %vm7803, 0
        %7820 = vst.msk [vmem:[#allocation4 + $0x50] sm:$0xf] %vm7798, 0
        %7821 = vst.msk [vmem:[#allocation4 + $0x54] sm:$0xf] %vm7798, 0
        %7822 = vst.msk [vmem:[#allocation4 + $0x58] sm:$0xf] %vm7798, 0
        %7823 = vst.msk [vmem:[#allocation4 + $0x5c] sm:$0xf] %vm7798, 0
        %7824 = vst.msk [vmem:[#allocation4 + $0x60] sm:$0x3] %vm7803, 0
        %7825 = vst.msk [vmem:[#allocation4 + $0x64] sm:$0xf] %vm7798, 0
        %7826 = vst.msk [vmem:[#allocation4 + $0x68] sm:$0xf] %vm7798, 0
        %7827 = vst.msk [vmem:[#allocation4 + $0x6c] sm:$0xf] %vm7798, 0
        %7828 = vst.msk [vmem:[#allocation4 + $0x70] sm:$0xf] %vm7798, 0
        %7829 = vst.msk [vmem:[#allocation4 + $0x74] sm:$0x3] %vm7803, 0
        %7830 = vst.msk [vmem:[#allocation4 + $0x78] sm:$0xf] %vm7798, 0
        %7831 = vst.msk [vmem:[#allocation4 + $0x7c] sm:$0xf] %vm7798, 0
        %7832 = vst.msk [vmem:[#allocation4 + $0x80] sm:$0xf] %vm7798, 0
        %7833 = vst.msk [vmem:[#allocation4 + $0x84] sm:$0xf] %vm7798, 0
        %7834 = vst.msk [vmem:[#allocation4 + $0x88] sm:$0x3] %vm7803, 0
        %7835 = vst.msk [vmem:[#allocation4 + $0x8c] sm:$0xf] %vm7798, 0
        %7836 = vst.msk [vmem:[#allocation4 + $0x90] sm:$0xf] %vm7798, 0
        %7837 = vst.msk [vmem:[#allocation4 + $0x94] sm:$0xf] %vm7798, 0
        %7838 = vst.msk [vmem:[#allocation4 + $0x98] sm:$0xf] %vm7798, 0
        %7839 = vst.msk [vmem:[#allocation4 + $0x9c] sm:$0x3] %vm7803, 0
        %7840 = vst.msk [vmem:[#allocation4 + $0xa0] sm:$0xf] %vm7798, 0
        %7841 = vst.msk [vmem:[#allocation4 + $0xa4] sm:$0xf] %vm7798, 0
        %7842 = vst.msk [vmem:[#allocation4 + $0xa8] sm:$0xf] %vm7798, 0
        %7843 = vst.msk [vmem:[#allocation4 + $0xac] sm:$0xf] %vm7798, 0
        %7844 = vst.msk [vmem:[#allocation4 + $0xb0] sm:$0x3] %vm7803, 0
        %7845 = vst.msk [vmem:[#allocation4 + $0xb4] sm:$0xf] %vm7798, 0
        %7846 = vst.msk [vmem:[#allocation4 + $0xb8] sm:$0xf] %vm7798, 0
        %7847 = vst.msk [vmem:[#allocation4 + $0xbc] sm:$0xf] %vm7798, 0
        %7848 = vst.msk [vmem:[#allocation4 + $0xc0] sm:$0xf] %vm7798, 0
        %7849 = vst.msk [vmem:[#allocation4 + $0xc4] sm:$0x3] %vm7803, 0
        %7850 = vst.msk [vmem:[#allocation4 + $0xc8] sm:$0xf] %vm7798, 0
        %7851 = vst.msk [vmem:[#allocation4 + $0xcc] sm:$0xf] %vm7798, 0
        %7852 = vst.msk [vmem:[#allocation4 + $0xd0] sm:$0xf] %vm7798, 0
        %7853 = vst.msk [vmem:[#allocation4 + $0xd4] sm:$0xf] %vm7798, 0
        %7854 = vst.msk [vmem:[#allocation4 + $0xd8] sm:$0x3] %vm7803, 0
        %7855 = vst.msk [vmem:[#allocation4 + $0xdc] sm:$0xf] %vm7798, 0
        %7856 = vst.msk [vmem:[#allocation4 + $0xe0] sm:$0xf] %vm7798, 0
        %7857 = vst.msk [vmem:[#allocation4 + $0xe4] sm:$0xf] %vm7798, 0
        %7858 = vst.msk [vmem:[#allocation4 + $0xe8] sm:$0xf] %vm7798, 0
        %7859 = vst.msk [vmem:[#allocation4 + $0xec] sm:$0x3] %vm7803, 0
        %7860 = vst.msk [vmem:[#allocation4 + $0xf0] sm:$0xf] %vm7798, 0
        %7861 = vst.msk [vmem:[#allocation4 + $0xf4] sm:$0xf] %vm7798, 0
        %7862 = vst.msk [vmem:[#allocation4 + $0xf8] sm:$0xf] %vm7798, 0
        %7863 = vst.msk [vmem:[#allocation4 + $0xfc] sm:$0xf] %vm7798, 0
        %7864 = vst.msk [vmem:[#allocation4 + $0x100] sm:$0x3] %vm7803, 0
        %7865 = vst.msk [vmem:[#allocation4 + $0x104] sm:$0xf] %vm7798, 0
        %7866 = vst.msk [vmem:[#allocation4 + $0x108] sm:$0xf] %vm7798, 0
        %7867 = vst.msk [vmem:[#allocation4 + $0x10c] sm:$0xf] %vm7798, 0
        %7868 = vst.msk [vmem:[#allocation4 + $0x110] sm:$0xf] %vm7798, 0
        %7869 = vst.msk [vmem:[#allocation4 + $0x114] sm:$0x3] %vm7803, 0
        %7870 = vst.msk [vmem:[#allocation4 + $0x118] sm:$0xf] %vm7798, 0
        %7871 = vst.msk [vmem:[#allocation4 + $0x11c] sm:$0xf] %vm7798, 0
        %7872 = vst.msk [vmem:[#allocation4 + $0x120] sm:$0xf] %vm7798, 0
        %7873 = vst.msk [vmem:[#allocation4 + $0x124] sm:$0xf] %vm7798, 0
        %7874 = vst.msk [vmem:[#allocation4 + $0x128] sm:$0x3] %vm7803, 0
        %7875 = vst.msk [vmem:[#allocation4 + $0x12c] sm:$0xf] %vm7798, 0
        %7876 = vst.msk [vmem:[#allocation4 + $0x130] sm:$0xf] %vm7798, 0
        %7877 = vst.msk [vmem:[#allocation4 + $0x134] sm:$0xf] %vm7798, 0
        %7878 = vst.msk [vmem:[#allocation4 + $0x138] sm:$0xf] %vm7798, 0
        %7879 = vst.msk [vmem:[#allocation4 + $0x13c] sm:$0x3] %vm7803, 0
        %7880 = vst.msk [vmem:[#allocation4 + $0x140] sm:$0xf] %vm7798, 0
        %7881 = vst.msk [vmem:[#allocation4 + $0x144] sm:$0xf] %vm7798, 0
        %7882 = vst.msk [vmem:[#allocation4 + $0x148] sm:$0xf] %vm7798, 0
        %7883 = vst.msk [vmem:[#allocation4 + $0x14c] sm:$0xf] %vm7798, 0
        %7884 = vst.msk [vmem:[#allocation4 + $0x150] sm:$0x3] %vm7803, 0
        %7885 = vst.msk [vmem:[#allocation4 + $0x154] sm:$0xf] %vm7798, 0
        %7886 = vst.msk [vmem:[#allocation4 + $0x158] sm:$0xf] %vm7798, 0
        %7887 = vst.msk [vmem:[#allocation4 + $0x15c] sm:$0xf] %vm7798, 0
        %7888 = vst.msk [vmem:[#allocation4 + $0x160] sm:$0xf] %vm7798, 0
        %7889 = vst.msk [vmem:[#allocation4 + $0x164] sm:$0x3] %vm7803, 0
        %7890 = vst.msk [vmem:[#allocation4 + $0x168] sm:$0xf] %vm7798, 0
        %7891 = vst.msk [vmem:[#allocation4 + $0x16c] sm:$0xf] %vm7798, 0
        %7892 = vst.msk [vmem:[#allocation4 + $0x170] sm:$0xf] %vm7798, 0
        %7893 = vst.msk [vmem:[#allocation4 + $0x174] sm:$0xf] %vm7798, 0
        %7894 = vst.msk [vmem:[#allocation4 + $0x178] sm:$0x3] %vm7803, 0
        %7895 = vst.msk [vmem:[#allocation4 + $0x17c] sm:$0xf] %vm7798, 0
        %7896 = vst.msk [vmem:[#allocation4 + $0x180] sm:$0xf] %vm7798, 0
        %7897 = vst.msk [vmem:[#allocation4 + $0x184] sm:$0xf] %vm7798, 0
        %7898 = vst.msk [vmem:[#allocation4 + $0x188] sm:$0xf] %vm7798, 0
        %7899 = vst.msk [vmem:[#allocation4 + $0x18c] sm:$0x3] %vm7803, 0
        %v7916 = vunpack.c.l.b16 %v1226
        %v7917 = vunpack.c.h.b16 %v1226
        %v7918 = vunpack.c.l.b16 %v1227
        %v7919 = vunpack.c.h.b16 %v1227
        %v7920 = vunpack.c.l.b16 %v1228
        %v7921 = vunpack.c.h.b16 %v1228
        %v7922 = vunpack.c.l.b16 %v1229
        %v7923 = vunpack.c.h.b16 %v1229
        %v7924 = vunpack.c.l.b16 %v1230
        %v7925 = vunpack.c.h.b16 %v1230
        %v7926 = vunpack.c.l.b16 %v1231
        %v7927 = vunpack.c.h.b16 %v1231
        %v7928 = vunpack.c.l.b16 %v1232
        %v7929 = vunpack.c.h.b16 %v1232
        %v7930 = vunpack.c.l.b16 %v1233
        %v7931 = vunpack.c.h.b16 %v1233
        %v7932 = vunpack.c.l.b16 %v1234
        %v7933 = vunpack.c.h.b16 %v1234
        %v7934 = vunpack.c.l.b16 %v1235
        %v7935 = vunpack.c.h.b16 %v1235
        %v7936 = vunpack.c.l.b16 %v1236
        %v7937 = vunpack.c.h.b16 %v1236
        %v7938 = vunpack.c.l.b16 %v1237
        %v7939 = vunpack.c.h.b16 %v1237
        %v7940 = vunpack.c.l.b16 %v1238
        %v7941 = vunpack.c.h.b16 %v1238
        %v7942 = vunpack.c.l.b16 %v1239
        %v7943 = vunpack.c.h.b16 %v1239
        %v7944 = vunpack.c.l.b16 %v1240
        %v7945 = vunpack.c.h.b16 %v1240
        %v7946 = vunpack.c.l.b16 %v1241
        %v7947 = vunpack.c.h.b16 %v1241
        %v7948 = vpack.c.b16 %v7916, %v7916
        %v7949 = vpack.c.b16 %v7917, %v7917
        %v7950 = vpack.c.b16 %v7918, %v7918
        %v7951 = vpack.c.b16 %v7919, %v7919
        %v7952 = vpack.c.b16 %v7920, %v7920
        %v7953 = vpack.c.b16 %v7921, %v7921
        %v7954 = vpack.c.b16 %v7922, %v7922
        %v7955 = vpack.c.b16 %v7923, %v7923
        %v7956 = vpack.c.b16 %v7924, %v7924
        %v7957 = vpack.c.b16 %v7925, %v7925
        %v7958 = vpack.c.b16 %v7926, %v7926
        %v7959 = vpack.c.b16 %v7927, %v7927
        %v7960 = vpack.c.b16 %v7928, %v7928
        %v7961 = vpack.c.b16 %v7929, %v7929
        %v7962 = vpack.c.b16 %v7930, %v7930
        %v7963 = vpack.c.b16 %v7931, %v7931
        %v7964 = vpack.c.b16 %v7932, %v7932
        %v7965 = vpack.c.b16 %v7933, %v7933
        %v7966 = vpack.c.b16 %v7934, %v7934
        %v7967 = vpack.c.b16 %v7935, %v7935
        %v7968 = vpack.c.b16 %v7936, %v7936
        %v7969 = vpack.c.b16 %v7937, %v7937
        %v7970 = vpack.c.b16 %v7938, %v7938
        %v7971 = vpack.c.b16 %v7939, %v7939
        %v7972 = vpack.c.b16 %v7940, %v7940
        %v7973 = vpack.c.b16 %v7941, %v7941
        %v7974 = vpack.c.b16 %v7942, %v7942
        %v7975 = vpack.c.b16 %v7943, %v7943
        %v7976 = vpack.c.b16 %v7944, %v7944
        %v7977 = vpack.c.b16 %v7945, %v7945
        %v7978 = vpack.c.b16 %v7946, %v7946
        %v7979 = vpack.c.b16 %v7947, %v7947
        %s8012 = scalar_lea.vmem [#allocation4], 40
        %8013 = vst.msk [vmem:[%s8012 + $0x8] sm:$0xf] %vm7798, %v7948
        %8014 = vst.msk [vmem:[%s8012 + $0xc] sm:$0xf] %vm7798, %v7949
        %8015 = vst.msk [vmem:[%s8012 + $0x1c] sm:$0xf] %vm7798, %v7950
        %8016 = vst.msk [vmem:[%s8012 + $0x20] sm:$0xf] %vm7798, %v7951
        %8017 = vst.msk [vmem:[%s8012 + $0x30] sm:$0xf] %vm7798, %v7952
        %8018 = vst.msk [vmem:[%s8012 + $0x34] sm:$0xf] %vm7798, %v7953
        %8019 = vst.msk [vmem:[%s8012 + $0x44] sm:$0xf] %vm7798, %v7954
        %8020 = vst.msk [vmem:[%s8012 + $0x48] sm:$0xf] %vm7798, %v7955
        %8021 = vst.msk [vmem:[%s8012 + $0x58] sm:$0xf] %vm7798, %v7956
        %8022 = vst.msk [vmem:[%s8012 + $0x5c] sm:$0xf] %vm7798, %v7957
        %8023 = vst.msk [vmem:[%s8012 + $0x6c] sm:$0xf] %vm7798, %v7958
        %8024 = vst.msk [vmem:[%s8012 + $0x70] sm:$0xf] %vm7798, %v7959
        %8025 = vst.msk [vmem:[%s8012 + $0x80] sm:$0xf] %vm7798, %v7960
        %8026 = vst.msk [vmem:[%s8012 + $0x84] sm:$0xf] %vm7798, %v7961
        %8027 = vst.msk [vmem:[%s8012 + $0x94] sm:$0xf] %vm7798, %v7962
        %8028 = vst.msk [vmem:[%s8012 + $0x98] sm:$0xf] %vm7798, %v7963
        %8029 = vst.msk [vmem:[%s8012 + $0xa8] sm:$0xf] %vm7798, %v7964
        %8030 = vst.msk [vmem:[%s8012 + $0xac] sm:$0xf] %vm7798, %v7965
        %8031 = vst.msk [vmem:[%s8012 + $0xbc] sm:$0xf] %vm7798, %v7966
        %8032 = vst.msk [vmem:[%s8012 + $0xc0] sm:$0xf] %vm7798, %v7967
        %8033 = vst.msk [vmem:[%s8012 + $0xd0] sm:$0xf] %vm7798, %v7968
        %8034 = vst.msk [vmem:[%s8012 + $0xd4] sm:$0xf] %vm7798, %v7969
        %8035 = vst.msk [vmem:[%s8012 + $0xe4] sm:$0xf] %vm7798, %v7970
        %8036 = vst.msk [vmem:[%s8012 + $0xe8] sm:$0xf] %vm7798, %v7971
        %8037 = vst.msk [vmem:[%s8012 + $0xf8] sm:$0xf] %vm7798, %v7972
        %8038 = vst.msk [vmem:[%s8012 + $0xfc] sm:$0xf] %vm7798, %v7973
        %8039 = vst.msk [vmem:[%s8012 + $0x10c] sm:$0xf] %vm7798, %v7974
        %8040 = vst.msk [vmem:[%s8012 + $0x110] sm:$0xf] %vm7798, %v7975
        %8041 = vst.msk [vmem:[%s8012 + $0x120] sm:$0xf] %vm7798, %v7976
        %8042 = vst.msk [vmem:[%s8012 + $0x124] sm:$0xf] %vm7798, %v7977
        %8043 = vst.msk [vmem:[%s8012 + $0x134] sm:$0xf] %vm7798, %v7978
        %8044 = vst.msk [vmem:[%s8012 + $0x138] sm:$0xf] %vm7798, %v7979
        %v8045 = vld [vmem:[#allocation4 + $0x4] sm:$0xf]
        %v8046 = vld [vmem:[#allocation4 + $0x8] sm:$0xf]
        %v8047 = vld [vmem:[#allocation4 + $0xc] sm:$0xf]
        %v8048 = vld [vmem:[#allocation4 + $0x10] sm:$0x3]
        %v8049 = vld [vmem:[#allocation4 + $0x18] sm:$0xf]
        %v8050 = vld [vmem:[#allocation4 + $0x1c] sm:$0xf]
        %v8051 = vld [vmem:[#allocation4 + $0x20] sm:$0xf]
        %v8052 = vld [vmem:[#allocation4 + $0x24] sm:$0x3]
        %v8053 = vld [vmem:[#allocation4 + $0x2c] sm:$0xf]
        %v8054 = vld [vmem:[#allocation4 + $0x30] sm:$0xf]
        %v8055 = vld [vmem:[#allocation4 + $0x34] sm:$0xf]
        %v8056 = vld [vmem:[#allocation4 + $0x38] sm:$0x3]
        %v8057 = vld [vmem:[#allocation4 + $0x40] sm:$0xf]
        %v8058 = vld [vmem:[#allocation4 + $0x44] sm:$0xf]
        %v8059 = vld [vmem:[#allocation4 + $0x48] sm:$0xf]
        %v8060 = vld [vmem:[#allocation4 + $0x4c] sm:$0x3]
        %v8061 = vld [vmem:[#allocation4 + $0x54] sm:$0xf]
        %v8062 = vld [vmem:[#allocation4 + $0x58] sm:$0xf]
        %v8063 = vld [vmem:[#allocation4 + $0x5c] sm:$0xf]
        %v8064 = vld [vmem:[#allocation4 + $0x60] sm:$0x3]
        %v8065 = vld [vmem:[#allocation4 + $0x68] sm:$0xf]
        %v8066 = vld [vmem:[#allocation4 + $0x6c] sm:$0xf]
        %v8067 = vld [vmem:[#allocation4 + $0x70] sm:$0xf]
        %v8068 = vld [vmem:[#allocation4 + $0x74] sm:$0x3]
        %v8069 = vld [vmem:[#allocation4 + $0x7c] sm:$0xf]
        %v8070 = vld [vmem:[#allocation4 + $0x80] sm:$0xf]
        %v8071 = vld [vmem:[#allocation4 + $0x84] sm:$0xf]
        %v8072 = vld [vmem:[#allocation4 + $0x88] sm:$0x3]
        %v8073 = vld [vmem:[#allocation4 + $0x90] sm:$0xf]
        %v8074 = vld [vmem:[#allocation4 + $0x94] sm:$0xf]
        %v8075 = vld [vmem:[#allocation4 + $0x98] sm:$0xf]
        %v8076 = vld [vmem:[#allocation4 + $0x9c] sm:$0x3]
        %v8077 = vld [vmem:[#allocation4 + $0xa4] sm:$0xf]
        %v8078 = vld [vmem:[#allocation4 + $0xa8] sm:$0xf]
        %v8079 = vld [vmem:[#allocation4 + $0xac] sm:$0xf]
        %v8080 = vld [vmem:[#allocation4 + $0xb0] sm:$0x3]
        %v8081 = vld [vmem:[#allocation4 + $0xb8] sm:$0xf]
        %v8082 = vld [vmem:[#allocation4 + $0xbc] sm:$0xf]
        %v8083 = vld [vmem:[#allocation4 + $0xc0] sm:$0xf]
        %v8084 = vld [vmem:[#allocation4 + $0xc4] sm:$0x3]
        %v8085 = vld [vmem:[#allocation4 + $0xcc] sm:$0xf]
        %v8086 = vld [vmem:[#allocation4 + $0xd0] sm:$0xf]
        %v8087 = vld [vmem:[#allocation4 + $0xd4] sm:$0xf]
        %v8088 = vld [vmem:[#allocation4 + $0xd8] sm:$0x3]
        %v8089 = vld [vmem:[#allocation4 + $0xe0] sm:$0xf]
        %v8090 = vld [vmem:[#allocation4 + $0xe4] sm:$0xf]
        %v8091 = vld [vmem:[#allocation4 + $0xe8] sm:$0xf]
        %v8092 = vld [vmem:[#allocation4 + $0xec] sm:$0x3]
        %v8093 = vld [vmem:[#allocation4 + $0xf4] sm:$0xf]
        %v8094 = vld [vmem:[#allocation4 + $0xf8] sm:$0xf]
        %v8095 = vld [vmem:[#allocation4 + $0xfc] sm:$0xf]
        %v8096 = vld [vmem:[#allocation4 + $0x100] sm:$0x3]
        %v8097 = vld [vmem:[#allocation4 + $0x108] sm:$0xf]
        %v8098 = vld [vmem:[#allocation4 + $0x10c] sm:$0xf]
        %v8099 = vld [vmem:[#allocation4 + $0x110] sm:$0xf]
        %v8100 = vld [vmem:[#allocation4 + $0x114] sm:$0x3]
        %v8101 = vld [vmem:[#allocation4 + $0x11c] sm:$0xf]
        %v8102 = vld [vmem:[#allocation4 + $0x120] sm:$0xf]
        %v8103 = vld [vmem:[#allocation4 + $0x124] sm:$0xf]
        %v8104 = vld [vmem:[#allocation4 + $0x128] sm:$0x3]
        %v8105 = vld [vmem:[#allocation4 + $0x130] sm:$0xf]
        %v8106 = vld [vmem:[#allocation4 + $0x134] sm:$0xf]
        %v8107 = vld [vmem:[#allocation4 + $0x138] sm:$0xf]
        %v8108 = vld [vmem:[#allocation4 + $0x13c] sm:$0x3]
        %v8109 = vld [vmem:[#allocation4 + $0x144] sm:$0xf]
        %v8110 = vld [vmem:[#allocation4 + $0x148] sm:$0xf]
        %v8111 = vld [vmem:[#allocation4 + $0x14c] sm:$0xf]
        %v8112 = vld [vmem:[#allocation4 + $0x150] sm:$0x3]
        %v8113 = vld [vmem:[#allocation4 + $0x158] sm:$0xf]
        %v8114 = vld [vmem:[#allocation4 + $0x15c] sm:$0xf]
        %v8115 = vld [vmem:[#allocation4 + $0x160] sm:$0xf]
        %v8116 = vld [vmem:[#allocation4 + $0x164] sm:$0x3]
        %v8117 = vld [vmem:[#allocation4 + $0x16c] sm:$0xf]
        %v8118 = vld [vmem:[#allocation4 + $0x170] sm:$0xf]
        %v8119 = vld [vmem:[#allocation4 + $0x174] sm:$0xf]
        %v8120 = vld [vmem:[#allocation4 + $0x178] sm:$0x3]
        %v8121 = vld [vmem:[#allocation4 + $0x180] sm:$0xf]
        %v8122 = vld [vmem:[#allocation4 + $0x184] sm:$0xf]
        %v8123 = vld [vmem:[#allocation4 + $0x188] sm:$0xf]
        %v8124 = vld [vmem:[#allocation4 + $0x18c] sm:$0x3]
        %v8185 = vunpack.c.l.b16 %v8045
        %v8186 = vunpack.c.l.b16 %v8046
        %v8187 = vunpack.c.l.b16 %v8047
        %v8188 = vunpack.c.l.b16 %v8049
        %v8189 = vunpack.c.l.b16 %v8050
        %v8190 = vunpack.c.l.b16 %v8051
        %v8191 = vunpack.c.l.b16 %v8053
        %v8192 = vunpack.c.l.b16 %v8054
        %v8193 = vunpack.c.l.b16 %v8055
        %v8194 = vunpack.c.l.b16 %v8057
        %v8195 = vunpack.c.l.b16 %v8058
        %v8196 = vunpack.c.l.b16 %v8059
        %v8197 = vunpack.c.l.b16 %v8061
        %v8198 = vunpack.c.l.b16 %v8062
        %v8199 = vunpack.c.l.b16 %v8063
        %v8200 = vunpack.c.l.b16 %v8065
        %v8201 = vunpack.c.l.b16 %v8066
        %v8202 = vunpack.c.l.b16 %v8067
        %v8203 = vunpack.c.l.b16 %v8069
        %v8204 = vunpack.c.l.b16 %v8070
        %v8205 = vunpack.c.l.b16 %v8071
        %v8206 = vunpack.c.l.b16 %v8073
        %v8207 = vunpack.c.l.b16 %v8074
        %v8208 = vunpack.c.l.b16 %v8075
        %v8209 = vunpack.c.l.b16 %v8077
        %v8210 = vunpack.c.l.b16 %v8078
        %v8211 = vunpack.c.l.b16 %v8079
        %v8212 = vunpack.c.l.b16 %v8081
        %v8213 = vunpack.c.l.b16 %v8082
        %v8214 = vunpack.c.l.b16 %v8083
        %v8215 = vunpack.c.l.b16 %v8085
        %v8216 = vunpack.c.l.b16 %v8086
        %v8217 = vunpack.c.l.b16 %v8087
        %v8218 = vunpack.c.l.b16 %v8089
        %v8219 = vunpack.c.l.b16 %v8090
        %v8220 = vunpack.c.l.b16 %v8091
        %v8221 = vunpack.c.l.b16 %v8093
        %v8222 = vunpack.c.l.b16 %v8094
        %v8223 = vunpack.c.l.b16 %v8095
        %v8224 = vunpack.c.l.b16 %v8097
        %v8225 = vunpack.c.l.b16 %v8098
        %v8226 = vunpack.c.l.b16 %v8099
        %v8227 = vunpack.c.l.b16 %v8101
        %v8228 = vunpack.c.l.b16 %v8102
        %v8229 = vunpack.c.l.b16 %v8103
        %v8230 = vunpack.c.l.b16 %v8105
        %v8231 = vunpack.c.l.b16 %v8106
        %v8232 = vunpack.c.l.b16 %v8107
        %v8233 = vunpack.c.l.b16 %v8109
        %v8234 = vunpack.c.l.b16 %v8110
        %v8235 = vunpack.c.l.b16 %v8111
        %v8236 = vunpack.c.l.b16 %v8113
        %v8237 = vunpack.c.l.b16 %v8114
        %v8238 = vunpack.c.l.b16 %v8115
        %v8239 = vunpack.c.l.b16 %v8117
        %v8240 = vunpack.c.l.b16 %v8118
        %v8241 = vunpack.c.l.b16 %v8119
        %v8242 = vunpack.c.l.b16 %v8121
        %v8243 = vunpack.c.l.b16 %v8122
        %v8244 = vunpack.c.l.b16 %v8123
        %v8245 = vpack.c.b16 %v8186, %v8185
        %v8246 = vpack.c.b16 %v8187, %v8187
        %v8247 = vpack.c.b16 %v8189, %v8188
        %v8248 = vpack.c.b16 %v8190, %v8190
        %v8249 = vpack.c.b16 %v8192, %v8191
        %v8250 = vpack.c.b16 %v8193, %v8193
        %v8251 = vpack.c.b16 %v8195, %v8194
        %v8252 = vpack.c.b16 %v8196, %v8196
        %v8253 = vpack.c.b16 %v8198, %v8197
        %v8254 = vpack.c.b16 %v8199, %v8199
        %v8255 = vpack.c.b16 %v8201, %v8200
        %v8256 = vpack.c.b16 %v8202, %v8202
        %v8257 = vpack.c.b16 %v8204, %v8203
        %v8258 = vpack.c.b16 %v8205, %v8205
        %v8259 = vpack.c.b16 %v8207, %v8206
        %v8260 = vpack.c.b16 %v8208, %v8208
        %v8261 = vpack.c.b16 %v8210, %v8209
        %v8262 = vpack.c.b16 %v8211, %v8211
        %v8263 = vpack.c.b16 %v8213, %v8212
        %v8264 = vpack.c.b16 %v8214, %v8214
        %v8265 = vpack.c.b16 %v8216, %v8215
        %v8266 = vpack.c.b16 %v8217, %v8217
        %v8267 = vpack.c.b16 %v8219, %v8218
        %v8268 = vpack.c.b16 %v8220, %v8220
        %v8269 = vpack.c.b16 %v8222, %v8221
        %v8270 = vpack.c.b16 %v8223, %v8223
        %v8271 = vpack.c.b16 %v8225, %v8224
        %v8272 = vpack.c.b16 %v8226, %v8226
        %v8273 = vpack.c.b16 %v8228, %v8227
        %v8274 = vpack.c.b16 %v8229, %v8229
        %v8275 = vpack.c.b16 %v8231, %v8230
        %v8276 = vpack.c.b16 %v8232, %v8232
        %v8277 = vpack.c.b16 %v8234, %v8233
        %v8278 = vpack.c.b16 %v8235, %v8235
        %v8279 = vpack.c.b16 %v8237, %v8236
        %v8280 = vpack.c.b16 %v8238, %v8238
        %v8281 = vpack.c.b16 %v8240, %v8239
        %v8282 = vpack.c.b16 %v8241, %v8241
        %v8283 = vpack.c.b16 %v8243, %v8242
        %v8284 = vpack.c.b16 %v8244, %v8244
        %vm8285 = vsmask.f32 7424
        %v8287 = vshrl.u32 %v8245, 16
        %v8289 = vshll.u32 %v8245, 16
        %v8291 = vrot.slane %v8289, 1
        %v8292 = vor.u32 %v8287, %v8291
        %v8294 = vshll.u32 %v8246, 16
        %v8296 = vrot.slane %v8294, 1
        %v8297 = vsel %vm8285, %v8292, %v8296
        %v8298 = vshrl.u32 %v8246, 16
        %v8300 = vor.u32 %v8298, %v8296
        %v8302 = vshrl.u32 %v8247, 16
        %v8304 = vshll.u32 %v8247, 16
        %v8306 = vrot.slane %v8304, 1
        %v8307 = vor.u32 %v8302, %v8306
        %v8309 = vshll.u32 %v8248, 16
        %v8311 = vrot.slane %v8309, 1
        %v8312 = vsel %vm8285, %v8307, %v8311
        %v8313 = vshrl.u32 %v8248, 16
        %v8315 = vor.u32 %v8313, %v8311
        %v8317 = vshrl.u32 %v8249, 16
        %v8319 = vshll.u32 %v8249, 16
        %v8321 = vrot.slane %v8319, 1
        %v8322 = vor.u32 %v8317, %v8321
        %v8324 = vshll.u32 %v8250, 16
        %v8326 = vrot.slane %v8324, 1
        %v8327 = vsel %vm8285, %v8322, %v8326
        %v8328 = vshrl.u32 %v8250, 16
        %v8330 = vor.u32 %v8328, %v8326
        %v8332 = vshrl.u32 %v8251, 16
        %v8334 = vshll.u32 %v8251, 16
        %v8336 = vrot.slane %v8334, 1
        %v8337 = vor.u32 %v8332, %v8336
        %v8339 = vshll.u32 %v8252, 16
        %v8341 = vrot.slane %v8339, 1
        %v8342 = vsel %vm8285, %v8337, %v8341
        %v8343 = vshrl.u32 %v8252, 16
        %v8345 = vor.u32 %v8343, %v8341
        %v8347 = vshrl.u32 %v8253, 16
        %v8349 = vshll.u32 %v8253, 16
        %v8351 = vrot.slane %v8349, 1
        %v8352 = vor.u32 %v8347, %v8351
        %v8354 = vshll.u32 %v8254, 16
        %v8356 = vrot.slane %v8354, 1
        %v8357 = vsel %vm8285, %v8352, %v8356
        %v8358 = vshrl.u32 %v8254, 16
        %v8360 = vor.u32 %v8358, %v8356
        %v8362 = vshrl.u32 %v8255, 16
        %v8364 = vshll.u32 %v8255, 16
        %v8366 = vrot.slane %v8364, 1
        %v8367 = vor.u32 %v8362, %v8366
        %v8369 = vshll.u32 %v8256, 16
        %v8371 = vrot.slane %v8369, 1
        %v8372 = vsel %vm8285, %v8367, %v8371
        %v8373 = vshrl.u32 %v8256, 16
        %v8375 = vor.u32 %v8373, %v8371
        %v8377 = vshrl.u32 %v8257, 16
        %v8379 = vshll.u32 %v8257, 16
        %v8381 = vrot.slane %v8379, 1
        %v8382 = vor.u32 %v8377, %v8381
        %v8384 = vshll.u32 %v8258, 16
        %v8386 = vrot.slane %v8384, 1
        %v8387 = vsel %vm8285, %v8382, %v8386
        %v8388 = vshrl.u32 %v8258, 16
        %v8390 = vor.u32 %v8388, %v8386
        %v8392 = vshrl.u32 %v8259, 16
        %v8394 = vshll.u32 %v8259, 16
        %v8396 = vrot.slane %v8394, 1
        %v8397 = vor.u32 %v8392, %v8396
        %v8399 = vshll.u32 %v8260, 16
        %v8401 = vrot.slane %v8399, 1
        %v8402 = vsel %vm8285, %v8397, %v8401
        %v8403 = vshrl.u32 %v8260, 16
        %v8405 = vor.u32 %v8403, %v8401
        %v8407 = vshrl.u32 %v8261, 16
        %v8409 = vshll.u32 %v8261, 16
        %v8411 = vrot.slane %v8409, 1
        %v8412 = vor.u32 %v8407, %v8411
        %v8414 = vshll.u32 %v8262, 16
        %v8416 = vrot.slane %v8414, 1
        %v8417 = vsel %vm8285, %v8412, %v8416
        %v8418 = vshrl.u32 %v8262, 16
        %v8420 = vor.u32 %v8418, %v8416
        %v8422 = vshrl.u32 %v8263, 16
        %v8424 = vshll.u32 %v8263, 16
        %v8426 = vrot.slane %v8424, 1
        %v8427 = vor.u32 %v8422, %v8426
        %v8429 = vshll.u32 %v8264, 16
        %v8431 = vrot.slane %v8429, 1
        %v8432 = vsel %vm8285, %v8427, %v8431
        %v8433 = vshrl.u32 %v8264, 16
        %v8435 = vor.u32 %v8433, %v8431
        %v8437 = vshrl.u32 %v8265, 16
        %v8439 = vshll.u32 %v8265, 16
        %v8441 = vrot.slane %v8439, 1
        %v8442 = vor.u32 %v8437, %v8441
        %v8444 = vshll.u32 %v8266, 16
        %v8446 = vrot.slane %v8444, 1
        %v8447 = vsel %vm8285, %v8442, %v8446
        %v8448 = vshrl.u32 %v8266, 16
        %v8450 = vor.u32 %v8448, %v8446
        %v8452 = vshrl.u32 %v8267, 16
        %v8454 = vshll.u32 %v8267, 16
        %v8456 = vrot.slane %v8454, 1
        %v8457 = vor.u32 %v8452, %v8456
        %v8459 = vshll.u32 %v8268, 16
        %v8461 = vrot.slane %v8459, 1
        %v8462 = vsel %vm8285, %v8457, %v8461
        %v8463 = vshrl.u32 %v8268, 16
        %v8465 = vor.u32 %v8463, %v8461
        %v8467 = vshrl.u32 %v8269, 16
        %v8469 = vshll.u32 %v8269, 16
        %v8471 = vrot.slane %v8469, 1
        %v8472 = vor.u32 %v8467, %v8471
        %v8474 = vshll.u32 %v8270, 16
        %v8476 = vrot.slane %v8474, 1
        %v8477 = vsel %vm8285, %v8472, %v8476
        %v8478 = vshrl.u32 %v8270, 16
        %v8480 = vor.u32 %v8478, %v8476
        %v8482 = vshrl.u32 %v8271, 16
        %v8484 = vshll.u32 %v8271, 16
        %v8486 = vrot.slane %v8484, 1
        %v8487 = vor.u32 %v8482, %v8486
        %v8489 = vshll.u32 %v8272, 16
        %v8491 = vrot.slane %v8489, 1
        %v8492 = vsel %vm8285, %v8487, %v8491
        %v8493 = vshrl.u32 %v8272, 16
        %v8495 = vor.u32 %v8493, %v8491
        %v8497 = vshrl.u32 %v8273, 16
        %v8499 = vshll.u32 %v8273, 16
        %v8501 = vrot.slane %v8499, 1
        %v8502 = vor.u32 %v8497, %v8501
        %v8504 = vshll.u32 %v8274, 16
        %v8506 = vrot.slane %v8504, 1
        %v8507 = vsel %vm8285, %v8502, %v8506
        %v8508 = vshrl.u32 %v8274, 16
        %v8510 = vor.u32 %v8508, %v8506
        %v8512 = vshrl.u32 %v8275, 16
        %v8514 = vshll.u32 %v8275, 16
        %v8516 = vrot.slane %v8514, 1
        %v8517 = vor.u32 %v8512, %v8516
        %v8519 = vshll.u32 %v8276, 16
        %v8521 = vrot.slane %v8519, 1
        %v8522 = vsel %vm8285, %v8517, %v8521
        %v8523 = vshrl.u32 %v8276, 16
        %v8525 = vor.u32 %v8523, %v8521
        %v8527 = vshrl.u32 %v8277, 16
        %v8529 = vshll.u32 %v8277, 16
        %v8531 = vrot.slane %v8529, 1
        %v8532 = vor.u32 %v8527, %v8531
        %v8534 = vshll.u32 %v8278, 16
        %v8536 = vrot.slane %v8534, 1
        %v8537 = vsel %vm8285, %v8532, %v8536
        %v8538 = vshrl.u32 %v8278, 16
        %v8540 = vor.u32 %v8538, %v8536
        %v8542 = vshrl.u32 %v8279, 16
        %v8544 = vshll.u32 %v8279, 16
        %v8546 = vrot.slane %v8544, 1
        %v8547 = vor.u32 %v8542, %v8546
        %v8549 = vshll.u32 %v8280, 16
        %v8551 = vrot.slane %v8549, 1
        %v8552 = vsel %vm8285, %v8547, %v8551
        %v8553 = vshrl.u32 %v8280, 16
        %v8555 = vor.u32 %v8553, %v8551
        %v8557 = vshrl.u32 %v8281, 16
        %v8559 = vshll.u32 %v8281, 16
        %v8561 = vrot.slane %v8559, 1
        %v8562 = vor.u32 %v8557, %v8561
        %v8564 = vshll.u32 %v8282, 16
        %v8566 = vrot.slane %v8564, 1
        %v8567 = vsel %vm8285, %v8562, %v8566
        %v8568 = vshrl.u32 %v8282, 16
        %v8570 = vor.u32 %v8568, %v8566
        %v8572 = vshrl.u32 %v8283, 16
        %v8574 = vshll.u32 %v8283, 16
        %v8576 = vrot.slane %v8574, 1
        %v8577 = vor.u32 %v8572, %v8576
        %v8579 = vshll.u32 %v8284, 16
        %v8581 = vrot.slane %v8579, 1
        %v8582 = vsel %vm8285, %v8577, %v8581
        %v8583 = vshrl.u32 %v8284, 16
        %v8585 = vor.u32 %v8583, %v8581
        %8586 = vrot.lane.b32.xlu0 %v8297, 48
        %v8587 = vpop.permute.xlu0 %8586
        %8588 = vrot.lane.b32.xlu0 %v8300, 48
        %v8589 = vpop.permute.xlu0 %8588
        %8590 = vrot.lane.b32.xlu0 %v8312, 48
        %v8591 = vpop.permute.xlu0 %8590
        %8592 = vrot.lane.b32.xlu0 %v8315, 48
        %v8593 = vpop.permute.xlu0 %8592
        %8594 = vrot.lane.b32.xlu0 %v8327, 48
        %v8595 = vpop.permute.xlu0 %8594
        %8596 = vrot.lane.b32.xlu0 %v8330, 48
        %v8597 = vpop.permute.xlu0 %8596
        %8598 = vrot.lane.b32.xlu0 %v8342, 48
        %v8599 = vpop.permute.xlu0 %8598
        %8600 = vrot.lane.b32.xlu0 %v8345, 48
        %v8601 = vpop.permute.xlu0 %8600
        %8602 = vrot.lane.b32.xlu0 %v8357, 48
        %v8603 = vpop.permute.xlu0 %8602
        %8604 = vrot.lane.b32.xlu0 %v8360, 48
        %v8605 = vpop.permute.xlu0 %8604
        %8606 = vrot.lane.b32.xlu0 %v8372, 48
        %v8607 = vpop.permute.xlu0 %8606
        %8608 = vrot.lane.b32.xlu0 %v8375, 48
        %v8609 = vpop.permute.xlu0 %8608
        %8610 = vrot.lane.b32.xlu0 %v8387, 48
        %v8611 = vpop.permute.xlu0 %8610
        %8612 = vrot.lane.b32.xlu0 %v8390, 48
        %v8613 = vpop.permute.xlu0 %8612
        %8614 = vrot.lane.b32.xlu0 %v8402, 48
        %v8615 = vpop.permute.xlu0 %8614
        %8616 = vrot.lane.b32.xlu0 %v8405, 48
        %v8617 = vpop.permute.xlu0 %8616
        %8618 = vrot.lane.b32.xlu0 %v8417, 48
        %v8619 = vpop.permute.xlu0 %8618
        %8620 = vrot.lane.b32.xlu0 %v8420, 48
        %v8621 = vpop.permute.xlu0 %8620
        %8622 = vrot.lane.b32.xlu0 %v8432, 48
        %v8623 = vpop.permute.xlu0 %8622
        %8624 = vrot.lane.b32.xlu0 %v8435, 48
        %v8625 = vpop.permute.xlu0 %8624
        %8626 = vrot.lane.b32.xlu0 %v8447, 48
        %v8627 = vpop.permute.xlu0 %8626
        %8628 = vrot.lane.b32.xlu0 %v8450, 48
        %v8629 = vpop.permute.xlu0 %8628
        %8630 = vrot.lane.b32.xlu0 %v8462, 48
        %v8631 = vpop.permute.xlu0 %8630
        %8632 = vrot.lane.b32.xlu0 %v8465, 48
        %v8633 = vpop.permute.xlu0 %8632
        %8634 = vrot.lane.b32.xlu0 %v8477, 48
        %v8635 = vpop.permute.xlu0 %8634
        %8636 = vrot.lane.b32.xlu0 %v8480, 48
        %v8637 = vpop.permute.xlu0 %8636
        %8638 = vrot.lane.b32.xlu0 %v8492, 48
        %v8639 = vpop.permute.xlu0 %8638
        %8640 = vrot.lane.b32.xlu0 %v8495, 48
        %v8641 = vpop.permute.xlu0 %8640
        %8642 = vrot.lane.b32.xlu0 %v8507, 48
        %v8643 = vpop.permute.xlu0 %8642
        %8644 = vrot.lane.b32.xlu0 %v8510, 48
        %v8645 = vpop.permute.xlu0 %8644
        %8646 = vrot.lane.b32.xlu0 %v8522, 48
        %v8647 = vpop.permute.xlu0 %8646
        %8648 = vrot.lane.b32.xlu0 %v8525, 48
        %v8649 = vpop.permute.xlu0 %8648
        %8650 = vrot.lane.b32.xlu0 %v8537, 48
        %v8651 = vpop.permute.xlu0 %8650
        %8652 = vrot.lane.b32.xlu0 %v8540, 48
        %v8653 = vpop.permute.xlu0 %8652
        %8654 = vrot.lane.b32.xlu0 %v8552, 48
        %v8655 = vpop.permute.xlu0 %8654
        %8656 = vrot.lane.b32.xlu0 %v8555, 48
        %v8657 = vpop.permute.xlu0 %8656
        %8658 = vrot.lane.b32.xlu0 %v8567, 48
        %v8659 = vpop.permute.xlu0 %8658
        %8660 = vrot.lane.b32.xlu0 %v8570, 48
        %v8661 = vpop.permute.xlu0 %8660
        %8662 = vrot.lane.b32.xlu0 %v8582, 48
        %v8663 = vpop.permute.xlu0 %8662
        %8664 = vrot.lane.b32.xlu0 %v8585, 48
        %v8665 = vpop.permute.xlu0 %8664
        %v8666 = vpack.c.b16 %v8187, %v8186
        %v8667 = vpack.c.b16 %v8190, %v8189
        %v8668 = vpack.c.b16 %v8193, %v8192
        %v8669 = vpack.c.b16 %v8196, %v8195
        %v8670 = vpack.c.b16 %v8199, %v8198
        %v8671 = vpack.c.b16 %v8202, %v8201
        %v8672 = vpack.c.b16 %v8205, %v8204
        %v8673 = vpack.c.b16 %v8208, %v8207
        %v8674 = vpack.c.b16 %v8211, %v8210
        %v8675 = vpack.c.b16 %v8214, %v8213
        %v8676 = vpack.c.b16 %v8217, %v8216
        %v8677 = vpack.c.b16 %v8220, %v8219
        %v8678 = vpack.c.b16 %v8223, %v8222
        %v8679 = vpack.c.b16 %v8226, %v8225
        %v8680 = vpack.c.b16 %v8229, %v8228
        %v8681 = vpack.c.b16 %v8232, %v8231
        %v8682 = vpack.c.b16 %v8235, %v8234
        %v8683 = vpack.c.b16 %v8238, %v8237
        %v8684 = vpack.c.b16 %v8241, %v8240
        %v8685 = vpack.c.b16 %v8244, %v8243
        %v8686 = vrot.slane %v8666, 5
        %v8687 = vrot.slane %v8667, 5
        %v8688 = vrot.slane %v8668, 5
        %v8689 = vrot.slane %v8669, 5
        %v8690 = vrot.slane %v8670, 5
        %v8691 = vrot.slane %v8671, 5
        %v8692 = vrot.slane %v8672, 5
        %v8693 = vrot.slane %v8673, 5
        %v8694 = vrot.slane %v8674, 5
        %v8695 = vrot.slane %v8675, 5
        %v8696 = vrot.slane %v8676, 5
        %v8697 = vrot.slane %v8677, 5
        %v8698 = vrot.slane %v8678, 5
        %v8699 = vrot.slane %v8679, 5
        %v8700 = vrot.slane %v8680, 5
        %v8701 = vrot.slane %v8681, 5
        %v8702 = vrot.slane %v8682, 5
        %v8703 = vrot.slane %v8683, 5
        %v8704 = vrot.slane %v8684, 5
        %v8705 = vrot.slane %v8685, 5
        %8706 = vrot.lane.b32.xlu0 %v8686, 96
        %v8707 = vpop.permute.xlu0 %8706
        %8708 = vrot.lane.b32.xlu0 %v8687, 96
        %v8709 = vpop.permute.xlu0 %8708
        %8710 = vrot.lane.b32.xlu0 %v8688, 96
        %v8711 = vpop.permute.xlu0 %8710
        %8712 = vrot.lane.b32.xlu0 %v8689, 96
        %v8713 = vpop.permute.xlu0 %8712
        %8714 = vrot.lane.b32.xlu0 %v8690, 96
        %v8715 = vpop.permute.xlu0 %8714
        %8716 = vrot.lane.b32.xlu0 %v8691, 96
        %v8717 = vpop.permute.xlu0 %8716
        %8718 = vrot.lane.b32.xlu0 %v8692, 96
        %v8719 = vpop.permute.xlu0 %8718
        %8720 = vrot.lane.b32.xlu0 %v8693, 96
        %v8721 = vpop.permute.xlu0 %8720
        %8722 = vrot.lane.b32.xlu0 %v8694, 96
        %v8723 = vpop.permute.xlu0 %8722
        %8724 = vrot.lane.b32.xlu0 %v8695, 96
        %v8725 = vpop.permute.xlu0 %8724
        %8726 = vrot.lane.b32.xlu0 %v8696, 96
        %v8727 = vpop.permute.xlu0 %8726
        %8728 = vrot.lane.b32.xlu0 %v8697, 96
        %v8729 = vpop.permute.xlu0 %8728
        %8730 = vrot.lane.b32.xlu0 %v8698, 96
        %v8731 = vpop.permute.xlu0 %8730
        %8732 = vrot.lane.b32.xlu0 %v8699, 96
        %v8733 = vpop.permute.xlu0 %8732
        %8734 = vrot.lane.b32.xlu0 %v8700, 96
        %v8735 = vpop.permute.xlu0 %8734
        %8736 = vrot.lane.b32.xlu0 %v8701, 96
        %v8737 = vpop.permute.xlu0 %8736
        %8738 = vrot.lane.b32.xlu0 %v8702, 96
        %v8739 = vpop.permute.xlu0 %8738
        %8740 = vrot.lane.b32.xlu0 %v8703, 96
        %v8741 = vpop.permute.xlu0 %8740
        %8742 = vrot.lane.b32.xlu0 %v8704, 96
        %v8743 = vpop.permute.xlu0 %8742
        %8744 = vrot.lane.b32.xlu0 %v8705, 96
        %v8745 = vpop.permute.xlu0 %8744
        %v8766 = vunpack.c.l.b16 %v8048
        %v8767 = vunpack.c.l.b16 %v8052
        %v8768 = vunpack.c.l.b16 %v8056
        %v8769 = vunpack.c.l.b16 %v8060
        %v8770 = vunpack.c.l.b16 %v8064
        %v8771 = vunpack.c.l.b16 %v8068
        %v8772 = vunpack.c.l.b16 %v8072
        %v8773 = vunpack.c.l.b16 %v8076
        %v8774 = vunpack.c.l.b16 %v8080
        %v8775 = vunpack.c.l.b16 %v8084
        %v8776 = vunpack.c.l.b16 %v8088
        %v8777 = vunpack.c.l.b16 %v8092
        %v8778 = vunpack.c.l.b16 %v8096
        %v8779 = vunpack.c.l.b16 %v8100
        %v8780 = vunpack.c.l.b16 %v8104
        %v8781 = vunpack.c.l.b16 %v8108
        %v8782 = vunpack.c.l.b16 %v8112
        %v8783 = vunpack.c.l.b16 %v8116
        %v8784 = vunpack.c.l.b16 %v8120
        %v8785 = vunpack.c.l.b16 %v8124
        %v8786 = vpack.c.b16 %v8766, %v8766
        %v8787 = vpack.c.b16 %v8767, %v8767
        %v8788 = vpack.c.b16 %v8768, %v8768
        %v8789 = vpack.c.b16 %v8769, %v8769
        %v8790 = vpack.c.b16 %v8770, %v8770
        %v8791 = vpack.c.b16 %v8771, %v8771
        %v8792 = vpack.c.b16 %v8772, %v8772
        %v8793 = vpack.c.b16 %v8773, %v8773
        %v8794 = vpack.c.b16 %v8774, %v8774
        %v8795 = vpack.c.b16 %v8775, %v8775
        %v8796 = vpack.c.b16 %v8776, %v8776
        %v8797 = vpack.c.b16 %v8777, %v8777
        %v8798 = vpack.c.b16 %v8778, %v8778
        %v8799 = vpack.c.b16 %v8779, %v8779
        %v8800 = vpack.c.b16 %v8780, %v8780
        %v8801 = vpack.c.b16 %v8781, %v8781
        %v8802 = vpack.c.b16 %v8782, %v8782
        %v8803 = vpack.c.b16 %v8783, %v8783
        %v8804 = vpack.c.b16 %v8784, %v8784
        %v8805 = vpack.c.b16 %v8785, %v8785
        %vm8806 = vsmask.f32 2304
        %v8808 = vshrl.u32 %v8666, 16
        %v8810 = vrot.slane %v8808, 5
        %v8811 = vshll.u32 %v8666, 16
        %v8813 = vrot.slane %v8811, 6
        %v8814 = vor.u32 %v8810, %v8813
        %v8816 = vshll.u32 %v8786, 16
        %v8818 = vrot.slane %v8816, 6
        %v8819 = vsel %vm8806, %v8814, %v8818
        %v8821 = vshrl.u32 %v8667, 16
        %v8823 = vrot.slane %v8821, 5
        %v8824 = vshll.u32 %v8667, 16
        %v8826 = vrot.slane %v8824, 6
        %v8827 = vor.u32 %v8823, %v8826
        %v8829 = vshll.u32 %v8787, 16
        %v8831 = vrot.slane %v8829, 6
        %v8832 = vsel %vm8806, %v8827, %v8831
        %v8834 = vshrl.u32 %v8668, 16
        %v8836 = vrot.slane %v8834, 5
        %v8837 = vshll.u32 %v8668, 16
        %v8839 = vrot.slane %v8837, 6
        %v8840 = vor.u32 %v8836, %v8839
        %v8842 = vshll.u32 %v8788, 16
        %v8844 = vrot.slane %v8842, 6
        %v8845 = vsel %vm8806, %v8840, %v8844
        %v8847 = vshrl.u32 %v8669, 16
        %v8849 = vrot.slane %v8847, 5
        %v8850 = vshll.u32 %v8669, 16
        %v8852 = vrot.slane %v8850, 6
        %v8853 = vor.u32 %v8849, %v8852
        %v8855 = vshll.u32 %v8789, 16
        %v8857 = vrot.slane %v8855, 6
        %v8858 = vsel %vm8806, %v8853, %v8857
        %v8860 = vshrl.u32 %v8670, 16
        %v8862 = vrot.slane %v8860, 5
        %v8863 = vshll.u32 %v8670, 16
        %v8865 = vrot.slane %v8863, 6
        %v8866 = vor.u32 %v8862, %v8865
        %v8868 = vshll.u32 %v8790, 16
        %v8870 = vrot.slane %v8868, 6
        %v8871 = vsel %vm8806, %v8866, %v8870
        %v8873 = vshrl.u32 %v8671, 16
        %v8875 = vrot.slane %v8873, 5
        %v8876 = vshll.u32 %v8671, 16
        %v8878 = vrot.slane %v8876, 6
        %v8879 = vor.u32 %v8875, %v8878
        %v8881 = vshll.u32 %v8791, 16
        %v8883 = vrot.slane %v8881, 6
        %v8884 = vsel %vm8806, %v8879, %v8883
        %v8886 = vshrl.u32 %v8672, 16
        %v8888 = vrot.slane %v8886, 5
        %v8889 = vshll.u32 %v8672, 16
        %v8891 = vrot.slane %v8889, 6
        %v8892 = vor.u32 %v8888, %v8891
        %v8894 = vshll.u32 %v8792, 16
        %v8896 = vrot.slane %v8894, 6
        %v8897 = vsel %vm8806, %v8892, %v8896
        %v8899 = vshrl.u32 %v8673, 16
        %v8901 = vrot.slane %v8899, 5
        %v8902 = vshll.u32 %v8673, 16
        %v8904 = vrot.slane %v8902, 6
        %v8905 = vor.u32 %v8901, %v8904
        %v8907 = vshll.u32 %v8793, 16
        %v8909 = vrot.slane %v8907, 6
        %v8910 = vsel %vm8806, %v8905, %v8909
        %v8912 = vshrl.u32 %v8674, 16
        %v8914 = vrot.slane %v8912, 5
        %v8915 = vshll.u32 %v8674, 16
        %v8917 = vrot.slane %v8915, 6
        %v8918 = vor.u32 %v8914, %v8917
        %v8920 = vshll.u32 %v8794, 16
        %v8922 = vrot.slane %v8920, 6
        %v8923 = vsel %vm8806, %v8918, %v8922
        %v8925 = vshrl.u32 %v8675, 16
        %v8927 = vrot.slane %v8925, 5
        %v8928 = vshll.u32 %v8675, 16
        %v8930 = vrot.slane %v8928, 6
        %v8931 = vor.u32 %v8927, %v8930
        %v8933 = vshll.u32 %v8795, 16
        %v8935 = vrot.slane %v8933, 6
        %v8936 = vsel %vm8806, %v8931, %v8935
        %v8938 = vshrl.u32 %v8676, 16
        %v8940 = vrot.slane %v8938, 5
        %v8941 = vshll.u32 %v8676, 16
        %v8943 = vrot.slane %v8941, 6
        %v8944 = vor.u32 %v8940, %v8943
        %v8946 = vshll.u32 %v8796, 16
        %v8948 = vrot.slane %v8946, 6
        %v8949 = vsel %vm8806, %v8944, %v8948
        %v8951 = vshrl.u32 %v8677, 16
        %v8953 = vrot.slane %v8951, 5
        %v8954 = vshll.u32 %v8677, 16
        %v8956 = vrot.slane %v8954, 6
        %v8957 = vor.u32 %v8953, %v8956
        %v8959 = vshll.u32 %v8797, 16
        %v8961 = vrot.slane %v8959, 6
        %v8962 = vsel %vm8806, %v8957, %v8961
        %v8964 = vshrl.u32 %v8678, 16
        %v8966 = vrot.slane %v8964, 5
        %v8967 = vshll.u32 %v8678, 16
        %v8969 = vrot.slane %v8967, 6
        %v8970 = vor.u32 %v8966, %v8969
        %v8972 = vshll.u32 %v8798, 16
        %v8974 = vrot.slane %v8972, 6
        %v8975 = vsel %vm8806, %v8970, %v8974
        %v8977 = vshrl.u32 %v8679, 16
        %v8979 = vrot.slane %v8977, 5
        %v8980 = vshll.u32 %v8679, 16
        %v8982 = vrot.slane %v8980, 6
        %v8983 = vor.u32 %v8979, %v8982
        %v8985 = vshll.u32 %v8799, 16
        %v8987 = vrot.slane %v8985, 6
        %v8988 = vsel %vm8806, %v8983, %v8987
        %v8990 = vshrl.u32 %v8680, 16
        %v8992 = vrot.slane %v8990, 5
        %v8993 = vshll.u32 %v8680, 16
        %v8995 = vrot.slane %v8993, 6
        %v8996 = vor.u32 %v8992, %v8995
        %v8998 = vshll.u32 %v8800, 16
        %v9000 = vrot.slane %v8998, 6
        %v9001 = vsel %vm8806, %v8996, %v9000
        %v9003 = vshrl.u32 %v8681, 16
        %v9005 = vrot.slane %v9003, 5
        %v9006 = vshll.u32 %v8681, 16
        %v9008 = vrot.slane %v9006, 6
        %v9009 = vor.u32 %v9005, %v9008
        %v9011 = vshll.u32 %v8801, 16
        %v9013 = vrot.slane %v9011, 6
        %v9014 = vsel %vm8806, %v9009, %v9013
        %v9016 = vshrl.u32 %v8682, 16
        %v9018 = vrot.slane %v9016, 5
        %v9019 = vshll.u32 %v8682, 16
        %v9021 = vrot.slane %v9019, 6
        %v9022 = vor.u32 %v9018, %v9021
        %v9024 = vshll.u32 %v8802, 16
        %v9026 = vrot.slane %v9024, 6
        %v9027 = vsel %vm8806, %v9022, %v9026
        %v9029 = vshrl.u32 %v8683, 16
        %v9031 = vrot.slane %v9029, 5
        %v9032 = vshll.u32 %v8683, 16
        %v9034 = vrot.slane %v9032, 6
        %v9035 = vor.u32 %v9031, %v9034
        %v9037 = vshll.u32 %v8803, 16
        %v9039 = vrot.slane %v9037, 6
        %v9040 = vsel %vm8806, %v9035, %v9039
        %v9042 = vshrl.u32 %v8684, 16
        %v9044 = vrot.slane %v9042, 5
        %v9045 = vshll.u32 %v8684, 16
        %v9047 = vrot.slane %v9045, 6
        %v9048 = vor.u32 %v9044, %v9047
        %v9050 = vshll.u32 %v8804, 16
        %v9052 = vrot.slane %v9050, 6
        %v9053 = vsel %vm8806, %v9048, %v9052
        %v9055 = vshrl.u32 %v8685, 16
        %v9057 = vrot.slane %v9055, 5
        %v9058 = vshll.u32 %v8685, 16
        %v9060 = vrot.slane %v9058, 6
        %v9061 = vor.u32 %v9057, %v9060
        %v9063 = vshll.u32 %v8805, 16
        %v9065 = vrot.slane %v9063, 6
        %v9066 = vsel %vm8806, %v9061, %v9065
        %9067 = vrot.lane.b32.xlu0 %v8814, 16
        %v9068 = vpop.permute.xlu0 %9067
        %9069 = vrot.lane.b32.xlu0 %v8819, 16
        %v9070 = vpop.permute.xlu0 %9069
        %9071 = vrot.lane.b32.xlu0 %v8827, 16
        %v9072 = vpop.permute.xlu0 %9071
        %9073 = vrot.lane.b32.xlu0 %v8832, 16
        %v9074 = vpop.permute.xlu0 %9073
        %9075 = vrot.lane.b32.xlu0 %v8840, 16
        %v9076 = vpop.permute.xlu0 %9075
        %9077 = vrot.lane.b32.xlu0 %v8845, 16
        %v9078 = vpop.permute.xlu0 %9077
        %9079 = vrot.lane.b32.xlu0 %v8853, 16
        %v9080 = vpop.permute.xlu0 %9079
        %9081 = vrot.lane.b32.xlu0 %v8858, 16
        %v9082 = vpop.permute.xlu0 %9081
        %9083 = vrot.lane.b32.xlu0 %v8866, 16
        %v9084 = vpop.permute.xlu0 %9083
        %9085 = vrot.lane.b32.xlu0 %v8871, 16
        %v9086 = vpop.permute.xlu0 %9085
        %9087 = vrot.lane.b32.xlu0 %v8879, 16
        %v9088 = vpop.permute.xlu0 %9087
        %9089 = vrot.lane.b32.xlu0 %v8884, 16
        %v9090 = vpop.permute.xlu0 %9089
        %9091 = vrot.lane.b32.xlu0 %v8892, 16
        %v9092 = vpop.permute.xlu0 %9091
        %9093 = vrot.lane.b32.xlu0 %v8897, 16
        %v9094 = vpop.permute.xlu0 %9093
        %9095 = vrot.lane.b32.xlu0 %v8905, 16
        %v9096 = vpop.permute.xlu0 %9095
        %9097 = vrot.lane.b32.xlu0 %v8910, 16
        %v9098 = vpop.permute.xlu0 %9097
        %9099 = vrot.lane.b32.xlu0 %v8918, 16
        %v9100 = vpop.permute.xlu0 %9099
        %9101 = vrot.lane.b32.xlu0 %v8923, 16
        %v9102 = vpop.permute.xlu0 %9101
        %9103 = vrot.lane.b32.xlu0 %v8931, 16
        %v9104 = vpop.permute.xlu0 %9103
        %9105 = vrot.lane.b32.xlu0 %v8936, 16
        %v9106 = vpop.permute.xlu0 %9105
        %9107 = vrot.lane.b32.xlu0 %v8944, 16
        %v9108 = vpop.permute.xlu0 %9107
        %9109 = vrot.lane.b32.xlu0 %v8949, 16
        %v9110 = vpop.permute.xlu0 %9109
        %9111 = vrot.lane.b32.xlu0 %v8957, 16
        %v9112 = vpop.permute.xlu0 %9111
        %9113 = vrot.lane.b32.xlu0 %v8962, 16
        %v9114 = vpop.permute.xlu0 %9113
        %9115 = vrot.lane.b32.xlu0 %v8970, 16
        %v9116 = vpop.permute.xlu0 %9115
        %9117 = vrot.lane.b32.xlu0 %v8975, 16
        %v9118 = vpop.permute.xlu0 %9117
        %9119 = vrot.lane.b32.xlu0 %v8983, 16
        %v9120 = vpop.permute.xlu0 %9119
        %9121 = vrot.lane.b32.xlu0 %v8988, 16
        %v9122 = vpop.permute.xlu0 %9121
        %9123 = vrot.lane.b32.xlu0 %v8996, 16
        %v9124 = vpop.permute.xlu0 %9123
        %9125 = vrot.lane.b32.xlu0 %v9001, 16
        %v9126 = vpop.permute.xlu0 %9125
        %9127 = vrot.lane.b32.xlu0 %v9009, 16
        %v9128 = vpop.permute.xlu0 %9127
        %9129 = vrot.lane.b32.xlu0 %v9014, 16
        %v9130 = vpop.permute.xlu0 %9129
        %9131 = vrot.lane.b32.xlu0 %v9022, 16
        %v9132 = vpop.permute.xlu0 %9131
        %9133 = vrot.lane.b32.xlu0 %v9027, 16
        %v9134 = vpop.permute.xlu0 %9133
        %9135 = vrot.lane.b32.xlu0 %v9035, 16
        %v9136 = vpop.permute.xlu0 %9135
        %9137 = vrot.lane.b32.xlu0 %v9040, 16
        %v9138 = vpop.permute.xlu0 %9137
        %9139 = vrot.lane.b32.xlu0 %v9048, 16
        %v9140 = vpop.permute.xlu0 %9139
        %9141 = vrot.lane.b32.xlu0 %v9053, 16
        %v9142 = vpop.permute.xlu0 %9141
        %9143 = vrot.lane.b32.xlu0 %v9061, 16
        %v9144 = vpop.permute.xlu0 %9143
        %9145 = vrot.lane.b32.xlu0 %v9066, 16
        %v9146 = vpop.permute.xlu0 %9145
        %vm9147 = vcmask 1041408
        %v9148 = vrot.slane %v8666, 6
        %v9149 = vrot.slane %v8786, 6
        %v9150 = vsel %vm9147, %v9148, %v9149
        %v9151 = vrot.slane %v8667, 6
        %v9152 = vrot.slane %v8787, 6
        %v9153 = vsel %vm9147, %v9151, %v9152
        %v9154 = vrot.slane %v8668, 6
        %v9155 = vrot.slane %v8788, 6
        %v9156 = vsel %vm9147, %v9154, %v9155
        %v9157 = vrot.slane %v8669, 6
        %v9158 = vrot.slane %v8789, 6
        %v9159 = vsel %vm9147, %v9157, %v9158
        %v9160 = vrot.slane %v8670, 6
        %v9161 = vrot.slane %v8790, 6
        %v9162 = vsel %vm9147, %v9160, %v9161
        %v9163 = vrot.slane %v8671, 6
        %v9164 = vrot.slane %v8791, 6
        %v9165 = vsel %vm9147, %v9163, %v9164
        %v9166 = vrot.slane %v8672, 6
        %v9167 = vrot.slane %v8792, 6
        %v9168 = vsel %vm9147, %v9166, %v9167
        %v9169 = vrot.slane %v8673, 6
        %v9170 = vrot.slane %v8793, 6
        %v9171 = vsel %vm9147, %v9169, %v9170
        %v9172 = vrot.slane %v8674, 6
        %v9173 = vrot.slane %v8794, 6
        %v9174 = vsel %vm9147, %v9172, %v9173
        %v9175 = vrot.slane %v8675, 6
        %v9176 = vrot.slane %v8795, 6
        %v9177 = vsel %vm9147, %v9175, %v9176
        %v9178 = vrot.slane %v8676, 6
        %v9179 = vrot.slane %v8796, 6
        %v9180 = vsel %vm9147, %v9178, %v9179
        %v9181 = vrot.slane %v8677, 6
        %v9182 = vrot.slane %v8797, 6
        %v9183 = vsel %vm9147, %v9181, %v9182
        %v9184 = vrot.slane %v8678, 6
        %v9185 = vrot.slane %v8798, 6
        %v9186 = vsel %vm9147, %v9184, %v9185
        %v9187 = vrot.slane %v8679, 6
        %v9188 = vrot.slane %v8799, 6
        %v9189 = vsel %vm9147, %v9187, %v9188
        %v9190 = vrot.slane %v8680, 6
        %v9191 = vrot.slane %v8800, 6
        %v9192 = vsel %vm9147, %v9190, %v9191
        %v9193 = vrot.slane %v8681, 6
        %v9194 = vrot.slane %v8801, 6
        %v9195 = vsel %vm9147, %v9193, %v9194
        %v9196 = vrot.slane %v8682, 6
        %v9197 = vrot.slane %v8802, 6
        %v9198 = vsel %vm9147, %v9196, %v9197
        %v9199 = vrot.slane %v8683, 6
        %v9200 = vrot.slane %v8803, 6
        %v9201 = vsel %vm9147, %v9199, %v9200
        %v9202 = vrot.slane %v8684, 6
        %v9203 = vrot.slane %v8804, 6
        %v9204 = vsel %vm9147, %v9202, %v9203
        %v9205 = vrot.slane %v8685, 6
        %v9206 = vrot.slane %v8805, 6
        %v9207 = vsel %vm9147, %v9205, %v9206
        %9208 = vrot.lane.b32.xlu0 %v9148, 64
        %v9209 = vpop.permute.xlu0 %9208
        %9210 = vrot.lane.b32.xlu0 %v9150, 64
        %v9211 = vpop.permute.xlu0 %9210
        %9212 = vrot.lane.b32.xlu0 %v9151, 64
        %v9213 = vpop.permute.xlu0 %9212
        %9214 = vrot.lane.b32.xlu0 %v9153, 64
        %v9215 = vpop.permute.xlu0 %9214
        %9216 = vrot.lane.b32.xlu0 %v9154, 64
        %v9217 = vpop.permute.xlu0 %9216
        %9218 = vrot.lane.b32.xlu0 %v9156, 64
        %v9219 = vpop.permute.xlu0 %9218
        %9220 = vrot.lane.b32.xlu0 %v9157, 64
        %v9221 = vpop.permute.xlu0 %9220
        %9222 = vrot.lane.b32.xlu0 %v9159, 64
        %v9223 = vpop.permute.xlu0 %9222
        %9224 = vrot.lane.b32.xlu0 %v9160, 64
        %v9225 = vpop.permute.xlu0 %9224
        %9226 = vrot.lane.b32.xlu0 %v9162, 64
        %v9227 = vpop.permute.xlu0 %9226
        %9228 = vrot.lane.b32.xlu0 %v9163, 64
        %v9229 = vpop.permute.xlu0 %9228
        %9230 = vrot.lane.b32.xlu0 %v9165, 64
        %v9231 = vpop.permute.xlu0 %9230
        %9232 = vrot.lane.b32.xlu0 %v9166, 64
        %v9233 = vpop.permute.xlu0 %9232
        %9234 = vrot.lane.b32.xlu0 %v9168, 64
        %v9235 = vpop.permute.xlu0 %9234
        %9236 = vrot.lane.b32.xlu0 %v9169, 64
        %v9237 = vpop.permute.xlu0 %9236
        %9238 = vrot.lane.b32.xlu0 %v9171, 64
        %v9239 = vpop.permute.xlu0 %9238
        %9240 = vrot.lane.b32.xlu0 %v9172, 64
        %v9241 = vpop.permute.xlu0 %9240
        %9242 = vrot.lane.b32.xlu0 %v9174, 64
        %v9243 = vpop.permute.xlu0 %9242
        %9244 = vrot.lane.b32.xlu0 %v9175, 64
        %v9245 = vpop.permute.xlu0 %9244
        %9246 = vrot.lane.b32.xlu0 %v9177, 64
        %v9247 = vpop.permute.xlu0 %9246
        %9248 = vrot.lane.b32.xlu0 %v9178, 64
        %v9249 = vpop.permute.xlu0 %9248
        %9250 = vrot.lane.b32.xlu0 %v9180, 64
        %v9251 = vpop.permute.xlu0 %9250
        %9252 = vrot.lane.b32.xlu0 %v9181, 64
        %v9253 = vpop.permute.xlu0 %9252
        %9254 = vrot.lane.b32.xlu0 %v9183, 64
        %v9255 = vpop.permute.xlu0 %9254
        %9256 = vrot.lane.b32.xlu0 %v9184, 64
        %v9257 = vpop.permute.xlu0 %9256
        %9258 = vrot.lane.b32.xlu0 %v9186, 64
        %v9259 = vpop.permute.xlu0 %9258
        %9260 = vrot.lane.b32.xlu0 %v9187, 64
        %v9261 = vpop.permute.xlu0 %9260
        %9262 = vrot.lane.b32.xlu0 %v9189, 64
        %v9263 = vpop.permute.xlu0 %9262
        %9264 = vrot.lane.b32.xlu0 %v9190, 64
        %v9265 = vpop.permute.xlu0 %9264
        %9266 = vrot.lane.b32.xlu0 %v9192, 64
        %v9267 = vpop.permute.xlu0 %9266
        %9268 = vrot.lane.b32.xlu0 %v9193, 64
        %v9269 = vpop.permute.xlu0 %9268
        %9270 = vrot.lane.b32.xlu0 %v9195, 64
        %v9271 = vpop.permute.xlu0 %9270
        %9272 = vrot.lane.b32.xlu0 %v9196, 64
        %v9273 = vpop.permute.xlu0 %9272
        %9274 = vrot.lane.b32.xlu0 %v9198, 64
        %v9275 = vpop.permute.xlu0 %9274
        %9276 = vrot.lane.b32.xlu0 %v9199, 64
        %v9277 = vpop.permute.xlu0 %9276
        %9278 = vrot.lane.b32.xlu0 %v9201, 64
        %v9279 = vpop.permute.xlu0 %9278
        %9280 = vrot.lane.b32.xlu0 %v9202, 64
        %v9281 = vpop.permute.xlu0 %9280
        %9282 = vrot.lane.b32.xlu0 %v9204, 64
        %v9283 = vpop.permute.xlu0 %9282
        %9284 = vrot.lane.b32.xlu0 %v9205, 64
        %v9285 = vpop.permute.xlu0 %9284
        %9286 = vrot.lane.b32.xlu0 %v9207, 64
        %v9287 = vpop.permute.xlu0 %9286
        %vm9288 = vcmask 392192
        %v9290 = vsel %vm9288, %v8245, %v8587
        %v9292 = vsel %vm9288, %v8246, %v8589
        %v9294 = vsel %vm9288, %v8247, %v8591
        %v9296 = vsel %vm9288, %v8248, %v8593
        %v9298 = vsel %vm9288, %v8249, %v8595
        %v9300 = vsel %vm9288, %v8250, %v8597
        %v9302 = vsel %vm9288, %v8251, %v8599
        %v9304 = vsel %vm9288, %v8252, %v8601
        %v9306 = vsel %vm9288, %v8253, %v8603
        %v9308 = vsel %vm9288, %v8254, %v8605
        %v9310 = vsel %vm9288, %v8255, %v8607
        %v9312 = vsel %vm9288, %v8256, %v8609
        %v9314 = vsel %vm9288, %v8257, %v8611
        %v9316 = vsel %vm9288, %v8258, %v8613
        %v9318 = vsel %vm9288, %v8259, %v8615
        %v9320 = vsel %vm9288, %v8260, %v8617
        %v9322 = vsel %vm9288, %v8261, %v8619
        %v9324 = vsel %vm9288, %v8262, %v8621
        %v9326 = vsel %vm9288, %v8263, %v8623
        %v9328 = vsel %vm9288, %v8264, %v8625
        %v9330 = vsel %vm9288, %v8265, %v8627
        %v9332 = vsel %vm9288, %v8266, %v8629
        %v9334 = vsel %vm9288, %v8267, %v8631
        %v9336 = vsel %vm9288, %v8268, %v8633
        %v9338 = vsel %vm9288, %v8269, %v8635
        %v9340 = vsel %vm9288, %v8270, %v8637
        %v9342 = vsel %vm9288, %v8271, %v8639
        %v9344 = vsel %vm9288, %v8272, %v8641
        %v9346 = vsel %vm9288, %v8273, %v8643
        %v9348 = vsel %vm9288, %v8274, %v8645
        %v9350 = vsel %vm9288, %v8275, %v8647
        %v9352 = vsel %vm9288, %v8276, %v8649
        %v9354 = vsel %vm9288, %v8277, %v8651
        %v9356 = vsel %vm9288, %v8278, %v8653
        %v9358 = vsel %vm9288, %v8279, %v8655
        %v9360 = vsel %vm9288, %v8280, %v8657
        %v9362 = vsel %vm9288, %v8281, %v8659
        %v9364 = vsel %vm9288, %v8282, %v8661
        %v9366 = vsel %vm9288, %v8283, %v8663
        %v9368 = vsel %vm9288, %v8284, %v8665
        %v9370 = vsel %vm5231, %v9290, %v8707
        %v9371 = vsel %vm5231, %v9292, %v8707
        %v9373 = vsel %vm5231, %v9294, %v8709
        %v9374 = vsel %vm5231, %v9296, %v8709
        %v9376 = vsel %vm5231, %v9298, %v8711
        %v9377 = vsel %vm5231, %v9300, %v8711
        %v9379 = vsel %vm5231, %v9302, %v8713
        %v9380 = vsel %vm5231, %v9304, %v8713
        %v9382 = vsel %vm5231, %v9306, %v8715
        %v9383 = vsel %vm5231, %v9308, %v8715
        %v9385 = vsel %vm5231, %v9310, %v8717
        %v9386 = vsel %vm5231, %v9312, %v8717
        %v9388 = vsel %vm5231, %v9314, %v8719
        %v9389 = vsel %vm5231, %v9316, %v8719
        %v9391 = vsel %vm5231, %v9318, %v8721
        %v9392 = vsel %vm5231, %v9320, %v8721
        %v9394 = vsel %vm5231, %v9322, %v8723
        %v9395 = vsel %vm5231, %v9324, %v8723
        %v9397 = vsel %vm5231, %v9326, %v8725
        %v9398 = vsel %vm5231, %v9328, %v8725
        %v9400 = vsel %vm5231, %v9330, %v8727
        %v9401 = vsel %vm5231, %v9332, %v8727
        %v9403 = vsel %vm5231, %v9334, %v8729
        %v9404 = vsel %vm5231, %v9336, %v8729
        %v9406 = vsel %vm5231, %v9338, %v8731
        %v9407 = vsel %vm5231, %v9340, %v8731
        %v9409 = vsel %vm5231, %v9342, %v8733
        %v9410 = vsel %vm5231, %v9344, %v8733
        %v9412 = vsel %vm5231, %v9346, %v8735
        %v9413 = vsel %vm5231, %v9348, %v8735
        %v9415 = vsel %vm5231, %v9350, %v8737
        %v9416 = vsel %vm5231, %v9352, %v8737
        %v9418 = vsel %vm5231, %v9354, %v8739
        %v9419 = vsel %vm5231, %v9356, %v8739
        %v9421 = vsel %vm5231, %v9358, %v8741
        %v9422 = vsel %vm5231, %v9360, %v8741
        %v9424 = vsel %vm5231, %v9362, %v8743
        %v9425 = vsel %vm5231, %v9364, %v8743
        %v9427 = vsel %vm5231, %v9366, %v8745
        %v9428 = vsel %vm5231, %v9368, %v8745
        %vm9429 = vcmask 130048
        %v9431 = vsel %vm9429, %v8707, %v9068
        %v9433 = vsel %vm9429, %v8707, %v9070
        %v9435 = vsel %vm9429, %v8709, %v9072
        %v9437 = vsel %vm9429, %v8709, %v9074
        %v9439 = vsel %vm9429, %v8711, %v9076
        %v9441 = vsel %vm9429, %v8711, %v9078
        %v9443 = vsel %vm9429, %v8713, %v9080
        %v9445 = vsel %vm9429, %v8713, %v9082
        %v9447 = vsel %vm9429, %v8715, %v9084
        %v9449 = vsel %vm9429, %v8715, %v9086
        %v9451 = vsel %vm9429, %v8717, %v9088
        %v9453 = vsel %vm9429, %v8717, %v9090
        %v9455 = vsel %vm9429, %v8719, %v9092
        %v9457 = vsel %vm9429, %v8719, %v9094
        %v9459 = vsel %vm9429, %v8721, %v9096
        %v9461 = vsel %vm9429, %v8721, %v9098
        %v9463 = vsel %vm9429, %v8723, %v9100
        %v9465 = vsel %vm9429, %v8723, %v9102
        %v9467 = vsel %vm9429, %v8725, %v9104
        %v9469 = vsel %vm9429, %v8725, %v9106
        %v9471 = vsel %vm9429, %v8727, %v9108
        %v9473 = vsel %vm9429, %v8727, %v9110
        %v9475 = vsel %vm9429, %v8729, %v9112
        %v9477 = vsel %vm9429, %v8729, %v9114
        %v9479 = vsel %vm9429, %v8731, %v9116
        %v9481 = vsel %vm9429, %v8731, %v9118
        %v9483 = vsel %vm9429, %v8733, %v9120
        %v9485 = vsel %vm9429, %v8733, %v9122
        %v9487 = vsel %vm9429, %v8735, %v9124
        %v9489 = vsel %vm9429, %v8735, %v9126
        %v9491 = vsel %vm9429, %v8737, %v9128
        %v9493 = vsel %vm9429, %v8737, %v9130
        %v9495 = vsel %vm9429, %v8739, %v9132
        %v9497 = vsel %vm9429, %v8739, %v9134
        %v9499 = vsel %vm9429, %v8741, %v9136
        %v9501 = vsel %vm9429, %v8741, %v9138
        %v9503 = vsel %vm9429, %v8743, %v9140
        %v9505 = vsel %vm9429, %v8743, %v9142
        %v9507 = vsel %vm9429, %v8745, %v9144
        %v9509 = vsel %vm9429, %v8745, %v9146
        %v9511 = vsel %vm2768, %v9431, %v9209
        %v9513 = vsel %vm2768, %v9433, %v9211
        %v9515 = vsel %vm2768, %v9435, %v9213
        %v9517 = vsel %vm2768, %v9437, %v9215
        %v9519 = vsel %vm2768, %v9439, %v9217
        %v9521 = vsel %vm2768, %v9441, %v9219
        %v9523 = vsel %vm2768, %v9443, %v9221
        %v9525 = vsel %vm2768, %v9445, %v9223
        %v9527 = vsel %vm2768, %v9447, %v9225
        %v9529 = vsel %vm2768, %v9449, %v9227
        %v9531 = vsel %vm2768, %v9451, %v9229
        %v9533 = vsel %vm2768, %v9453, %v9231
        %v9535 = vsel %vm2768, %v9455, %v9233
        %v9537 = vsel %vm2768, %v9457, %v9235
        %v9539 = vsel %vm2768, %v9459, %v9237
        %v9541 = vsel %vm2768, %v9461, %v9239
        %v9543 = vsel %vm2768, %v9463, %v9241
        %v9545 = vsel %vm2768, %v9465, %v9243
        %v9547 = vsel %vm2768, %v9467, %v9245
        %v9549 = vsel %vm2768, %v9469, %v9247
        %v9551 = vsel %vm2768, %v9471, %v9249
        %v9553 = vsel %vm2768, %v9473, %v9251
        %v9555 = vsel %vm2768, %v9475, %v9253
        %v9557 = vsel %vm2768, %v9477, %v9255
        %v9559 = vsel %vm2768, %v9479, %v9257
        %v9561 = vsel %vm2768, %v9481, %v9259
        %v9563 = vsel %vm2768, %v9483, %v9261
        %v9565 = vsel %vm2768, %v9485, %v9263
        %v9567 = vsel %vm2768, %v9487, %v9265
        %v9569 = vsel %vm2768, %v9489, %v9267
        %v9571 = vsel %vm2768, %v9491, %v9269
        %v9573 = vsel %vm2768, %v9493, %v9271
        %v9575 = vsel %vm2768, %v9495, %v9273
        %v9577 = vsel %vm2768, %v9497, %v9275
        %v9579 = vsel %vm2768, %v9499, %v9277
        %v9581 = vsel %vm2768, %v9501, %v9279
        %v9583 = vsel %vm2768, %v9503, %v9281
        %v9585 = vsel %vm2768, %v9505, %v9283
        %v9587 = vsel %vm2768, %v9507, %v9285
        %v9589 = vsel %vm2768, %v9509, %v9287
        %vm9654 = vcmask 1044480
        %v9655 = vrot.slane %v9370, 3
        %v9656 = vrot.slane %v9371, 3
        %v9657 = vsel %vm9654, %v9655, %v9656
        %v9658 = vrot.slane %v9511, 3
        %v9659 = vrot.slane %v9513, 3
        %v9660 = vsel %vm9654, %v9658, %v9659
        %v9661 = vrot.slane %v9373, 3
        %v9662 = vrot.slane %v9374, 3
        %v9663 = vsel %vm9654, %v9661, %v9662
        %v9664 = vrot.slane %v9515, 3
        %v9665 = vrot.slane %v9517, 3
        %v9666 = vsel %vm9654, %v9664, %v9665
        %v9667 = vrot.slane %v9376, 3
        %v9668 = vrot.slane %v9377, 3
        %v9669 = vsel %vm9654, %v9667, %v9668
        %v9670 = vrot.slane %v9519, 3
        %v9671 = vrot.slane %v9521, 3
        %v9672 = vsel %vm9654, %v9670, %v9671
        %v9673 = vrot.slane %v9379, 3
        %v9674 = vrot.slane %v9380, 3
        %v9675 = vsel %vm9654, %v9673, %v9674
        %v9676 = vrot.slane %v9523, 3
        %v9677 = vrot.slane %v9525, 3
        %v9678 = vsel %vm9654, %v9676, %v9677
        %v9679 = vrot.slane %v9382, 3
        %v9680 = vrot.slane %v9383, 3
        %v9681 = vsel %vm9654, %v9679, %v9680
        %v9682 = vrot.slane %v9527, 3
        %v9683 = vrot.slane %v9529, 3
        %v9684 = vsel %vm9654, %v9682, %v9683
        %v9685 = vrot.slane %v9385, 3
        %v9686 = vrot.slane %v9386, 3
        %v9687 = vsel %vm9654, %v9685, %v9686
        %v9688 = vrot.slane %v9531, 3
        %v9689 = vrot.slane %v9533, 3
        %v9690 = vsel %vm9654, %v9688, %v9689
        %v9691 = vrot.slane %v9388, 3
        %v9692 = vrot.slane %v9389, 3
        %v9693 = vsel %vm9654, %v9691, %v9692
        %v9694 = vrot.slane %v9535, 3
        %v9695 = vrot.slane %v9537, 3
        %v9696 = vsel %vm9654, %v9694, %v9695
        %v9697 = vrot.slane %v9391, 3
        %v9698 = vrot.slane %v9392, 3
        %v9699 = vsel %vm9654, %v9697, %v9698
        %v9700 = vrot.slane %v9539, 3
        %v9701 = vrot.slane %v9541, 3
        %v9702 = vsel %vm9654, %v9700, %v9701
        %v9703 = vrot.slane %v9394, 3
        %v9704 = vrot.slane %v9395, 3
        %v9705 = vsel %vm9654, %v9703, %v9704
        %v9706 = vrot.slane %v9543, 3
        %v9707 = vrot.slane %v9545, 3
        %v9708 = vsel %vm9654, %v9706, %v9707
        %v9709 = vrot.slane %v9397, 3
        %v9710 = vrot.slane %v9398, 3
        %v9711 = vsel %vm9654, %v9709, %v9710
        %v9712 = vrot.slane %v9547, 3
        %v9713 = vrot.slane %v9549, 3
        %v9714 = vsel %vm9654, %v9712, %v9713
        %v9715 = vrot.slane %v9400, 3
        %v9716 = vrot.slane %v9401, 3
        %v9717 = vsel %vm9654, %v9715, %v9716
        %v9718 = vrot.slane %v9551, 3
        %v9719 = vrot.slane %v9553, 3
        %v9720 = vsel %vm9654, %v9718, %v9719
        %v9721 = vrot.slane %v9403, 3
        %v9722 = vrot.slane %v9404, 3
        %v9723 = vsel %vm9654, %v9721, %v9722
        %v9724 = vrot.slane %v9555, 3
        %v9725 = vrot.slane %v9557, 3
        %v9726 = vsel %vm9654, %v9724, %v9725
        %v9727 = vrot.slane %v9406, 3
        %v9728 = vrot.slane %v9407, 3
        %v9729 = vsel %vm9654, %v9727, %v9728
        %v9730 = vrot.slane %v9559, 3
        %v9731 = vrot.slane %v9561, 3
        %v9732 = vsel %vm9654, %v9730, %v9731
        %v9733 = vrot.slane %v9409, 3
        %v9734 = vrot.slane %v9410, 3
        %v9735 = vsel %vm9654, %v9733, %v9734
        %v9736 = vrot.slane %v9563, 3
        %v9737 = vrot.slane %v9565, 3
        %v9738 = vsel %vm9654, %v9736, %v9737
        %v9739 = vrot.slane %v9412, 3
        %v9740 = vrot.slane %v9413, 3
        %v9741 = vsel %vm9654, %v9739, %v9740
        %v9742 = vrot.slane %v9567, 3
        %v9743 = vrot.slane %v9569, 3
        %v9744 = vsel %vm9654, %v9742, %v9743
        %v9745 = vrot.slane %v9415, 3
        %v9746 = vrot.slane %v9416, 3
        %v9747 = vsel %vm9654, %v9745, %v9746
        %v9748 = vrot.slane %v9571, 3
        %v9749 = vrot.slane %v9573, 3
        %v9750 = vsel %vm9654, %v9748, %v9749
        %v9767 = vld [vmem:[%s9] sm:$0xf]
        %v9768 = vld [vmem:[%s9 + $0x4] sm:$0xf]
        %v9769 = vld [vmem:[%s9 + $0x8] sm:$0xf]
        %v9770 = vld [vmem:[%s9 + $0xc] sm:$0xf]
        %v9771 = vld [vmem:[%s9 + $0x10] sm:$0xf]
        %v9772 = vld [vmem:[%s9 + $0x14] sm:$0xf]
        %v9773 = vld [vmem:[%s9 + $0x18] sm:$0xf]
        %v9774 = vld [vmem:[%s9 + $0x1c] sm:$0xf]
        %v9775 = vld [vmem:[%s9 + $0x20] sm:$0xf]
        %v9776 = vld [vmem:[%s9 + $0x24] sm:$0xf]
        %v9777 = vld [vmem:[%s9 + $0x28] sm:$0xf]
        %v9778 = vld [vmem:[%s9 + $0x2c] sm:$0xf]
        %v9779 = vld [vmem:[%s9 + $0x30] sm:$0xf]
        %v9780 = vld [vmem:[%s9 + $0x34] sm:$0xf]
        %v9781 = vld [vmem:[%s9 + $0x38] sm:$0xf]
        %v9782 = vld [vmem:[%s9 + $0x3c] sm:$0xf]
        %v9783 = vld [vmem:[%s9 + $0x40] sm:$0xf]
        %v9784 = vld [vmem:[%s9 + $0x44] sm:$0xf]
        %v9785 = vld [vmem:[%s9 + $0x48] sm:$0xf]
        %v9786 = vld [vmem:[%s9 + $0x4c] sm:$0xf]
        %v9787 = vld [vmem:[%s9 + $0x50] sm:$0xf]
        %v9788 = vld [vmem:[%s9 + $0x54] sm:$0xf]
        %v9789 = vld [vmem:[%s9 + $0x58] sm:$0xf]
        %v9790 = vld [vmem:[%s9 + $0x5c] sm:$0xf]
        %v9791 = vld [vmem:[%s9 + $0x60] sm:$0xf]
        %v9792 = vld [vmem:[%s9 + $0x64] sm:$0xf]
        %v9793 = vld [vmem:[%s9 + $0x68] sm:$0xf]
        %v9794 = vld [vmem:[%s9 + $0x6c] sm:$0xf]
        %v9795 = vld [vmem:[%s9 + $0x70] sm:$0xf]
        %v9796 = vld [vmem:[%s9 + $0x74] sm:$0xf]
        %v9801 = vrot.slane %v9418, 3
        %v9802 = vrot.slane %v9419, 3
        %v9803 = vsel %vm9654, %v9801, %v9802
        %v9804 = vrot.slane %v9575, 3
        %v9805 = vrot.slane %v9577, 3
        %v9806 = vsel %vm9654, %v9804, %v9805
        %s9808 = scalar_lea.vmem %s9, 120
        %v9809 = vld [vmem:[%s9808] sm:$0xf]
        %v9810 = vld [vmem:[%s9808 + $0x4] sm:$0xf]
        %v9811 = vld [vmem:[%s9808 + $0x8] sm:$0xf]
        %v9812 = vld [vmem:[%s9808 + $0xc] sm:$0xf]
        %v9813 = vld [vmem:[%s9808 + $0x10] sm:$0xf]
        %v9814 = vld [vmem:[%s9808 + $0x14] sm:$0xf]
        %v9815 = vld [vmem:[%s9808 + $0x18] sm:$0xf]
        %v9816 = vld [vmem:[%s9808 + $0x1c] sm:$0xf]
        %v9817 = vld [vmem:[%s9808 + $0x20] sm:$0xf]
        %v9818 = vld [vmem:[%s9808 + $0x24] sm:$0xf]
        %v9819 = vld [vmem:[%s9808 + $0x28] sm:$0xf]
        %v9820 = vld [vmem:[%s9808 + $0x2c] sm:$0xf]
        %v9821 = vld [vmem:[%s9808 + $0x30] sm:$0xf]
        %v9822 = vld [vmem:[%s9808 + $0x34] sm:$0xf]
        %v9823 = vld [vmem:[%s9808 + $0x38] sm:$0xf]
        %v9824 = vld [vmem:[%s9808 + $0x3c] sm:$0xf]
        %v9825 = vld [vmem:[%s9808 + $0x40] sm:$0xf]
        %v9826 = vld [vmem:[%s9808 + $0x44] sm:$0xf]
        %v9827 = vld [vmem:[%s9808 + $0x48] sm:$0xf]
        %v9828 = vld [vmem:[%s9808 + $0x4c] sm:$0xf]
        %v9829 = vld [vmem:[%s9808 + $0x50] sm:$0xf]
        %v9830 = vld [vmem:[%s9808 + $0x54] sm:$0xf]
        %v9831 = vld [vmem:[%s9808 + $0x58] sm:$0xf]
        %v9832 = vld [vmem:[%s9808 + $0x5c] sm:$0xf]
        %v9833 = vld [vmem:[%s9808 + $0x60] sm:$0xf]
        %v9834 = vld [vmem:[%s9808 + $0x64] sm:$0xf]
        %v9835 = vld [vmem:[%s9808 + $0x68] sm:$0xf]
        %v9836 = vld [vmem:[%s9808 + $0x6c] sm:$0xf]
        %v9837 = vld [vmem:[%s9808 + $0x70] sm:$0xf]
        %v9838 = vld [vmem:[%s9808 + $0x74] sm:$0xf]
        %v9869 = vunpack.c.l.b16 %v9809
        %v9870 = vunpack.c.l.b16 %v9810
        %v9871 = vunpack.c.l.b16 %v9811
        %v9872 = vunpack.c.l.b16 %v9812
        %v9873 = vunpack.c.l.b16 %v9813
        %v9874 = vunpack.c.l.b16 %v9814
        %v9875 = vunpack.c.l.b16 %v9815
        %v9876 = vunpack.c.l.b16 %v9816
        %v9877 = vunpack.c.l.b16 %v9817
        %v9878 = vunpack.c.l.b16 %v9818
        %v9879 = vunpack.c.l.b16 %v9819
        %v9880 = vunpack.c.l.b16 %v9820
        %v9881 = vunpack.c.l.b16 %v9821
        %v9882 = vunpack.c.l.b16 %v9822
        %v9883 = vunpack.c.l.b16 %v9823
        %v9884 = vunpack.c.l.b16 %v9824
        %v9885 = vunpack.c.l.b16 %v9825
        %v9886 = vunpack.c.l.b16 %v9826
        %v9887 = vunpack.c.l.b16 %v9827
        %v9888 = vunpack.c.l.b16 %v9828
        %v9889 = vunpack.c.l.b16 %v9829
        %v9890 = vunpack.c.l.b16 %v9830
        %v9891 = vunpack.c.l.b16 %v9831
        %v9892 = vunpack.c.l.b16 %v9832
        %v9893 = vunpack.c.l.b16 %v9833
        %v9894 = vunpack.c.l.b16 %v9834
        %v9895 = vunpack.c.l.b16 %v9835
        %v9896 = vunpack.c.l.b16 %v9836
        %v9897 = vunpack.c.l.b16 %v9837
        %v9898 = vunpack.c.l.b16 %v9838
        %v9899 = vpack.c.b16 %v9870, %v9869
        %v9900 = vpack.c.b16 %v9872, %v9871
        %v9901 = vpack.c.b16 %v9874, %v9873
        %v9902 = vpack.c.b16 %v9876, %v9875
        %v9903 = vpack.c.b16 %v9878, %v9877
        %v9904 = vpack.c.b16 %v9880, %v9879
        %v9905 = vpack.c.b16 %v9882, %v9881
        %v9906 = vpack.c.b16 %v9884, %v9883
        %v9907 = vpack.c.b16 %v9886, %v9885
        %v9908 = vpack.c.b16 %v9888, %v9887
        %v9909 = vpack.c.b16 %v9890, %v9889
        %v9910 = vpack.c.b16 %v9892, %v9891
        %v9911 = vpack.c.b16 %v9894, %v9893
        %v9912 = vpack.c.b16 %v9896, %v9895
        %v9913 = vpack.c.b16 %v9898, %v9897
        %vm9929 = vcmask 916480
        %v9931 = vsel %vm9929, %v9666, 0
        %v9934 = vsel %vm9929, %v9672, 0
        %v9937 = vsel %vm9929, %v9678, 0
        %v9940 = vsel %vm9929, %v9684, 0
        %v9943 = vsel %vm9929, %v9690, 0
        %v9946 = vsel %vm9929, %v9696, 0
        %v9949 = vsel %vm9929, %v9702, 0
        %v9952 = vsel %vm9929, %v9708, 0
        %v9955 = vsel %vm9929, %v9714, 0
        %v9958 = vsel %vm9929, %v9720, 0
        %v9961 = vsel %vm9929, %v9726, 0
        %v9964 = vsel %vm9929, %v9732, 0
        %v9967 = vsel %vm9929, %v9738, 0
        %v9970 = vsel %vm9929, %v9744, 0
        %v9973 = vsel %vm9929, %v9750, 0
        %v9976 = vsel %vm9929, %v9806, 0
        %9978 = vmatprep.subr.bf16.mxu0 0
        %9979 = vmatpush1.bf16.msra.mxu0 %v9899
        %9980 = vmatprep.subr.bf16.mxu0 0
        %9981 = vmatpush1.bf16.msra.mxu0 %v9900
        %9982 = vmatprep.subr.bf16.mxu0 0
        %9983 = vmatpush1.bf16.msra.mxu0 %v9901
        %9984 = vmatprep.subr.bf16.mxu0 0
        %9985 = vmatpush1.bf16.msra.mxu0 %v9902
        %9986 = vmatprep.subr.bf16.mxu0 0
        %9987 = vmatpush1.bf16.msra.mxu0 %v9903
        %9988 = vmatprep.subr.bf16.mxu0 0
        %9989 = vmatpush1.bf16.msra.mxu0 %v9904
        %9990 = vmatprep.subr.bf16.mxu0 0
        %9991 = vmatpush1.bf16.msra.mxu0 %v9905
        %9992 = vmatprep.subr.bf16.mxu0 0
        %9993 = vmatpush1.bf16.msra.mxu0 %v9906
        %9994 = vmatprep.subr.bf16.mxu0 0
        %9995 = vmatpush1.bf16.msra.mxu0 %v9907
        %9996 = vmatprep.subr.bf16.mxu0 0
        %9997 = vmatpush1.bf16.msra.mxu0 %v9908
        %9998 = vmatprep.subr.bf16.mxu0 0
        %9999 = vmatpush1.bf16.msra.mxu0 %v9909
        %10000 = vmatprep.subr.bf16.mxu0 0
        %10001 = vmatpush1.bf16.msra.mxu0 %v9910
        %10002 = vmatprep.subr.bf16.mxu0 0
        %10003 = vmatpush1.bf16.msra.mxu0 %v9911
        %10004 = vmatprep.subr.bf16.mxu0 0
        %10005 = vmatpush1.bf16.msra.mxu0 %v9912
        %10006 = vmatprep.subr.bf16.mxu0 0
        %10007 = vmatpush1.bf16.msra.mxu0 %v9913
        %10008 = vmatprep.subr.bf16.mxu0 0
        %10009 = vmatpush1.bf16.msra.mxu0 0
        %10010 = vmatprep.mubr.bf16.mxu0 %v9931
        %10011 = vmatmul.mubr.bf16.gmra.mrb[0].mxu0 %v9663
        %v10012 = vpop.f32.mrb[0].mxu0
        %v10013 = vadd.f32 0.0, %v10012
        %v10014 = vpop.f32.mrb[0].mxu0
        %v10015 = vpop.f32.mrb[0].mxu0
        %v10016 = vadd.f32 0.0, %v10015
        %v10017 = vpop.f32.mrb[0].mxu0
        %10018 = vmatprep.mubr.bf16.mxu0 %v9934
        %10019 = vmatmul.mubr.bf16.gmra.mrb[0].mxu0 %v9669
        %v10020 = vpop.f32.mrb[0].mxu0
        %v10021 = vadd.f32 0.0, %v10020
        %v10022 = vpop.f32.mrb[0].mxu0
        %v10023 = vpop.f32.mrb[0].mxu0
        %v10024 = vadd.f32 0.0, %v10023
        %v10025 = vpop.f32.mrb[0].mxu0
        %10026 = vmatprep.mubr.bf16.mxu0 %v9937
        %10027 = vmatmul.mubr.bf16.gmra.mrb[0].mxu0 %v9675
        %v10028 = vpop.f32.mrb[0].mxu0
        %v10029 = vadd.f32 0.0, %v10028
        %v10030 = vpop.f32.mrb[0].mxu0
        %v10031 = vpop.f32.mrb[0].mxu0
        %v10032 = vadd.f32 0.0, %v10031
        %v10033 = vpop.f32.mrb[0].mxu0
        %10034 = vmatprep.mubr.bf16.mxu0 %v9940
        %10035 = vmatmul.mubr.bf16.gmra.mrb[0].mxu0 %v9681
        %v10036 = vpop.f32.mrb[0].mxu0
        %v10037 = vadd.f32 0.0, %v10036
        %v10038 = vpop.f32.mrb[0].mxu0
        %v10039 = vpop.f32.mrb[0].mxu0
        %v10040 = vadd.f32 0.0, %v10039
        %v10041 = vpop.f32.mrb[0].mxu0
        %10042 = vmatprep.mubr.bf16.mxu0 %v9943
        %10043 = vmatmul.mubr.bf16.gmra.mrb[0].mxu0 %v9687
        %v10044 = vpop.f32.mrb[0].mxu0
        %v10045 = vadd.f32 0.0, %v10044
        %v10046 = vpop.f32.mrb[0].mxu0
        %v10047 = vpop.f32.mrb[0].mxu0
        %v10048 = vadd.f32 0.0, %v10047
        %v10049 = vpop.f32.mrb[0].mxu0
        %10050 = vmatprep.mubr.bf16.mxu0 %v9946
        %10051 = vmatmul.mubr.bf16.gmra.mrb[0].mxu0 %v9693
        %v10052 = vpop.f32.mrb[0].mxu0
        %v10053 = vadd.f32 0.0, %v10052
        %v10054 = vpop.f32.mrb[0].mxu0
        %v10055 = vpop.f32.mrb[0].mxu0
        %v10056 = vadd.f32 0.0, %v10055
        %v10057 = vpop.f32.mrb[0].mxu0
        %10058 = vmatprep.mubr.bf16.mxu0 %v9949
        %10059 = vmatmul.mubr.bf16.gmra.mrb[0].mxu0 %v9699
        %v10060 = vpop.f32.mrb[0].mxu0
        %v10061 = vadd.f32 0.0, %v10060
        %v10062 = vpop.f32.mrb[0].mxu0
        %v10063 = vpop.f32.mrb[0].mxu0
        %v10064 = vadd.f32 0.0, %v10063
        %v10065 = vpop.f32.mrb[0].mxu0
        %10066 = vmatprep.mubr.bf16.mxu0 %v9952
        %10067 = vmatmul.mubr.bf16.gmra.mrb[0].mxu0 %v9705
        %v10068 = vpop.f32.mrb[0].mxu0
        %v10069 = vadd.f32 0.0, %v10068
        %v10070 = vpop.f32.mrb[0].mxu0
        %v10071 = vpop.f32.mrb[0].mxu0
        %v10072 = vadd.f32 0.0, %v10071
        %v10073 = vpop.f32.mrb[0].mxu0
        %10074 = vmatprep.mubr.bf16.mxu0 %v9955
        %10075 = vmatmul.mubr.bf16.gmra.mrb[0].mxu0 %v9711
        %v10076 = vpop.f32.mrb[0].mxu0
        %v10077 = vadd.f32 0.0, %v10076
        %v10078 = vpop.f32.mrb[0].mxu0
        %v10079 = vpop.f32.mrb[0].mxu0
        %v10080 = vadd.f32 0.0, %v10079
        %v10081 = vpop.f32.mrb[0].mxu0
        %10082 = vmatprep.mubr.bf16.mxu0 %v9958
        %10083 = vmatmul.mubr.bf16.gmra.mrb[0].mxu0 %v9717
        %v10084 = vpop.f32.mrb[0].mxu0
        %v10085 = vadd.f32 0.0, %v10084
        %v10086 = vpop.f32.mrb[0].mxu0
        %v10087 = vpop.f32.mrb[0].mxu0
        %v10088 = vadd.f32 0.0, %v10087
        %v10089 = vpop.f32.mrb[0].mxu0
        %10090 = vmatprep.mubr.bf16.mxu0 %v9961
        %10091 = vmatmul.mubr.bf16.gmra.mrb[0].mxu0 %v9723
        %v10092 = vpop.f32.mrb[0].mxu0
        %v10093 = vadd.f32 0.0, %v10092
        %v10094 = vpop.f32.mrb[0].mxu0
        %v10095 = vpop.f32.mrb[0].mxu0
        %v10096 = vadd.f32 0.0, %v10095
        %v10097 = vpop.f32.mrb[0].mxu0
        %10098 = vmatprep.mubr.bf16.mxu0 %v9964
        %10099 = vmatmul.mubr.bf16.gmra.mrb[0].mxu0 %v9729
        %v10100 = vpop.f32.mrb[0].mxu0
        %v10101 = vadd.f32 0.0, %v10100
        %v10102 = vpop.f32.mrb[0].mxu0
        %v10103 = vpop.f32.mrb[0].mxu0
        %v10104 = vadd.f32 0.0, %v10103
        %v10105 = vpop.f32.mrb[0].mxu0
        %10106 = vmatprep.mubr.bf16.mxu0 %v9967
        %10107 = vmatmul.mubr.bf16.gmra.mrb[0].mxu0 %v9735
        %v10108 = vpop.f32.mrb[0].mxu0
        %v10109 = vadd.f32 0.0, %v10108
        %v10110 = vpop.f32.mrb[0].mxu0
        %v10111 = vpop.f32.mrb[0].mxu0
        %v10112 = vadd.f32 0.0, %v10111
        %v10113 = vpop.f32.mrb[0].mxu0
        %10114 = vmatprep.mubr.bf16.mxu0 %v9970
        %10115 = vmatmul.mubr.bf16.gmra.mrb[0].mxu0 %v9741
        %v10116 = vpop.f32.mrb[0].mxu0
        %v10117 = vadd.f32 0.0, %v10116
        %v10118 = vpop.f32.mrb[0].mxu0
        %v10119 = vpop.f32.mrb[0].mxu0
        %v10120 = vadd.f32 0.0, %v10119
        %v10121 = vpop.f32.mrb[0].mxu0
        %10122 = vmatprep.mubr.bf16.mxu0 %v9973
        %10123 = vmatmul.mubr.bf16.gmra.mrb[0].mxu0 %v9747
        %v10124 = vpop.f32.mrb[0].mxu0
        %v10125 = vadd.f32 0.0, %v10124
        %v10126 = vpop.f32.mrb[0].mxu0
        %v10127 = vpop.f32.mrb[0].mxu0
        %v10128 = vadd.f32 0.0, %v10127
        %v10129 = vpop.f32.mrb[0].mxu0
        %10130 = vmatprep.mubr.bf16.mxu0 %v9976
        %10131 = vmatmul.mubr.bf16.gmra.mrb[0].mxu0 %v9803
        %v10132 = vpop.f32.mrb[0].mxu0
        %v10133 = vadd.f32 0.0, %v10132
        %v10134 = vpop.f32.mrb[0].mxu0
        %v10135 = vpop.f32.mrb[0].mxu0
        %v10136 = vadd.f32 0.0, %v10135
        %v10137 = vpop.f32.mrb[0].mxu0
        %10138 = vdwg.mxu0
        %v10169 = vunpack.c.l.b16 %v9767
        %v10170 = vunpack.c.l.b16 %v9768
        %v10171 = vunpack.c.l.b16 %v9769
        %v10172 = vunpack.c.l.b16 %v9770
        %v10173 = vunpack.c.l.b16 %v9771
        %v10174 = vunpack.c.l.b16 %v9772
        %v10175 = vunpack.c.l.b16 %v9773
        %v10176 = vunpack.c.l.b16 %v9774
        %v10177 = vunpack.c.l.b16 %v9775
        %v10178 = vunpack.c.l.b16 %v9776
        %v10179 = vunpack.c.l.b16 %v9777
        %v10180 = vunpack.c.l.b16 %v9778
        %v10181 = vunpack.c.l.b16 %v9779
        %v10182 = vunpack.c.l.b16 %v9780
        %v10183 = vunpack.c.l.b16 %v9781
        %v10184 = vunpack.c.l.b16 %v9782
        %v10185 = vunpack.c.l.b16 %v9783
        %v10186 = vunpack.c.l.b16 %v9784
        %v10187 = vunpack.c.l.b16 %v9785
        %v10188 = vunpack.c.l.b16 %v9786
        %v10189 = vunpack.c.l.b16 %v9787
        %v10190 = vunpack.c.l.b16 %v9788
        %v10191 = vunpack.c.l.b16 %v9789
        %v10192 = vunpack.c.l.b16 %v9790
        %v10193 = vunpack.c.l.b16 %v9791
        %v10194 = vunpack.c.l.b16 %v9792
        %v10195 = vunpack.c.l.b16 %v9793
        %v10196 = vunpack.c.l.b16 %v9794
        %v10197 = vunpack.c.l.b16 %v9795
        %v10198 = vunpack.c.l.b16 %v9796
        %v10199 = vpack.c.b16 %v10170, %v10169
        %v10200 = vpack.c.b16 %v10172, %v10171
        %v10201 = vpack.c.b16 %v10174, %v10173
        %v10202 = vpack.c.b16 %v10176, %v10175
        %v10203 = vpack.c.b16 %v10178, %v10177
        %v10204 = vpack.c.b16 %v10180, %v10179
        %v10205 = vpack.c.b16 %v10182, %v10181
        %v10206 = vpack.c.b16 %v10184, %v10183
        %v10207 = vpack.c.b16 %v10186, %v10185
        %v10208 = vpack.c.b16 %v10188, %v10187
        %v10209 = vpack.c.b16 %v10190, %v10189
        %v10210 = vpack.c.b16 %v10192, %v10191
        %v10211 = vpack.c.b16 %v10194, %v10193
        %v10212 = vpack.c.b16 %v10196, %v10195
        %v10213 = vpack.c.b16 %v10198, %v10197
        %v10230 = vsel %vm9929, %v9660, 0
        %10232 = vmatprep.subr.bf16.mxu0 0
        %10233 = vmatpush1.bf16.msra.mxu0 %v10199
        %10234 = vmatprep.subr.bf16.mxu0 0
        %10235 = vmatpush1.bf16.msra.mxu0 %v10200
        %10236 = vmatprep.subr.bf16.mxu0 0
        %10237 = vmatpush1.bf16.msra.mxu0 %v10201
        %10238 = vmatprep.subr.bf16.mxu0 0
        %10239 = vmatpush1.bf16.msra.mxu0 %v10202
        %10240 = vmatprep.subr.bf16.mxu0 0
        %10241 = vmatpush1.bf16.msra.mxu0 %v10203
        %10242 = vmatprep.subr.bf16.mxu0 0
        %10243 = vmatpush1.bf16.msra.mxu0 %v10204
        %10244 = vmatprep.subr.bf16.mxu0 0
        %10245 = vmatpush1.bf16.msra.mxu0 %v10205
        %10246 = vmatprep.subr.bf16.mxu0 0
        %10247 = vmatpush1.bf16.msra.mxu0 %v10206
        %10248 = vmatprep.subr.bf16.mxu0 0
        %10249 = vmatpush1.bf16.msra.mxu0 %v10207
        %10250 = vmatprep.subr.bf16.mxu0 0
        %10251 = vmatpush1.bf16.msra.mxu0 %v10208
        %10252 = vmatprep.subr.bf16.mxu0 0
        %10253 = vmatpush1.bf16.msra.mxu0 %v10209
        %10254 = vmatprep.subr.bf16.mxu0 0
        %10255 = vmatpush1.bf16.msra.mxu0 %v10210
        %10256 = vmatprep.subr.bf16.mxu0 0
        %10257 = vmatpush1.bf16.msra.mxu0 %v10211
        %10258 = vmatprep.subr.bf16.mxu0 0
        %10259 = vmatpush1.bf16.msra.mxu0 %v10212
        %10260 = vmatprep.subr.bf16.mxu0 0
        %10261 = vmatpush1.bf16.msra.mxu0 %v10213
        %10262 = vmatprep.subr.bf16.mxu0 0
        %10263 = vmatpush1.bf16.msra.mxu0 0
        %10264 = vmatprep.mubr.bf16.mxu0 %v10230
        %10265 = vmatmul.mubr.bf16.gmra.mrb[0].mxu0 %v9657
        %v10266 = vpop.f32.mrb[0].mxu0
        %v10267 = vadd.f32 %v10013, %v10266
        %v10268 = vpop.f32.mrb[0].mxu0
        %v10269 = vpop.f32.mrb[0].mxu0
        %v10270 = vadd.f32 %v10016, %v10269
        %v10271 = vpop.f32.mrb[0].mxu0
        %10272 = vmatprep.mubr.bf16.mxu0 %v9931
        %10273 = vmatmul.mubr.bf16.gmra.mrb[0].mxu0 %v9663
        %v10274 = vpop.f32.mrb[0].mxu0
        %v10275 = vadd.f32 %v10021, %v10274
        %v10276 = vpop.f32.mrb[0].mxu0
        %v10277 = vpop.f32.mrb[0].mxu0
        %v10278 = vadd.f32 %v10024, %v10277
        %v10279 = vpop.f32.mrb[0].mxu0
        %10280 = vmatprep.mubr.bf16.mxu0 %v9934
        %10281 = vmatmul.mubr.bf16.gmra.mrb[0].mxu0 %v9669
        %v10282 = vpop.f32.mrb[0].mxu0
        %v10283 = vadd.f32 %v10029, %v10282
        %v10284 = vpop.f32.mrb[0].mxu0
        %v10285 = vpop.f32.mrb[0].mxu0
        %v10286 = vadd.f32 %v10032, %v10285
        %v10287 = vpop.f32.mrb[0].mxu0
        %10288 = vmatprep.mubr.bf16.mxu0 %v9937
        %10289 = vmatmul.mubr.bf16.gmra.mrb[0].mxu0 %v9675
        %v10290 = vpop.f32.mrb[0].mxu0
        %v10291 = vadd.f32 %v10037, %v10290
        %v10292 = vpop.f32.mrb[0].mxu0
        %v10293 = vpop.f32.mrb[0].mxu0
        %v10294 = vadd.f32 %v10040, %v10293
        %v10295 = vpop.f32.mrb[0].mxu0
        %10296 = vmatprep.mubr.bf16.mxu0 %v9940
        %10297 = vmatmul.mubr.bf16.gmra.mrb[0].mxu0 %v9681
        %v10298 = vpop.f32.mrb[0].mxu0
        %v10299 = vadd.f32 %v10045, %v10298
        %v10300 = vpop.f32.mrb[0].mxu0
        %v10301 = vpop.f32.mrb[0].mxu0
        %v10302 = vadd.f32 %v10048, %v10301
        %v10303 = vpop.f32.mrb[0].mxu0
        %10304 = vmatprep.mubr.bf16.mxu0 %v9943
        %10305 = vmatmul.mubr.bf16.gmra.mrb[0].mxu0 %v9687
        %v10306 = vpop.f32.mrb[0].mxu0
        %v10307 = vadd.f32 %v10053, %v10306
        %v10308 = vpop.f32.mrb[0].mxu0
        %v10309 = vpop.f32.mrb[0].mxu0
        %v10310 = vadd.f32 %v10056, %v10309
        %v10311 = vpop.f32.mrb[0].mxu0
        %10312 = vmatprep.mubr.bf16.mxu0 %v9946
        %10313 = vmatmul.mubr.bf16.gmra.mrb[0].mxu0 %v9693
        %v10314 = vpop.f32.mrb[0].mxu0
        %v10315 = vadd.f32 %v10061, %v10314
        %v10316 = vpop.f32.mrb[0].mxu0
        %v10317 = vpop.f32.mrb[0].mxu0
        %v10318 = vadd.f32 %v10064, %v10317
        %v10319 = vpop.f32.mrb[0].mxu0
        %10320 = vmatprep.mubr.bf16.mxu0 %v9949
        %10321 = vmatmul.mubr.bf16.gmra.mrb[0].mxu0 %v9699
        %v10322 = vpop.f32.mrb[0].mxu0
        %v10323 = vadd.f32 %v10069, %v10322
        %v10324 = vpop.f32.mrb[0].mxu0
        %v10325 = vpop.f32.mrb[0].mxu0
        %v10326 = vadd.f32 %v10072, %v10325
        %v10327 = vpop.f32.mrb[0].mxu0
        %10328 = vmatprep.mubr.bf16.mxu0 %v9952
        %10329 = vmatmul.mubr.bf16.gmra.mrb[0].mxu0 %v9705
        %v10330 = vpop.f32.mrb[0].mxu0
        %v10331 = vadd.f32 %v10077, %v10330
        %v10332 = vpop.f32.mrb[0].mxu0
        %v10333 = vpop.f32.mrb[0].mxu0
        %v10334 = vadd.f32 %v10080, %v10333
        %v10335 = vpop.f32.mrb[0].mxu0
        %10336 = vmatprep.mubr.bf16.mxu0 %v9955
        %10337 = vmatmul.mubr.bf16.gmra.mrb[0].mxu0 %v9711
        %v10338 = vpop.f32.mrb[0].mxu0
        %v10339 = vadd.f32 %v10085, %v10338
        %v10340 = vpop.f32.mrb[0].mxu0
        %v10341 = vpop.f32.mrb[0].mxu0
        %v10342 = vadd.f32 %v10088, %v10341
        %v10343 = vpop.f32.mrb[0].mxu0
        %10344 = vmatprep.mubr.bf16.mxu0 %v9958
        %10345 = vmatmul.mubr.bf16.gmra.mrb[0].mxu0 %v9717
        %v10346 = vpop.f32.mrb[0].mxu0
        %v10347 = vadd.f32 %v10093, %v10346
        %v10348 = vpop.f32.mrb[0].mxu0
        %v10349 = vpop.f32.mrb[0].mxu0
        %v10350 = vadd.f32 %v10096, %v10349
        %v10351 = vpop.f32.mrb[0].mxu0
        %10352 = vmatprep.mubr.bf16.mxu0 %v9961
        %10353 = vmatmul.mubr.bf16.gmra.mrb[0].mxu0 %v9723
        %v10354 = vpop.f32.mrb[0].mxu0
        %v10355 = vadd.f32 %v10101, %v10354
        %v10356 = vpop.f32.mrb[0].mxu0
        %v10357 = vpop.f32.mrb[0].mxu0
        %v10358 = vadd.f32 %v10104, %v10357
        %v10359 = vpop.f32.mrb[0].mxu0
        %10360 = vmatprep.mubr.bf16.mxu0 %v9964
        %10361 = vmatmul.mubr.bf16.gmra.mrb[0].mxu0 %v9729
        %v10362 = vpop.f32.mrb[0].mxu0
        %v10363 = vadd.f32 %v10109, %v10362
        %v10364 = vpop.f32.mrb[0].mxu0
        %v10365 = vpop.f32.mrb[0].mxu0
        %v10366 = vadd.f32 %v10112, %v10365
        %v10367 = vpop.f32.mrb[0].mxu0
        %10368 = vmatprep.mubr.bf16.mxu0 %v9967
        %10369 = vmatmul.mubr.bf16.gmra.mrb[0].mxu0 %v9735
        %v10370 = vpop.f32.mrb[0].mxu0
        %v10371 = vadd.f32 %v10117, %v10370
        %v10372 = vpop.f32.mrb[0].mxu0
        %v10373 = vpop.f32.mrb[0].mxu0
        %v10374 = vadd.f32 %v10120, %v10373
        %v10375 = vpop.f32.mrb[0].mxu0
        %10376 = vmatprep.mubr.bf16.mxu0 %v9970
        %10377 = vmatmul.mubr.bf16.gmra.mrb[0].mxu0 %v9741
        %v10378 = vpop.f32.mrb[0].mxu0
        %v10379 = vadd.f32 %v10125, %v10378
        %v10380 = vpop.f32.mrb[0].mxu0
        %v10381 = vpop.f32.mrb[0].mxu0
        %v10382 = vadd.f32 %v10128, %v10381
        %v10383 = vpop.f32.mrb[0].mxu0
        %10384 = vmatprep.mubr.bf16.mxu0 %v9973
        %10385 = vmatmul.mubr.bf16.gmra.mrb[0].mxu0 %v9747
        %v10386 = vpop.f32.mrb[0].mxu0
        %v10387 = vadd.f32 %v10133, %v10386
        %v10388 = vpop.f32.mrb[0].mxu0
        %v10389 = vpop.f32.mrb[0].mxu0
        %v10390 = vadd.f32 %v10136, %v10389
        %v10391 = vpop.f32.mrb[0].mxu0
        %10392 = vdwg.mxu0
        %v10397 = vrot.slane %v9421, 3
        %v10398 = vrot.slane %v9422, 3
        %v10399 = vsel %vm9654, %v10397, %v10398
        %v10400 = vrot.slane %v9579, 3
        %v10401 = vrot.slane %v9581, 3
        %v10402 = vsel %vm9654, %v10400, %v10401
        %s10404 = scalar_lea.vmem %s9, 240
        %v10405 = vld [vmem:[%s10404] sm:$0xf]
        %v10406 = vld [vmem:[%s10404 + $0x4] sm:$0xf]
        %v10407 = vld [vmem:[%s10404 + $0x8] sm:$0xf]
        %v10408 = vld [vmem:[%s10404 + $0xc] sm:$0xf]
        %v10409 = vld [vmem:[%s10404 + $0x10] sm:$0xf]
        %v10410 = vld [vmem:[%s10404 + $0x14] sm:$0xf]
        %v10411 = vld [vmem:[%s10404 + $0x18] sm:$0xf]
        %v10412 = vld [vmem:[%s10404 + $0x1c] sm:$0xf]
        %v10413 = vld [vmem:[%s10404 + $0x20] sm:$0xf]
        %v10414 = vld [vmem:[%s10404 + $0x24] sm:$0xf]
        %v10415 = vld [vmem:[%s10404 + $0x28] sm:$0xf]
        %v10416 = vld [vmem:[%s10404 + $0x2c] sm:$0xf]
        %v10417 = vld [vmem:[%s10404 + $0x30] sm:$0xf]
        %v10418 = vld [vmem:[%s10404 + $0x34] sm:$0xf]
        %v10419 = vld [vmem:[%s10404 + $0x38] sm:$0xf]
        %v10420 = vld [vmem:[%s10404 + $0x3c] sm:$0xf]
        %v10421 = vld [vmem:[%s10404 + $0x40] sm:$0xf]
        %v10422 = vld [vmem:[%s10404 + $0x44] sm:$0xf]
        %v10423 = vld [vmem:[%s10404 + $0x48] sm:$0xf]
        %v10424 = vld [vmem:[%s10404 + $0x4c] sm:$0xf]
        %v10425 = vld [vmem:[%s10404 + $0x50] sm:$0xf]
        %v10426 = vld [vmem:[%s10404 + $0x54] sm:$0xf]
        %v10427 = vld [vmem:[%s10404 + $0x58] sm:$0xf]
        %v10428 = vld [vmem:[%s10404 + $0x5c] sm:$0xf]
        %v10429 = vld [vmem:[%s10404 + $0x60] sm:$0xf]
        %v10430 = vld [vmem:[%s10404 + $0x64] sm:$0xf]
        %v10431 = vld [vmem:[%s10404 + $0x68] sm:$0xf]
        %v10432 = vld [vmem:[%s10404 + $0x6c] sm:$0xf]
        %v10433 = vld [vmem:[%s10404 + $0x70] sm:$0xf]
        %v10434 = vld [vmem:[%s10404 + $0x74] sm:$0xf]
        %v10465 = vunpack.c.l.b16 %v10405
        %v10466 = vunpack.c.l.b16 %v10406
        %v10467 = vunpack.c.l.b16 %v10407
        %v10468 = vunpack.c.l.b16 %v10408
        %v10469 = vunpack.c.l.b16 %v10409
        %v10470 = vunpack.c.l.b16 %v10410
        %v10471 = vunpack.c.l.b16 %v10411
        %v10472 = vunpack.c.l.b16 %v10412
        %v10473 = vunpack.c.l.b16 %v10413
        %v10474 = vunpack.c.l.b16 %v10414
        %v10475 = vunpack.c.l.b16 %v10415
        %v10476 = vunpack.c.l.b16 %v10416
        %v10477 = vunpack.c.l.b16 %v10417
        %v10478 = vunpack.c.l.b16 %v10418
        %v10479 = vunpack.c.l.b16 %v10419
        %v10480 = vunpack.c.l.b16 %v10420
        %v10481 = vunpack.c.l.b16 %v10421
        %v10482 = vunpack.c.l.b16 %v10422
        %v10483 = vunpack.c.l.b16 %v10423
        %v10484 = vunpack.c.l.b16 %v10424
        %v10485 = vunpack.c.l.b16 %v10425
        %v10486 = vunpack.c.l.b16 %v10426
        %v10487 = vunpack.c.l.b16 %v10427
        %v10488 = vunpack.c.l.b16 %v10428
        %v10489 = vunpack.c.l.b16 %v10429
        %v10490 = vunpack.c.l.b16 %v10430
        %v10491 = vunpack.c.l.b16 %v10431
        %v10492 = vunpack.c.l.b16 %v10432
        %v10493 = vunpack.c.l.b16 %v10433
        %v10494 = vunpack.c.l.b16 %v10434
        %v10495 = vpack.c.b16 %v10466, %v10465
        %v10496 = vpack.c.b16 %v10468, %v10467
        %v10497 = vpack.c.b16 %v10470, %v10469
        %v10498 = vpack.c.b16 %v10472, %v10471
        %v10499 = vpack.c.b16 %v10474, %v10473
        %v10500 = vpack.c.b16 %v10476, %v10475
        %v10501 = vpack.c.b16 %v10478, %v10477
        %v10502 = vpack.c.b16 %v10480, %v10479
        %v10503 = vpack.c.b16 %v10482, %v10481
        %v10504 = vpack.c.b16 %v10484, %v10483
        %v10505 = vpack.c.b16 %v10486, %v10485
        %v10506 = vpack.c.b16 %v10488, %v10487
        %v10507 = vpack.c.b16 %v10490, %v10489
        %v10508 = vpack.c.b16 %v10492, %v10491
        %v10509 = vpack.c.b16 %v10494, %v10493
        %v10526 = vsel %vm9929, %v10402, 0
        %10528 = vmatprep.subr.bf16.mxu0 0
        %10529 = vmatpush1.bf16.msra.mxu0 %v10495
        %10530 = vmatprep.subr.bf16.mxu0 0
        %10531 = vmatpush1.bf16.msra.mxu0 %v10496
        %10532 = vmatprep.subr.bf16.mxu0 0
        %10533 = vmatpush1.bf16.msra.mxu0 %v10497
        %10534 = vmatprep.subr.bf16.mxu0 0
        %10535 = vmatpush1.bf16.msra.mxu0 %v10498
        %10536 = vmatprep.subr.bf16.mxu0 0
        %10537 = vmatpush1.bf16.msra.mxu0 %v10499
        %10538 = vmatprep.subr.bf16.mxu0 0
        %10539 = vmatpush1.bf16.msra.mxu0 %v10500
        %10540 = vmatprep.subr.bf16.mxu0 0
        %10541 = vmatpush1.bf16.msra.mxu0 %v10501
        %10542 = vmatprep.subr.bf16.mxu0 0
        %10543 = vmatpush1.bf16.msra.mxu0 %v10502
        %10544 = vmatprep.subr.bf16.mxu0 0
        %10545 = vmatpush1.bf16.msra.mxu0 %v10503
        %10546 = vmatprep.subr.bf16.mxu0 0
        %10547 = vmatpush1.bf16.msra.mxu0 %v10504
        %10548 = vmatprep.subr.bf16.mxu0 0
        %10549 = vmatpush1.bf16.msra.mxu0 %v10505
        %10550 = vmatprep.subr.bf16.mxu0 0
        %10551 = vmatpush1.bf16.msra.mxu0 %v10506
        %10552 = vmatprep.subr.bf16.mxu0 0
        %10553 = vmatpush1.bf16.msra.mxu0 %v10507
        %10554 = vmatprep.subr.bf16.mxu0 0
        %10555 = vmatpush1.bf16.msra.mxu0 %v10508
        %10556 = vmatprep.subr.bf16.mxu0 0
        %10557 = vmatpush1.bf16.msra.mxu0 %v10509
        %10558 = vmatprep.subr.bf16.mxu0 0
        %10559 = vmatpush1.bf16.msra.mxu0 0
        %10560 = vmatprep.mubr.bf16.mxu0 %v9934
        %10561 = vmatmul.mubr.bf16.gmra.mrb[0].mxu0 %v9669
        %v10562 = vpop.f32.mrb[0].mxu0
        %v10563 = vadd.f32 0.0, %v10562
        %v10564 = vpop.f32.mrb[0].mxu0
        %v10565 = vpop.f32.mrb[0].mxu0
        %v10566 = vadd.f32 0.0, %v10565
        %v10567 = vpop.f32.mrb[0].mxu0
        %10568 = vmatprep.mubr.bf16.mxu0 %v9937
        %10569 = vmatmul.mubr.bf16.gmra.mrb[0].mxu0 %v9675
        %v10570 = vpop.f32.mrb[0].mxu0
        %v10571 = vadd.f32 0.0, %v10570
        %v10572 = vpop.f32.mrb[0].mxu0
        %v10573 = vpop.f32.mrb[0].mxu0
        %v10574 = vadd.f32 0.0, %v10573
        %v10575 = vpop.f32.mrb[0].mxu0
        %10576 = vmatprep.mubr.bf16.mxu0 %v9940
        %10577 = vmatmul.mubr.bf16.gmra.mrb[0].mxu0 %v9681
        %v10578 = vpop.f32.mrb[0].mxu0
        %v10579 = vadd.f32 0.0, %v10578
        %v10580 = vpop.f32.mrb[0].mxu0
        %v10581 = vpop.f32.mrb[0].mxu0
        %v10582 = vadd.f32 0.0, %v10581
        %v10583 = vpop.f32.mrb[0].mxu0
        %10584 = vmatprep.mubr.bf16.mxu0 %v9943
        %10585 = vmatmul.mubr.bf16.gmra.mrb[0].mxu0 %v9687
        %v10586 = vpop.f32.mrb[0].mxu0
        %v10587 = vadd.f32 0.0, %v10586
        %v10588 = vpop.f32.mrb[0].mxu0
        %v10589 = vpop.f32.mrb[0].mxu0
        %v10590 = vadd.f32 0.0, %v10589
        %v10591 = vpop.f32.mrb[0].mxu0
        %10592 = vmatprep.mubr.bf16.mxu0 %v9946
        %10593 = vmatmul.mubr.bf16.gmra.mrb[0].mxu0 %v9693
        %v10594 = vpop.f32.mrb[0].mxu0
        %v10595 = vadd.f32 0.0, %v10594
        %v10596 = vpop.f32.mrb[0].mxu0
        %v10597 = vpop.f32.mrb[0].mxu0
        %v10598 = vadd.f32 0.0, %v10597
        %v10599 = vpop.f32.mrb[0].mxu0
        %10600 = vmatprep.mubr.bf16.mxu0 %v9949
        %10601 = vmatmul.mubr.bf16.gmra.mrb[0].mxu0 %v9699
        %v10602 = vpop.f32.mrb[0].mxu0
        %v10603 = vadd.f32 0.0, %v10602
        %v10604 = vpop.f32.mrb[0].mxu0
        %v10605 = vpop.f32.mrb[0].mxu0
        %v10606 = vadd.f32 0.0, %v10605
        %v10607 = vpop.f32.mrb[0].mxu0
        %10608 = vmatprep.mubr.bf16.mxu0 %v9952
        %10609 = vmatmul.mubr.bf16.gmra.mrb[0].mxu0 %v9705
        %v10610 = vpop.f32.mrb[0].mxu0
        %v10611 = vadd.f32 0.0, %v10610
        %v10612 = vpop.f32.mrb[0].mxu0
        %v10613 = vpop.f32.mrb[0].mxu0
        %v10614 = vadd.f32 0.0, %v10613
        %v10615 = vpop.f32.mrb[0].mxu0
        %10616 = vmatprep.mubr.bf16.mxu0 %v9955
        %10617 = vmatmul.mubr.bf16.gmra.mrb[0].mxu0 %v9711
        %v10618 = vpop.f32.mrb[0].mxu0
        %v10619 = vadd.f32 0.0, %v10618
        %v10620 = vpop.f32.mrb[0].mxu0
        %v10621 = vpop.f32.mrb[0].mxu0
        %v10622 = vadd.f32 0.0, %v10621
        %v10623 = vpop.f32.mrb[0].mxu0
        %10624 = vmatprep.mubr.bf16.mxu0 %v9958
        %10625 = vmatmul.mubr.bf16.gmra.mrb[0].mxu0 %v9717
        %v10626 = vpop.f32.mrb[0].mxu0
        %v10627 = vadd.f32 0.0, %v10626
        %v10628 = vpop.f32.mrb[0].mxu0
        %v10629 = vpop.f32.mrb[0].mxu0
        %v10630 = vadd.f32 0.0, %v10629
        %v10631 = vpop.f32.mrb[0].mxu0
        %10632 = vmatprep.mubr.bf16.mxu0 %v9961
        %10633 = vmatmul.mubr.bf16.gmra.mrb[0].mxu0 %v9723
        %v10634 = vpop.f32.mrb[0].mxu0
        %v10635 = vadd.f32 0.0, %v10634
        %v10636 = vpop.f32.mrb[0].mxu0
        %v10637 = vpop.f32.mrb[0].mxu0
        %v10638 = vadd.f32 0.0, %v10637
        %v10639 = vpop.f32.mrb[0].mxu0
        %10640 = vmatprep.mubr.bf16.mxu0 %v9964
        %10641 = vmatmul.mubr.bf16.gmra.mrb[0].mxu0 %v9729
        %v10642 = vpop.f32.mrb[0].mxu0
        %v10643 = vadd.f32 0.0, %v10642
        %v10644 = vpop.f32.mrb[0].mxu0
        %v10645 = vpop.f32.mrb[0].mxu0
        %v10646 = vadd.f32 0.0, %v10645
        %v10647 = vpop.f32.mrb[0].mxu0
        %10648 = vmatprep.mubr.bf16.mxu0 %v9967
        %10649 = vmatmul.mubr.bf16.gmra.mrb[0].mxu0 %v9735
        %v10650 = vpop.f32.mrb[0].mxu0
        %v10651 = vadd.f32 0.0, %v10650
        %v10652 = vpop.f32.mrb[0].mxu0
        %v10653 = vpop.f32.mrb[0].mxu0
        %v10654 = vadd.f32 0.0, %v10653
        %v10655 = vpop.f32.mrb[0].mxu0
        %10656 = vmatprep.mubr.bf16.mxu0 %v9970
        %10657 = vmatmul.mubr.bf16.gmra.mrb[0].mxu0 %v9741
        %v10658 = vpop.f32.mrb[0].mxu0
        %v10659 = vadd.f32 0.0, %v10658
        %v10660 = vpop.f32.mrb[0].mxu0
        %v10661 = vpop.f32.mrb[0].mxu0
        %v10662 = vadd.f32 0.0, %v10661
        %v10663 = vpop.f32.mrb[0].mxu0
        %10664 = vmatprep.mubr.bf16.mxu0 %v9973
        %10665 = vmatmul.mubr.bf16.gmra.mrb[0].mxu0 %v9747
        %v10666 = vpop.f32.mrb[0].mxu0
        %v10667 = vadd.f32 0.0, %v10666
        %v10668 = vpop.f32.mrb[0].mxu0
        %v10669 = vpop.f32.mrb[0].mxu0
        %v10670 = vadd.f32 0.0, %v10669
        %v10671 = vpop.f32.mrb[0].mxu0
        %10672 = vmatprep.mubr.bf16.mxu0 %v9976
        %10673 = vmatmul.mubr.bf16.gmra.mrb[0].mxu0 %v9803
        %v10674 = vpop.f32.mrb[0].mxu0
        %v10675 = vadd.f32 0.0, %v10674
        %v10676 = vpop.f32.mrb[0].mxu0
        %v10677 = vpop.f32.mrb[0].mxu0
        %v10678 = vadd.f32 0.0, %v10677
        %v10679 = vpop.f32.mrb[0].mxu0
        %10680 = vmatprep.mubr.bf16.mxu0 %v10526
        %10681 = vmatmul.mubr.bf16.gmra.mrb[0].mxu0 %v10399
        %v10682 = vpop.f32.mrb[0].mxu0
        %v10683 = vadd.f32 0.0, %v10682
        %v10684 = vpop.f32.mrb[0].mxu0
        %v10685 = vpop.f32.mrb[0].mxu0
        %v10686 = vadd.f32 0.0, %v10685
        %v10687 = vpop.f32.mrb[0].mxu0
        %10688 = vdwg.mxu0
        %v10689 = vadd.f32 %v10267, %v10563
        %v10690 = vadd.f32 %v10270, %v10566
        %v10691 = vadd.f32 %v10275, %v10571
        %v10692 = vadd.f32 %v10278, %v10574
        %v10693 = vadd.f32 %v10283, %v10579
        %v10694 = vadd.f32 %v10286, %v10582
        %v10695 = vadd.f32 %v10291, %v10587
        %v10696 = vadd.f32 %v10294, %v10590
        %v10697 = vadd.f32 %v10299, %v10595
        %v10698 = vadd.f32 %v10302, %v10598
        %v10699 = vadd.f32 %v10307, %v10603
        %v10700 = vadd.f32 %v10310, %v10606
        %v10701 = vadd.f32 %v10315, %v10611
        %v10702 = vadd.f32 %v10318, %v10614
        %v10703 = vadd.f32 %v10323, %v10619
        %v10704 = vadd.f32 %v10326, %v10622
        %v10705 = vadd.f32 %v10331, %v10627
        %v10706 = vadd.f32 %v10334, %v10630
        %v10707 = vadd.f32 %v10339, %v10635
        %v10708 = vadd.f32 %v10342, %v10638
        %v10709 = vadd.f32 %v10347, %v10643
        %v10710 = vadd.f32 %v10350, %v10646
        %v10711 = vadd.f32 %v10355, %v10651
        %v10712 = vadd.f32 %v10358, %v10654
        %v10713 = vadd.f32 %v10363, %v10659
        %v10714 = vadd.f32 %v10366, %v10662
        %v10715 = vadd.f32 %v10371, %v10667
        %v10716 = vadd.f32 %v10374, %v10670
        %v10717 = vadd.f32 %v10379, %v10675
        %v10718 = vadd.f32 %v10382, %v10678
        %v10719 = vadd.f32 %v10387, %v10683
        %v10720 = vadd.f32 %v10390, %v10686
        %v10725 = vrot.slane %v9424, 3
        %v10726 = vrot.slane %v9425, 3
        %v10727 = vsel %vm9654, %v10725, %v10726
        %v10728 = vrot.slane %v9583, 3
        %v10729 = vrot.slane %v9585, 3
        %v10730 = vsel %vm9654, %v10728, %v10729
        %s10732 = scalar_lea.vmem %s9, 360
        %v10733 = vld [vmem:[%s10732] sm:$0xf]
        %v10734 = vld [vmem:[%s10732 + $0x4] sm:$0xf]
        %v10735 = vld [vmem:[%s10732 + $0x8] sm:$0xf]
        %v10736 = vld [vmem:[%s10732 + $0xc] sm:$0xf]
        %v10737 = vld [vmem:[%s10732 + $0x10] sm:$0xf]
        %v10738 = vld [vmem:[%s10732 + $0x14] sm:$0xf]
        %v10739 = vld [vmem:[%s10732 + $0x18] sm:$0xf]
        %v10740 = vld [vmem:[%s10732 + $0x1c] sm:$0xf]
        %v10741 = vld [vmem:[%s10732 + $0x20] sm:$0xf]
        %v10742 = vld [vmem:[%s10732 + $0x24] sm:$0xf]
        %v10743 = vld [vmem:[%s10732 + $0x28] sm:$0xf]
        %v10744 = vld [vmem:[%s10732 + $0x2c] sm:$0xf]
        %v10745 = vld [vmem:[%s10732 + $0x30] sm:$0xf]
        %v10746 = vld [vmem:[%s10732 + $0x34] sm:$0xf]
        %v10747 = vld [vmem:[%s10732 + $0x38] sm:$0xf]
        %v10748 = vld [vmem:[%s10732 + $0x3c] sm:$0xf]
        %v10749 = vld [vmem:[%s10732 + $0x40] sm:$0xf]
        %v10750 = vld [vmem:[%s10732 + $0x44] sm:$0xf]
        %v10751 = vld [vmem:[%s10732 + $0x48] sm:$0xf]
        %v10752 = vld [vmem:[%s10732 + $0x4c] sm:$0xf]
        %v10753 = vld [vmem:[%s10732 + $0x50] sm:$0xf]
        %v10754 = vld [vmem:[%s10732 + $0x54] sm:$0xf]
        %v10755 = vld [vmem:[%s10732 + $0x58] sm:$0xf]
        %v10756 = vld [vmem:[%s10732 + $0x5c] sm:$0xf]
        %v10757 = vld [vmem:[%s10732 + $0x60] sm:$0xf]
        %v10758 = vld [vmem:[%s10732 + $0x64] sm:$0xf]
        %v10759 = vld [vmem:[%s10732 + $0x68] sm:$0xf]
        %v10760 = vld [vmem:[%s10732 + $0x6c] sm:$0xf]
        %v10761 = vld [vmem:[%s10732 + $0x70] sm:$0xf]
        %v10762 = vld [vmem:[%s10732 + $0x74] sm:$0xf]
        %v10793 = vunpack.c.l.b16 %v10733
        %v10794 = vunpack.c.l.b16 %v10734
        %v10795 = vunpack.c.l.b16 %v10735
        %v10796 = vunpack.c.l.b16 %v10736
        %v10797 = vunpack.c.l.b16 %v10737
        %v10798 = vunpack.c.l.b16 %v10738
        %v10799 = vunpack.c.l.b16 %v10739
        %v10800 = vunpack.c.l.b16 %v10740
        %v10801 = vunpack.c.l.b16 %v10741
        %v10802 = vunpack.c.l.b16 %v10742
        %v10803 = vunpack.c.l.b16 %v10743
        %v10804 = vunpack.c.l.b16 %v10744
        %v10805 = vunpack.c.l.b16 %v10745
        %v10806 = vunpack.c.l.b16 %v10746
        %v10807 = vunpack.c.l.b16 %v10747
        %v10808 = vunpack.c.l.b16 %v10748
        %v10809 = vunpack.c.l.b16 %v10749
        %v10810 = vunpack.c.l.b16 %v10750
        %v10811 = vunpack.c.l.b16 %v10751
        %v10812 = vunpack.c.l.b16 %v10752
        %v10813 = vunpack.c.l.b16 %v10753
        %v10814 = vunpack.c.l.b16 %v10754
        %v10815 = vunpack.c.l.b16 %v10755
        %v10816 = vunpack.c.l.b16 %v10756
        %v10817 = vunpack.c.l.b16 %v10757
        %v10818 = vunpack.c.l.b16 %v10758
        %v10819 = vunpack.c.l.b16 %v10759
        %v10820 = vunpack.c.l.b16 %v10760
        %v10821 = vunpack.c.l.b16 %v10761
        %v10822 = vunpack.c.l.b16 %v10762
        %v10823 = vpack.c.b16 %v10794, %v10793
        %v10824 = vpack.c.b16 %v10796, %v10795
        %v10825 = vpack.c.b16 %v10798, %v10797
        %v10826 = vpack.c.b16 %v10800, %v10799
        %v10827 = vpack.c.b16 %v10802, %v10801
        %v10828 = vpack.c.b16 %v10804, %v10803
        %v10829 = vpack.c.b16 %v10806, %v10805
        %v10830 = vpack.c.b16 %v10808, %v10807
        %v10831 = vpack.c.b16 %v10810, %v10809
        %v10832 = vpack.c.b16 %v10812, %v10811
        %v10833 = vpack.c.b16 %v10814, %v10813
        %v10834 = vpack.c.b16 %v10816, %v10815
        %v10835 = vpack.c.b16 %v10818, %v10817
        %v10836 = vpack.c.b16 %v10820, %v10819
        %v10837 = vpack.c.b16 %v10822, %v10821
        %v10854 = vsel %vm9929, %v10730, 0
        %10856 = vmatprep.subr.bf16.mxu0 0
        %10857 = vmatpush1.bf16.msra.mxu0 %v10823
        %10858 = vmatprep.subr.bf16.mxu0 0
        %10859 = vmatpush1.bf16.msra.mxu0 %v10824
        %10860 = vmatprep.subr.bf16.mxu0 0
        %10861 = vmatpush1.bf16.msra.mxu0 %v10825
        %10862 = vmatprep.subr.bf16.mxu0 0
        %10863 = vmatpush1.bf16.msra.mxu0 %v10826
        %10864 = vmatprep.subr.bf16.mxu0 0
        %10865 = vmatpush1.bf16.msra.mxu0 %v10827
        %10866 = vmatprep.subr.bf16.mxu0 0
        %10867 = vmatpush1.bf16.msra.mxu0 %v10828
        %10868 = vmatprep.subr.bf16.mxu0 0
        %10869 = vmatpush1.bf16.msra.mxu0 %v10829
        %10870 = vmatprep.subr.bf16.mxu0 0
        %10871 = vmatpush1.bf16.msra.mxu0 %v10830
        %10872 = vmatprep.subr.bf16.mxu0 0
        %10873 = vmatpush1.bf16.msra.mxu0 %v10831
        %10874 = vmatprep.subr.bf16.mxu0 0
        %10875 = vmatpush1.bf16.msra.mxu0 %v10832
        %10876 = vmatprep.subr.bf16.mxu0 0
        %10877 = vmatpush1.bf16.msra.mxu0 %v10833
        %10878 = vmatprep.subr.bf16.mxu0 0
        %10879 = vmatpush1.bf16.msra.mxu0 %v10834
        %10880 = vmatprep.subr.bf16.mxu0 0
        %10881 = vmatpush1.bf16.msra.mxu0 %v10835
        %10882 = vmatprep.subr.bf16.mxu0 0
        %10883 = vmatpush1.bf16.msra.mxu0 %v10836
        %10884 = vmatprep.subr.bf16.mxu0 0
        %10885 = vmatpush1.bf16.msra.mxu0 %v10837
        %10886 = vmatprep.subr.bf16.mxu0 0
        %10887 = vmatpush1.bf16.msra.mxu0 0
        %10888 = vmatprep.mubr.bf16.mxu0 %v9937
        %10889 = vmatmul.mubr.bf16.gmra.mrb[0].mxu0 %v9675
        %v10890 = vpop.f32.mrb[0].mxu0
        %v10891 = vadd.f32 0.0, %v10890
        %v10892 = vpop.f32.mrb[0].mxu0
        %v10893 = vpop.f32.mrb[0].mxu0
        %v10894 = vadd.f32 0.0, %v10893
        %v10895 = vpop.f32.mrb[0].mxu0
        %10896 = vmatprep.mubr.bf16.mxu0 %v9940
        %10897 = vmatmul.mubr.bf16.gmra.mrb[0].mxu0 %v9681
        %v10898 = vpop.f32.mrb[0].mxu0
        %v10899 = vadd.f32 0.0, %v10898
        %v10900 = vpop.f32.mrb[0].mxu0
        %v10901 = vpop.f32.mrb[0].mxu0
        %v10902 = vadd.f32 0.0, %v10901
        %v10903 = vpop.f32.mrb[0].mxu0
        %10904 = vmatprep.mubr.bf16.mxu0 %v9943
        %10905 = vmatmul.mubr.bf16.gmra.mrb[0].mxu0 %v9687
        %v10906 = vpop.f32.mrb[0].mxu0
        %v10907 = vadd.f32 0.0, %v10906
        %v10908 = vpop.f32.mrb[0].mxu0
        %v10909 = vpop.f32.mrb[0].mxu0
        %v10910 = vadd.f32 0.0, %v10909
        %v10911 = vpop.f32.mrb[0].mxu0
        %10912 = vmatprep.mubr.bf16.mxu0 %v9946
        %10913 = vmatmul.mubr.bf16.gmra.mrb[0].mxu0 %v9693
        %v10914 = vpop.f32.mrb[0].mxu0
        %v10915 = vadd.f32 0.0, %v10914
        %v10916 = vpop.f32.mrb[0].mxu0
        %v10917 = vpop.f32.mrb[0].mxu0
        %v10918 = vadd.f32 0.0, %v10917
        %v10919 = vpop.f32.mrb[0].mxu0
        %10920 = vmatprep.mubr.bf16.mxu0 %v9949
        %10921 = vmatmul.mubr.bf16.gmra.mrb[0].mxu0 %v9699
        %v10922 = vpop.f32.mrb[0].mxu0
        %v10923 = vadd.f32 0.0, %v10922
        %v10924 = vpop.f32.mrb[0].mxu0
        %v10925 = vpop.f32.mrb[0].mxu0
        %v10926 = vadd.f32 0.0, %v10925
        %v10927 = vpop.f32.mrb[0].mxu0
        %10928 = vmatprep.mubr.bf16.mxu0 %v9952
        %10929 = vmatmul.mubr.bf16.gmra.mrb[0].mxu0 %v9705
        %v10930 = vpop.f32.mrb[0].mxu0
        %v10931 = vadd.f32 0.0, %v10930
        %v10932 = vpop.f32.mrb[0].mxu0
        %v10933 = vpop.f32.mrb[0].mxu0
        %v10934 = vadd.f32 0.0, %v10933
        %v10935 = vpop.f32.mrb[0].mxu0
        %10936 = vmatprep.mubr.bf16.mxu0 %v9955
        %10937 = vmatmul.mubr.bf16.gmra.mrb[0].mxu0 %v9711
        %v10938 = vpop.f32.mrb[0].mxu0
        %v10939 = vadd.f32 0.0, %v10938
        %v10940 = vpop.f32.mrb[0].mxu0
        %v10941 = vpop.f32.mrb[0].mxu0
        %v10942 = vadd.f32 0.0, %v10941
        %v10943 = vpop.f32.mrb[0].mxu0
        %10944 = vmatprep.mubr.bf16.mxu0 %v9958
        %10945 = vmatmul.mubr.bf16.gmra.mrb[0].mxu0 %v9717
        %v10946 = vpop.f32.mrb[0].mxu0
        %v10947 = vadd.f32 0.0, %v10946
        %v10948 = vpop.f32.mrb[0].mxu0
        %v10949 = vpop.f32.mrb[0].mxu0
        %v10950 = vadd.f32 0.0, %v10949
        %v10951 = vpop.f32.mrb[0].mxu0
        %10952 = vmatprep.mubr.bf16.mxu0 %v9961
        %10953 = vmatmul.mubr.bf16.gmra.mrb[0].mxu0 %v9723
        %v10954 = vpop.f32.mrb[0].mxu0
        %v10955 = vadd.f32 0.0, %v10954
        %v10956 = vpop.f32.mrb[0].mxu0
        %v10957 = vpop.f32.mrb[0].mxu0
        %v10958 = vadd.f32 0.0, %v10957
        %v10959 = vpop.f32.mrb[0].mxu0
        %10960 = vmatprep.mubr.bf16.mxu0 %v9964
        %10961 = vmatmul.mubr.bf16.gmra.mrb[0].mxu0 %v9729
        %v10962 = vpop.f32.mrb[0].mxu0
        %v10963 = vadd.f32 0.0, %v10962
        %v10964 = vpop.f32.mrb[0].mxu0
        %v10965 = vpop.f32.mrb[0].mxu0
        %v10966 = vadd.f32 0.0, %v10965
        %v10967 = vpop.f32.mrb[0].mxu0
        %10968 = vmatprep.mubr.bf16.mxu0 %v9967
        %10969 = vmatmul.mubr.bf16.gmra.mrb[0].mxu0 %v9735
        %v10970 = vpop.f32.mrb[0].mxu0
        %v10971 = vadd.f32 0.0, %v10970
        %v10972 = vpop.f32.mrb[0].mxu0
        %v10973 = vpop.f32.mrb[0].mxu0
        %v10974 = vadd.f32 0.0, %v10973
        %v10975 = vpop.f32.mrb[0].mxu0
        %10976 = vmatprep.mubr.bf16.mxu0 %v9970
        %10977 = vmatmul.mubr.bf16.gmra.mrb[0].mxu0 %v9741
        %v10978 = vpop.f32.mrb[0].mxu0
        %v10979 = vadd.f32 0.0, %v10978
        %v10980 = vpop.f32.mrb[0].mxu0
        %v10981 = vpop.f32.mrb[0].mxu0
        %v10982 = vadd.f32 0.0, %v10981
        %v10983 = vpop.f32.mrb[0].mxu0
        %10984 = vmatprep.mubr.bf16.mxu0 %v9973
        %10985 = vmatmul.mubr.bf16.gmra.mrb[0].mxu0 %v9747
        %v10986 = vpop.f32.mrb[0].mxu0
        %v10987 = vadd.f32 0.0, %v10986
        %v10988 = vpop.f32.mrb[0].mxu0
        %v10989 = vpop.f32.mrb[0].mxu0
        %v10990 = vadd.f32 0.0, %v10989
        %v10991 = vpop.f32.mrb[0].mxu0
        %10992 = vmatprep.mubr.bf16.mxu0 %v9976
        %10993 = vmatmul.mubr.bf16.gmra.mrb[0].mxu0 %v9803
        %v10994 = vpop.f32.mrb[0].mxu0
        %v10995 = vadd.f32 0.0, %v10994
        %v10996 = vpop.f32.mrb[0].mxu0
        %v10997 = vpop.f32.mrb[0].mxu0
        %v10998 = vadd.f32 0.0, %v10997
        %v10999 = vpop.f32.mrb[0].mxu0
        %11000 = vmatprep.mubr.bf16.mxu0 %v10526
        %11001 = vmatmul.mubr.bf16.gmra.mrb[0].mxu0 %v10399
        %v11002 = vpop.f32.mrb[0].mxu0
        %v11003 = vadd.f32 0.0, %v11002
        %v11004 = vpop.f32.mrb[0].mxu0
        %v11005 = vpop.f32.mrb[0].mxu0
        %v11006 = vadd.f32 0.0, %v11005
        %v11007 = vpop.f32.mrb[0].mxu0
        %11008 = vmatprep.mubr.bf16.mxu0 %v10854
        %11009 = vmatmul.mubr.bf16.gmra.mrb[0].mxu0 %v10727
        %v11010 = vpop.f32.mrb[0].mxu0
        %v11011 = vadd.f32 0.0, %v11010
        %v11012 = vpop.f32.mrb[0].mxu0
        %v11013 = vpop.f32.mrb[0].mxu0
        %v11014 = vadd.f32 0.0, %v11013
        %v11015 = vpop.f32.mrb[0].mxu0
        %11016 = vdwg.mxu0
        %v11017 = vadd.f32 %v10689, %v10891
        %v11018 = vadd.f32 %v10690, %v10894
        %v11019 = vadd.f32 %v10691, %v10899
        %v11020 = vadd.f32 %v10692, %v10902
        %v11021 = vadd.f32 %v10693, %v10907
        %v11022 = vadd.f32 %v10694, %v10910
        %v11023 = vadd.f32 %v10695, %v10915
        %v11024 = vadd.f32 %v10696, %v10918
        %v11025 = vadd.f32 %v10697, %v10923
        %v11026 = vadd.f32 %v10698, %v10926
        %v11027 = vadd.f32 %v10699, %v10931
        %v11028 = vadd.f32 %v10700, %v10934
        %v11029 = vadd.f32 %v10701, %v10939
        %v11030 = vadd.f32 %v10702, %v10942
        %v11031 = vadd.f32 %v10703, %v10947
        %v11032 = vadd.f32 %v10704, %v10950
        %v11033 = vadd.f32 %v10705, %v10955
        %v11034 = vadd.f32 %v10706, %v10958
        %v11035 = vadd.f32 %v10707, %v10963
        %v11036 = vadd.f32 %v10708, %v10966
        %v11037 = vadd.f32 %v10709, %v10971
        %v11038 = vadd.f32 %v10710, %v10974
        %v11039 = vadd.f32 %v10711, %v10979
        %v11040 = vadd.f32 %v10712, %v10982
        %v11041 = vadd.f32 %v10713, %v10987
        %v11042 = vadd.f32 %v10714, %v10990
        %v11043 = vadd.f32 %v10715, %v10995
        %v11044 = vadd.f32 %v10716, %v10998
        %v11045 = vadd.f32 %v10717, %v11003
        %v11046 = vadd.f32 %v10718, %v11006
        %v11047 = vadd.f32 %v10719, %v11011
        %v11048 = vadd.f32 %v10720, %v11014
        %v11053 = vrot.slane %v9427, 3
        %v11054 = vrot.slane %v9428, 3
        %v11055 = vsel %vm9654, %v11053, %v11054
        %v11056 = vrot.slane %v9587, 3
        %v11057 = vrot.slane %v9589, 3
        %v11058 = vsel %vm9654, %v11056, %v11057
        %s11060 = scalar_lea.vmem %s9, 480
        %v11061 = vld [vmem:[%s11060] sm:$0xf]
        %v11062 = vld [vmem:[%s11060 + $0x4] sm:$0xf]
        %v11063 = vld [vmem:[%s11060 + $0x8] sm:$0xf]
        %v11064 = vld [vmem:[%s11060 + $0xc] sm:$0xf]
        %v11065 = vld [vmem:[%s11060 + $0x10] sm:$0xf]
        %v11066 = vld [vmem:[%s11060 + $0x14] sm:$0xf]
        %v11067 = vld [vmem:[%s11060 + $0x18] sm:$0xf]
        %v11068 = vld [vmem:[%s11060 + $0x1c] sm:$0xf]
        %v11069 = vld [vmem:[%s11060 + $0x20] sm:$0xf]
        %v11070 = vld [vmem:[%s11060 + $0x24] sm:$0xf]
        %v11071 = vld [vmem:[%s11060 + $0x28] sm:$0xf]
        %v11072 = vld [vmem:[%s11060 + $0x2c] sm:$0xf]
        %v11073 = vld [vmem:[%s11060 + $0x30] sm:$0xf]
        %v11074 = vld [vmem:[%s11060 + $0x34] sm:$0xf]
        %v11075 = vld [vmem:[%s11060 + $0x38] sm:$0xf]
        %v11076 = vld [vmem:[%s11060 + $0x3c] sm:$0xf]
        %v11077 = vld [vmem:[%s11060 + $0x40] sm:$0xf]
        %v11078 = vld [vmem:[%s11060 + $0x44] sm:$0xf]
        %v11079 = vld [vmem:[%s11060 + $0x48] sm:$0xf]
        %v11080 = vld [vmem:[%s11060 + $0x4c] sm:$0xf]
        %v11081 = vld [vmem:[%s11060 + $0x50] sm:$0xf]
        %v11082 = vld [vmem:[%s11060 + $0x54] sm:$0xf]
        %v11083 = vld [vmem:[%s11060 + $0x58] sm:$0xf]
        %v11084 = vld [vmem:[%s11060 + $0x5c] sm:$0xf]
        %v11085 = vld [vmem:[%s11060 + $0x60] sm:$0xf]
        %v11086 = vld [vmem:[%s11060 + $0x64] sm:$0xf]
        %v11087 = vld [vmem:[%s11060 + $0x68] sm:$0xf]
        %v11088 = vld [vmem:[%s11060 + $0x6c] sm:$0xf]
        %v11089 = vld [vmem:[%s11060 + $0x70] sm:$0xf]
        %v11090 = vld [vmem:[%s11060 + $0x74] sm:$0xf]
        %v11121 = vunpack.c.l.b16 %v11061
        %v11122 = vunpack.c.l.b16 %v11062
        %v11123 = vunpack.c.l.b16 %v11063
        %v11124 = vunpack.c.l.b16 %v11064
        %v11125 = vunpack.c.l.b16 %v11065
        %v11126 = vunpack.c.l.b16 %v11066
        %v11127 = vunpack.c.l.b16 %v11067
        %v11128 = vunpack.c.l.b16 %v11068
        %v11129 = vunpack.c.l.b16 %v11069
        %v11130 = vunpack.c.l.b16 %v11070
        %v11131 = vunpack.c.l.b16 %v11071
        %v11132 = vunpack.c.l.b16 %v11072
        %v11133 = vunpack.c.l.b16 %v11073
        %v11134 = vunpack.c.l.b16 %v11074
        %v11135 = vunpack.c.l.b16 %v11075
        %v11136 = vunpack.c.l.b16 %v11076
        %v11137 = vunpack.c.l.b16 %v11077
        %v11138 = vunpack.c.l.b16 %v11078
        %v11139 = vunpack.c.l.b16 %v11079
        %v11140 = vunpack.c.l.b16 %v11080
        %v11141 = vunpack.c.l.b16 %v11081
        %v11142 = vunpack.c.l.b16 %v11082
        %v11143 = vunpack.c.l.b16 %v11083
        %v11144 = vunpack.c.l.b16 %v11084
        %v11145 = vunpack.c.l.b16 %v11085
        %v11146 = vunpack.c.l.b16 %v11086
        %v11147 = vunpack.c.l.b16 %v11087
        %v11148 = vunpack.c.l.b16 %v11088
        %v11149 = vunpack.c.l.b16 %v11089
        %v11150 = vunpack.c.l.b16 %v11090
        %v11151 = vpack.c.b16 %v11122, %v11121
        %v11152 = vpack.c.b16 %v11124, %v11123
        %v11153 = vpack.c.b16 %v11126, %v11125
        %v11154 = vpack.c.b16 %v11128, %v11127
        %v11155 = vpack.c.b16 %v11130, %v11129
        %v11156 = vpack.c.b16 %v11132, %v11131
        %v11157 = vpack.c.b16 %v11134, %v11133
        %v11158 = vpack.c.b16 %v11136, %v11135
        %v11159 = vpack.c.b16 %v11138, %v11137
        %v11160 = vpack.c.b16 %v11140, %v11139
        %v11161 = vpack.c.b16 %v11142, %v11141
        %v11162 = vpack.c.b16 %v11144, %v11143
        %v11163 = vpack.c.b16 %v11146, %v11145
        %v11164 = vpack.c.b16 %v11148, %v11147
        %v11165 = vpack.c.b16 %v11150, %v11149
        %v11182 = vsel %vm9929, %v11058, 0
        %11184 = vmatprep.subr.bf16.mxu0 0
        %11185 = vmatpush1.bf16.msra.mxu0 %v11151
        %11186 = vmatprep.subr.bf16.mxu0 0
        %11187 = vmatpush1.bf16.msra.mxu0 %v11152
        %11188 = vmatprep.subr.bf16.mxu0 0
        %11189 = vmatpush1.bf16.msra.mxu0 %v11153
        %11190 = vmatprep.subr.bf16.mxu0 0
        %11191 = vmatpush1.bf16.msra.mxu0 %v11154
        %11192 = vmatprep.subr.bf16.mxu0 0
        %11193 = vmatpush1.bf16.msra.mxu0 %v11155
        %11194 = vmatprep.subr.bf16.mxu0 0
        %11195 = vmatpush1.bf16.msra.mxu0 %v11156
        %11196 = vmatprep.subr.bf16.mxu0 0
        %11197 = vmatpush1.bf16.msra.mxu0 %v11157
        %11198 = vmatprep.subr.bf16.mxu0 0
        %11199 = vmatpush1.bf16.msra.mxu0 %v11158
        %11200 = vmatprep.subr.bf16.mxu0 0
        %11201 = vmatpush1.bf16.msra.mxu0 %v11159
        %11202 = vmatprep.subr.bf16.mxu0 0
        %11203 = vmatpush1.bf16.msra.mxu0 %v11160
        %11204 = vmatprep.subr.bf16.mxu0 0
        %11205 = vmatpush1.bf16.msra.mxu0 %v11161
        %11206 = vmatprep.subr.bf16.mxu0 0
        %11207 = vmatpush1.bf16.msra.mxu0 %v11162
        %11208 = vmatprep.subr.bf16.mxu0 0
        %11209 = vmatpush1.bf16.msra.mxu0 %v11163
        %11210 = vmatprep.subr.bf16.mxu0 0
        %11211 = vmatpush1.bf16.msra.mxu0 %v11164
        %11212 = vmatprep.subr.bf16.mxu0 0
        %11213 = vmatpush1.bf16.msra.mxu0 %v11165
        %11214 = vmatprep.subr.bf16.mxu0 0
        %11215 = vmatpush1.bf16.msra.mxu0 0
        %11216 = vmatprep.mubr.bf16.mxu0 %v9940
        %11217 = vmatmul.mubr.bf16.gmra.mrb[0].mxu0 %v9681
        %v11218 = vpop.f32.mrb[0].mxu0
        %v11219 = vadd.f32 0.0, %v11218
        %v11220 = vpop.f32.mrb[0].mxu0
        %v11221 = vpop.f32.mrb[0].mxu0
        %v11222 = vadd.f32 0.0, %v11221
        %v11223 = vpop.f32.mrb[0].mxu0
        %11224 = vmatprep.mubr.bf16.mxu0 %v9943
        %11225 = vmatmul.mubr.bf16.gmra.mrb[0].mxu0 %v9687
        %v11226 = vpop.f32.mrb[0].mxu0
        %v11227 = vadd.f32 0.0, %v11226
        %v11228 = vpop.f32.mrb[0].mxu0
        %v11229 = vpop.f32.mrb[0].mxu0
        %v11230 = vadd.f32 0.0, %v11229
        %v11231 = vpop.f32.mrb[0].mxu0
        %11232 = vmatprep.mubr.bf16.mxu0 %v9946
        %11233 = vmatmul.mubr.bf16.gmra.mrb[0].mxu0 %v9693
        %v11234 = vpop.f32.mrb[0].mxu0
        %v11235 = vadd.f32 0.0, %v11234
        %v11236 = vpop.f32.mrb[0].mxu0
        %v11237 = vpop.f32.mrb[0].mxu0
        %v11238 = vadd.f32 0.0, %v11237
        %v11239 = vpop.f32.mrb[0].mxu0
        %11240 = vmatprep.mubr.bf16.mxu0 %v9949
        %11241 = vmatmul.mubr.bf16.gmra.mrb[0].mxu0 %v9699
        %v11242 = vpop.f32.mrb[0].mxu0
        %v11243 = vadd.f32 0.0, %v11242
        %v11244 = vpop.f32.mrb[0].mxu0
        %v11245 = vpop.f32.mrb[0].mxu0
        %v11246 = vadd.f32 0.0, %v11245
        %v11247 = vpop.f32.mrb[0].mxu0
        %11248 = vmatprep.mubr.bf16.mxu0 %v9952
        %11249 = vmatmul.mubr.bf16.gmra.mrb[0].mxu0 %v9705
        %v11250 = vpop.f32.mrb[0].mxu0
        %v11251 = vadd.f32 0.0, %v11250
        %v11252 = vpop.f32.mrb[0].mxu0
        %v11253 = vpop.f32.mrb[0].mxu0
        %v11254 = vadd.f32 0.0, %v11253
        %v11255 = vpop.f32.mrb[0].mxu0
        %11256 = vmatprep.mubr.bf16.mxu0 %v9955
        %11257 = vmatmul.mubr.bf16.gmra.mrb[0].mxu0 %v9711
        %v11258 = vpop.f32.mrb[0].mxu0
        %v11259 = vadd.f32 0.0, %v11258
        %v11260 = vpop.f32.mrb[0].mxu0
        %v11261 = vpop.f32.mrb[0].mxu0
        %v11262 = vadd.f32 0.0, %v11261
        %v11263 = vpop.f32.mrb[0].mxu0
        %11264 = vmatprep.mubr.bf16.mxu0 %v9958
        %11265 = vmatmul.mubr.bf16.gmra.mrb[0].mxu0 %v9717
        %v11266 = vpop.f32.mrb[0].mxu0
        %v11267 = vadd.f32 0.0, %v11266
        %v11268 = vpop.f32.mrb[0].mxu0
        %v11269 = vpop.f32.mrb[0].mxu0
        %v11270 = vadd.f32 0.0, %v11269
        %v11271 = vpop.f32.mrb[0].mxu0
        %11272 = vmatprep.mubr.bf16.mxu0 %v9961
        %11273 = vmatmul.mubr.bf16.gmra.mrb[0].mxu0 %v9723
        %v11274 = vpop.f32.mrb[0].mxu0
        %v11275 = vadd.f32 0.0, %v11274
        %v11276 = vpop.f32.mrb[0].mxu0
        %v11277 = vpop.f32.mrb[0].mxu0
        %v11278 = vadd.f32 0.0, %v11277
        %v11279 = vpop.f32.mrb[0].mxu0
        %11280 = vmatprep.mubr.bf16.mxu0 %v9964
        %11281 = vmatmul.mubr.bf16.gmra.mrb[0].mxu0 %v9729
        %v11282 = vpop.f32.mrb[0].mxu0
        %v11283 = vadd.f32 0.0, %v11282
        %v11284 = vpop.f32.mrb[0].mxu0
        %v11285 = vpop.f32.mrb[0].mxu0
        %v11286 = vadd.f32 0.0, %v11285
        %v11287 = vpop.f32.mrb[0].mxu0
        %11288 = vmatprep.mubr.bf16.mxu0 %v9967
        %11289 = vmatmul.mubr.bf16.gmra.mrb[0].mxu0 %v9735
        %v11290 = vpop.f32.mrb[0].mxu0
        %v11291 = vadd.f32 0.0, %v11290
        %v11292 = vpop.f32.mrb[0].mxu0
        %v11293 = vpop.f32.mrb[0].mxu0
        %v11294 = vadd.f32 0.0, %v11293
        %v11295 = vpop.f32.mrb[0].mxu0
        %11296 = vmatprep.mubr.bf16.mxu0 %v9970
        %11297 = vmatmul.mubr.bf16.gmra.mrb[0].mxu0 %v9741
        %v11298 = vpop.f32.mrb[0].mxu0
        %v11299 = vadd.f32 0.0, %v11298
        %v11300 = vpop.f32.mrb[0].mxu0
        %v11301 = vpop.f32.mrb[0].mxu0
        %v11302 = vadd.f32 0.0, %v11301
        %v11303 = vpop.f32.mrb[0].mxu0
        %11304 = vmatprep.mubr.bf16.mxu0 %v9973
        %11305 = vmatmul.mubr.bf16.gmra.mrb[0].mxu0 %v9747
        %v11306 = vpop.f32.mrb[0].mxu0
        %v11307 = vadd.f32 0.0, %v11306
        %v11308 = vpop.f32.mrb[0].mxu0
        %v11309 = vpop.f32.mrb[0].mxu0
        %v11310 = vadd.f32 0.0, %v11309
        %v11311 = vpop.f32.mrb[0].mxu0
        %11312 = vmatprep.mubr.bf16.mxu0 %v9976
        %11313 = vmatmul.mubr.bf16.gmra.mrb[0].mxu0 %v9803
        %v11314 = vpop.f32.mrb[0].mxu0
        %v11315 = vadd.f32 0.0, %v11314
        %v11316 = vpop.f32.mrb[0].mxu0
        %v11317 = vpop.f32.mrb[0].mxu0
        %v11318 = vadd.f32 0.0, %v11317
        %v11319 = vpop.f32.mrb[0].mxu0
        %11320 = vmatprep.mubr.bf16.mxu0 %v10526
        %11321 = vmatmul.mubr.bf16.gmra.mrb[0].mxu0 %v10399
        %v11322 = vpop.f32.mrb[0].mxu0
        %v11323 = vadd.f32 0.0, %v11322
        %v11324 = vpop.f32.mrb[0].mxu0
        %v11325 = vpop.f32.mrb[0].mxu0
        %v11326 = vadd.f32 0.0, %v11325
        %v11327 = vpop.f32.mrb[0].mxu0
        %11328 = vmatprep.mubr.bf16.mxu0 %v10854
        %11329 = vmatmul.mubr.bf16.gmra.mrb[0].mxu0 %v10727
        %v11330 = vpop.f32.mrb[0].mxu0
        %v11331 = vadd.f32 0.0, %v11330
        %v11332 = vpop.f32.mrb[0].mxu0
        %v11333 = vpop.f32.mrb[0].mxu0
        %v11334 = vadd.f32 0.0, %v11333
        %v11335 = vpop.f32.mrb[0].mxu0
        %11336 = vmatprep.mubr.bf16.mxu0 %v11182
        %11337 = vmatmul.mubr.bf16.gmra.mrb[0].mxu0 %v11055
        %v11338 = vpop.f32.mrb[0].mxu0
        %v11339 = vadd.f32 0.0, %v11338
        %v11340 = vpop.f32.mrb[0].mxu0
        %v11341 = vpop.f32.mrb[0].mxu0
        %v11342 = vadd.f32 0.0, %v11341
        %v11343 = vpop.f32.mrb[0].mxu0
        %11344 = vdwg.mxu0
        %v11345 = vadd.f32 %v11017, %v11219
        %v11346 = vadd.f32 %v11018, %v11222
        %v11347 = vadd.f32 %v11019, %v11227
        %v11348 = vadd.f32 %v11020, %v11230
        %v11349 = vadd.f32 %v11021, %v11235
        %v11350 = vadd.f32 %v11022, %v11238
        %v11351 = vadd.f32 %v11023, %v11243
        %v11352 = vadd.f32 %v11024, %v11246
        %v11353 = vadd.f32 %v11025, %v11251
        %v11354 = vadd.f32 %v11026, %v11254
        %v11355 = vadd.f32 %v11027, %v11259
        %v11356 = vadd.f32 %v11028, %v11262
        %v11357 = vadd.f32 %v11029, %v11267
        %v11358 = vadd.f32 %v11030, %v11270
        %v11359 = vadd.f32 %v11031, %v11275
        %v11360 = vadd.f32 %v11032, %v11278
        %v11361 = vadd.f32 %v11033, %v11283
        %v11362 = vadd.f32 %v11034, %v11286
        %v11363 = vadd.f32 %v11035, %v11291
        %v11364 = vadd.f32 %v11036, %v11294
        %v11365 = vadd.f32 %v11037, %v11299
        %v11366 = vadd.f32 %v11038, %v11302
        %v11367 = vadd.f32 %v11039, %v11307
        %v11368 = vadd.f32 %v11040, %v11310
        %v11369 = vadd.f32 %v11041, %v11315
        %v11370 = vadd.f32 %v11042, %v11318
        %v11371 = vadd.f32 %v11043, %v11323
        %v11372 = vadd.f32 %v11044, %v11326
        %v11373 = vadd.f32 %v11045, %v11331
        %v11374 = vadd.f32 %v11046, %v11334
        %v11375 = vadd.f32 %v11047, %v11339
        %v11376 = vadd.f32 %v11048, %v11342
        %v11377 = vld [vmem:[%s10] sm:$0x1]
        %v11379 = vlaneseq
        %v11380 = vshrl.u32 %v11379, 7
        %v11381 = vsub.s32 0, %v11380
        %v11382 = vrot.slane %v11377, %v11381
        %v11384 = vadd.f32 %v11345, %v11382
        %v11385 = vadd.f32 %v11346, %v11382
        %v11386 = vadd.f32 %v11347, %v11382
        %v11387 = vadd.f32 %v11348, %v11382
        %v11388 = vadd.f32 %v11349, %v11382
        %v11389 = vadd.f32 %v11350, %v11382
        %v11390 = vadd.f32 %v11351, %v11382
        %v11391 = vadd.f32 %v11352, %v11382
        %v11392 = vadd.f32 %v11353, %v11382
        %v11393 = vadd.f32 %v11354, %v11382
        %v11394 = vadd.f32 %v11355, %v11382
        %v11395 = vadd.f32 %v11356, %v11382
        %v11396 = vadd.f32 %v11357, %v11382
        %v11397 = vadd.f32 %v11358, %v11382
        %v11398 = vadd.f32 %v11359, %v11382
        %v11399 = vadd.f32 %v11360, %v11382
        %v11400 = vadd.f32 %v11361, %v11382
        %v11401 = vadd.f32 %v11362, %v11382
        %v11402 = vadd.f32 %v11363, %v11382
        %v11403 = vadd.f32 %v11364, %v11382
        %v11404 = vadd.f32 %v11365, %v11382
        %v11405 = vadd.f32 %v11366, %v11382
        %v11406 = vadd.f32 %v11367, %v11382
        %v11407 = vadd.f32 %v11368, %v11382
        %v11408 = vadd.f32 %v11369, %v11382
        %v11409 = vadd.f32 %v11370, %v11382
        %v11410 = vadd.f32 %v11371, %v11382
        %v11411 = vadd.f32 %v11372, %v11382
        %v11412 = vadd.f32 %v11373, %v11382
        %v11413 = vadd.f32 %v11374, %v11382
        %v11414 = vadd.f32 %v11375, %v11382
        %v11415 = vadd.f32 %v11376, %v11382
        %v11416 = vmax.f32 %v11384, 0.0
        %v11417 = vmax.f32 %v11385, 0.0
        %v11418 = vmax.f32 %v11386, 0.0
        %v11419 = vmax.f32 %v11387, 0.0
        %v11420 = vmax.f32 %v11388, 0.0
        %v11421 = vmax.f32 %v11389, 0.0
        %v11422 = vmax.f32 %v11390, 0.0
        %v11423 = vmax.f32 %v11391, 0.0
        %v11424 = vmax.f32 %v11392, 0.0
        %v11425 = vmax.f32 %v11393, 0.0
        %v11426 = vmax.f32 %v11394, 0.0
        %v11427 = vmax.f32 %v11395, 0.0
        %v11428 = vmax.f32 %v11396, 0.0
        %v11429 = vmax.f32 %v11397, 0.0
        %v11430 = vmax.f32 %v11398, 0.0
        %v11431 = vmax.f32 %v11399, 0.0
        %v11432 = vmax.f32 %v11400, 0.0
        %v11433 = vmax.f32 %v11401, 0.0
        %v11434 = vmax.f32 %v11402, 0.0
        %v11435 = vmax.f32 %v11403, 0.0
        %v11436 = vmax.f32 %v11404, 0.0
        %v11437 = vmax.f32 %v11405, 0.0
        %v11438 = vmax.f32 %v11406, 0.0
        %v11439 = vmax.f32 %v11407, 0.0
        %v11440 = vmax.f32 %v11408, 0.0
        %v11441 = vmax.f32 %v11409, 0.0
        %v11442 = vmax.f32 %v11410, 0.0
        %v11443 = vmax.f32 %v11411, 0.0
        %v11444 = vmax.f32 %v11412, 0.0
        %v11445 = vmax.f32 %v11413, 0.0
        %v11446 = vmax.f32 %v11414, 0.0
        %v11447 = vmax.f32 %v11415, 0.0
        %11480 = vrot.lane.b32.xlu0 %v11416, 96
        %v11481 = vpop.permute.xlu0 %11480
        %11482 = vrot.lane.b32.xlu0 %v11417, 96
        %v11483 = vpop.permute.xlu0 %11482
        %11484 = vrot.lane.b32.xlu0 %v11418, 96
        %v11485 = vpop.permute.xlu0 %11484
        %11486 = vrot.lane.b32.xlu0 %v11419, 96
        %v11487 = vpop.permute.xlu0 %11486
        %11488 = vrot.lane.b32.xlu0 %v11420, 96
        %v11489 = vpop.permute.xlu0 %11488
        %11490 = vrot.lane.b32.xlu0 %v11421, 96
        %v11491 = vpop.permute.xlu0 %11490
        %11492 = vrot.lane.b32.xlu0 %v11422, 96
        %v11493 = vpop.permute.xlu0 %11492
        %11494 = vrot.lane.b32.xlu0 %v11423, 96
        %v11495 = vpop.permute.xlu0 %11494
        %11496 = vrot.lane.b32.xlu0 %v11424, 96
        %v11497 = vpop.permute.xlu0 %11496
        %11498 = vrot.lane.b32.xlu0 %v11425, 96
        %v11499 = vpop.permute.xlu0 %11498
        %11500 = vrot.lane.b32.xlu0 %v11426, 96
        %v11501 = vpop.permute.xlu0 %11500
        %11502 = vrot.lane.b32.xlu0 %v11427, 96
        %v11503 = vpop.permute.xlu0 %11502
        %11504 = vrot.lane.b32.xlu0 %v11428, 96
        %v11505 = vpop.permute.xlu0 %11504
        %11506 = vrot.lane.b32.xlu0 %v11429, 96
        %v11507 = vpop.permute.xlu0 %11506
        %11508 = vrot.lane.b32.xlu0 %v11430, 96
        %v11509 = vpop.permute.xlu0 %11508
        %11510 = vrot.lane.b32.xlu0 %v11431, 96
        %v11511 = vpop.permute.xlu0 %11510
        %11512 = vrot.lane.b32.xlu0 %v11432, 96
        %v11513 = vpop.permute.xlu0 %11512
        %11514 = vrot.lane.b32.xlu0 %v11433, 96
        %v11515 = vpop.permute.xlu0 %11514
        %11516 = vrot.lane.b32.xlu0 %v11434, 96
        %v11517 = vpop.permute.xlu0 %11516
        %11518 = vrot.lane.b32.xlu0 %v11435, 96
        %v11519 = vpop.permute.xlu0 %11518
        %11520 = vrot.lane.b32.xlu0 %v11436, 96
        %v11521 = vpop.permute.xlu0 %11520
        %11522 = vrot.lane.b32.xlu0 %v11437, 96
        %v11523 = vpop.permute.xlu0 %11522
        %11524 = vrot.lane.b32.xlu0 %v11438, 96
        %v11525 = vpop.permute.xlu0 %11524
        %11526 = vrot.lane.b32.xlu0 %v11439, 96
        %v11527 = vpop.permute.xlu0 %11526
        %11528 = vrot.lane.b32.xlu0 %v11440, 96
        %v11529 = vpop.permute.xlu0 %11528
        %11530 = vrot.lane.b32.xlu0 %v11441, 96
        %v11531 = vpop.permute.xlu0 %11530
        %11532 = vrot.lane.b32.xlu0 %v11442, 96
        %v11533 = vpop.permute.xlu0 %11532
        %11534 = vrot.lane.b32.xlu0 %v11443, 96
        %v11535 = vpop.permute.xlu0 %11534
        %11536 = vrot.lane.b32.xlu0 %v11444, 96
        %v11537 = vpop.permute.xlu0 %11536
        %11538 = vrot.lane.b32.xlu0 %v11445, 96
        %v11539 = vpop.permute.xlu0 %11538
        %11540 = vrot.lane.b32.xlu0 %v11446, 96
        %v11541 = vpop.permute.xlu0 %11540
        %11542 = vrot.lane.b32.xlu0 %v11447, 96
        %v11543 = vpop.permute.xlu0 %11542
        %11608 = vrot.lane.b32.xlu0 %v1976, 32
        %v11609 = vpop.permute.xlu0 %11608
        %11610 = vrot.lane.b32.xlu0 %v1977, 32
        %v11611 = vpop.permute.xlu0 %11610
        %11612 = vrot.lane.b32.xlu0 %v1978, 32
        %v11613 = vpop.permute.xlu0 %11612
        %11614 = vrot.lane.b32.xlu0 %v1979, 32
        %v11615 = vpop.permute.xlu0 %11614
        %11616 = vrot.lane.b32.xlu0 %v1980, 32
        %v11617 = vpop.permute.xlu0 %11616
        %11618 = vrot.lane.b32.xlu0 %v1981, 32
        %v11619 = vpop.permute.xlu0 %11618
        %11620 = vrot.lane.b32.xlu0 %v1982, 32
        %v11621 = vpop.permute.xlu0 %11620
        %11622 = vrot.lane.b32.xlu0 %v1983, 32
        %v11623 = vpop.permute.xlu0 %11622
        %11624 = vrot.lane.b32.xlu0 %v1984, 32
        %v11625 = vpop.permute.xlu0 %11624
        %11626 = vrot.lane.b32.xlu0 %v1985, 32
        %v11627 = vpop.permute.xlu0 %11626
        %11628 = vrot.lane.b32.xlu0 %v1986, 32
        %v11629 = vpop.permute.xlu0 %11628
        %11630 = vrot.lane.b32.xlu0 %v1987, 32
        %v11631 = vpop.permute.xlu0 %11630
        %11632 = vrot.lane.b32.xlu0 %v1988, 32
        %v11633 = vpop.permute.xlu0 %11632
        %11634 = vrot.lane.b32.xlu0 %v1989, 32
        %v11635 = vpop.permute.xlu0 %11634
        %11636 = vrot.lane.b32.xlu0 %v1990, 32
        %v11637 = vpop.permute.xlu0 %11636
        %11638 = vrot.lane.b32.xlu0 %v1991, 32
        %v11639 = vpop.permute.xlu0 %11638
        %11640 = vrot.lane.b32.xlu0 %v1992, 32
        %v11641 = vpop.permute.xlu0 %11640
        %11642 = vrot.lane.b32.xlu0 %v1993, 32
        %v11643 = vpop.permute.xlu0 %11642
        %11644 = vrot.lane.b32.xlu0 %v1994, 32
        %v11645 = vpop.permute.xlu0 %11644
        %11646 = vrot.lane.b32.xlu0 %v1995, 32
        %v11647 = vpop.permute.xlu0 %11646
        %11648 = vrot.lane.b32.xlu0 %v1996, 32
        %v11649 = vpop.permute.xlu0 %11648
        %11650 = vrot.lane.b32.xlu0 %v1997, 32
        %v11651 = vpop.permute.xlu0 %11650
        %11652 = vrot.lane.b32.xlu0 %v1998, 32
        %v11653 = vpop.permute.xlu0 %11652
        %11654 = vrot.lane.b32.xlu0 %v1999, 32
        %v11655 = vpop.permute.xlu0 %11654
        %11656 = vrot.lane.b32.xlu0 %v2000, 32
        %v11657 = vpop.permute.xlu0 %11656
        %11658 = vrot.lane.b32.xlu0 %v2001, 32
        %v11659 = vpop.permute.xlu0 %11658
        %11660 = vrot.lane.b32.xlu0 %v2002, 32
        %v11661 = vpop.permute.xlu0 %11660
        %11662 = vrot.lane.b32.xlu0 %v2003, 32
        %v11663 = vpop.permute.xlu0 %11662
        %11664 = vrot.lane.b32.xlu0 %v2004, 32
        %v11665 = vpop.permute.xlu0 %11664
        %11666 = vrot.lane.b32.xlu0 %v2005, 32
        %v11667 = vpop.permute.xlu0 %11666
        %11668 = vrot.lane.b32.xlu0 %v2006, 32
        %v11669 = vpop.permute.xlu0 %11668
        %11670 = vrot.lane.b32.xlu0 %v2007, 32
        %v11671 = vpop.permute.xlu0 %11670
        %11736 = vrot.lane.b32.xlu0 %v1146, 104
        %v11737 = vpop.permute.xlu0 %11736
        %11738 = vrot.lane.b32.xlu0 %v1148, 104
        %v11739 = vpop.permute.xlu0 %11738
        %11740 = vrot.lane.b32.xlu0 %v1150, 104
        %v11741 = vpop.permute.xlu0 %11740
        %11742 = vrot.lane.b32.xlu0 %v1152, 104
        %v11743 = vpop.permute.xlu0 %11742
        %11744 = vrot.lane.b32.xlu0 %v1154, 104
        %v11745 = vpop.permute.xlu0 %11744
        %11746 = vrot.lane.b32.xlu0 %v1156, 104
        %v11747 = vpop.permute.xlu0 %11746
        %11748 = vrot.lane.b32.xlu0 %v1158, 104
        %v11749 = vpop.permute.xlu0 %11748
        %11750 = vrot.lane.b32.xlu0 %v1160, 104
        %v11751 = vpop.permute.xlu0 %11750
        %11752 = vrot.lane.b32.xlu0 %v1162, 104
        %v11753 = vpop.permute.xlu0 %11752
        %11754 = vrot.lane.b32.xlu0 %v1164, 104
        %v11755 = vpop.permute.xlu0 %11754
        %11756 = vrot.lane.b32.xlu0 %v1166, 104
        %v11757 = vpop.permute.xlu0 %11756
        %11758 = vrot.lane.b32.xlu0 %v1168, 104
        %v11759 = vpop.permute.xlu0 %11758
        %11760 = vrot.lane.b32.xlu0 %v1170, 104
        %v11761 = vpop.permute.xlu0 %11760
        %11762 = vrot.lane.b32.xlu0 %v1172, 104
        %v11763 = vpop.permute.xlu0 %11762
        %11764 = vrot.lane.b32.xlu0 %v1174, 104
        %v11765 = vpop.permute.xlu0 %11764
        %11766 = vrot.lane.b32.xlu0 %v1176, 104
        %v11767 = vpop.permute.xlu0 %11766
        %11768 = vrot.lane.b32.xlu0 %v1178, 104
        %v11769 = vpop.permute.xlu0 %11768
        %11770 = vrot.lane.b32.xlu0 %v1180, 104
        %v11771 = vpop.permute.xlu0 %11770
        %11772 = vrot.lane.b32.xlu0 %v1182, 104
        %v11773 = vpop.permute.xlu0 %11772
        %11774 = vrot.lane.b32.xlu0 %v1184, 104
        %v11775 = vpop.permute.xlu0 %11774
        %11776 = vrot.lane.b32.xlu0 %v1186, 104
        %v11777 = vpop.permute.xlu0 %11776
        %11778 = vrot.lane.b32.xlu0 %v1188, 104
        %v11779 = vpop.permute.xlu0 %11778
        %11780 = vrot.lane.b32.xlu0 %v1190, 104
        %v11781 = vpop.permute.xlu0 %11780
        %11782 = vrot.lane.b32.xlu0 %v1192, 104
        %v11783 = vpop.permute.xlu0 %11782
        %11784 = vrot.lane.b32.xlu0 %v1194, 104
        %v11785 = vpop.permute.xlu0 %11784
        %11786 = vrot.lane.b32.xlu0 %v1196, 104
        %v11787 = vpop.permute.xlu0 %11786
        %11788 = vrot.lane.b32.xlu0 %v1198, 104
        %v11789 = vpop.permute.xlu0 %11788
        %11790 = vrot.lane.b32.xlu0 %v1200, 104
        %v11791 = vpop.permute.xlu0 %11790
        %11792 = vrot.lane.b32.xlu0 %v1202, 104
        %v11793 = vpop.permute.xlu0 %11792
        %11794 = vrot.lane.b32.xlu0 %v1204, 104
        %v11795 = vpop.permute.xlu0 %11794
        %11796 = vrot.lane.b32.xlu0 %v1206, 104
        %v11797 = vpop.permute.xlu0 %11796
        %11798 = vrot.lane.b32.xlu0 %v1208, 104
        %v11799 = vpop.permute.xlu0 %11798
        %v11832 = vsel %vm5231, %v7766, %v11481
        %v11833 = vsel %vm5231, %v7767, %v11483
        %v11834 = vsel %vm5231, %v7768, %v11485
        %v11835 = vsel %vm5231, %v7769, %v11487
        %v11836 = vsel %vm5231, %v7770, %v11489
        %v11837 = vsel %vm5231, %v7771, %v11491
        %v11838 = vsel %vm5231, %v7772, %v11493
        %v11839 = vsel %vm5231, %v7773, %v11495
        %v11840 = vsel %vm5231, %v7774, %v11497
        %v11841 = vsel %vm5231, %v7775, %v11499
        %v11842 = vsel %vm5231, %v7776, %v11501
        %v11843 = vsel %vm5231, %v7777, %v11503
        %v11844 = vsel %vm5231, %v7778, %v11505
        %v11845 = vsel %vm5231, %v7779, %v11507
        %v11846 = vsel %vm5231, %v7780, %v11509
        %v11847 = vsel %vm5231, %v7781, %v11511
        %v11848 = vsel %vm5231, %v7782, %v11513
        %v11849 = vsel %vm5231, %v7783, %v11515
        %v11850 = vsel %vm5231, %v7784, %v11517
        %v11851 = vsel %vm5231, %v7785, %v11519
        %v11852 = vsel %vm5231, %v7786, %v11521
        %v11853 = vsel %vm5231, %v7787, %v11523
        %v11854 = vsel %vm5231, %v7788, %v11525
        %v11855 = vsel %vm5231, %v7789, %v11527
        %v11856 = vsel %vm5231, %v7790, %v11529
        %v11857 = vsel %vm5231, %v7791, %v11531
        %v11858 = vsel %vm5231, %v7792, %v11533
        %v11859 = vsel %vm5231, %v7793, %v11535
        %v11860 = vsel %vm5231, %v7794, %v11537
        %v11861 = vsel %vm5231, %v7795, %v11539
        %v11862 = vsel %vm5231, %v7796, %v11541
        %v11863 = vsel %vm5231, %v7797, %v11543
        %v11864 = vsel %vm6374, %v11481, %v11609
        %v11865 = vsel %vm6374, %v11483, %v11611
        %v11866 = vsel %vm6374, %v11485, %v11613
        %v11867 = vsel %vm6374, %v11487, %v11615
        %v11868 = vsel %vm6374, %v11489, %v11617
        %v11869 = vsel %vm6374, %v11491, %v11619
        %v11870 = vsel %vm6374, %v11493, %v11621
        %v11871 = vsel %vm6374, %v11495, %v11623
        %v11872 = vsel %vm6374, %v11497, %v11625
        %v11873 = vsel %vm6374, %v11499, %v11627
        %v11874 = vsel %vm6374, %v11501, %v11629
        %v11875 = vsel %vm6374, %v11503, %v11631
        %v11876 = vsel %vm6374, %v11505, %v11633
        %v11877 = vsel %vm6374, %v11507, %v11635
        %v11878 = vsel %vm6374, %v11509, %v11637
        %v11879 = vsel %vm6374, %v11511, %v11639
        %v11880 = vsel %vm6374, %v11513, %v11641
        %v11881 = vsel %vm6374, %v11515, %v11643
        %v11882 = vsel %vm6374, %v11517, %v11645
        %v11883 = vsel %vm6374, %v11519, %v11647
        %v11884 = vsel %vm6374, %v11521, %v11649
        %v11885 = vsel %vm6374, %v11523, %v11651
        %v11886 = vsel %vm6374, %v11525, %v11653
        %v11887 = vsel %vm6374, %v11527, %v11655
        %v11888 = vsel %vm6374, %v11529, %v11657
        %v11889 = vsel %vm6374, %v11531, %v11659
        %v11890 = vsel %vm6374, %v11533, %v11661
        %v11891 = vsel %vm6374, %v11535, %v11663
        %v11892 = vsel %vm6374, %v11537, %v11665
        %v11893 = vsel %vm6374, %v11539, %v11667
        %v11894 = vsel %vm6374, %v11541, %v11669
        %v11895 = vsel %vm6374, %v11543, %v11671
        %vm11896 = vcmask 326656
        %v11897 = vsel %vm11896, %v11864, %v11737
        %v11898 = vsel %vm11896, %v11865, %v11739
        %v11899 = vsel %vm11896, %v11866, %v11741
        %v11900 = vsel %vm11896, %v11867, %v11743
        %v11901 = vsel %vm11896, %v11868, %v11745
        %v11902 = vsel %vm11896, %v11869, %v11747
        %v11903 = vsel %vm11896, %v11870, %v11749
        %v11904 = vsel %vm11896, %v11871, %v11751
        %v11905 = vsel %vm11896, %v11872, %v11753
        %v11906 = vsel %vm11896, %v11873, %v11755
        %v11907 = vsel %vm11896, %v11874, %v11757
        %v11908 = vsel %vm11896, %v11875, %v11759
        %v11909 = vsel %vm11896, %v11876, %v11761
        %v11910 = vsel %vm11896, %v11877, %v11763
        %v11911 = vsel %vm11896, %v11878, %v11765
        %v11912 = vsel %vm11896, %v11879, %v11767
        %v11913 = vsel %vm11896, %v11880, %v11769
        %v11914 = vsel %vm11896, %v11881, %v11771
        %v11915 = vsel %vm11896, %v11882, %v11773
        %v11916 = vsel %vm11896, %v11883, %v11775
        %v11917 = vsel %vm11896, %v11884, %v11777
        %v11918 = vsel %vm11896, %v11885, %v11779
        %v11919 = vsel %vm11896, %v11886, %v11781
        %v11920 = vsel %vm11896, %v11887, %v11783
        %v11921 = vsel %vm11896, %v11888, %v11785
        %v11922 = vsel %vm11896, %v11889, %v11787
        %v11923 = vsel %vm11896, %v11890, %v11789
        %v11924 = vsel %vm11896, %v11891, %v11791
        %v11925 = vsel %vm11896, %v11892, %v11793
        %v11926 = vsel %vm11896, %v11893, %v11795
        %v11927 = vsel %vm11896, %v11894, %v11797
        %v11928 = vsel %vm11896, %v11895, %v11799
        %11929 = vst [vmem:[%s379] sm:$0xff] %v11832
        %vm11930 = vcmask 850944
        %11931 = vst.msk [vmem:[%s379 + $0x8] sm:$0xff] %vm11930, %v11897
        %11932 = vst [vmem:[%s379 + $0x10] sm:$0xff] %v11833
        %11933 = vst.msk [vmem:[%s379 + $0x18] sm:$0xff] %vm11930, %v11898
        %11934 = vst [vmem:[%s379 + $0x20] sm:$0xff] %v11834
        %11935 = vst.msk [vmem:[%s379 + $0x28] sm:$0xff] %vm11930, %v11899
        %11936 = vst [vmem:[%s379 + $0x30] sm:$0xff] %v11835
        %11937 = vst.msk [vmem:[%s379 + $0x38] sm:$0xff] %vm11930, %v11900
        %11938 = vst [vmem:[%s379 + $0x40] sm:$0xff] %v11836
        %11939 = vst.msk [vmem:[%s379 + $0x48] sm:$0xff] %vm11930, %v11901
        %11940 = vst [vmem:[%s379 + $0x50] sm:$0xff] %v11837
        %11941 = vst.msk [vmem:[%s379 + $0x58] sm:$0xff] %vm11930, %v11902
        %11942 = vst [vmem:[%s379 + $0x60] sm:$0xff] %v11838
        %11943 = vst.msk [vmem:[%s379 + $0x68] sm:$0xff] %vm11930, %v11903
        %11944 = vst [vmem:[%s379 + $0x70] sm:$0xff] %v11839
        %11945 = vst.msk [vmem:[%s379 + $0x78] sm:$0xff] %vm11930, %v11904
        %11946 = vst [vmem:[%s379 + $0x80] sm:$0xff] %v11840
        %11947 = vst.msk [vmem:[%s379 + $0x88] sm:$0xff] %vm11930, %v11905
        %11948 = vst [vmem:[%s379 + $0x90] sm:$0xff] %v11841
        %11949 = vst.msk [vmem:[%s379 + $0x98] sm:$0xff] %vm11930, %v11906
        %11950 = vst [vmem:[%s379 + $0xa0] sm:$0xff] %v11842
        %11951 = vst.msk [vmem:[%s379 + $0xa8] sm:$0xff] %vm11930, %v11907
        %11952 = vst [vmem:[%s379 + $0xb0] sm:$0xff] %v11843
        %11953 = vst.msk [vmem:[%s379 + $0xb8] sm:$0xff] %vm11930, %v11908
        %11954 = vst [vmem:[%s379 + $0xc0] sm:$0xff] %v11844
        %11955 = vst.msk [vmem:[%s379 + $0xc8] sm:$0xff] %vm11930, %v11909
        %11956 = vst [vmem:[%s379 + $0xd0] sm:$0xff] %v11845
        %11957 = vst.msk [vmem:[%s379 + $0xd8] sm:$0xff] %vm11930, %v11910
        %11958 = vst [vmem:[%s379 + $0xe0] sm:$0xff] %v11846
        %11959 = vst.msk [vmem:[%s379 + $0xe8] sm:$0xff] %vm11930, %v11911
        %11960 = vst [vmem:[%s379 + $0xf0] sm:$0xff] %v11847
        %11961 = vst.msk [vmem:[%s379 + $0xf8] sm:$0xff] %vm11930, %v11912
        %11962 = vst [vmem:[%s379 + $0x100] sm:$0xff] %v11848
        %11963 = vst.msk [vmem:[%s379 + $0x108] sm:$0xff] %vm11930, %v11913
        %11964 = vst [vmem:[%s379 + $0x110] sm:$0xff] %v11849
        %11965 = vst.msk [vmem:[%s379 + $0x118] sm:$0xff] %vm11930, %v11914
        %11966 = vst [vmem:[%s379 + $0x120] sm:$0xff] %v11850
        %11967 = vst.msk [vmem:[%s379 + $0x128] sm:$0xff] %vm11930, %v11915
        %11968 = vst [vmem:[%s379 + $0x130] sm:$0xff] %v11851
        %11969 = vst.msk [vmem:[%s379 + $0x138] sm:$0xff] %vm11930, %v11916
        %11970 = vst [vmem:[%s379 + $0x140] sm:$0xff] %v11852
        %11971 = vst.msk [vmem:[%s379 + $0x148] sm:$0xff] %vm11930, %v11917
        %11972 = vst [vmem:[%s379 + $0x150] sm:$0xff] %v11853
        %11973 = vst.msk [vmem:[%s379 + $0x158] sm:$0xff] %vm11930, %v11918
        %11974 = vst [vmem:[%s379 + $0x160] sm:$0xff] %v11854
        %11975 = vst.msk [vmem:[%s379 + $0x168] sm:$0xff] %vm11930, %v11919
        %11976 = vst [vmem:[%s379 + $0x170] sm:$0xff] %v11855
        %11977 = vst.msk [vmem:[%s379 + $0x178] sm:$0xff] %vm11930, %v11920
        %11978 = vst [vmem:[%s379 + $0x180] sm:$0xff] %v11856
        %11979 = vst.msk [vmem:[%s379 + $0x188] sm:$0xff] %vm11930, %v11921
        %11980 = vst [vmem:[%s379 + $0x190] sm:$0xff] %v11857
        %11981 = vst.msk [vmem:[%s379 + $0x198] sm:$0xff] %vm11930, %v11922
        %11982 = vst [vmem:[%s379 + $0x1a0] sm:$0xff] %v11858
        %11983 = vst.msk [vmem:[%s379 + $0x1a8] sm:$0xff] %vm11930, %v11923
        %11984 = vst [vmem:[%s379 + $0x1b0] sm:$0xff] %v11859
        %11985 = vst.msk [vmem:[%s379 + $0x1b8] sm:$0xff] %vm11930, %v11924
        %11986 = vst [vmem:[%s379 + $0x1c0] sm:$0xff] %v11860
        %11987 = vst.msk [vmem:[%s379 + $0x1c8] sm:$0xff] %vm11930, %v11925
        %11988 = vst [vmem:[%s379 + $0x1d0] sm:$0xff] %v11861
        %11989 = vst.msk [vmem:[%s379 + $0x1d8] sm:$0xff] %vm11930, %v11926
        %11990 = vst [vmem:[%s379 + $0x1e0] sm:$0xff] %v11862
        %11991 = vst.msk [vmem:[%s379 + $0x1e8] sm:$0xff] %vm11930, %v11927
        %11992 = vst [vmem:[%s379 + $0x1f0] sm:$0xff] %v11863
        %11993 = vst.msk [vmem:[%s379 + $0x1f8] sm:$0xff] %vm11930, %v11928
        %s11994 = sand.u32 %s269, 1
        %s11995 = scalar_lea.sflag [#allocation6], %s11994
        %s11996 = sand.u32 %s269, 1
        %s11997 = smul.addr %s11996, 512
        %s11998 = scalar_lea.vmem [#allocation5], %s11997
        // Predicated region
        $region65: #{inception_a_forward.1} parent=63 // pred_check
          %p11999 = pneg %p279
        $region66: #{inception_a_forward.1} parent=63 // pred_check_branch
          %12001 = sbr.rel (%p11999) target = $region68
        $region67: #{inception_a_forward.1} parent=63 // pred_region
          %s12003 = ssub.s32 8192, 8192
          %12004 = vsyncadd %s11995, %s12003
          %s12005 = smul.addr %s25, 64
          %s12006 = smul.addr %s12005, 128
          %s12007 = scalar_lea.hbm %s11, %s12006
          %s12008 = sshll.u32 %s11998, 4
          %s12009 = int_to_ptr.vmem [resolvable:$true] %s12008
          %12014 = dma.vmem_to_hbm [thread:$0]  %s12009, 8192, %s12007, %s11995, 256, 256, 16
        $region68: #{inception_a_forward.1} parent=63 // pred_fallthru
          _
      $region64: #{inception_a_forward.1} parent=5 // pred_fallthru
        _
      %p12015 = scmp.le.s32.totalorder 2, %s20
      // Predicated region
      $region69: #{inception_a_forward.1} parent=5 // pred_check
        %p12016 = pneg %p12015
      $region70: #{inception_a_forward.1} parent=5 // pred_check_branch
        %12018 = sbr.rel (%p12016) target = $region72
      $region71: #{inception_a_forward.1} parent=5 // pred_region
        %s12019 = ssub.s32 %s20, 2
        // Predicated region
        $region73: #{inception_a_forward.1} parent=71 // pred_check
          %p12020 = pneg %p285
        $region74: #{inception_a_forward.1} parent=71 // pred_check_branch
          %12022 = sbr.rel (%p12020) target = $region76
        $region75: #{inception_a_forward.1} parent=71 // pred_region
          %s12023 = sand.u32 %s270, 1
          %s12024 = scalar_lea.sflag [#allocation6], %s12023
          %s12025 = sand.u32 %s270, 1
          %s12026 = smul.addr %s12025, 512
          %s12027 = scalar_lea.vmem [#allocation5], %s12026
          %12028 = dma.done %s12024, 8192
        $region76: #{inception_a_forward.1} parent=71 // pred_fallthru
          _
      $region72: #{inception_a_forward.1} parent=5 // pred_fallthru
        _
    $region6: #{inception_a_forward.1} parent=1 // loop_footer
      %s24 = sadd.s32 1, %s20
    $region7: #{inception_a_forward.1} parent=1 // loop_footer_branch
      %19 = sbr.rel target = $region3
    $region8: #{inception_a_forward.1} parent=1 // loop_exit
      _
    %12029 = vsyncpa [#allocation6], 1
    %s12030 = scalar_lea.sflag [#allocation6], 1
    %12031 = vsyncpa %s12030, 1

</llo_original>
